<compile_context>
chip_gen: v7x
topology: tpu7x:2x2x1
jax: 0.10.0
libtpu: 0.0.40
codegen_flags: <defaults>
</compile_context>

<pallas_src>
import jax
import jax.numpy as jnp
from jax.experimental import pallas as pl
from jax.experimental.pallas import tpu as pltpu


def _round_up(x, m):
    return (x + m - 1) // m * m


# ---------------------------------------------------------------------------
# Bidirectional GRU layer kernel (both directions fused, grid over direction).
# ---------------------------------------------------------------------------
def _bigru_layer_kernel(x_ref, wih_ref, whh_ref, bih_ref, bhh_ref,
                        o_ref, gi_ref, h_ref):
    B, Hp = h_ref.shape            # padded batch (mult of 8), padded hidden (mult of 128)
    TB = x_ref.shape[0]
    T = TB // B
    d = pl.program_id(0)           # 0 = forward, 1 = backward

    # (1) Hoisted input projection (b_ih folded in): one large MXU-shaped
    #     matmul over the whole sequence of this direction.
    gi_ref[...] = (
        jnp.dot(x_ref[...], wih_ref[0], preferred_element_type=jnp.float32)
        + bih_ref[0])

    # (2) Sequential recurrence, hidden state resident in VMEM scratch.
    h_ref[...] = jnp.zeros_like(h_ref)          # h0 = 0 (PyTorch default)
    whh = whh_ref[0]                            # (Hp, 3Hp), stays resident
    bhh = bhh_ref[0]                            # (1, 3Hp)

    def step(t, carry):
        t_eff = jnp.where(d == 0, t, T - 1 - t)
        row = pl.multiple_of(t_eff * B, B)
        gi = gi_ref[pl.ds(row, B), :]           # (B, 3Hp)
        h = h_ref[...]
        gh = jnp.dot(h, whh, preferred_element_type=jnp.float32) + bhh
        # PyTorch gate order [r, z, n]; slices are 128-lane aligned (Hp % 128 == 0).
        r = jax.nn.sigmoid(gi[:, :Hp] + gh[:, :Hp])
        z = jax.nn.sigmoid(gi[:, Hp:2 * Hp] + gh[:, Hp:2 * Hp])
        n = jnp.tanh(gi[:, 2 * Hp:] + r * gh[:, 2 * Hp:])
        h_new = (1.0 - z) * n + z * h
        h_ref[...] = h_new
        o_ref[pl.ds(row, B), :] = h_new.astype(o_ref.dtype)
        return carry

    jax.lax.fori_loop(0, T, step, None, unroll=(T <= 32))


def bigru_layer(x2d, layer_params, *, batch):
    """x2d: (T*B_pad, Din_pad) -> (T*B_pad, 2*H_pad), both directions fused."""
    wih, whh, bih, bhh = layer_params            # each stacked over direction
    TB, Din = x2d.shape
    Hp = whh.shape[1]
    G = 3 * Hp

    cost = pl.CostEstimate(
        flops=2 * (2 * TB * Din * G + 2 * TB * Hp * G),
        transcendentals=2 * TB * G,
        bytes_accessed=4 * (TB * Din + 2 * (Din * G + Hp * G + 2 * G)
                            + TB * 2 * Hp),
    )
    return pl.pallas_call(
        _bigru_layer_kernel,
        out_shape=jax.ShapeDtypeStruct((TB, 2 * Hp), jnp.float32),
        grid_spec=pltpu.PrefetchScalarGridSpec(
            num_scalar_prefetch=0,
            grid=(2,),                                   # direction axis
            in_specs=[
                pl.BlockSpec((TB, Din), lambda d: (0, 0)),
                pl.BlockSpec((1, Din, G), lambda d: (d, 0, 0)),
                pl.BlockSpec((1, Hp, G), lambda d: (d, 0, 0)),
                pl.BlockSpec((1, 1, G), lambda d: (d, 0, 0)),
                pl.BlockSpec((1, 1, G), lambda d: (d, 0, 0)),
            ],
            out_specs=pl.BlockSpec((TB, Hp), lambda d: (0, d)),
            scratch_shapes=[
                pltpu.VMEM((TB, G), jnp.float32),        # gi for this direction
                pltpu.VMEM((batch, Hp), jnp.float32),    # hidden state
            ],
        ),
        compiler_params=pltpu.CompilerParams(
            dimension_semantics=("parallel",)),          # safe: no cross-step state
        cost_estimate=cost,
    )(x2d, wih, whh, bih, bhh)


# ---------------------------------------------------------------------------
# Fused Conv1D (kernel_size=1) heads: C_pad -> 64 -> 16 -> 128(=padded 1)
# ---------------------------------------------------------------------------
def _cnn_heads_kernel(y_ref, w1_ref, b1_ref, w2_ref, b2_ref, w3_ref, b3_ref,
                      o_ref):
    y = y_ref[...]
    h = jnp.dot(y, w1_ref[0], preferred_element_type=jnp.float32) + b1_ref[0]
    h = jnp.maximum(h, 0.0)
    h = jnp.dot(h, w2_ref[0], preferred_element_type=jnp.float32) + b2_ref[0]
    h = jnp.maximum(h, 0.0)
    o = jnp.dot(h, w3_ref[0], preferred_element_type=jnp.float32) + b3_ref[0]
    o_ref[0] = o.astype(o_ref.dtype)


def cnn_heads(y2d, head_params):
    """y2d: (N, C_pad) -> (n_heads, N, OUT_PAD); all heads in one pallas_call."""
    w1, b1, w2, b2, w3, b3 = head_params
    N, Cp = y2d.shape
    n_heads, _, c1 = w1.shape
    c2 = w2.shape[2]
    cop = w3.shape[2]

    cost = pl.CostEstimate(
        flops=2 * n_heads * N * (Cp * c1 + c1 * c2 + c2 * cop),
        transcendentals=0,
        bytes_accessed=4 * (N * Cp
                            + n_heads * (Cp * c1 + c1 + c1 * c2 + c2
                                         + c2 * cop + cop)
                            + n_heads * N * cop),
    )
    return pl.pallas_call(
        _cnn_heads_kernel,
        out_shape=jax.ShapeDtypeStruct((n_heads, N, cop), jnp.float32),
        grid_spec=pltpu.PrefetchScalarGridSpec(
            num_scalar_prefetch=0,
            grid=(n_heads,),
            in_specs=[
                pl.BlockSpec((N, Cp), lambda h: (0, 0)),
                pl.BlockSpec((1, Cp, c1), lambda h: (h, 0, 0)),
                pl.BlockSpec((1, 1, c1), lambda h: (h, 0, 0)),
                pl.BlockSpec((1, c1, c2), lambda h: (h, 0, 0)),
                pl.BlockSpec((1, 1, c2), lambda h: (h, 0, 0)),
                pl.BlockSpec((1, c2, cop), lambda h: (h, 0, 0)),
                pl.BlockSpec((1, 1, cop), lambda h: (h, 0, 0)),
            ],
            out_specs=pl.BlockSpec((1, N, cop), lambda h: (h, 0, 0)),
        ),
        compiler_params=pltpu.CompilerParams(
            dimension_semantics=("parallel",)),
        cost_estimate=cost,
    )(y2d, w1, b1, w2, b2, w3, b3)


# ---------------------------------------------------------------------------
# Trace-time parameter padding / transposition (lane-aligned gate layout)
# ---------------------------------------------------------------------------
def _pad_gate_matrix(w, in_segments, din_pad, H, H_pad):
    """w: (3H, Din_real) PyTorch layout -> (din_pad, 3*H_pad) transposed+padded."""
    wt = jnp.asarray(w, jnp.float32).T                      # (Din_real, 3H)
    out = jnp.zeros((din_pad, 3 * H_pad), jnp.float32)
    for (src, length, dst) in in_segments:
        for g in range(3):
            out = out.at[dst:dst + length, g * H_pad:g * H_pad + H].set(
                wt[src:src + length, g * H:(g + 1) * H])
    return out


def _pad_gate_bias(b, H, H_pad):
    out = jnp.zeros((3 * H_pad,), jnp.float32)
    for g in range(3):
        out = out.at[g * H_pad:g * H_pad + H].set(b[g * H:(g + 1) * H])
    return out


def _prep_gru_layer(layer_params, d_model, H, H_pad, layer_idx):
    if layer_idx == 0:
        din_pad = H_pad
        segs = [(0, d_model, 0)]
    else:
        din_pad = 2 * H_pad
        segs = [(0, H, 0), (H, H, H_pad)]                   # fwd half, bwd half
    wihs, whhs, bihs, bhhs = [], [], [], []
    for (w_ih, w_hh, b_ih, b_hh) in layer_params:           # [forward, backward]
        wihs.append(_pad_gate_matrix(w_ih, segs, din_pad, H, H_pad))
        whhs.append(_pad_gate_matrix(w_hh, [(0, H, 0)], H_pad, H, H_pad))
        bihs.append(_pad_gate_bias(b_ih, H, H_pad))
        bhhs.append(_pad_gate_bias(b_hh, H, H_pad))
    return (jnp.stack(wihs), jnp.stack(whhs),
            jnp.stack(bihs)[:, None, :], jnp.stack(bhhs)[:, None, :])


def _prep_cnn_heads(heads_params, H, H_pad, out_pad):
    w1s, b1s, w2s, b2s, w3s, b3s = [], [], [], [], [], []
    for (w1, b1), (w2, b2), (w3, b3) in heads_params:
        c1, c2 = w1.shape[1], w2.shape[1]
        w1p = jnp.zeros((2 * H_pad, c1), jnp.float32)
        w1p = w1p.at[0:H, :].set(w1[0:H, :])                 # forward-direction channels
        w1p = w1p.at[H_pad:H_pad + H, :].set(w1[H:2 * H, :])  # backward-direction channels
        cout = w3.shape[1]
        w3p = jnp.zeros((c2, out_pad), jnp.float32).at[:, 0:cout].set(w3)
        b3p = jnp.zeros((out_pad,), jnp.float32).at[0:cout].set(b3)
        w1s.append(w1p); b1s.append(b1)
        w2s.append(w2); b2s.append(b2)
        w3s.append(w3p); b3s.append(b3p)
    return (jnp.stack(w1s), jnp.stack(b1s)[:, None, :],
            jnp.stack(w2s), jnp.stack(b2s)[:, None, :],
            jnp.stack(w3s), jnp.stack(b3s)[:, None, :])


# ---------------------------------------------------------------------------
# Full module forward (matches GRU.forward: list of (B, T) arrays, one per head)
# ---------------------------------------------------------------------------
def gru_module_forward(x, gru_params, cnn_params_heads, *, d_model):
    B, T, D = x.shape
    H = d_model
    H_pad = _round_up(H, 128)
    B_pad = _round_up(B, 8)
    OUT_PAD = 128

    layers_p = [_prep_gru_layer(p, d_model, H, H_pad, li)
                for li, p in enumerate(gru_params)]
    heads_p = _prep_cnn_heads(cnn_params_heads, H, H_pad, OUT_PAD)

    # time-major, batch/feature padded, flattened to a lane-dense 2-D slab
    x_tm = jnp.transpose(x, (1, 0, 2))                       # (T, B, D)
    x_p = jnp.zeros((T, B_pad, H_pad), jnp.float32)
    x_p = x_p.at[:, :B, :D].set(x_tm.astype(jnp.float32))
    h2d = x_p.reshape(T * B_pad, H_pad)

    for layer_p in layers_p:
        h2d = bigru_layer(h2d, layer_p, batch=B_pad)         # (T*B_pad, 2*H_pad)

    heads_out = cnn_heads(h2d, heads_p)                      # (n_heads, T*B_pad, OUT_PAD)
    y = heads_out[:, :, 0].reshape(-1, T, B_pad)[:, :, :B]   # (n_heads, T, B)
    return [jnp.transpose(y[i]) for i in range(y.shape[0])]


# ---------------------------------------------------------------------------
# Pure-JAX reference (for a numerical smoke check)
# ---------------------------------------------------------------------------
def _reference_forward(x, gru_params, cnn_params_heads, d_model):
    B, T, _ = x.shape
    H = d_model
    hp = jax.lax.Precision.HIGHEST
    h = x
    for layer_p in gru_params:
        outs = []
        for direction, (w_ih, w_hh, b_ih, b_hh) in enumerate(layer_p):
            hs = jnp.zeros((B, H), jnp.float32)
            out_t = [None] * T
            order = range(T) if direction == 0 else range(T - 1, -1, -1)
            for t in order:
                xt = h[:, t, :]
                gi = jnp.dot(xt, w_ih.T, precision=hp) + b_ih
                gh = jnp.dot(hs, w_hh.T, precision=hp) + b_hh
                r = jax.nn.sigmoid(gi[:, :H] + gh[:, :H])
                z = jax.nn.sigmoid(gi[:, H:2 * H] + gh[:, H:2 * H])
                n = jnp.tanh(gi[:, 2 * H:] + r * gh[:, 2 * H:])
                hs = (1.0 - z) * n + z * hs
                out_t[t] = hs
            outs.append(jnp.stack(out_t, axis=1))            # (B, T, H)
        h = jnp.concatenate(outs, axis=-1)                   # (B, T, 2H)
    res = []
    for (w1, b1), (w2, b2), (w3, b3) in cnn_params_heads:
        yh = jnp.maximum(jnp.dot(h, w1, precision=hp) + b1, 0.0)
        yh = jnp.maximum(jnp.dot(yh, w2, precision=hp) + b2, 0.0)
        yh = jnp.dot(yh, w3, precision=hp) + b3
        res.append(yh[..., 0])
    return res


# ---------------------------------------------------------------------------
# Parameter init (deterministic, PyTorch-like uniform(-1/sqrt(H), 1/sqrt(H)))
# ---------------------------------------------------------------------------
def init_gru_params(key, d_model, n_layers):
    H = d_model
    s = 1.0 / float(H) ** 0.5
    params = []
    for layer in range(n_layers):
        din = d_model if layer == 0 else 2 * d_model
        layer_p = []
        for _direction in range(2):
            key, k1, k2, k3, k4 = jax.random.split(key, 5)
            layer_p.append((
                jax.random.uniform(k1, (3 * H, din), jnp.float32, -s, s),
                jax.random.uniform(k2, (3 * H, H), jnp.float32, -s, s),
                jax.random.uniform(k3, (3 * H,), jnp.float32, -s, s),
                jax.random.uniform(k4, (3 * H,), jnp.float32, -s, s),
            ))
        params.append(layer_p)
    return key, params


def init_cnn_params(key, conv_dims):
    params = []
    for cin, cout in zip(conv_dims[:-1], conv_dims[1:]):
        s = 1.0 / float(cin) ** 0.5
        key, k1, k2 = jax.random.split(key, 3)
        w = jax.random.uniform(k1, (cin, cout), jnp.float32, -s, s)
        b = jax.random.uniform(k2, (cout,), jnp.float32, -s, s)
        params.append((w, b))
    return key, params


if __name__ == "__main__":
    d_model = 32
    n_layers = 2
    n_heads = 1
    B, T = 2, 8
    conv_dims = [2 * d_model] + [64, 16, 1]

    key = jax.random.PRNGKey(0)
    key, kx = jax.random.split(key)
    x = jax.random.normal(kx, (B, T, d_model), jnp.float32)

    key, gru_params = init_gru_params(key, d_model, n_layers)
    cnn_params_heads = []
    for _ in range(n_heads):
        key, head_p = init_cnn_params(key, conv_dims)
        cnn_params_heads.append(head_p)

    fwd = jax.jit(gru_module_forward, static_argnames=("d_model",))
    outs = fwd(x, gru_params, cnn_params_heads, d_model=d_model)
    outs = [jax.block_until_ready(o) for o in outs]
    assert len(outs) == n_heads and outs[0].shape == (B, T)

    # Light numerical smoke check against a pure-JAX reference.
    refs = _reference_forward(x, gru_params, cnn_params_heads, d_model)
    for o, r in zip(outs, refs):
        err = float(jnp.max(jnp.abs(o - r)))
        scale = float(jnp.max(jnp.abs(r))) + 1e-6
        assert err <= 1e-2 + 1e-2 * scale, (err, scale)

    print("KERNEL_OK")
</pallas_src>

<mosaic_0001>
module attributes {stable_mosaic.version = 11 : i64} {
  func.func @_bigru_layer_kernel(%arg0: i32, %arg1: memref<64x128xf32, #tpu.memory_space<vmem>>, %arg2: memref<1x128x384xf32, #tpu.memory_space<vmem>>, %arg3: memref<1x128x384xf32, #tpu.memory_space<vmem>>, %arg4: memref<1x1x384xf32, #tpu.memory_space<vmem>>, %arg5: memref<1x1x384xf32, #tpu.memory_space<vmem>>, %arg6: memref<64x128xf32, #tpu.memory_space<vmem>>, %arg7: memref<64x384xf32, #tpu.memory_space<vmem>>, %arg8: memref<8x128xf32, #tpu.memory_space<vmem>>) attributes {dimension_semantics = [#tpu.dimension_semantics<parallel>], iteration_bounds = array<i64: 2>, scalar_prefetch = 0 : i64, scratch_operands = 2 : i64, tpu.core_type = #tpu.core_type<tc>, window_params = [{pipeline_mode = #tpu.pipeline_mode<synchronous>, transform_indices = @transform_0, window_bounds = array<i64: 64, 128>}, {transform_indices = @transform_1, window_bounds = array<i64: 1, 128, 384>}, {transform_indices = @transform_2, window_bounds = array<i64: 1, 128, 384>}, {transform_indices = @transform_3, window_bounds = array<i64: 1, 1, 384>}, {transform_indices = @transform_4, window_bounds = array<i64: 1, 1, 384>}, {transform_indices = @transform_5, window_bounds = array<i64: 64, 128>}]} {
    %c0 = arith.constant 0 : index
    %c0_0 = arith.constant 0 : index
    %0 = vector.load %arg1[%c0, %c0_0] : memref<64x128xf32, #tpu.memory_space<vmem>>, vector<64x128xf32>
    %c0_1 = arith.constant 0 : index
    %c0_2 = arith.constant 0 : index
    %c0_3 = arith.constant 0 : index
    %1 = vector.load %arg2[%c0_1, %c0_2, %c0_3] : memref<1x128x384xf32, #tpu.memory_space<vmem>>, vector<1x128x384xf32>
    %2 = vector.shape_cast %1 : vector<1x128x384xf32> to vector<128x384xf32>
    %cst = arith.constant dense<0.000000e+00> : vector<64x384xf32>
    %3 = tpu.matmul %0, %2, %cst {dimension_numbers = #tpu.dot_dimension_numbers<[1], [0], [0], [1], [0, 0, 1, 1], [], []>} : vector<64x128xf32>, vector<128x384xf32>, vector<64x384xf32> -> vector<64x384xf32>
    %c0_4 = arith.constant 0 : index
    %c0_5 = arith.constant 0 : index
    %c0_6 = arith.constant 0 : index
    %4 = vector.load %arg4[%c0_4, %c0_5, %c0_6] : memref<1x1x384xf32, #tpu.memory_space<vmem>>, vector<1x1x384xf32>
    %5 = vector.shape_cast %4 : vector<1x1x384xf32> to vector<1x384xf32>
    %6 = vector.broadcast %5 : vector<1x384xf32> to vector<64x384xf32>
    %7 = arith.addf %3, %6 : vector<64x384xf32>
    %c0_7 = arith.constant 0 : index
    %c0_8 = arith.constant 0 : index
    %8 = vector.load %arg7[%c0_7, %c0_8] : memref<64x384xf32, #tpu.memory_space<vmem>>, vector<64x384xf32>
    tpu.vector_store %arg7[%c0_7, %c0_8], %7 {strides = array<i32>} : memref<64x384xf32, #tpu.memory_space<vmem>>, vector<64x384xf32>,
    %cst_9 = arith.constant 0.000000e+00 : f32
    %9 = vector.broadcast %cst_9 : f32 to vector<8x128xf32>
    %c0_10 = arith.constant 0 : index
    %c0_11 = arith.constant 0 : index
    %10 = vector.load %arg8[%c0_10, %c0_11] : memref<8x128xf32, #tpu.memory_space<vmem>>, vector<8x128xf32>
    tpu.vector_store %arg8[%c0_10, %c0_11], %9 {strides = array<i32>} : memref<8x128xf32, #tpu.memory_space<vmem>>, vector<8x128xf32>,
    %c0_12 = arith.constant 0 : index
    %c0_13 = arith.constant 0 : index
    %c0_14 = arith.constant 0 : index
    %11 = vector.load %arg3[%c0_12, %c0_13, %c0_14] : memref<1x128x384xf32, #tpu.memory_space<vmem>>, vector<1x128x384xf32>
    %12 = vector.shape_cast %11 : vector<1x128x384xf32> to vector<128x384xf32>
    %c0_15 = arith.constant 0 : index
    %c0_16 = arith.constant 0 : index
    %c0_17 = arith.constant 0 : index
    %13 = vector.load %arg5[%c0_15, %c0_16, %c0_17] : memref<1x1x384xf32, #tpu.memory_space<vmem>>, vector<1x1x384xf32>
    %14 = vector.shape_cast %13 : vector<1x1x384xf32> to vector<1x384xf32>
    %c0_i32 = arith.constant 0 : i32
    %c0_i32_18 = arith.constant 0 : i32
    %15 = arith.cmpi eq, %arg0, %c0_i32_18 : i32
    %c7_i32 = arith.constant 7 : i32
    %16 = arith.subi %c7_i32, %c0_i32 : i32
    %17 = arith.select %15, %c0_i32, %16 : i32
    %c8_i32 = arith.constant 8 : i32
    %18 = arith.muli %17, %c8_i32 : i32
    %19 = tpu.assume_multiple %18, 8 : i32
    %20 = arith.index_cast %19 : i32 to index
    %c0_19 = arith.constant 0 : index
    %21 = vector.load %arg7[%20, %c0_19] : memref<64x384xf32, #tpu.memory_space<vmem>>, vector<8x384xf32>
    %c0_20 = arith.constant 0 : index
    %c0_21 = arith.constant 0 : index
    %22 = vector.load %arg8[%c0_20, %c0_21] : memref<8x128xf32, #tpu.memory_space<vmem>>, vector<8x128xf32>
    %cst_22 = arith.constant dense<0.000000e+00> : vector<8x384xf32>
    %23 = tpu.matmul %22, %12, %cst_22 {dimension_numbers = #tpu.dot_dimension_numbers<[1], [0], [0], [1], [0, 0, 1, 1], [], []>} : vector<8x128xf32>, vector<128x384xf32>, vector<8x384xf32> -> vector<8x384xf32>
    %24 = vector.broadcast %14 : vector<1x384xf32> to vector<8x384xf32>
    %25 = arith.addf %23, %24 : vector<8x384xf32>
    %26 = vector.extract_strided_slice %21 {offsets = [0, 0], sizes = [8, 128], strides = [1, 1]} : vector<8x384xf32> to vector<8x128xf32>
    %27 = vector.extract_strided_slice %25 {offsets = [0, 0], sizes = [8, 128], strides = [1, 1]} : vector<8x384xf32> to vector<8x128xf32>
    %28 = arith.addf %26, %27 : vector<8x128xf32>
    %29 = arith.negf %28 : vector<8x128xf32>
    %30 = math.exp %29 : vector<8x128xf32>
    %cst_23 = arith.constant 1.000000e+00 : f32
    %31 = vector.broadcast %cst_23 : f32 to vector<8x128xf32>
    %32 = arith.addf %31, %30 : vector<8x128xf32>
    %33 = arith.divf %31, %32 : vector<8x128xf32>
    %34 = vector.extract_strided_slice %21 {offsets = [0, 128], sizes = [8, 128], strides = [1, 1]} : vector<8x384xf32> to vector<8x128xf32>
    %35 = vector.extract_strided_slice %25 {offsets = [0, 128], sizes = [8, 128], strides = [1, 1]} : vector<8x384xf32> to vector<8x128xf32>
    %36 = arith.addf %34, %35 : vector<8x128xf32>
    %37 = arith.negf %36 : vector<8x128xf32>
    %38 = math.exp %37 : vector<8x128xf32>
    %cst_24 = arith.constant 1.000000e+00 : f32
    %39 = vector.broadcast %cst_24 : f32 to vector<8x128xf32>
    %40 = arith.addf %39, %38 : vector<8x128xf32>
    %41 = arith.divf %39, %40 : vector<8x128xf32>
    %42 = vector.extract_strided_slice %21 {offsets = [0, 256], sizes = [8, 128], strides = [1, 1]} : vector<8x384xf32> to vector<8x128xf32>
    %43 = vector.extract_strided_slice %25 {offsets = [0, 256], sizes = [8, 128], strides = [1, 1]} : vector<8x384xf32> to vector<8x128xf32>
    %44 = arith.mulf %33, %43 : vector<8x128xf32>
    %45 = arith.addf %42, %44 : vector<8x128xf32>
    %46 = math.tanh %45 : vector<8x128xf32>
    %cst_25 = arith.constant 1.000000e+00 : f32
    %47 = vector.broadcast %cst_25 : f32 to vector<8x128xf32>
    %48 = arith.subf %47, %41 : vector<8x128xf32>
    %49 = arith.mulf %48, %46 : vector<8x128xf32>
    %50 = arith.mulf %41, %22 : vector<8x128xf32>
    %51 = arith.addf %49, %50 : vector<8x128xf32>
    %c0_26 = arith.constant 0 : index
    %c0_27 = arith.constant 0 : index
    %52 = vector.load %arg8[%c0_26, %c0_27] : memref<8x128xf32, #tpu.memory_space<vmem>>, vector<8x128xf32>
    tpu.vector_store %arg8[%c0_26, %c0_27], %51 {strides = array<i32>} : memref<8x128xf32, #tpu.memory_space<vmem>>, vector<8x128xf32>,
    %53 = arith.index_cast %19 : i32 to index
    %c0_28 = arith.constant 0 : index
    %54 = vector.load %arg6[%53, %c0_28] : memref<64x128xf32, #tpu.memory_space<vmem>>, vector<8x128xf32>
    tpu.vector_store %arg6[%53, %c0_28], %51 {strides = array<i32>} : memref<64x128xf32, #tpu.memory_space<vmem>>, vector<8x128xf32>,
    %c1_i32 = arith.constant 1 : i32
    %c0_i32_29 = arith.constant 0 : i32
    %55 = arith.cmpi eq, %arg0, %c0_i32_29 : i32
    %c7_i32_30 = arith.constant 7 : i32
    %56 = arith.subi %c7_i32_30, %c1_i32 : i32
    %57 = arith.select %55, %c1_i32, %56 : i32
    %c8_i32_31 = arith.constant 8 : i32
    %58 = arith.muli %57, %c8_i32_31 : i32
    %59 = tpu.assume_multiple %58, 8 : i32
    %60 = arith.index_cast %59 : i32 to index
    %c0_32 = arith.constant 0 : index
    %61 = vector.load %arg7[%60, %c0_32] : memref<64x384xf32, #tpu.memory_space<vmem>>, vector<8x384xf32>
    %c0_33 = arith.constant 0 : index
    %c0_34 = arith.constant 0 : index
    %62 = vector.load %arg8[%c0_33, %c0_34] : memref<8x128xf32, #tpu.memory_space<vmem>>, vector<8x128xf32>
    %cst_35 = arith.constant dense<0.000000e+00> : vector<8x384xf32>
    %63 = tpu.matmul %62, %12, %cst_35 {dimension_numbers = #tpu.dot_dimension_numbers<[1], [0], [0], [1], [0, 0, 1, 1], [], []>} : vector<8x128xf32>, vector<128x384xf32>, vector<8x384xf32> -> vector<8x384xf32>
    %64 = vector.broadcast %14 : vector<1x384xf32> to vector<8x384xf32>
    %65 = arith.addf %63, %64 : vector<8x384xf32>
    %66 = vector.extract_strided_slice %61 {offsets = [0, 0], sizes = [8, 128], strides = [1, 1]} : vector<8x384xf32> to vector<8x128xf32>
    %67 = vector.extract_strided_slice %65 {offsets = [0, 0], sizes = [8, 128], strides = [1, 1]} : vector<8x384xf32> to vector<8x128xf32>
    %68 = arith.addf %66, %67 : vector<8x128xf32>
    %69 = arith.negf %68 : vector<8x128xf32>
    %70 = math.exp %69 : vector<8x128xf32>
    %cst_36 = arith.constant 1.000000e+00 : f32
    %71 = vector.broadcast %cst_36 : f32 to vector<8x128xf32>
    %72 = arith.addf %71, %70 : vector<8x128xf32>
    %73 = arith.divf %71, %72 : vector<8x128xf32>
    %74 = vector.extract_strided_slice %61 {offsets = [0, 128], sizes = [8, 128], strides = [1, 1]} : vector<8x384xf32> to vector<8x128xf32>
    %75 = vector.extract_strided_slice %65 {offsets = [0, 128], sizes = [8, 128], strides = [1, 1]} : vector<8x384xf32> to vector<8x128xf32>
    %76 = arith.addf %74, %75 : vector<8x128xf32>
    %77 = arith.negf %76 : vector<8x128xf32>
    %78 = math.exp %77 : vector<8x128xf32>
    %cst_37 = arith.constant 1.000000e+00 : f32
    %79 = vector.broadcast %cst_37 : f32 to vector<8x128xf32>
    %80 = arith.addf %79, %78 : vector<8x128xf32>
    %81 = arith.divf %79, %80 : vector<8x128xf32>
    %82 = vector.extract_strided_slice %61 {offsets = [0, 256], sizes = [8, 128], strides = [1, 1]} : vector<8x384xf32> to vector<8x128xf32>
    %83 = vector.extract_strided_slice %65 {offsets = [0, 256], sizes = [8, 128], strides = [1, 1]} : vector<8x384xf32> to vector<8x128xf32>
    %84 = arith.mulf %73, %83 : vector<8x128xf32>
    %85 = arith.addf %82, %84 : vector<8x128xf32>
    %86 = math.tanh %85 : vector<8x128xf32>
    %cst_38 = arith.constant 1.000000e+00 : f32
    %87 = vector.broadcast %cst_38 : f32 to vector<8x128xf32>
    %88 = arith.subf %87, %81 : vector<8x128xf32>
    %89 = arith.mulf %88, %86 : vector<8x128xf32>
    %90 = arith.mulf %81, %62 : vector<8x128xf32>
    %91 = arith.addf %89, %90 : vector<8x128xf32>
    %c0_39 = arith.constant 0 : index
    %c0_40 = arith.constant 0 : index
    %92 = vector.load %arg8[%c0_39, %c0_40] : memref<8x128xf32, #tpu.memory_space<vmem>>, vector<8x128xf32>
    tpu.vector_store %arg8[%c0_39, %c0_40], %91 {strides = array<i32>} : memref<8x128xf32, #tpu.memory_space<vmem>>, vector<8x128xf32>,
    %93 = arith.index_cast %59 : i32 to index
    %c0_41 = arith.constant 0 : index
    %94 = vector.load %arg6[%93, %c0_41] : memref<64x128xf32, #tpu.memory_space<vmem>>, vector<8x128xf32>
    tpu.vector_store %arg6[%93, %c0_41], %91 {strides = array<i32>} : memref<64x128xf32, #tpu.memory_space<vmem>>, vector<8x128xf32>,
    %c2_i32 = arith.constant 2 : i32
    %c0_i32_42 = arith.constant 0 : i32
    %95 = arith.cmpi eq, %arg0, %c0_i32_42 : i32
    %c7_i32_43 = arith.constant 7 : i32
    %96 = arith.subi %c7_i32_43, %c2_i32 : i32
    %97 = arith.select %95, %c2_i32, %96 : i32
    %c8_i32_44 = arith.constant 8 : i32
    %98 = arith.muli %97, %c8_i32_44 : i32
    %99 = tpu.assume_multiple %98, 8 : i32
    %100 = arith.index_cast %99 : i32 to index
    %c0_45 = arith.constant 0 : index
    %101 = vector.load %arg7[%100, %c0_45] : memref<64x384xf32, #tpu.memory_space<vmem>>, vector<8x384xf32>
    %c0_46 = arith.constant 0 : index
    %c0_47 = arith.constant 0 : index
    %102 = vector.load %arg8[%c0_46, %c0_47] : memref<8x128xf32, #tpu.memory_space<vmem>>, vector<8x128xf32>
    %cst_48 = arith.constant dense<0.000000e+00> : vector<8x384xf32>
    %103 = tpu.matmul %102, %12, %cst_48 {dimension_numbers = #tpu.dot_dimension_numbers<[1], [0], [0], [1], [0, 0, 1, 1], [], []>} : vector<8x128xf32>, vector<128x384xf32>, vector<8x384xf32> -> vector<8x384xf32>
    %104 = vector.broadcast %14 : vector<1x384xf32> to vector<8x384xf32>
    %105 = arith.addf %103, %104 : vector<8x384xf32>
    %106 = vector.extract_strided_slice %101 {offsets = [0, 0], sizes = [8, 128], strides = [1, 1]} : vector<8x384xf32> to vector<8x128xf32>
    %107 = vector.extract_strided_slice %105 {offsets = [0, 0], sizes = [8, 128], strides = [1, 1]} : vector<8x384xf32> to vector<8x128xf32>
    %108 = arith.addf %106, %107 : vector<8x128xf32>
    %109 = arith.negf %108 : vector<8x128xf32>
    %110 = math.exp %109 : vector<8x128xf32>
    %cst_49 = arith.constant 1.000000e+00 : f32
    %111 = vector.broadcast %cst_49 : f32 to vector<8x128xf32>
    %112 = arith.addf %111, %110 : vector<8x128xf32>
    %113 = arith.divf %111, %112 : vector<8x128xf32>
    %114 = vector.extract_strided_slice %101 {offsets = [0, 128], sizes = [8, 128], strides = [1, 1]} : vector<8x384xf32> to vector<8x128xf32>
    %115 = vector.extract_strided_slice %105 {offsets = [0, 128], sizes = [8, 128], strides = [1, 1]} : vector<8x384xf32> to vector<8x128xf32>
    %116 = arith.addf %114, %115 : vector<8x128xf32>
    %117 = arith.negf %116 : vector<8x128xf32>
    %118 = math.exp %117 : vector<8x128xf32>
    %cst_50 = arith.constant 1.000000e+00 : f32
    %119 = vector.broadcast %cst_50 : f32 to vector<8x128xf32>
    %120 = arith.addf %119, %118 : vector<8x128xf32>
    %121 = arith.divf %119, %120 : vector<8x128xf32>
    %122 = vector.extract_strided_slice %101 {offsets = [0, 256], sizes = [8, 128], strides = [1, 1]} : vector<8x384xf32> to vector<8x128xf32>
    %123 = vector.extract_strided_slice %105 {offsets = [0, 256], sizes = [8, 128], strides = [1, 1]} : vector<8x384xf32> to vector<8x128xf32>
    %124 = arith.mulf %113, %123 : vector<8x128xf32>
    %125 = arith.addf %122, %124 : vector<8x128xf32>
    %126 = math.tanh %125 : vector<8x128xf32>
    %cst_51 = arith.constant 1.000000e+00 : f32
    %127 = vector.broadcast %cst_51 : f32 to vector<8x128xf32>
    %128 = arith.subf %127, %121 : vector<8x128xf32>
    %129 = arith.mulf %128, %126 : vector<8x128xf32>
    %130 = arith.mulf %121, %102 : vector<8x128xf32>
    %131 = arith.addf %129, %130 : vector<8x128xf32>
    %c0_52 = arith.constant 0 : index
    %c0_53 = arith.constant 0 : index
    %132 = vector.load %arg8[%c0_52, %c0_53] : memref<8x128xf32, #tpu.memory_space<vmem>>, vector<8x128xf32>
    tpu.vector_store %arg8[%c0_52, %c0_53], %131 {strides = array<i32>} : memref<8x128xf32, #tpu.memory_space<vmem>>, vector<8x128xf32>,
    %133 = arith.index_cast %99 : i32 to index
    %c0_54 = arith.constant 0 : index
    %134 = vector.load %arg6[%133, %c0_54] : memref<64x128xf32, #tpu.memory_space<vmem>>, vector<8x128xf32>
    tpu.vector_store %arg6[%133, %c0_54], %131 {strides = array<i32>} : memref<64x128xf32, #tpu.memory_space<vmem>>, vector<8x128xf32>,
    %c3_i32 = arith.constant 3 : i32
    %c0_i32_55 = arith.constant 0 : i32
    %135 = arith.cmpi eq, %arg0, %c0_i32_55 : i32
    %c7_i32_56 = arith.constant 7 : i32
    %136 = arith.subi %c7_i32_56, %c3_i32 : i32
    %137 = arith.select %135, %c3_i32, %136 : i32
    %c8_i32_57 = arith.constant 8 : i32
    %138 = arith.muli %137, %c8_i32_57 : i32
    %139 = tpu.assume_multiple %138, 8 : i32
    %140 = arith.index_cast %139 : i32 to index
    %c0_58 = arith.constant 0 : index
    %141 = vector.load %arg7[%140, %c0_58] : memref<64x384xf32, #tpu.memory_space<vmem>>, vector<8x384xf32>
    %c0_59 = arith.constant 0 : index
    %c0_60 = arith.constant 0 : index
    %142 = vector.load %arg8[%c0_59, %c0_60] : memref<8x128xf32, #tpu.memory_space<vmem>>, vector<8x128xf32>
    %cst_61 = arith.constant dense<0.000000e+00> : vector<8x384xf32>
    %143 = tpu.matmul %142, %12, %cst_61 {dimension_numbers = #tpu.dot_dimension_numbers<[1], [0], [0], [1], [0, 0, 1, 1], [], []>} : vector<8x128xf32>, vector<128x384xf32>, vector<8x384xf32> -> vector<8x384xf32>
    %144 = vector.broadcast %14 : vector<1x384xf32> to vector<8x384xf32>
    %145 = arith.addf %143, %144 : vector<8x384xf32>
    %146 = vector.extract_strided_slice %141 {offsets = [0, 0], sizes = [8, 128], strides = [1, 1]} : vector<8x384xf32> to vector<8x128xf32>
    %147 = vector.extract_strided_slice %145 {offsets = [0, 0], sizes = [8, 128], strides = [1, 1]} : vector<8x384xf32> to vector<8x128xf32>
    %148 = arith.addf %146, %147 : vector<8x128xf32>
    %149 = arith.negf %148 : vector<8x128xf32>
    %150 = math.exp %149 : vector<8x128xf32>
    %cst_62 = arith.constant 1.000000e+00 : f32
    %151 = vector.broadcast %cst_62 : f32 to vector<8x128xf32>
    %152 = arith.addf %151, %150 : vector<8x128xf32>
    %153 = arith.divf %151, %152 : vector<8x128xf32>
    %154 = vector.extract_strided_slice %141 {offsets = [0, 128], sizes = [8, 128], strides = [1, 1]} : vector<8x384xf32> to vector<8x128xf32>
    %155 = vector.extract_strided_slice %145 {offsets = [0, 128], sizes = [8, 128], strides = [1, 1]} : vector<8x384xf32> to vector<8x128xf32>
    %156 = arith.addf %154, %155 : vector<8x128xf32>
    %157 = arith.negf %156 : vector<8x128xf32>
    %158 = math.exp %157 : vector<8x128xf32>
    %cst_63 = arith.constant 1.000000e+00 : f32
    %159 = vector.broadcast %cst_63 : f32 to vector<8x128xf32>
    %160 = arith.addf %159, %158 : vector<8x128xf32>
    %161 = arith.divf %159, %160 : vector<8x128xf32>
    %162 = vector.extract_strided_slice %141 {offsets = [0, 256], sizes = [8, 128], strides = [1, 1]} : vector<8x384xf32> to vector<8x128xf32>
    %163 = vector.extract_strided_slice %145 {offsets = [0, 256], sizes = [8, 128], strides = [1, 1]} : vector<8x384xf32> to vector<8x128xf32>
    %164 = arith.mulf %153, %163 : vector<8x128xf32>
    %165 = arith.addf %162, %164 : vector<8x128xf32>
    %166 = math.tanh %165 : vector<8x128xf32>
    %cst_64 = arith.constant 1.000000e+00 : f32
    %167 = vector.broadcast %cst_64 : f32 to vector<8x128xf32>
    %168 = arith.subf %167, %161 : vector<8x128xf32>
    %169 = arith.mulf %168, %166 : vector<8x128xf32>
    %170 = arith.mulf %161, %142 : vector<8x128xf32>
    %171 = arith.addf %169, %170 : vector<8x128xf32>
    %c0_65 = arith.constant 0 : index
    %c0_66 = arith.constant 0 : index
    %172 = vector.load %arg8[%c0_65, %c0_66] : memref<8x128xf32, #tpu.memory_space<vmem>>, vector<8x128xf32>
    tpu.vector_store %arg8[%c0_65, %c0_66], %171 {strides = array<i32>} : memref<8x128xf32, #tpu.memory_space<vmem>>, vector<8x128xf32>,
    %173 = arith.index_cast %139 : i32 to index
    %c0_67 = arith.constant 0 : index
    %174 = vector.load %arg6[%173, %c0_67] : memref<64x128xf32, #tpu.memory_space<vmem>>, vector<8x128xf32>
    tpu.vector_store %arg6[%173, %c0_67], %171 {strides = array<i32>} : memref<64x128xf32, #tpu.memory_space<vmem>>, vector<8x128xf32>,
    %c4_i32 = arith.constant 4 : i32
    %c0_i32_68 = arith.constant 0 : i32
    %175 = arith.cmpi eq, %arg0, %c0_i32_68 : i32
    %c7_i32_69 = arith.constant 7 : i32
    %176 = arith.subi %c7_i32_69, %c4_i32 : i32
    %177 = arith.select %175, %c4_i32, %176 : i32
    %c8_i32_70 = arith.constant 8 : i32
    %178 = arith.muli %177, %c8_i32_70 : i32
    %179 = tpu.assume_multiple %178, 8 : i32
    %180 = arith.index_cast %179 : i32 to index
    %c0_71 = arith.constant 0 : index
    %181 = vector.load %arg7[%180, %c0_71] : memref<64x384xf32, #tpu.memory_space<vmem>>, vector<8x384xf32>
    %c0_72 = arith.constant 0 : index
    %c0_73 = arith.constant 0 : index
    %182 = vector.load %arg8[%c0_72, %c0_73] : memref<8x128xf32, #tpu.memory_space<vmem>>, vector<8x128xf32>
    %cst_74 = arith.constant dense<0.000000e+00> : vector<8x384xf32>
    %183 = tpu.matmul %182, %12, %cst_74 {dimension_numbers = #tpu.dot_dimension_numbers<[1], [0], [0], [1], [0, 0, 1, 1], [], []>} : vector<8x128xf32>, vector<128x384xf32>, vector<8x384xf32> -> vector<8x384xf32>
    %184 = vector.broadcast %14 : vector<1x384xf32> to vector<8x384xf32>
    %185 = arith.addf %183, %184 : vector<8x384xf32>
    %186 = vector.extract_strided_slice %181 {offsets = [0, 0], sizes = [8, 128], strides = [1, 1]} : vector<8x384xf32> to vector<8x128xf32>
    %187 = vector.extract_strided_slice %185 {offsets = [0, 0], sizes = [8, 128], strides = [1, 1]} : vector<8x384xf32> to vector<8x128xf32>
    %188 = arith.addf %186, %187 : vector<8x128xf32>
    %189 = arith.negf %188 : vector<8x128xf32>
    %190 = math.exp %189 : vector<8x128xf32>
    %cst_75 = arith.constant 1.000000e+00 : f32
    %191 = vector.broadcast %cst_75 : f32 to vector<8x128xf32>
    %192 = arith.addf %191, %190 : vector<8x128xf32>
    %193 = arith.divf %191, %192 : vector<8x128xf32>
    %194 = vector.extract_strided_slice %181 {offsets = [0, 128], sizes = [8, 128], strides = [1, 1]} : vector<8x384xf32> to vector<8x128xf32>
    %195 = vector.extract_strided_slice %185 {offsets = [0, 128], sizes = [8, 128], strides = [1, 1]} : vector<8x384xf32> to vector<8x128xf32>
    %196 = arith.addf %194, %195 : vector<8x128xf32>
    %197 = arith.negf %196 : vector<8x128xf32>
    %198 = math.exp %197 : vector<8x128xf32>
    %cst_76 = arith.constant 1.000000e+00 : f32
    %199 = vector.broadcast %cst_76 : f32 to vector<8x128xf32>
    %200 = arith.addf %199, %198 : vector<8x128xf32>
    %201 = arith.divf %199, %200 : vector<8x128xf32>
    %202 = vector.extract_strided_slice %181 {offsets = [0, 256], sizes = [8, 128], strides = [1, 1]} : vector<8x384xf32> to vector<8x128xf32>
    %203 = vector.extract_strided_slice %185 {offsets = [0, 256], sizes = [8, 128], strides = [1, 1]} : vector<8x384xf32> to vector<8x128xf32>
    %204 = arith.mulf %193, %203 : vector<8x128xf32>
    %205 = arith.addf %202, %204 : vector<8x128xf32>
    %206 = math.tanh %205 : vector<8x128xf32>
    %cst_77 = arith.constant 1.000000e+00 : f32
    %207 = vector.broadcast %cst_77 : f32 to vector<8x128xf32>
    %208 = arith.subf %207, %201 : vector<8x128xf32>
    %209 = arith.mulf %208, %206 : vector<8x128xf32>
    %210 = arith.mulf %201, %182 : vector<8x128xf32>
    %211 = arith.addf %209, %210 : vector<8x128xf32>
    %c0_78 = arith.constant 0 : index
    %c0_79 = arith.constant 0 : index
    %212 = vector.load %arg8[%c0_78, %c0_79] : memref<8x128xf32, #tpu.memory_space<vmem>>, vector<8x128xf32>
    tpu.vector_store %arg8[%c0_78, %c0_79], %211 {strides = array<i32>} : memref<8x128xf32, #tpu.memory_space<vmem>>, vector<8x128xf32>,
    %213 = arith.index_cast %179 : i32 to index
    %c0_80 = arith.constant 0 : index
    %214 = vector.load %arg6[%213, %c0_80] : memref<64x128xf32, #tpu.memory_space<vmem>>, vector<8x128xf32>
    tpu.vector_store %arg6[%213, %c0_80], %211 {strides = array<i32>} : memref<64x128xf32, #tpu.memory_space<vmem>>, vector<8x128xf32>,
    %c5_i32 = arith.constant 5 : i32
    %c0_i32_81 = arith.constant 0 : i32
    %215 = arith.cmpi eq, %arg0, %c0_i32_81 : i32
    %c7_i32_82 = arith.constant 7 : i32
    %216 = arith.subi %c7_i32_82, %c5_i32 : i32
    %217 = arith.select %215, %c5_i32, %216 : i32
    %c8_i32_83 = arith.constant 8 : i32
    %218 = arith.muli %217, %c8_i32_83 : i32
    %219 = tpu.assume_multiple %218, 8 : i32
    %220 = arith.index_cast %219 : i32 to index
    %c0_84 = arith.constant 0 : index
    %221 = vector.load %arg7[%220, %c0_84] : memref<64x384xf32, #tpu.memory_space<vmem>>, vector<8x384xf32>
    %c0_85 = arith.constant 0 : index
    %c0_86 = arith.constant 0 : index
    %222 = vector.load %arg8[%c0_85, %c0_86] : memref<8x128xf32, #tpu.memory_space<vmem>>, vector<8x128xf32>
    %cst_87 = arith.constant dense<0.000000e+00> : vector<8x384xf32>
    %223 = tpu.matmul %222, %12, %cst_87 {dimension_numbers = #tpu.dot_dimension_numbers<[1], [0], [0], [1], [0, 0, 1, 1], [], []>} : vector<8x128xf32>, vector<128x384xf32>, vector<8x384xf32> -> vector<8x384xf32>
    %224 = vector.broadcast %14 : vector<1x384xf32> to vector<8x384xf32>
    %225 = arith.addf %223, %224 : vector<8x384xf32>
    %226 = vector.extract_strided_slice %221 {offsets = [0, 0], sizes = [8, 128], strides = [1, 1]} : vector<8x384xf32> to vector<8x128xf32>
    %227 = vector.extract_strided_slice %225 {offsets = [0, 0], sizes = [8, 128], strides = [1, 1]} : vector<8x384xf32> to vector<8x128xf32>
    %228 = arith.addf %226, %227 : vector<8x128xf32>
    %229 = arith.negf %228 : vector<8x128xf32>
    %230 = math.exp %229 : vector<8x128xf32>
    %cst_88 = arith.constant 1.000000e+00 : f32
    %231 = vector.broadcast %cst_88 : f32 to vector<8x128xf32>
    %232 = arith.addf %231, %230 : vector<8x128xf32>
    %233 = arith.divf %231, %232 : vector<8x128xf32>
    %234 = vector.extract_strided_slice %221 {offsets = [0, 128], sizes = [8, 128], strides = [1, 1]} : vector<8x384xf32> to vector<8x128xf32>
    %235 = vector.extract_strided_slice %225 {offsets = [0, 128], sizes = [8, 128], strides = [1, 1]} : vector<8x384xf32> to vector<8x128xf32>
    %236 = arith.addf %234, %235 : vector<8x128xf32>
    %237 = arith.negf %236 : vector<8x128xf32>
    %238 = math.exp %237 : vector<8x128xf32>
    %cst_89 = arith.constant 1.000000e+00 : f32
    %239 = vector.broadcast %cst_89 : f32 to vector<8x128xf32>
    %240 = arith.addf %239, %238 : vector<8x128xf32>
    %241 = arith.divf %239, %240 : vector<8x128xf32>
    %242 = vector.extract_strided_slice %221 {offsets = [0, 256], sizes = [8, 128], strides = [1, 1]} : vector<8x384xf32> to vector<8x128xf32>
    %243 = vector.extract_strided_slice %225 {offsets = [0, 256], sizes = [8, 128], strides = [1, 1]} : vector<8x384xf32> to vector<8x128xf32>
    %244 = arith.mulf %233, %243 : vector<8x128xf32>
    %245 = arith.addf %242, %244 : vector<8x128xf32>
    %246 = math.tanh %245 : vector<8x128xf32>
    %cst_90 = arith.constant 1.000000e+00 : f32
    %247 = vector.broadcast %cst_90 : f32 to vector<8x128xf32>
    %248 = arith.subf %247, %241 : vector<8x128xf32>
    %249 = arith.mulf %248, %246 : vector<8x128xf32>
    %250 = arith.mulf %241, %222 : vector<8x128xf32>
    %251 = arith.addf %249, %250 : vector<8x128xf32>
    %c0_91 = arith.constant 0 : index
    %c0_92 = arith.constant 0 : index
    %252 = vector.load %arg8[%c0_91, %c0_92] : memref<8x128xf32, #tpu.memory_space<vmem>>, vector<8x128xf32>
    tpu.vector_store %arg8[%c0_91, %c0_92], %251 {strides = array<i32>} : memref<8x128xf32, #tpu.memory_space<vmem>>, vector<8x128xf32>,
    %253 = arith.index_cast %219 : i32 to index
    %c0_93 = arith.constant 0 : index
    %254 = vector.load %arg6[%253, %c0_93] : memref<64x128xf32, #tpu.memory_space<vmem>>, vector<8x128xf32>
    tpu.vector_store %arg6[%253, %c0_93], %251 {strides = array<i32>} : memref<64x128xf32, #tpu.memory_space<vmem>>, vector<8x128xf32>,
    %c6_i32 = arith.constant 6 : i32
    %c0_i32_94 = arith.constant 0 : i32
    %255 = arith.cmpi eq, %arg0, %c0_i32_94 : i32
    %c7_i32_95 = arith.constant 7 : i32
    %256 = arith.subi %c7_i32_95, %c6_i32 : i32
    %257 = arith.select %255, %c6_i32, %256 : i32
    %c8_i32_96 = arith.constant 8 : i32
    %258 = arith.muli %257, %c8_i32_96 : i32
    %259 = tpu.assume_multiple %258, 8 : i32
    %260 = arith.index_cast %259 : i32 to index
    %c0_97 = arith.constant 0 : index
    %261 = vector.load %arg7[%260, %c0_97] : memref<64x384xf32, #tpu.memory_space<vmem>>, vector<8x384xf32>
    %c0_98 = arith.constant 0 : index
    %c0_99 = arith.constant 0 : index
    %262 = vector.load %arg8[%c0_98, %c0_99] : memref<8x128xf32, #tpu.memory_space<vmem>>, vector<8x128xf32>
    %cst_100 = arith.constant dense<0.000000e+00> : vector<8x384xf32>
    %263 = tpu.matmul %262, %12, %cst_100 {dimension_numbers = #tpu.dot_dimension_numbers<[1], [0], [0], [1], [0, 0, 1, 1], [], []>} : vector<8x128xf32>, vector<128x384xf32>, vector<8x384xf32> -> vector<8x384xf32>
    %264 = vector.broadcast %14 : vector<1x384xf32> to vector<8x384xf32>
    %265 = arith.addf %263, %264 : vector<8x384xf32>
    %266 = vector.extract_strided_slice %261 {offsets = [0, 0], sizes = [8, 128], strides = [1, 1]} : vector<8x384xf32> to vector<8x128xf32>
    %267 = vector.extract_strided_slice %265 {offsets = [0, 0], sizes = [8, 128], strides = [1, 1]} : vector<8x384xf32> to vector<8x128xf32>
    %268 = arith.addf %266, %267 : vector<8x128xf32>
    %269 = arith.negf %268 : vector<8x128xf32>
    %270 = math.exp %269 : vector<8x128xf32>
    %cst_101 = arith.constant 1.000000e+00 : f32
    %271 = vector.broadcast %cst_101 : f32 to vector<8x128xf32>
    %272 = arith.addf %271, %270 : vector<8x128xf32>
    %273 = arith.divf %271, %272 : vector<8x128xf32>
    %274 = vector.extract_strided_slice %261 {offsets = [0, 128], sizes = [8, 128], strides = [1, 1]} : vector<8x384xf32> to vector<8x128xf32>
    %275 = vector.extract_strided_slice %265 {offsets = [0, 128], sizes = [8, 128], strides = [1, 1]} : vector<8x384xf32> to vector<8x128xf32>
    %276 = arith.addf %274, %275 : vector<8x128xf32>
    %277 = arith.negf %276 : vector<8x128xf32>
    %278 = math.exp %277 : vector<8x128xf32>
    %cst_102 = arith.constant 1.000000e+00 : f32
    %279 = vector.broadcast %cst_102 : f32 to vector<8x128xf32>
    %280 = arith.addf %279, %278 : vector<8x128xf32>
    %281 = arith.divf %279, %280 : vector<8x128xf32>
    %282 = vector.extract_strided_slice %261 {offsets = [0, 256], sizes = [8, 128], strides = [1, 1]} : vector<8x384xf32> to vector<8x128xf32>
    %283 = vector.extract_strided_slice %265 {offsets = [0, 256], sizes = [8, 128], strides = [1, 1]} : vector<8x384xf32> to vector<8x128xf32>
    %284 = arith.mulf %273, %283 : vector<8x128xf32>
    %285 = arith.addf %282, %284 : vector<8x128xf32>
    %286 = math.tanh %285 : vector<8x128xf32>
    %cst_103 = arith.constant 1.000000e+00 : f32
    %287 = vector.broadcast %cst_103 : f32 to vector<8x128xf32>
    %288 = arith.subf %287, %281 : vector<8x128xf32>
    %289 = arith.mulf %288, %286 : vector<8x128xf32>
    %290 = arith.mulf %281, %262 : vector<8x128xf32>
    %291 = arith.addf %289, %290 : vector<8x128xf32>
    %c0_104 = arith.constant 0 : index
    %c0_105 = arith.constant 0 : index
    %292 = vector.load %arg8[%c0_104, %c0_105] : memref<8x128xf32, #tpu.memory_space<vmem>>, vector<8x128xf32>
    tpu.vector_store %arg8[%c0_104, %c0_105], %291 {strides = array<i32>} : memref<8x128xf32, #tpu.memory_space<vmem>>, vector<8x128xf32>,
    %293 = arith.index_cast %259 : i32 to index
    %c0_106 = arith.constant 0 : index
    %294 = vector.load %arg6[%293, %c0_106] : memref<64x128xf32, #tpu.memory_space<vmem>>, vector<8x128xf32>
    tpu.vector_store %arg6[%293, %c0_106], %291 {strides = array<i32>} : memref<64x128xf32, #tpu.memory_space<vmem>>, vector<8x128xf32>,
    %c7_i32_107 = arith.constant 7 : i32
    %c0_i32_108 = arith.constant 0 : i32
    %295 = arith.cmpi eq, %arg0, %c0_i32_108 : i32
    %c7_i32_109 = arith.constant 7 : i32
    %296 = arith.subi %c7_i32_109, %c7_i32_107 : i32
    %297 = arith.select %295, %c7_i32_107, %296 : i32
    %c8_i32_110 = arith.constant 8 : i32
    %298 = arith.muli %297, %c8_i32_110 : i32
    %299 = tpu.assume_multiple %298, 8 : i32
    %300 = arith.index_cast %299 : i32 to index
    %c0_111 = arith.constant 0 : index
    %301 = vector.load %arg7[%300, %c0_111] : memref<64x384xf32, #tpu.memory_space<vmem>>, vector<8x384xf32>
    %c0_112 = arith.constant 0 : index
    %c0_113 = arith.constant 0 : index
    %302 = vector.load %arg8[%c0_112, %c0_113] : memref<8x128xf32, #tpu.memory_space<vmem>>, vector<8x128xf32>
    %cst_114 = arith.constant dense<0.000000e+00> : vector<8x384xf32>
    %303 = tpu.matmul %302, %12, %cst_114 {dimension_numbers = #tpu.dot_dimension_numbers<[1], [0], [0], [1], [0, 0, 1, 1], [], []>} : vector<8x128xf32>, vector<128x384xf32>, vector<8x384xf32> -> vector<8x384xf32>
    %304 = vector.broadcast %14 : vector<1x384xf32> to vector<8x384xf32>
    %305 = arith.addf %303, %304 : vector<8x384xf32>
    %306 = vector.extract_strided_slice %301 {offsets = [0, 0], sizes = [8, 128], strides = [1, 1]} : vector<8x384xf32> to vector<8x128xf32>
    %307 = vector.extract_strided_slice %305 {offsets = [0, 0], sizes = [8, 128], strides = [1, 1]} : vector<8x384xf32> to vector<8x128xf32>
    %308 = arith.addf %306, %307 : vector<8x128xf32>
    %309 = arith.negf %308 : vector<8x128xf32>
    %310 = math.exp %309 : vector<8x128xf32>
    %cst_115 = arith.constant 1.000000e+00 : f32
    %311 = vector.broadcast %cst_115 : f32 to vector<8x128xf32>
    %312 = arith.addf %311, %310 : vector<8x128xf32>
    %313 = arith.divf %311, %312 : vector<8x128xf32>
    %314 = vector.extract_strided_slice %301 {offsets = [0, 128], sizes = [8, 128], strides = [1, 1]} : vector<8x384xf32> to vector<8x128xf32>
    %315 = vector.extract_strided_slice %305 {offsets = [0, 128], sizes = [8, 128], strides = [1, 1]} : vector<8x384xf32> to vector<8x128xf32>
    %316 = arith.addf %314, %315 : vector<8x128xf32>
    %317 = arith.negf %316 : vector<8x128xf32>
    %318 = math.exp %317 : vector<8x128xf32>
    %cst_116 = arith.constant 1.000000e+00 : f32
    %319 = vector.broadcast %cst_116 : f32 to vector<8x128xf32>
    %320 = arith.addf %319, %318 : vector<8x128xf32>
    %321 = arith.divf %319, %320 : vector<8x128xf32>
    %322 = vector.extract_strided_slice %301 {offsets = [0, 256], sizes = [8, 128], strides = [1, 1]} : vector<8x384xf32> to vector<8x128xf32>
    %323 = vector.extract_strided_slice %305 {offsets = [0, 256], sizes = [8, 128], strides = [1, 1]} : vector<8x384xf32> to vector<8x128xf32>
    %324 = arith.mulf %313, %323 : vector<8x128xf32>
    %325 = arith.addf %322, %324 : vector<8x128xf32>
    %326 = math.tanh %325 : vector<8x128xf32>
    %cst_117 = arith.constant 1.000000e+00 : f32
    %327 = vector.broadcast %cst_117 : f32 to vector<8x128xf32>
    %328 = arith.subf %327, %321 : vector<8x128xf32>
    %329 = arith.mulf %328, %326 : vector<8x128xf32>
    %330 = arith.mulf %321, %302 : vector<8x128xf32>
    %331 = arith.addf %329, %330 : vector<8x128xf32>
    %c0_118 = arith.constant 0 : index
    %c0_119 = arith.constant 0 : index
    %332 = vector.load %arg8[%c0_118, %c0_119] : memref<8x128xf32, #tpu.memory_space<vmem>>, vector<8x128xf32>
    tpu.vector_store %arg8[%c0_118, %c0_119], %331 {strides = array<i32>} : memref<8x128xf32, #tpu.memory_space<vmem>>, vector<8x128xf32>,
    %333 = arith.index_cast %299 : i32 to index
    %c0_120 = arith.constant 0 : index
    %334 = vector.load %arg6[%333, %c0_120] : memref<64x128xf32, #tpu.memory_space<vmem>>, vector<8x128xf32>
    tpu.vector_store %arg6[%333, %c0_120], %331 {strides = array<i32>} : memref<64x128xf32, #tpu.memory_space<vmem>>, vector<8x128xf32>,
    %c8_i32_121 = arith.constant 8 : i32
    return
  }
  func.func @transform_0(%arg0: i32) -> (i32, i32) {
    %c0_i32 = arith.constant 0 : i32
    %c0_i32_0 = arith.constant 0 : i32
    %c0_i32_1 = arith.constant 0 : i32
    return %c0_i32, %c0_i32_0 : i32, i32
  }
  func.func @transform_1(%arg0: i32) -> (i32, i32, i32) {
    %c0_i32 = arith.constant 0 : i32
    %c0_i32_0 = arith.constant 0 : i32
    %c0_i32_1 = arith.constant 0 : i32
    return %arg0, %c0_i32, %c0_i32_0 : i32, i32, i32
  }
  func.func @transform_2(%arg0: i32) -> (i32, i32, i32) {
    %c0_i32 = arith.constant 0 : i32
    %c0_i32_0 = arith.constant 0 : i32
    %c0_i32_1 = arith.constant 0 : i32
    return %arg0, %c0_i32, %c0_i32_0 : i32, i32, i32
  }
  func.func @transform_3(%arg0: i32) -> (i32, i32, i32) {
    %c0_i32 = arith.constant 0 : i32
    %c0_i32_0 = arith.constant 0 : i32
    %c0_i32_1 = arith.constant 0 : i32
    return %arg0, %c0_i32, %c0_i32_0 : i32, i32, i32
  }
  func.func @transform_4(%arg0: i32) -> (i32, i32, i32) {
    %c0_i32 = arith.constant 0 : i32
    %c0_i32_0 = arith.constant 0 : i32
    %c0_i32_1 = arith.constant 0 : i32
    return %arg0, %c0_i32, %c0_i32_0 : i32, i32, i32
  }
  func.func @transform_5(%arg0: i32) -> (i32, i32) {
    %c0_i32 = arith.constant 0 : i32
    %c0_i32_0 = arith.constant 0 : i32
    return %c0_i32, %arg0 : i32, i32
  }
}

module attributes {stable_mosaic.version = 11 : i64} {
  func.func @_bigru_layer_kernel(%arg0: i32, %arg1: memref<64x256xf32, #tpu.memory_space<vmem>>, %arg2: memref<1x256x384xf32, #tpu.memory_space<vmem>>, %arg3: memref<1x128x384xf32, #tpu.memory_space<vmem>>, %arg4: memref<1x1x384xf32, #tpu.memory_space<vmem>>, %arg5: memref<1x1x384xf32, #tpu.memory_space<vmem>>, %arg6: memref<64x128xf32, #tpu.memory_space<vmem>>, %arg7: memref<64x384xf32, #tpu.memory_space<vmem>>, %arg8: memref<8x128xf32, #tpu.memory_space<vmem>>) attributes {dimension_semantics = [#tpu.dimension_semantics<parallel>], iteration_bounds = array<i64: 2>, scalar_prefetch = 0 : i64, scratch_operands = 2 : i64, tpu.core_type = #tpu.core_type<tc>, window_params = [{pipeline_mode = #tpu.pipeline_mode<synchronous>, transform_indices = @transform_0, window_bounds = array<i64: 64, 256>}, {transform_indices = @transform_1, window_bounds = array<i64: 1, 256, 384>}, {transform_indices = @transform_2, window_bounds = array<i64: 1, 128, 384>}, {transform_indices = @transform_3, window_bounds = array<i64: 1, 1, 384>}, {transform_indices = @transform_4, window_bounds = array<i64: 1, 1, 384>}, {transform_indices = @transform_5, window_bounds = array<i64: 64, 128>}]} {
    %c0 = arith.constant 0 : index
    %c0_0 = arith.constant 0 : index
    %0 = vector.load %arg1[%c0, %c0_0] : memref<64x256xf32, #tpu.memory_space<vmem>>, vector<64x256xf32>
    %c0_1 = arith.constant 0 : index
    %c0_2 = arith.constant 0 : index
    %c0_3 = arith.constant 0 : index
    %1 = vector.load %arg2[%c0_1, %c0_2, %c0_3] : memref<1x256x384xf32, #tpu.memory_space<vmem>>, vector<1x256x384xf32>
    %2 = vector.shape_cast %1 : vector<1x256x384xf32> to vector<256x384xf32>
    %cst = arith.constant dense<0.000000e+00> : vector<64x384xf32>
    %3 = tpu.matmul %0, %2, %cst {dimension_numbers = #tpu.dot_dimension_numbers<[1], [0], [0], [1], [0, 0, 1, 1], [], []>} : vector<64x256xf32>, vector<256x384xf32>, vector<64x384xf32> -> vector<64x384xf32>
    %c0_4 = arith.constant 0 : index
    %c0_5 = arith.constant 0 : index
    %c0_6 = arith.constant 0 : index
    %4 = vector.load %arg4[%c0_4, %c0_5, %c0_6] : memref<1x1x384xf32, #tpu.memory_space<vmem>>, vector<1x1x384xf32>
    %5 = vector.shape_cast %4 : vector<1x1x384xf32> to vector<1x384xf32>
    %6 = vector.broadcast %5 : vector<1x384xf32> to vector<64x384xf32>
    %7 = arith.addf %3, %6 : vector<64x384xf32>
    %c0_7 = arith.constant 0 : index
    %c0_8 = arith.constant 0 : index
    %8 = vector.load %arg7[%c0_7, %c0_8] : memref<64x384xf32, #tpu.memory_space<vmem>>, vector<64x384xf32>
    tpu.vector_store %arg7[%c0_7, %c0_8], %7 {strides = array<i32>} : memref<64x384xf32, #tpu.memory_space<vmem>>, vector<64x384xf32>,
    %cst_9 = arith.constant 0.000000e+00 : f32
    %9 = vector.broadcast %cst_9 : f32 to vector<8x128xf32>
    %c0_10 = arith.constant 0 : index
    %c0_11 = arith.constant 0 : index
    %10 = vector.load %arg8[%c0_10, %c0_11] : memref<8x128xf32, #tpu.memory_space<vmem>>, vector<8x128xf32>
    tpu.vector_store %arg8[%c0_10, %c0_11], %9 {strides = array<i32>} : memref<8x128xf32, #tpu.memory_space<vmem>>, vector<8x128xf32>,
    %c0_12 = arith.constant 0 : index
    %c0_13 = arith.constant 0 : index
    %c0_14 = arith.constant 0 : index
    %11 = vector.load %arg3[%c0_12, %c0_13, %c0_14] : memref<1x128x384xf32, #tpu.memory_space<vmem>>, vector<1x128x384xf32>
    %12 = vector.shape_cast %11 : vector<1x128x384xf32> to vector<128x384xf32>
    %c0_15 = arith.constant 0 : index
    %c0_16 = arith.constant 0 : index
    %c0_17 = arith.constant 0 : index
    %13 = vector.load %arg5[%c0_15, %c0_16, %c0_17] : memref<1x1x384xf32, #tpu.memory_space<vmem>>, vector<1x1x384xf32>
    %14 = vector.shape_cast %13 : vector<1x1x384xf32> to vector<1x384xf32>
    %c0_i32 = arith.constant 0 : i32
    %c0_i32_18 = arith.constant 0 : i32
    %15 = arith.cmpi eq, %arg0, %c0_i32_18 : i32
    %c7_i32 = arith.constant 7 : i32
    %16 = arith.subi %c7_i32, %c0_i32 : i32
    %17 = arith.select %15, %c0_i32, %16 : i32
    %c8_i32 = arith.constant 8 : i32
    %18 = arith.muli %17, %c8_i32 : i32
    %19 = tpu.assume_multiple %18, 8 : i32
    %20 = arith.index_cast %19 : i32 to index
    %c0_19 = arith.constant 0 : index
    %21 = vector.load %arg7[%20, %c0_19] : memref<64x384xf32, #tpu.memory_space<vmem>>, vector<8x384xf32>
    %c0_20 = arith.constant 0 : index
    %c0_21 = arith.constant 0 : index
    %22 = vector.load %arg8[%c0_20, %c0_21] : memref<8x128xf32, #tpu.memory_space<vmem>>, vector<8x128xf32>
    %cst_22 = arith.constant dense<0.000000e+00> : vector<8x384xf32>
    %23 = tpu.matmul %22, %12, %cst_22 {dimension_numbers = #tpu.dot_dimension_numbers<[1], [0], [0], [1], [0, 0, 1, 1], [], []>} : vector<8x128xf32>, vector<128x384xf32>, vector<8x384xf32> -> vector<8x384xf32>
    %24 = vector.broadcast %14 : vector<1x384xf32> to vector<8x384xf32>
    %25 = arith.addf %23, %24 : vector<8x384xf32>
    %26 = vector.extract_strided_slice %21 {offsets = [0, 0], sizes = [8, 128], strides = [1, 1]} : vector<8x384xf32> to vector<8x128xf32>
    %27 = vector.extract_strided_slice %25 {offsets = [0, 0], sizes = [8, 128], strides = [1, 1]} : vector<8x384xf32> to vector<8x128xf32>
    %28 = arith.addf %26, %27 : vector<8x128xf32>
    %29 = arith.negf %28 : vector<8x128xf32>
    %30 = math.exp %29 : vector<8x128xf32>
    %cst_23 = arith.constant 1.000000e+00 : f32
    %31 = vector.broadcast %cst_23 : f32 to vector<8x128xf32>
    %32 = arith.addf %31, %30 : vector<8x128xf32>
    %33 = arith.divf %31, %32 : vector<8x128xf32>
    %34 = vector.extract_strided_slice %21 {offsets = [0, 128], sizes = [8, 128], strides = [1, 1]} : vector<8x384xf32> to vector<8x128xf32>
    %35 = vector.extract_strided_slice %25 {offsets = [0, 128], sizes = [8, 128], strides = [1, 1]} : vector<8x384xf32> to vector<8x128xf32>
    %36 = arith.addf %34, %35 : vector<8x128xf32>
    %37 = arith.negf %36 : vector<8x128xf32>
    %38 = math.exp %37 : vector<8x128xf32>
    %cst_24 = arith.constant 1.000000e+00 : f32
    %39 = vector.broadcast %cst_24 : f32 to vector<8x128xf32>
    %40 = arith.addf %39, %38 : vector<8x128xf32>
    %41 = arith.divf %39, %40 : vector<8x128xf32>
    %42 = vector.extract_strided_slice %21 {offsets = [0, 256], sizes = [8, 128], strides = [1, 1]} : vector<8x384xf32> to vector<8x128xf32>
    %43 = vector.extract_strided_slice %25 {offsets = [0, 256], sizes = [8, 128], strides = [1, 1]} : vector<8x384xf32> to vector<8x128xf32>
    %44 = arith.mulf %33, %43 : vector<8x128xf32>
    %45 = arith.addf %42, %44 : vector<8x128xf32>
    %46 = math.tanh %45 : vector<8x128xf32>
    %cst_25 = arith.constant 1.000000e+00 : f32
    %47 = vector.broadcast %cst_25 : f32 to vector<8x128xf32>
    %48 = arith.subf %47, %41 : vector<8x128xf32>
    %49 = arith.mulf %48, %46 : vector<8x128xf32>
    %50 = arith.mulf %41, %22 : vector<8x128xf32>
    %51 = arith.addf %49, %50 : vector<8x128xf32>
    %c0_26 = arith.constant 0 : index
    %c0_27 = arith.constant 0 : index
    %52 = vector.load %arg8[%c0_26, %c0_27] : memref<8x128xf32, #tpu.memory_space<vmem>>, vector<8x128xf32>
    tpu.vector_store %arg8[%c0_26, %c0_27], %51 {strides = array<i32>} : memref<8x128xf32, #tpu.memory_space<vmem>>, vector<8x128xf32>,
    %53 = arith.index_cast %19 : i32 to index
    %c0_28 = arith.constant 0 : index
    %54 = vector.load %arg6[%53, %c0_28] : memref<64x128xf32, #tpu.memory_space<vmem>>, vector<8x128xf32>
    tpu.vector_store %arg6[%53, %c0_28], %51 {strides = array<i32>} : memref<64x128xf32, #tpu.memory_space<vmem>>, vector<8x128xf32>,
    %c1_i32 = arith.constant 1 : i32
    %c0_i32_29 = arith.constant 0 : i32
    %55 = arith.cmpi eq, %arg0, %c0_i32_29 : i32
    %c7_i32_30 = arith.constant 7 : i32
    %56 = arith.subi %c7_i32_30, %c1_i32 : i32
    %57 = arith.select %55, %c1_i32, %56 : i32
    %c8_i32_31 = arith.constant 8 : i32
    %58 = arith.muli %57, %c8_i32_31 : i32
    %59 = tpu.assume_multiple %58, 8 : i32
    %60 = arith.index_cast %59 : i32 to index
    %c0_32 = arith.constant 0 : index
    %61 = vector.load %arg7[%60, %c0_32] : memref<64x384xf32, #tpu.memory_space<vmem>>, vector<8x384xf32>
    %c0_33 = arith.constant 0 : index
    %c0_34 = arith.constant 0 : index
    %62 = vector.load %arg8[%c0_33, %c0_34] : memref<8x128xf32, #tpu.memory_space<vmem>>, vector<8x128xf32>
    %cst_35 = arith.constant dense<0.000000e+00> : vector<8x384xf32>
    %63 = tpu.matmul %62, %12, %cst_35 {dimension_numbers = #tpu.dot_dimension_numbers<[1], [0], [0], [1], [0, 0, 1, 1], [], []>} : vector<8x128xf32>, vector<128x384xf32>, vector<8x384xf32> -> vector<8x384xf32>
    %64 = vector.broadcast %14 : vector<1x384xf32> to vector<8x384xf32>
    %65 = arith.addf %63, %64 : vector<8x384xf32>
    %66 = vector.extract_strided_slice %61 {offsets = [0, 0], sizes = [8, 128], strides = [1, 1]} : vector<8x384xf32> to vector<8x128xf32>
    %67 = vector.extract_strided_slice %65 {offsets = [0, 0], sizes = [8, 128], strides = [1, 1]} : vector<8x384xf32> to vector<8x128xf32>
    %68 = arith.addf %66, %67 : vector<8x128xf32>
    %69 = arith.negf %68 : vector<8x128xf32>
    %70 = math.exp %69 : vector<8x128xf32>
    %cst_36 = arith.constant 1.000000e+00 : f32
    %71 = vector.broadcast %cst_36 : f32 to vector<8x128xf32>
    %72 = arith.addf %71, %70 : vector<8x128xf32>
    %73 = arith.divf %71, %72 : vector<8x128xf32>
    %74 = vector.extract_strided_slice %61 {offsets = [0, 128], sizes = [8, 128], strides = [1, 1]} : vector<8x384xf32> to vector<8x128xf32>
    %75 = vector.extract_strided_slice %65 {offsets = [0, 128], sizes = [8, 128], strides = [1, 1]} : vector<8x384xf32> to vector<8x128xf32>
    %76 = arith.addf %74, %75 : vector<8x128xf32>
    %77 = arith.negf %76 : vector<8x128xf32>
    %78 = math.exp %77 : vector<8x128xf32>
    %cst_37 = arith.constant 1.000000e+00 : f32
    %79 = vector.broadcast %cst_37 : f32 to vector<8x128xf32>
    %80 = arith.addf %79, %78 : vector<8x128xf32>
    %81 = arith.divf %79, %80 : vector<8x128xf32>
    %82 = vector.extract_strided_slice %61 {offsets = [0, 256], sizes = [8, 128], strides = [1, 1]} : vector<8x384xf32> to vector<8x128xf32>
    %83 = vector.extract_strided_slice %65 {offsets = [0, 256], sizes = [8, 128], strides = [1, 1]} : vector<8x384xf32> to vector<8x128xf32>
    %84 = arith.mulf %73, %83 : vector<8x128xf32>
    %85 = arith.addf %82, %84 : vector<8x128xf32>
    %86 = math.tanh %85 : vector<8x128xf32>
    %cst_38 = arith.constant 1.000000e+00 : f32
    %87 = vector.broadcast %cst_38 : f32 to vector<8x128xf32>
    %88 = arith.subf %87, %81 : vector<8x128xf32>
    %89 = arith.mulf %88, %86 : vector<8x128xf32>
    %90 = arith.mulf %81, %62 : vector<8x128xf32>
    %91 = arith.addf %89, %90 : vector<8x128xf32>
    %c0_39 = arith.constant 0 : index
    %c0_40 = arith.constant 0 : index
    %92 = vector.load %arg8[%c0_39, %c0_40] : memref<8x128xf32, #tpu.memory_space<vmem>>, vector<8x128xf32>
    tpu.vector_store %arg8[%c0_39, %c0_40], %91 {strides = array<i32>} : memref<8x128xf32, #tpu.memory_space<vmem>>, vector<8x128xf32>,
    %93 = arith.index_cast %59 : i32 to index
    %c0_41 = arith.constant 0 : index
    %94 = vector.load %arg6[%93, %c0_41] : memref<64x128xf32, #tpu.memory_space<vmem>>, vector<8x128xf32>
    tpu.vector_store %arg6[%93, %c0_41], %91 {strides = array<i32>} : memref<64x128xf32, #tpu.memory_space<vmem>>, vector<8x128xf32>,
    %c2_i32 = arith.constant 2 : i32
    %c0_i32_42 = arith.constant 0 : i32
    %95 = arith.cmpi eq, %arg0, %c0_i32_42 : i32
    %c7_i32_43 = arith.constant 7 : i32
    %96 = arith.subi %c7_i32_43, %c2_i32 : i32
    %97 = arith.select %95, %c2_i32, %96 : i32
    %c8_i32_44 = arith.constant 8 : i32
    %98 = arith.muli %97, %c8_i32_44 : i32
    %99 = tpu.assume_multiple %98, 8 : i32
    %100 = arith.index_cast %99 : i32 to index
    %c0_45 = arith.constant 0 : index
    %101 = vector.load %arg7[%100, %c0_45] : memref<64x384xf32, #tpu.memory_space<vmem>>, vector<8x384xf32>
    %c0_46 = arith.constant 0 : index
    %c0_47 = arith.constant 0 : index
    %102 = vector.load %arg8[%c0_46, %c0_47] : memref<8x128xf32, #tpu.memory_space<vmem>>, vector<8x128xf32>
    %cst_48 = arith.constant dense<0.000000e+00> : vector<8x384xf32>
    %103 = tpu.matmul %102, %12, %cst_48 {dimension_numbers = #tpu.dot_dimension_numbers<[1], [0], [0], [1], [0, 0, 1, 1], [], []>} : vector<8x128xf32>, vector<128x384xf32>, vector<8x384xf32> -> vector<8x384xf32>
    %104 = vector.broadcast %14 : vector<1x384xf32> to vector<8x384xf32>
    %105 = arith.addf %103, %104 : vector<8x384xf32>
    %106 = vector.extract_strided_slice %101 {offsets = [0, 0], sizes = [8, 128], strides = [1, 1]} : vector<8x384xf32> to vector<8x128xf32>
    %107 = vector.extract_strided_slice %105 {offsets = [0, 0], sizes = [8, 128], strides = [1, 1]} : vector<8x384xf32> to vector<8x128xf32>
    %108 = arith.addf %106, %107 : vector<8x128xf32>
    %109 = arith.negf %108 : vector<8x128xf32>
    %110 = math.exp %109 : vector<8x128xf32>
    %cst_49 = arith.constant 1.000000e+00 : f32
    %111 = vector.broadcast %cst_49 : f32 to vector<8x128xf32>
    %112 = arith.addf %111, %110 : vector<8x128xf32>
    %113 = arith.divf %111, %112 : vector<8x128xf32>
    %114 = vector.extract_strided_slice %101 {offsets = [0, 128], sizes = [8, 128], strides = [1, 1]} : vector<8x384xf32> to vector<8x128xf32>
    %115 = vector.extract_strided_slice %105 {offsets = [0, 128], sizes = [8, 128], strides = [1, 1]} : vector<8x384xf32> to vector<8x128xf32>
    %116 = arith.addf %114, %115 : vector<8x128xf32>
    %117 = arith.negf %116 : vector<8x128xf32>
    %118 = math.exp %117 : vector<8x128xf32>
    %cst_50 = arith.constant 1.000000e+00 : f32
    %119 = vector.broadcast %cst_50 : f32 to vector<8x128xf32>
    %120 = arith.addf %119, %118 : vector<8x128xf32>
    %121 = arith.divf %119, %120 : vector<8x128xf32>
    %122 = vector.extract_strided_slice %101 {offsets = [0, 256], sizes = [8, 128], strides = [1, 1]} : vector<8x384xf32> to vector<8x128xf32>
    %123 = vector.extract_strided_slice %105 {offsets = [0, 256], sizes = [8, 128], strides = [1, 1]} : vector<8x384xf32> to vector<8x128xf32>
    %124 = arith.mulf %113, %123 : vector<8x128xf32>
    %125 = arith.addf %122, %124 : vector<8x128xf32>
    %126 = math.tanh %125 : vector<8x128xf32>
    %cst_51 = arith.constant 1.000000e+00 : f32
    %127 = vector.broadcast %cst_51 : f32 to vector<8x128xf32>
    %128 = arith.subf %127, %121 : vector<8x128xf32>
    %129 = arith.mulf %128, %126 : vector<8x128xf32>
    %130 = arith.mulf %121, %102 : vector<8x128xf32>
    %131 = arith.addf %129, %130 : vector<8x128xf32>
    %c0_52 = arith.constant 0 : index
    %c0_53 = arith.constant 0 : index
    %132 = vector.load %arg8[%c0_52, %c0_53] : memref<8x128xf32, #tpu.memory_space<vmem>>, vector<8x128xf32>
    tpu.vector_store %arg8[%c0_52, %c0_53], %131 {strides = array<i32>} : memref<8x128xf32, #tpu.memory_space<vmem>>, vector<8x128xf32>,
    %133 = arith.index_cast %99 : i32 to index
    %c0_54 = arith.constant 0 : index
    %134 = vector.load %arg6[%133, %c0_54] : memref<64x128xf32, #tpu.memory_space<vmem>>, vector<8x128xf32>
    tpu.vector_store %arg6[%133, %c0_54], %131 {strides = array<i32>} : memref<64x128xf32, #tpu.memory_space<vmem>>, vector<8x128xf32>,
    %c3_i32 = arith.constant 3 : i32
    %c0_i32_55 = arith.constant 0 : i32
    %135 = arith.cmpi eq, %arg0, %c0_i32_55 : i32
    %c7_i32_56 = arith.constant 7 : i32
    %136 = arith.subi %c7_i32_56, %c3_i32 : i32
    %137 = arith.select %135, %c3_i32, %136 : i32
    %c8_i32_57 = arith.constant 8 : i32
    %138 = arith.muli %137, %c8_i32_57 : i32
    %139 = tpu.assume_multiple %138, 8 : i32
    %140 = arith.index_cast %139 : i32 to index
    %c0_58 = arith.constant 0 : index
    %141 = vector.load %arg7[%140, %c0_58] : memref<64x384xf32, #tpu.memory_space<vmem>>, vector<8x384xf32>
    %c0_59 = arith.constant 0 : index
    %c0_60 = arith.constant 0 : index
    %142 = vector.load %arg8[%c0_59, %c0_60] : memref<8x128xf32, #tpu.memory_space<vmem>>, vector<8x128xf32>
    %cst_61 = arith.constant dense<0.000000e+00> : vector<8x384xf32>
    %143 = tpu.matmul %142, %12, %cst_61 {dimension_numbers = #tpu.dot_dimension_numbers<[1], [0], [0], [1], [0, 0, 1, 1], [], []>} : vector<8x128xf32>, vector<128x384xf32>, vector<8x384xf32> -> vector<8x384xf32>
    %144 = vector.broadcast %14 : vector<1x384xf32> to vector<8x384xf32>
    %145 = arith.addf %143, %144 : vector<8x384xf32>
    %146 = vector.extract_strided_slice %141 {offsets = [0, 0], sizes = [8, 128], strides = [1, 1]} : vector<8x384xf32> to vector<8x128xf32>
    %147 = vector.extract_strided_slice %145 {offsets = [0, 0], sizes = [8, 128], strides = [1, 1]} : vector<8x384xf32> to vector<8x128xf32>
    %148 = arith.addf %146, %147 : vector<8x128xf32>
    %149 = arith.negf %148 : vector<8x128xf32>
    %150 = math.exp %149 : vector<8x128xf32>
    %cst_62 = arith.constant 1.000000e+00 : f32
    %151 = vector.broadcast %cst_62 : f32 to vector<8x128xf32>
    %152 = arith.addf %151, %150 : vector<8x128xf32>
    %153 = arith.divf %151, %152 : vector<8x128xf32>
    %154 = vector.extract_strided_slice %141 {offsets = [0, 128], sizes = [8, 128], strides = [1, 1]} : vector<8x384xf32> to vector<8x128xf32>
    %155 = vector.extract_strided_slice %145 {offsets = [0, 128], sizes = [8, 128], strides = [1, 1]} : vector<8x384xf32> to vector<8x128xf32>
    %156 = arith.addf %154, %155 : vector<8x128xf32>
    %157 = arith.negf %156 : vector<8x128xf32>
    %158 = math.exp %157 : vector<8x128xf32>
    %cst_63 = arith.constant 1.000000e+00 : f32
    %159 = vector.broadcast %cst_63 : f32 to vector<8x128xf32>
    %160 = arith.addf %159, %158 : vector<8x128xf32>
    %161 = arith.divf %159, %160 : vector<8x128xf32>
    %162 = vector.extract_strided_slice %141 {offsets = [0, 256], sizes = [8, 128], strides = [1, 1]} : vector<8x384xf32> to vector<8x128xf32>
    %163 = vector.extract_strided_slice %145 {offsets = [0, 256], sizes = [8, 128], strides = [1, 1]} : vector<8x384xf32> to vector<8x128xf32>
    %164 = arith.mulf %153, %163 : vector<8x128xf32>
    %165 = arith.addf %162, %164 : vector<8x128xf32>
    %166 = math.tanh %165 : vector<8x128xf32>
    %cst_64 = arith.constant 1.000000e+00 : f32
    %167 = vector.broadcast %cst_64 : f32 to vector<8x128xf32>
    %168 = arith.subf %167, %161 : vector<8x128xf32>
    %169 = arith.mulf %168, %166 : vector<8x128xf32>
    %170 = arith.mulf %161, %142 : vector<8x128xf32>
    %171 = arith.addf %169, %170 : vector<8x128xf32>
    %c0_65 = arith.constant 0 : index
    %c0_66 = arith.constant 0 : index
    %172 = vector.load %arg8[%c0_65, %c0_66] : memref<8x128xf32, #tpu.memory_space<vmem>>, vector<8x128xf32>
    tpu.vector_store %arg8[%c0_65, %c0_66], %171 {strides = array<i32>} : memref<8x128xf32, #tpu.memory_space<vmem>>, vector<8x128xf32>,
    %173 = arith.index_cast %139 : i32 to index
    %c0_67 = arith.constant 0 : index
    %174 = vector.load %arg6[%173, %c0_67] : memref<64x128xf32, #tpu.memory_space<vmem>>, vector<8x128xf32>
    tpu.vector_store %arg6[%173, %c0_67], %171 {strides = array<i32>} : memref<64x128xf32, #tpu.memory_space<vmem>>, vector<8x128xf32>,
    %c4_i32 = arith.constant 4 : i32
    %c0_i32_68 = arith.constant 0 : i32
    %175 = arith.cmpi eq, %arg0, %c0_i32_68 : i32
    %c7_i32_69 = arith.constant 7 : i32
    %176 = arith.subi %c7_i32_69, %c4_i32 : i32
    %177 = arith.select %175, %c4_i32, %176 : i32
    %c8_i32_70 = arith.constant 8 : i32
    %178 = arith.muli %177, %c8_i32_70 : i32
    %179 = tpu.assume_multiple %178, 8 : i32
    %180 = arith.index_cast %179 : i32 to index
    %c0_71 = arith.constant 0 : index
    %181 = vector.load %arg7[%180, %c0_71] : memref<64x384xf32, #tpu.memory_space<vmem>>, vector<8x384xf32>
    %c0_72 = arith.constant 0 : index
    %c0_73 = arith.constant 0 : index
    %182 = vector.load %arg8[%c0_72, %c0_73] : memref<8x128xf32, #tpu.memory_space<vmem>>, vector<8x128xf32>
    %cst_74 = arith.constant dense<0.000000e+00> : vector<8x384xf32>
    %183 = tpu.matmul %182, %12, %cst_74 {dimension_numbers = #tpu.dot_dimension_numbers<[1], [0], [0], [1], [0, 0, 1, 1], [], []>} : vector<8x128xf32>, vector<128x384xf32>, vector<8x384xf32> -> vector<8x384xf32>
    %184 = vector.broadcast %14 : vector<1x384xf32> to vector<8x384xf32>
    %185 = arith.addf %183, %184 : vector<8x384xf32>
    %186 = vector.extract_strided_slice %181 {offsets = [0, 0], sizes = [8, 128], strides = [1, 1]} : vector<8x384xf32> to vector<8x128xf32>
    %187 = vector.extract_strided_slice %185 {offsets = [0, 0], sizes = [8, 128], strides = [1, 1]} : vector<8x384xf32> to vector<8x128xf32>
    %188 = arith.addf %186, %187 : vector<8x128xf32>
    %189 = arith.negf %188 : vector<8x128xf32>
    %190 = math.exp %189 : vector<8x128xf32>
    %cst_75 = arith.constant 1.000000e+00 : f32
    %191 = vector.broadcast %cst_75 : f32 to vector<8x128xf32>
    %192 = arith.addf %191, %190 : vector<8x128xf32>
    %193 = arith.divf %191, %192 : vector<8x128xf32>
    %194 = vector.extract_strided_slice %181 {offsets = [0, 128], sizes = [8, 128], strides = [1, 1]} : vector<8x384xf32> to vector<8x128xf32>
    %195 = vector.extract_strided_slice %185 {offsets = [0, 128], sizes = [8, 128], strides = [1, 1]} : vector<8x384xf32> to vector<8x128xf32>
    %196 = arith.addf %194, %195 : vector<8x128xf32>
    %197 = arith.negf %196 : vector<8x128xf32>
    %198 = math.exp %197 : vector<8x128xf32>
    %cst_76 = arith.constant 1.000000e+00 : f32
    %199 = vector.broadcast %cst_76 : f32 to vector<8x128xf32>
    %200 = arith.addf %199, %198 : vector<8x128xf32>
    %201 = arith.divf %199, %200 : vector<8x128xf32>
    %202 = vector.extract_strided_slice %181 {offsets = [0, 256], sizes = [8, 128], strides = [1, 1]} : vector<8x384xf32> to vector<8x128xf32>
    %203 = vector.extract_strided_slice %185 {offsets = [0, 256], sizes = [8, 128], strides = [1, 1]} : vector<8x384xf32> to vector<8x128xf32>
    %204 = arith.mulf %193, %203 : vector<8x128xf32>
    %205 = arith.addf %202, %204 : vector<8x128xf32>
    %206 = math.tanh %205 : vector<8x128xf32>
    %cst_77 = arith.constant 1.000000e+00 : f32
    %207 = vector.broadcast %cst_77 : f32 to vector<8x128xf32>
    %208 = arith.subf %207, %201 : vector<8x128xf32>
    %209 = arith.mulf %208, %206 : vector<8x128xf32>
    %210 = arith.mulf %201, %182 : vector<8x128xf32>
    %211 = arith.addf %209, %210 : vector<8x128xf32>
    %c0_78 = arith.constant 0 : index
    %c0_79 = arith.constant 0 : index
    %212 = vector.load %arg8[%c0_78, %c0_79] : memref<8x128xf32, #tpu.memory_space<vmem>>, vector<8x128xf32>
    tpu.vector_store %arg8[%c0_78, %c0_79], %211 {strides = array<i32>} : memref<8x128xf32, #tpu.memory_space<vmem>>, vector<8x128xf32>,
    %213 = arith.index_cast %179 : i32 to index
    %c0_80 = arith.constant 0 : index
    %214 = vector.load %arg6[%213, %c0_80] : memref<64x128xf32, #tpu.memory_space<vmem>>, vector<8x128xf32>
    tpu.vector_store %arg6[%213, %c0_80], %211 {strides = array<i32>} : memref<64x128xf32, #tpu.memory_space<vmem>>, vector<8x128xf32>,
    %c5_i32 = arith.constant 5 : i32
    %c0_i32_81 = arith.constant 0 : i32
    %215 = arith.cmpi eq, %arg0, %c0_i32_81 : i32
    %c7_i32_82 = arith.constant 7 : i32
    %216 = arith.subi %c7_i32_82, %c5_i32 : i32
    %217 = arith.select %215, %c5_i32, %216 : i32
    %c8_i32_83 = arith.constant 8 : i32
    %218 = arith.muli %217, %c8_i32_83 : i32
    %219 = tpu.assume_multiple %218, 8 : i32
    %220 = arith.index_cast %219 : i32 to index
    %c0_84 = arith.constant 0 : index
    %221 = vector.load %arg7[%220, %c0_84] : memref<64x384xf32, #tpu.memory_space<vmem>>, vector<8x384xf32>
    %c0_85 = arith.constant 0 : index
    %c0_86 = arith.constant 0 : index
    %222 = vector.load %arg8[%c0_85, %c0_86] : memref<8x128xf32, #tpu.memory_space<vmem>>, vector<8x128xf32>
    %cst_87 = arith.constant dense<0.000000e+00> : vector<8x384xf32>
    %223 = tpu.matmul %222, %12, %cst_87 {dimension_numbers = #tpu.dot_dimension_numbers<[1], [0], [0], [1], [0, 0, 1, 1], [], []>} : vector<8x128xf32>, vector<128x384xf32>, vector<8x384xf32> -> vector<8x384xf32>
    %224 = vector.broadcast %14 : vector<1x384xf32> to vector<8x384xf32>
    %225 = arith.addf %223, %224 : vector<8x384xf32>
    %226 = vector.extract_strided_slice %221 {offsets = [0, 0], sizes = [8, 128], strides = [1, 1]} : vector<8x384xf32> to vector<8x128xf32>
    %227 = vector.extract_strided_slice %225 {offsets = [0, 0], sizes = [8, 128], strides = [1, 1]} : vector<8x384xf32> to vector<8x128xf32>
    %228 = arith.addf %226, %227 : vector<8x128xf32>
    %229 = arith.negf %228 : vector<8x128xf32>
    %230 = math.exp %229 : vector<8x128xf32>
    %cst_88 = arith.constant 1.000000e+00 : f32
    %231 = vector.broadcast %cst_88 : f32 to vector<8x128xf32>
    %232 = arith.addf %231, %230 : vector<8x128xf32>
    %233 = arith.divf %231, %232 : vector<8x128xf32>
    %234 = vector.extract_strided_slice %221 {offsets = [0, 128], sizes = [8, 128], strides = [1, 1]} : vector<8x384xf32> to vector<8x128xf32>
    %235 = vector.extract_strided_slice %225 {offsets = [0, 128], sizes = [8, 128], strides = [1, 1]} : vector<8x384xf32> to vector<8x128xf32>
    %236 = arith.addf %234, %235 : vector<8x128xf32>
    %237 = arith.negf %236 : vector<8x128xf32>
    %238 = math.exp %237 : vector<8x128xf32>
    %cst_89 = arith.constant 1.000000e+00 : f32
    %239 = vector.broadcast %cst_89 : f32 to vector<8x128xf32>
    %240 = arith.addf %239, %238 : vector<8x128xf32>
    %241 = arith.divf %239, %240 : vector<8x128xf32>
    %242 = vector.extract_strided_slice %221 {offsets = [0, 256], sizes = [8, 128], strides = [1, 1]} : vector<8x384xf32> to vector<8x128xf32>
    %243 = vector.extract_strided_slice %225 {offsets = [0, 256], sizes = [8, 128], strides = [1, 1]} : vector<8x384xf32> to vector<8x128xf32>
    %244 = arith.mulf %233, %243 : vector<8x128xf32>
    %245 = arith.addf %242, %244 : vector<8x128xf32>
    %246 = math.tanh %245 : vector<8x128xf32>
    %cst_90 = arith.constant 1.000000e+00 : f32
    %247 = vector.broadcast %cst_90 : f32 to vector<8x128xf32>
    %248 = arith.subf %247, %241 : vector<8x128xf32>
    %249 = arith.mulf %248, %246 : vector<8x128xf32>
    %250 = arith.mulf %241, %222 : vector<8x128xf32>
    %251 = arith.addf %249, %250 : vector<8x128xf32>
    %c0_91 = arith.constant 0 : index
    %c0_92 = arith.constant 0 : index
    %252 = vector.load %arg8[%c0_91, %c0_92] : memref<8x128xf32, #tpu.memory_space<vmem>>, vector<8x128xf32>
    tpu.vector_store %arg8[%c0_91, %c0_92], %251 {strides = array<i32>} : memref<8x128xf32, #tpu.memory_space<vmem>>, vector<8x128xf32>,
    %253 = arith.index_cast %219 : i32 to index
    %c0_93 = arith.constant 0 : index
    %254 = vector.load %arg6[%253, %c0_93] : memref<64x128xf32, #tpu.memory_space<vmem>>, vector<8x128xf32>
    tpu.vector_store %arg6[%253, %c0_93], %251 {strides = array<i32>} : memref<64x128xf32, #tpu.memory_space<vmem>>, vector<8x128xf32>,
    %c6_i32 = arith.constant 6 : i32
    %c0_i32_94 = arith.constant 0 : i32
    %255 = arith.cmpi eq, %arg0, %c0_i32_94 : i32
    %c7_i32_95 = arith.constant 7 : i32
    %256 = arith.subi %c7_i32_95, %c6_i32 : i32
    %257 = arith.select %255, %c6_i32, %256 : i32
    %c8_i32_96 = arith.constant 8 : i32
    %258 = arith.muli %257, %c8_i32_96 : i32
    %259 = tpu.assume_multiple %258, 8 : i32
    %260 = arith.index_cast %259 : i32 to index
    %c0_97 = arith.constant 0 : index
    %261 = vector.load %arg7[%260, %c0_97] : memref<64x384xf32, #tpu.memory_space<vmem>>, vector<8x384xf32>
    %c0_98 = arith.constant 0 : index
    %c0_99 = arith.constant 0 : index
    %262 = vector.load %arg8[%c0_98, %c0_99] : memref<8x128xf32, #tpu.memory_space<vmem>>, vector<8x128xf32>
    %cst_100 = arith.constant dense<0.000000e+00> : vector<8x384xf32>
    %263 = tpu.matmul %262, %12, %cst_100 {dimension_numbers = #tpu.dot_dimension_numbers<[1], [0], [0], [1], [0, 0, 1, 1], [], []>} : vector<8x128xf32>, vector<128x384xf32>, vector<8x384xf32> -> vector<8x384xf32>
    %264 = vector.broadcast %14 : vector<1x384xf32> to vector<8x384xf32>
    %265 = arith.addf %263, %264 : vector<8x384xf32>
    %266 = vector.extract_strided_slice %261 {offsets = [0, 0], sizes = [8, 128], strides = [1, 1]} : vector<8x384xf32> to vector<8x128xf32>
    %267 = vector.extract_strided_slice %265 {offsets = [0, 0], sizes = [8, 128], strides = [1, 1]} : vector<8x384xf32> to vector<8x128xf32>
    %268 = arith.addf %266, %267 : vector<8x128xf32>
    %269 = arith.negf %268 : vector<8x128xf32>
    %270 = math.exp %269 : vector<8x128xf32>
    %cst_101 = arith.constant 1.000000e+00 : f32
    %271 = vector.broadcast %cst_101 : f32 to vector<8x128xf32>
    %272 = arith.addf %271, %270 : vector<8x128xf32>
    %273 = arith.divf %271, %272 : vector<8x128xf32>
    %274 = vector.extract_strided_slice %261 {offsets = [0, 128], sizes = [8, 128], strides = [1, 1]} : vector<8x384xf32> to vector<8x128xf32>
    %275 = vector.extract_strided_slice %265 {offsets = [0, 128], sizes = [8, 128], strides = [1, 1]} : vector<8x384xf32> to vector<8x128xf32>
    %276 = arith.addf %274, %275 : vector<8x128xf32>
    %277 = arith.negf %276 : vector<8x128xf32>
    %278 = math.exp %277 : vector<8x128xf32>
    %cst_102 = arith.constant 1.000000e+00 : f32
    %279 = vector.broadcast %cst_102 : f32 to vector<8x128xf32>
    %280 = arith.addf %279, %278 : vector<8x128xf32>
    %281 = arith.divf %279, %280 : vector<8x128xf32>
    %282 = vector.extract_strided_slice %261 {offsets = [0, 256], sizes = [8, 128], strides = [1, 1]} : vector<8x384xf32> to vector<8x128xf32>
    %283 = vector.extract_strided_slice %265 {offsets = [0, 256], sizes = [8, 128], strides = [1, 1]} : vector<8x384xf32> to vector<8x128xf32>
    %284 = arith.mulf %273, %283 : vector<8x128xf32>
    %285 = arith.addf %282, %284 : vector<8x128xf32>
    %286 = math.tanh %285 : vector<8x128xf32>
    %cst_103 = arith.constant 1.000000e+00 : f32
    %287 = vector.broadcast %cst_103 : f32 to vector<8x128xf32>
    %288 = arith.subf %287, %281 : vector<8x128xf32>
    %289 = arith.mulf %288, %286 : vector<8x128xf32>
    %290 = arith.mulf %281, %262 : vector<8x128xf32>
    %291 = arith.addf %289, %290 : vector<8x128xf32>
    %c0_104 = arith.constant 0 : index
    %c0_105 = arith.constant 0 : index
    %292 = vector.load %arg8[%c0_104, %c0_105] : memref<8x128xf32, #tpu.memory_space<vmem>>, vector<8x128xf32>
    tpu.vector_store %arg8[%c0_104, %c0_105], %291 {strides = array<i32>} : memref<8x128xf32, #tpu.memory_space<vmem>>, vector<8x128xf32>,
    %293 = arith.index_cast %259 : i32 to index
    %c0_106 = arith.constant 0 : index
    %294 = vector.load %arg6[%293, %c0_106] : memref<64x128xf32, #tpu.memory_space<vmem>>, vector<8x128xf32>
    tpu.vector_store %arg6[%293, %c0_106], %291 {strides = array<i32>} : memref<64x128xf32, #tpu.memory_space<vmem>>, vector<8x128xf32>,
    %c7_i32_107 = arith.constant 7 : i32
    %c0_i32_108 = arith.constant 0 : i32
    %295 = arith.cmpi eq, %arg0, %c0_i32_108 : i32
    %c7_i32_109 = arith.constant 7 : i32
    %296 = arith.subi %c7_i32_109, %c7_i32_107 : i32
    %297 = arith.select %295, %c7_i32_107, %296 : i32
    %c8_i32_110 = arith.constant 8 : i32
    %298 = arith.muli %297, %c8_i32_110 : i32
    %299 = tpu.assume_multiple %298, 8 : i32
    %300 = arith.index_cast %299 : i32 to index
    %c0_111 = arith.constant 0 : index
    %301 = vector.load %arg7[%300, %c0_111] : memref<64x384xf32, #tpu.memory_space<vmem>>, vector<8x384xf32>
    %c0_112 = arith.constant 0 : index
    %c0_113 = arith.constant 0 : index
    %302 = vector.load %arg8[%c0_112, %c0_113] : memref<8x128xf32, #tpu.memory_space<vmem>>, vector<8x128xf32>
    %cst_114 = arith.constant dense<0.000000e+00> : vector<8x384xf32>
    %303 = tpu.matmul %302, %12, %cst_114 {dimension_numbers = #tpu.dot_dimension_numbers<[1], [0], [0], [1], [0, 0, 1, 1], [], []>} : vector<8x128xf32>, vector<128x384xf32>, vector<8x384xf32> -> vector<8x384xf32>
    %304 = vector.broadcast %14 : vector<1x384xf32> to vector<8x384xf32>
    %305 = arith.addf %303, %304 : vector<8x384xf32>
    %306 = vector.extract_strided_slice %301 {offsets = [0, 0], sizes = [8, 128], strides = [1, 1]} : vector<8x384xf32> to vector<8x128xf32>
    %307 = vector.extract_strided_slice %305 {offsets = [0, 0], sizes = [8, 128], strides = [1, 1]} : vector<8x384xf32> to vector<8x128xf32>
    %308 = arith.addf %306, %307 : vector<8x128xf32>
    %309 = arith.negf %308 : vector<8x128xf32>
    %310 = math.exp %309 : vector<8x128xf32>
    %cst_115 = arith.constant 1.000000e+00 : f32
    %311 = vector.broadcast %cst_115 : f32 to vector<8x128xf32>
    %312 = arith.addf %311, %310 : vector<8x128xf32>
    %313 = arith.divf %311, %312 : vector<8x128xf32>
    %314 = vector.extract_strided_slice %301 {offsets = [0, 128], sizes = [8, 128], strides = [1, 1]} : vector<8x384xf32> to vector<8x128xf32>
    %315 = vector.extract_strided_slice %305 {offsets = [0, 128], sizes = [8, 128], strides = [1, 1]} : vector<8x384xf32> to vector<8x128xf32>
    %316 = arith.addf %314, %315 : vector<8x128xf32>
    %317 = arith.negf %316 : vector<8x128xf32>
    %318 = math.exp %317 : vector<8x128xf32>
    %cst_116 = arith.constant 1.000000e+00 : f32
    %319 = vector.broadcast %cst_116 : f32 to vector<8x128xf32>
    %320 = arith.addf %319, %318 : vector<8x128xf32>
    %321 = arith.divf %319, %320 : vector<8x128xf32>
    %322 = vector.extract_strided_slice %301 {offsets = [0, 256], sizes = [8, 128], strides = [1, 1]} : vector<8x384xf32> to vector<8x128xf32>
    %323 = vector.extract_strided_slice %305 {offsets = [0, 256], sizes = [8, 128], strides = [1, 1]} : vector<8x384xf32> to vector<8x128xf32>
    %324 = arith.mulf %313, %323 : vector<8x128xf32>
    %325 = arith.addf %322, %324 : vector<8x128xf32>
    %326 = math.tanh %325 : vector<8x128xf32>
    %cst_117 = arith.constant 1.000000e+00 : f32
    %327 = vector.broadcast %cst_117 : f32 to vector<8x128xf32>
    %328 = arith.subf %327, %321 : vector<8x128xf32>
    %329 = arith.mulf %328, %326 : vector<8x128xf32>
    %330 = arith.mulf %321, %302 : vector<8x128xf32>
    %331 = arith.addf %329, %330 : vector<8x128xf32>
    %c0_118 = arith.constant 0 : index
    %c0_119 = arith.constant 0 : index
    %332 = vector.load %arg8[%c0_118, %c0_119] : memref<8x128xf32, #tpu.memory_space<vmem>>, vector<8x128xf32>
    tpu.vector_store %arg8[%c0_118, %c0_119], %331 {strides = array<i32>} : memref<8x128xf32, #tpu.memory_space<vmem>>, vector<8x128xf32>,
    %333 = arith.index_cast %299 : i32 to index
    %c0_120 = arith.constant 0 : index
    %334 = vector.load %arg6[%333, %c0_120] : memref<64x128xf32, #tpu.memory_space<vmem>>, vector<8x128xf32>
    tpu.vector_store %arg6[%333, %c0_120], %331 {strides = array<i32>} : memref<64x128xf32, #tpu.memory_space<vmem>>, vector<8x128xf32>,
    %c8_i32_121 = arith.constant 8 : i32
    return
  }
  func.func @transform_0(%arg0: i32) -> (i32, i32) {
    %c0_i32 = arith.constant 0 : i32
    %c0_i32_0 = arith.constant 0 : i32
    %c0_i32_1 = arith.constant 0 : i32
    return %c0_i32, %c0_i32_0 : i32, i32
  }
  func.func @transform_1(%arg0: i32) -> (i32, i32, i32) {
    %c0_i32 = arith.constant 0 : i32
    %c0_i32_0 = arith.constant 0 : i32
    %c0_i32_1 = arith.constant 0 : i32
    return %arg0, %c0_i32, %c0_i32_0 : i32, i32, i32
  }
  func.func @transform_2(%arg0: i32) -> (i32, i32, i32) {
    %c0_i32 = arith.constant 0 : i32
    %c0_i32_0 = arith.constant 0 : i32
    %c0_i32_1 = arith.constant 0 : i32
    return %arg0, %c0_i32, %c0_i32_0 : i32, i32, i32
  }
  func.func @transform_3(%arg0: i32) -> (i32, i32, i32) {
    %c0_i32 = arith.constant 0 : i32
    %c0_i32_0 = arith.constant 0 : i32
    %c0_i32_1 = arith.constant 0 : i32
    return %arg0, %c0_i32, %c0_i32_0 : i32, i32, i32
  }
  func.func @transform_4(%arg0: i32) -> (i32, i32, i32) {
    %c0_i32 = arith.constant 0 : i32
    %c0_i32_0 = arith.constant 0 : i32
    %c0_i32_1 = arith.constant 0 : i32
    return %arg0, %c0_i32, %c0_i32_0 : i32, i32, i32
  }
  func.func @transform_5(%arg0: i32) -> (i32, i32) {
    %c0_i32 = arith.constant 0 : i32
    %c0_i32_0 = arith.constant 0 : i32
    return %c0_i32, %arg0 : i32, i32
  }
}

module attributes {stable_mosaic.version = 11 : i64} {
  func.func @_cnn_heads_kernel(%arg0: i32, %arg1: memref<64x256xf32, #tpu.memory_space<vmem>>, %arg2: memref<1x256x64xf32, #tpu.memory_space<vmem>>, %arg3: memref<1x1x64xf32, #tpu.memory_space<vmem>>, %arg4: memref<1x64x16xf32, #tpu.memory_space<vmem>>, %arg5: memref<1x1x16xf32, #tpu.memory_space<vmem>>, %arg6: memref<1x16x128xf32, #tpu.memory_space<vmem>>, %arg7: memref<1x1x128xf32, #tpu.memory_space<vmem>>, %arg8: memref<1x64x128xf32, #tpu.memory_space<vmem>>) attributes {dimension_semantics = [#tpu.dimension_semantics<parallel>], iteration_bounds = array<i64: 1>, scalar_prefetch = 0 : i64, scratch_operands = 0 : i64, tpu.core_type = #tpu.core_type<tc>, window_params = [{pipeline_mode = #tpu.pipeline_mode<synchronous>, transform_indices = @transform_0, window_bounds = array<i64: 64, 256>}, {transform_indices = @transform_1, window_bounds = array<i64: 1, 256, 64>}, {transform_indices = @transform_2, window_bounds = array<i64: 1, 1, 64>}, {transform_indices = @transform_3, window_bounds = array<i64: 1, 64, 16>}, {transform_indices = @transform_4, window_bounds = array<i64: 1, 1, 16>}, {transform_indices = @transform_5, window_bounds = array<i64: 1, 16, 128>}, {transform_indices = @transform_6, window_bounds = array<i64: 1, 1, 128>}, {transform_indices = @transform_7, window_bounds = array<i64: 1, 64, 128>}]} {
    %c0 = arith.constant 0 : index
    %c0_0 = arith.constant 0 : index
    %0 = vector.load %arg1[%c0, %c0_0] : memref<64x256xf32, #tpu.memory_space<vmem>>, vector<64x256xf32>
    %c0_1 = arith.constant 0 : index
    %c0_2 = arith.constant 0 : index
    %c0_3 = arith.constant 0 : index
    %1 = vector.load %arg2[%c0_1, %c0_2, %c0_3] : memref<1x256x64xf32, #tpu.memory_space<vmem>>, vector<1x256x64xf32>
    %2 = vector.shape_cast %1 : vector<1x256x64xf32> to vector<256x64xf32>
    %cst = arith.constant dense<0.000000e+00> : vector<64x64xf32>
    %3 = tpu.matmul %0, %2, %cst {dimension_numbers = #tpu.dot_dimension_numbers<[1], [0], [0], [1], [0, 0, 1, 1], [], []>} : vector<64x256xf32>, vector<256x64xf32>, vector<64x64xf32> -> vector<64x64xf32>
    %c0_4 = arith.constant 0 : index
    %c0_5 = arith.constant 0 : index
    %c0_6 = arith.constant 0 : index
    %4 = vector.load %arg3[%c0_4, %c0_5, %c0_6] : memref<1x1x64xf32, #tpu.memory_space<vmem>>, vector<1x1x64xf32>
    %5 = vector.shape_cast %4 : vector<1x1x64xf32> to vector<1x64xf32>
    %6 = vector.broadcast %5 : vector<1x64xf32> to vector<64x64xf32>
    %7 = arith.addf %3, %6 : vector<64x64xf32>
    %cst_7 = arith.constant 0.000000e+00 : f32
    %8 = vector.broadcast %cst_7 : f32 to vector<64x64xf32>
    %9 = arith.maximumf %7, %8 : vector<64x64xf32>
    %c0_8 = arith.constant 0 : index
    %c0_9 = arith.constant 0 : index
    %c0_10 = arith.constant 0 : index
    %10 = vector.load %arg4[%c0_8, %c0_9, %c0_10] : memref<1x64x16xf32, #tpu.memory_space<vmem>>, vector<1x64x16xf32>
    %11 = vector.shape_cast %10 : vector<1x64x16xf32> to vector<64x16xf32>
    %cst_11 = arith.constant dense<0.000000e+00> : vector<64x16xf32>
    %12 = tpu.matmul %9, %11, %cst_11 {dimension_numbers = #tpu.dot_dimension_numbers<[1], [0], [0], [1], [0, 0, 1, 1], [], []>} : vector<64x64xf32>, vector<64x16xf32>, vector<64x16xf32> -> vector<64x16xf32>
    %c0_12 = arith.constant 0 : index
    %c0_13 = arith.constant 0 : index
    %c0_14 = arith.constant 0 : index
    %13 = vector.load %arg5[%c0_12, %c0_13, %c0_14] : memref<1x1x16xf32, #tpu.memory_space<vmem>>, vector<1x1x16xf32>
    %14 = vector.shape_cast %13 : vector<1x1x16xf32> to vector<1x16xf32>
    %15 = vector.broadcast %14 : vector<1x16xf32> to vector<64x16xf32>
    %16 = arith.addf %12, %15 : vector<64x16xf32>
    %cst_15 = arith.constant 0.000000e+00 : f32
    %17 = vector.broadcast %cst_15 : f32 to vector<64x16xf32>
    %18 = arith.maximumf %16, %17 : vector<64x16xf32>
    %c0_16 = arith.constant 0 : index
    %c0_17 = arith.constant 0 : index
    %c0_18 = arith.constant 0 : index
    %19 = vector.load %arg6[%c0_16, %c0_17, %c0_18] : memref<1x16x128xf32, #tpu.memory_space<vmem>>, vector<1x16x128xf32>
    %20 = vector.shape_cast %19 : vector<1x16x128xf32> to vector<16x128xf32>
    %cst_19 = arith.constant dense<0.000000e+00> : vector<64x128xf32>
    %21 = tpu.matmul %18, %20, %cst_19 {dimension_numbers = #tpu.dot_dimension_numbers<[1], [0], [0], [1], [0, 0, 1, 1], [], []>} : vector<64x16xf32>, vector<16x128xf32>, vector<64x128xf32> -> vector<64x128xf32>
    %c0_20 = arith.constant 0 : index
    %c0_21 = arith.constant 0 : index
    %c0_22 = arith.constant 0 : index
    %22 = vector.load %arg7[%c0_20, %c0_21, %c0_22] : memref<1x1x128xf32, #tpu.memory_space<vmem>>, vector<1x1x128xf32>
    %23 = vector.shape_cast %22 : vector<1x1x128xf32> to vector<1x128xf32>
    %24 = vector.broadcast %23 : vector<1x128xf32> to vector<64x128xf32>
    %25 = arith.addf %21, %24 : vector<64x128xf32>
    %c0_23 = arith.constant 0 : index
    %c0_24 = arith.constant 0 : index
    %c0_25 = arith.constant 0 : index
    %26 = vector.load %arg8[%c0_23, %c0_24, %c0_25] : memref<1x64x128xf32, #tpu.memory_space<vmem>>, vector<1x64x128xf32>
    %27 = vector.shape_cast %26 : vector<1x64x128xf32> to vector<64x128xf32>
    %28 = vector.shape_cast %25 : vector<64x128xf32> to vector<1x64x128xf32>
    tpu.vector_store %arg8[%c0_23, %c0_24, %c0_25], %28 {strides = array<i32>} : memref<1x64x128xf32, #tpu.memory_space<vmem>>, vector<1x64x128xf32>,
    return
  }
  func.func @transform_0(%arg0: i32) -> (i32, i32) {
    %c0_i32 = arith.constant 0 : i32
    %c0_i32_0 = arith.constant 0 : i32
    %c0_i32_1 = arith.constant 0 : i32
    return %c0_i32, %c0_i32_0 : i32, i32
  }
  func.func @transform_1(%arg0: i32) -> (i32, i32, i32) {
    %c0_i32 = arith.constant 0 : i32
    %c0_i32_0 = arith.constant 0 : i32
    %c0_i32_1 = arith.constant 0 : i32
    return %arg0, %c0_i32, %c0_i32_0 : i32, i32, i32
  }
  func.func @transform_2(%arg0: i32) -> (i32, i32, i32) {
    %c0_i32 = arith.constant 0 : i32
    %c0_i32_0 = arith.constant 0 : i32
    %c0_i32_1 = arith.constant 0 : i32
    return %arg0, %c0_i32, %c0_i32_0 : i32, i32, i32
  }
  func.func @transform_3(%arg0: i32) -> (i32, i32, i32) {
    %c0_i32 = arith.constant 0 : i32
    %c0_i32_0 = arith.constant 0 : i32
    %c0_i32_1 = arith.constant 0 : i32
    return %arg0, %c0_i32, %c0_i32_0 : i32, i32, i32
  }
  func.func @transform_4(%arg0: i32) -> (i32, i32, i32) {
    %c0_i32 = arith.constant 0 : i32
    %c0_i32_0 = arith.constant 0 : i32
    %c0_i32_1 = arith.constant 0 : i32
    return %arg0, %c0_i32, %c0_i32_0 : i32, i32, i32
  }
  func.func @transform_5(%arg0: i32) -> (i32, i32, i32) {
    %c0_i32 = arith.constant 0 : i32
    %c0_i32_0 = arith.constant 0 : i32
    %c0_i32_1 = arith.constant 0 : i32
    return %arg0, %c0_i32, %c0_i32_0 : i32, i32, i32
  }
  func.func @transform_6(%arg0: i32) -> (i32, i32, i32) {
    %c0_i32 = arith.constant 0 : i32
    %c0_i32_0 = arith.constant 0 : i32
    %c0_i32_1 = arith.constant 0 : i32
    return %arg0, %c0_i32, %c0_i32_0 : i32, i32, i32
  }
  func.func @transform_7(%arg0: i32) -> (i32, i32, i32) {
    %c0_i32 = arith.constant 0 : i32
    %c0_i32_0 = arith.constant 0 : i32
    %c0_i32_1 = arith.constant 0 : i32
    return %arg0, %c0_i32, %c0_i32_0 : i32, i32, i32
  }
}

</mosaic_0001>

<llo_original>
// kernel: gru_module_forward.3
$region0: #{gru_module_forward.3}
  #allocation0 [shape = 'u32[]', space=smem, size = 0x4, offset = 0x4, fixed_abs, tag = 'smem constant byte address 0x4 - core index']
  #allocation1 [shape = 'u32[144,128]{1,0:T(1,128)}', space=vmem, size = 0x12000, scoped, tag = 'internal scratch']
  #allocation2 [shape = 'f32[64,384]{1,0:T(8,128)}', space=vmem, size = 0x18000, scoped, tag = 'scratch operand']
  #allocation3 [shape = 'f32[8,128]{1,0:T(8,128)}', space=vmem, size = 0x1000, scoped, tag = 'scratch operand']
  %s0 = inlined_call_operand.vmem [shape: f32[64,128], index: 0, kind: input, shape index: {}]
  %s1 = inlined_call_operand.vmem [shape: f32[2,128,384], index: 1, kind: input, shape index: {}]
  %s2 = inlined_call_operand.vmem [shape: f32[2,128,384], index: 2, kind: input, shape index: {}]
  %s3 = inlined_call_operand.vmem [shape: f32[2,1,384], index: 3, kind: input, shape index: {}]
  %s4 = inlined_call_operand.vmem [shape: f32[2,1,384], index: 4, kind: input, shape index: {}]
  %s5 = inlined_call_operand.vmem [shape: f32[64,256], index: 5, kind: output, shape index: {}]
  %s6 = sld [smem:[#allocation0]]
  $region87: #{gru_module_forward.3} parent=0
    _
  %s8 = ssub.s32 1, %s6
  %s9 = scalar_select 0, %s8, %s6
  $region1: #{gru_module_forward.3} parent=0
    #allocation4 [shape = 'u8[65536]{0}', space=vmem, size = 0x10000, scoped, tag = 'output window, operand 0']
    loop: start=0, step=1, limit=4
    $region2: #{gru_module_forward.3} parent=1 // loop_pre_header
      _
    $region3: #{gru_module_forward.3} parent=1 // loop_header
      %s11 = sphi 0, %s15
      %p12 = scmp.ge.s32.totalorder %s11, 4
      %s19 = sphi 0, %s19
      %s21 = sphi 0, %s19
      %s22 = sphi 0, %s21
      %s36 = sphi 0, %s22
      %s42 = sphi 0, %s44
      %s45 = sphi 0, %s42
      %s46 = sphi 0, %s45
      %s62 = sphi 0, %s46
      %s68 = sphi 0, %s70
      %s71 = sphi 0, %s68
      %s72 = sphi 0, %s71
      %s88 = sphi 0, %s72
      %s94 = sphi 0, %s96
      %s97 = sphi 0, %s94
      %s98 = sphi 0, %s97
      %s114 = sphi 0, %s98
      %s120 = sphi 0, %s122
      %s123 = sphi 0, %s120
      %s124 = sphi 0, %s123
      %s140 = sphi 0, %s124
      %s146 = sphi 0, %s148
      %s149 = sphi 0, %s146
      %s150 = sphi 0, %s149
      %s166 = sphi 0, %s150
    $region4: #{gru_module_forward.3} parent=1 // loop_header_branch
      %14 = sbr.rel (%p12) target = $region8
    $region5: #{gru_module_forward.3} parent=1 // loop_body
      %s16 = ssub.s32 %s11, 1
      %s17 = ssub.s32 %s11, 2
      %s18 = sadd.s32 %s11, 1
      %s20 = sadd.s32 %s19, 1
      %p23 = scmp.eq.s32.totalorder %s11, 1
      %p24 = scmp.ne.s32.totalorder %s19, %s21
      %p25 = scmp.eq.s32.totalorder %s11, 0
      %p26 = por %p24, %p25
      %p27 = scmp.ne.s32.totalorder %s19, %s21
      %p28 = scmp.eq.s32.totalorder %s16, 1
      %p29 = por %p27, %p28
      %p30 = scmp.ne.s32.totalorder %s21, %s22
      %p31 = scmp.eq.s32.totalorder %s16, 0
      %p32 = por %p30, %p31
      %p33 = scmp.ne.s32.totalorder %s21, %s22
      %p34 = scmp.eq.s32.totalorder %s17, 1
      %p35 = por %p33, %p34
      %p37 = scmp.ne.s32.totalorder %s22, %s36
      %p38 = scmp.eq.s32.totalorder %s17, 0
      %p39 = por %p37, %p38
      %s40 = ssub.s32 %s11, %s18
      %p41 = scmp.eq.s32.totalorder %s40, 0
      %s43 = sadd.s32 %s42, 1
      %s44 = scalar_select %p41, %s42, %s43
      %p47 = pneg %p41
      %p48 = scmp.eq.s32.totalorder %s11, 1
      %p49 = por %p47, %p48
      %p50 = scmp.ne.s32.totalorder %s42, %s45
      %p51 = scmp.eq.s32.totalorder %s11, 0
      %p52 = por %p50, %p51
      %p53 = scmp.ne.s32.totalorder %s42, %s45
      %p54 = scmp.eq.s32.totalorder %s16, 1
      %p55 = por %p53, %p54
      %p56 = scmp.ne.s32.totalorder %s45, %s46
      %p57 = scmp.eq.s32.totalorder %s16, 0
      %p58 = por %p56, %p57
      %p59 = scmp.ne.s32.totalorder %s45, %s46
      %p60 = scmp.eq.s32.totalorder %s17, 1
      %p61 = por %p59, %p60
      %p63 = scmp.ne.s32.totalorder %s46, %s62
      %p64 = scmp.eq.s32.totalorder %s17, 0
      %p65 = por %p63, %p64
      %s66 = ssub.s32 %s11, %s18
      %p67 = scmp.eq.s32.totalorder %s66, 0
      %s69 = sadd.s32 %s68, 1
      %s70 = scalar_select %p67, %s68, %s69
      %p73 = pneg %p67
      %p74 = scmp.eq.s32.totalorder %s11, 1
      %p75 = por %p73, %p74
      %p76 = scmp.ne.s32.totalorder %s68, %s71
      %p77 = scmp.eq.s32.totalorder %s11, 0
      %p78 = por %p76, %p77
      %p79 = scmp.ne.s32.totalorder %s68, %s71
      %p80 = scmp.eq.s32.totalorder %s16, 1
      %p81 = por %p79, %p80
      %p82 = scmp.ne.s32.totalorder %s71, %s72
      %p83 = scmp.eq.s32.totalorder %s16, 0
      %p84 = por %p82, %p83
      %p85 = scmp.ne.s32.totalorder %s71, %s72
      %p86 = scmp.eq.s32.totalorder %s17, 1
      %p87 = por %p85, %p86
      %p89 = scmp.ne.s32.totalorder %s72, %s88
      %p90 = scmp.eq.s32.totalorder %s17, 0
      %p91 = por %p89, %p90
      %s92 = ssub.s32 %s11, %s18
      %p93 = scmp.eq.s32.totalorder %s92, 0
      %s95 = sadd.s32 %s94, 1
      %s96 = scalar_select %p93, %s94, %s95
      %p99 = pneg %p93
      %p100 = scmp.eq.s32.totalorder %s11, 1
      %p101 = por %p99, %p100
      %p102 = scmp.ne.s32.totalorder %s94, %s97
      %p103 = scmp.eq.s32.totalorder %s11, 0
      %p104 = por %p102, %p103
      %p105 = scmp.ne.s32.totalorder %s94, %s97
      %p106 = scmp.eq.s32.totalorder %s16, 1
      %p107 = por %p105, %p106
      %p108 = scmp.ne.s32.totalorder %s97, %s98
      %p109 = scmp.eq.s32.totalorder %s16, 0
      %p110 = por %p108, %p109
      %p111 = scmp.ne.s32.totalorder %s97, %s98
      %p112 = scmp.eq.s32.totalorder %s17, 1
      %p113 = por %p111, %p112
      %p115 = scmp.ne.s32.totalorder %s98, %s114
      %p116 = scmp.eq.s32.totalorder %s17, 0
      %p117 = por %p115, %p116
      %s118 = ssub.s32 %s11, %s18
      %p119 = scmp.eq.s32.totalorder %s118, 0
      %s121 = sadd.s32 %s120, 1
      %s122 = scalar_select %p119, %s120, %s121
      %p125 = pneg %p119
      %p126 = scmp.eq.s32.totalorder %s11, 1
      %p127 = por %p125, %p126
      %p128 = scmp.ne.s32.totalorder %s120, %s123
      %p129 = scmp.eq.s32.totalorder %s11, 0
      %p130 = por %p128, %p129
      %p131 = scmp.ne.s32.totalorder %s120, %s123
      %p132 = scmp.eq.s32.totalorder %s16, 1
      %p133 = por %p131, %p132
      %p134 = scmp.ne.s32.totalorder %s123, %s124
      %p135 = scmp.eq.s32.totalorder %s16, 0
      %p136 = por %p134, %p135
      %p137 = scmp.ne.s32.totalorder %s123, %s124
      %p138 = scmp.eq.s32.totalorder %s17, 1
      %p139 = por %p137, %p138
      %p141 = scmp.ne.s32.totalorder %s124, %s140
      %p142 = scmp.eq.s32.totalorder %s17, 0
      %p143 = por %p141, %p142
      %s144 = ssub.s32 %s11, %s18
      %p145 = scmp.eq.s32.totalorder %s144, 0
      %s147 = sadd.s32 %s146, 1
      %s148 = scalar_select %p145, %s146, %s147
      %p151 = pneg %p145
      %p152 = scmp.eq.s32.totalorder %s11, 1
      %p153 = por %p151, %p152
      %p154 = scmp.ne.s32.totalorder %s146, %s149
      %p155 = scmp.eq.s32.totalorder %s11, 0
      %p156 = por %p154, %p155
      %p157 = scmp.ne.s32.totalorder %s146, %s149
      %p158 = scmp.eq.s32.totalorder %s16, 1
      %p159 = por %p157, %p158
      %p160 = scmp.ne.s32.totalorder %s149, %s150
      %p161 = scmp.eq.s32.totalorder %s16, 0
      %p162 = por %p160, %p161
      %p163 = scmp.ne.s32.totalorder %s149, %s150
      %p164 = scmp.eq.s32.totalorder %s17, 1
      %p165 = por %p163, %p164
      %p167 = scmp.ne.s32.totalorder %s150, %s166
      %p168 = scmp.eq.s32.totalorder %s17, 0
      %p169 = por %p167, %p168
      %p170 = scmp.le.s32.totalorder 1, %s11
      %p171 = scmp.lt.s32.totalorder %s11, 3
      %p172 = pnand %p170, %p171
      %p173 = pneg %p172
      // Predicated region
      $region9: #{gru_module_forward.3} parent=5 // pred_check
        _
      $region10: #{gru_module_forward.3} parent=5 // pred_check_branch
        %175 = sbr.rel (%p172) target = $region12
      $region11: #{gru_module_forward.3} parent=5 // pred_region
        %s176 = ssub.s32 %s11, 1
        // Predicated region
        $region13: #{gru_module_forward.3} parent=11 // pred_check
          %p177 = pneg %p32
        $region14: #{gru_module_forward.3} parent=11 // pred_check_branch
          %179 = sbr.rel (%p177) target = $region16
        $region15: #{gru_module_forward.3} parent=11 // pred_region
          _
        $region16: #{gru_module_forward.3} parent=11 // pred_fallthru
          _
      $region12: #{gru_module_forward.3} parent=5 // pred_fallthru
        _
      %p180 = scmp.lt.s32.totalorder %s11, 2
      // Predicated region
      $region17: #{gru_module_forward.3} parent=5 // pred_check
        %p181 = pneg %p180
      $region18: #{gru_module_forward.3} parent=5 // pred_check_branch
        %183 = sbr.rel (%p181) target = $region20
      $region19: #{gru_module_forward.3} parent=5 // pred_region
        // Predicated region
        $region21: #{gru_module_forward.3} parent=19 // pred_check
          %p184 = pneg %p52
        $region22: #{gru_module_forward.3} parent=19 // pred_check_branch
          %186 = sbr.rel (%p184) target = $region24
        $region23: #{gru_module_forward.3} parent=19 // pred_region
          %p187 = scmp.lt.s32.totalorder %s11, 1
          %s188 = scalar_select %p187, %s11, 1
          %s189 = smul.addr %s188, 48
          %s190 = smul.addr %s189, 8
          %s191 = scalar_lea.vmem %s1, %s190
        $region24: #{gru_module_forward.3} parent=19 // pred_fallthru
          _
        // Predicated region
        $region25: #{gru_module_forward.3} parent=19 // pred_check
          %p192 = pneg %p78
        $region26: #{gru_module_forward.3} parent=19 // pred_check_branch
          %194 = sbr.rel (%p192) target = $region28
        $region27: #{gru_module_forward.3} parent=19 // pred_region
          %p195 = scmp.lt.s32.totalorder %s11, 1
          %s196 = scalar_select %p195, %s11, 1
          %s197 = smul.addr %s196, 48
          %s198 = smul.addr %s197, 8
          %s199 = scalar_lea.vmem %s2, %s198
        $region28: #{gru_module_forward.3} parent=19 // pred_fallthru
          _
        // Predicated region
        $region29: #{gru_module_forward.3} parent=19 // pred_check
          %p200 = pneg %p104
        $region30: #{gru_module_forward.3} parent=19 // pred_check_branch
          %202 = sbr.rel (%p200) target = $region32
        $region31: #{gru_module_forward.3} parent=19 // pred_region
          %p203 = scmp.lt.s32.totalorder %s11, 1
          %s204 = scalar_select %p203, %s11, 1
          %s205 = smul.addr %s204, 3
          %s206 = scalar_lea.vmem %s3, %s205
        $region32: #{gru_module_forward.3} parent=19 // pred_fallthru
          _
        // Predicated region
        $region33: #{gru_module_forward.3} parent=19 // pred_check
          %p207 = pneg %p130
        $region34: #{gru_module_forward.3} parent=19 // pred_check_branch
          %209 = sbr.rel (%p207) target = $region36
        $region35: #{gru_module_forward.3} parent=19 // pred_region
          %p210 = scmp.lt.s32.totalorder %s11, 1
          %s211 = scalar_select %p210, %s11, 1
          %s212 = smul.addr %s211, 3
          %s213 = scalar_lea.vmem %s4, %s212
        $region36: #{gru_module_forward.3} parent=19 // pred_fallthru
          _
      $region20: #{gru_module_forward.3} parent=5 // pred_fallthru
        _
      %p214 = scmp.le.s32.totalorder 1, %s11
      %p215 = scmp.lt.s32.totalorder %s11, 3
      %p216 = pnand %p214, %p215
      %p217 = pneg %p216
      // Predicated region
      $region37: #{gru_module_forward.3} parent=5 // pred_check
        _
      $region38: #{gru_module_forward.3} parent=5 // pred_check_branch
        %219 = sbr.rel (%p216) target = $region40
      $region39: #{gru_module_forward.3} parent=5 // pred_region
        %s220 = ssub.s32 %s11, 1
        %p221 = pneg %p32
        %p222 = pneg %p29
        %p223 = scmp.lt.s32.totalorder %s16, 1
        %s224 = scalar_select %p223, %s16, 1
        %s225 = smul.addr %s224, 48
        %s226 = smul.addr %s225, 8
        %s227 = scalar_lea.vmem %s1, %s226
        %p228 = pneg %p58
        %p229 = pneg %p55
        %p230 = scmp.lt.s32.totalorder %s16, 1
        %s231 = scalar_select %p230, %s16, 1
        %s232 = smul.addr %s231, 48
        %s233 = smul.addr %s232, 8
        %s234 = scalar_lea.vmem %s2, %s233
        %p235 = pneg %p84
        %p236 = pneg %p81
        %p237 = scmp.lt.s32.totalorder %s16, 1
        %s238 = scalar_select %p237, %s16, 1
        %s239 = smul.addr %s238, 3
        %s240 = scalar_lea.vmem %s3, %s239
        %p241 = pneg %p110
        %p242 = pneg %p107
        %p243 = scmp.lt.s32.totalorder %s16, 1
        %s244 = scalar_select %p243, %s16, 1
        %s245 = smul.addr %s244, 3
        %s246 = scalar_lea.vmem %s4, %s245
        %p247 = pneg %p136
        %p248 = pneg %p133
        %p249 = pneg %p162
        %p250 = pneg %p159
        %s251 = sand.u32 %s149, 1
        %s252 = sand.u32 %s149, 1
        %s253 = smul.addr %s252, 64
        %s254 = scalar_lea.vmem [#allocation4], %s253
        %p255 = scmp.lt.s32.totalorder %s16, 1
        %s256 = scalar_select %p255, %s16, 1
        %s257 = smul.addr %s256, 48
        %s258 = smul.addr %s257, 8
        %s259 = scalar_lea.vmem %s1, %s258
        %p260 = scmp.lt.s32.totalorder %s16, 1
        %s261 = scalar_select %p260, %s16, 1
        %s262 = smul.addr %s261, 48
        %s263 = smul.addr %s262, 8
        %s264 = scalar_lea.vmem %s2, %s263
        %p265 = scmp.lt.s32.totalorder %s16, 1
        %s266 = scalar_select %p265, %s16, 1
        %s267 = smul.addr %s266, 3
        %s268 = scalar_lea.vmem %s3, %s267
        %p269 = scmp.lt.s32.totalorder %s16, 1
        %s270 = scalar_select %p269, %s16, 1
        %s271 = smul.addr %s270, 3
        %s272 = scalar_lea.vmem %s4, %s271
        %v273 = vld [vmem:[%s0] sm:$0xff]
        %v274 = vld [vmem:[%s0 + $0x8] sm:$0xff]
        %v275 = vld [vmem:[%s0 + $0x10] sm:$0xff]
        %v276 = vld [vmem:[%s0 + $0x18] sm:$0xff]
        %v277 = vld [vmem:[%s0 + $0x20] sm:$0xff]
        %v278 = vld [vmem:[%s0 + $0x28] sm:$0xff]
        %v279 = vld [vmem:[%s0 + $0x30] sm:$0xff]
        %v280 = vld [vmem:[%s0 + $0x38] sm:$0xff]
        %v281 = vld [vmem:[%s259] sm:$0xff]
        %v282 = vld [vmem:[%s259 + $0x8] sm:$0xff]
        %v283 = vld [vmem:[%s259 + $0x10] sm:$0xff]
        %v284 = vld [vmem:[%s259 + $0x18] sm:$0xff]
        %v285 = vld [vmem:[%s259 + $0x20] sm:$0xff]
        %v286 = vld [vmem:[%s259 + $0x28] sm:$0xff]
        %v287 = vld [vmem:[%s259 + $0x30] sm:$0xff]
        %v288 = vld [vmem:[%s259 + $0x38] sm:$0xff]
        %v289 = vld [vmem:[%s259 + $0x40] sm:$0xff]
        %v290 = vld [vmem:[%s259 + $0x48] sm:$0xff]
        %v291 = vld [vmem:[%s259 + $0x50] sm:$0xff]
        %v292 = vld [vmem:[%s259 + $0x58] sm:$0xff]
        %v293 = vld [vmem:[%s259 + $0x60] sm:$0xff]
        %v294 = vld [vmem:[%s259 + $0x68] sm:$0xff]
        %v295 = vld [vmem:[%s259 + $0x70] sm:$0xff]
        %v296 = vld [vmem:[%s259 + $0x78] sm:$0xff]
        %v297 = vld [vmem:[%s259 + $0x80] sm:$0xff]
        %v298 = vld [vmem:[%s259 + $0x88] sm:$0xff]
        %v299 = vld [vmem:[%s259 + $0x90] sm:$0xff]
        %v300 = vld [vmem:[%s259 + $0x98] sm:$0xff]
        %v301 = vld [vmem:[%s259 + $0xa0] sm:$0xff]
        %v302 = vld [vmem:[%s259 + $0xa8] sm:$0xff]
        %v303 = vld [vmem:[%s259 + $0xb0] sm:$0xff]
        %v304 = vld [vmem:[%s259 + $0xb8] sm:$0xff]
        %v305 = vld [vmem:[%s259 + $0xc0] sm:$0xff]
        %v306 = vld [vmem:[%s259 + $0xc8] sm:$0xff]
        %v307 = vld [vmem:[%s259 + $0xd0] sm:$0xff]
        %v308 = vld [vmem:[%s259 + $0xd8] sm:$0xff]
        %v309 = vld [vmem:[%s259 + $0xe0] sm:$0xff]
        %v310 = vld [vmem:[%s259 + $0xe8] sm:$0xff]
        %v311 = vld [vmem:[%s259 + $0xf0] sm:$0xff]
        %v312 = vld [vmem:[%s259 + $0xf8] sm:$0xff]
        %v313 = vld [vmem:[%s259 + $0x100] sm:$0xff]
        %v314 = vld [vmem:[%s259 + $0x108] sm:$0xff]
        %v315 = vld [vmem:[%s259 + $0x110] sm:$0xff]
        %v316 = vld [vmem:[%s259 + $0x118] sm:$0xff]
        %v317 = vld [vmem:[%s259 + $0x120] sm:$0xff]
        %v318 = vld [vmem:[%s259 + $0x128] sm:$0xff]
        %v319 = vld [vmem:[%s259 + $0x130] sm:$0xff]
        %v320 = vld [vmem:[%s259 + $0x138] sm:$0xff]
        %v321 = vld [vmem:[%s259 + $0x140] sm:$0xff]
        %v322 = vld [vmem:[%s259 + $0x148] sm:$0xff]
        %v323 = vld [vmem:[%s259 + $0x150] sm:$0xff]
        %v324 = vld [vmem:[%s259 + $0x158] sm:$0xff]
        %v325 = vld [vmem:[%s259 + $0x160] sm:$0xff]
        %v326 = vld [vmem:[%s259 + $0x168] sm:$0xff]
        %v327 = vld [vmem:[%s259 + $0x170] sm:$0xff]
        %v328 = vld [vmem:[%s259 + $0x178] sm:$0xff]
        %v329 = vld [vmem:[%s268] sm:$0x7]
        %v331 = vlaneseq
        %v332 = vshrl.u32 %v331, 7
        %v333 = vsub.s32 0, %v332
        %v334 = vrot.slane %v329, %v333
        %v335 = vlaneseq
        %v336 = vshrl.u32 %v335, 7
        %v337 = vsub.s32 1, %v336
        %v338 = vrot.slane %v329, %v337
        %v339 = vlaneseq
        %v340 = vshrl.u32 %v339, 7
        %v341 = vsub.s32 2, %v340
        %v342 = vrot.slane %v329, %v341
        %346 = vmatprep.subr.mxu0 %v282
        %347 = vmatpush1.msra.mxu0 %v281
        %348 = vmatprep.subr.mxu0 %v285
        %349 = vmatpush1.msra.mxu0 %v284
        %350 = vmatprep.subr.mxu0 %v288
        %351 = vmatpush1.msra.mxu0 %v287
        %352 = vmatprep.subr.mxu0 %v291
        %353 = vmatpush1.msra.mxu0 %v290
        %354 = vmatprep.subr.mxu0 %v294
        %355 = vmatpush1.msra.mxu0 %v293
        %356 = vmatprep.subr.mxu0 %v297
        %357 = vmatpush1.msra.mxu0 %v296
        %358 = vmatprep.subr.mxu0 %v300
        %359 = vmatpush1.msra.mxu0 %v299
        %360 = vmatprep.subr.mxu0 %v303
        %361 = vmatpush1.msra.mxu0 %v302
        %362 = vmatprep.subr.mxu0 %v306
        %363 = vmatpush1.msra.mxu0 %v305
        %364 = vmatprep.subr.mxu0 %v309
        %365 = vmatpush1.msra.mxu0 %v308
        %366 = vmatprep.subr.mxu0 %v312
        %367 = vmatpush1.msra.mxu0 %v311
        %368 = vmatprep.subr.mxu0 %v315
        %369 = vmatpush1.msra.mxu0 %v314
        %370 = vmatprep.subr.mxu0 %v318
        %371 = vmatpush1.msra.mxu0 %v317
        %372 = vmatprep.subr.mxu0 %v321
        %373 = vmatpush1.msra.mxu0 %v320
        %374 = vmatprep.subr.mxu0 %v324
        %375 = vmatpush1.msra.mxu0 %v323
        %376 = vmatprep.subr.mxu0 %v327
        %377 = vmatpush1.msra.mxu0 %v326
        %378 = vmatprep.subr.mxu0 0.0
        %379 = vmatpush1.msra.mxu0 0.0
        %380 = vmatprep.subr.mxu0 0.0
        %381 = vmatpush1.msra.mxu0 0.0
        %382 = vmatprep.subr.mxu0 0.0
        %383 = vmatpush1.msra.mxu0 0.0
        %384 = vmatprep.subr.mxu0 0.0
        %385 = vmatpush1.msra.mxu0 0.0
        %386 = vmatprep.subr.mxu0 0.0
        %387 = vmatpush1.msra.mxu0 0.0
        %388 = vmatprep.subr.mxu0 0.0
        %389 = vmatpush1.msra.mxu0 0.0
        %390 = vmatprep.subr.mxu0 0.0
        %391 = vmatpush1.msra.mxu0 0.0
        %392 = vmatprep.subr.mxu0 0.0
        %393 = vmatpush1.msra.mxu0 0.0
        %394 = vmatprep.subr.mxu0 0.0
        %395 = vmatpush1.msra.mxu0 0.0
        %396 = vmatprep.subr.mxu0 0.0
        %397 = vmatpush1.msra.mxu0 0.0
        %398 = vmatprep.subr.mxu0 0.0
        %399 = vmatpush1.msra.mxu0 0.0
        %400 = vmatprep.subr.mxu0 0.0
        %401 = vmatpush1.msra.mxu0 0.0
        %402 = vmatprep.subr.mxu0 0.0
        %403 = vmatpush1.msra.mxu0 0.0
        %404 = vmatprep.subr.mxu0 0.0
        %405 = vmatpush1.msra.mxu0 0.0
        %406 = vmatprep.subr.mxu0 0.0
        %407 = vmatpush1.msra.mxu0 0.0
        %408 = vmatprep.subr.mxu0 0.0
        %409 = vmatpush1.msra.mxu0 0.0
        %410 = vmatprep.mubr.f32.mxu0 0.0
        %411 = vmatmul.mubr.f32.gmra.mrb[0].mxu0 %v273
        %v412 = vpop.f32.mrb[0].mxu0
        %v413 = vadd.f32 %v334, %v412
        %v414 = vpop.f32.mrb[0].mxu0
        %v415 = vadd.f32 %v338, %v414
        %416 = vmatprep.mubr.f32.mxu0 0.0
        %417 = vmatmul.mubr.f32.gmra.mrb[0].mxu0 %v274
        %v418 = vpop.f32.mrb[0].mxu0
        %v419 = vadd.f32 %v334, %v418
        %v420 = vpop.f32.mrb[0].mxu0
        %v421 = vadd.f32 %v338, %v420
        %422 = vmatprep.mubr.f32.mxu0 0.0
        %423 = vmatmul.mubr.f32.gmra.mrb[0].mxu0 %v275
        %v424 = vpop.f32.mrb[0].mxu0
        %v425 = vadd.f32 %v334, %v424
        %v426 = vpop.f32.mrb[0].mxu0
        %v427 = vadd.f32 %v338, %v426
        %428 = vmatprep.mubr.f32.mxu0 0.0
        %429 = vmatmul.mubr.f32.gmra.mrb[0].mxu0 %v276
        %v430 = vpop.f32.mrb[0].mxu0
        %v431 = vadd.f32 %v334, %v430
        %v432 = vpop.f32.mrb[0].mxu0
        %v433 = vadd.f32 %v338, %v432
        %434 = vmatprep.mubr.f32.mxu0 0.0
        %435 = vmatmul.mubr.f32.gmra.mrb[0].mxu0 %v277
        %v436 = vpop.f32.mrb[0].mxu0
        %v437 = vadd.f32 %v334, %v436
        %v438 = vpop.f32.mrb[0].mxu0
        %v439 = vadd.f32 %v338, %v438
        %440 = vmatprep.mubr.f32.mxu0 0.0
        %441 = vmatmul.mubr.f32.gmra.mrb[0].mxu0 %v278
        %v442 = vpop.f32.mrb[0].mxu0
        %v443 = vadd.f32 %v334, %v442
        %v444 = vpop.f32.mrb[0].mxu0
        %v445 = vadd.f32 %v338, %v444
        %446 = vmatprep.mubr.f32.mxu0 0.0
        %447 = vmatmul.mubr.f32.gmra.mrb[0].mxu0 %v279
        %v448 = vpop.f32.mrb[0].mxu0
        %v449 = vadd.f32 %v334, %v448
        %v450 = vpop.f32.mrb[0].mxu0
        %v451 = vadd.f32 %v338, %v450
        %452 = vmatprep.mubr.f32.mxu0 0.0
        %453 = vmatmul.mubr.f32.gmra.mrb[0].mxu0 %v280
        %v454 = vpop.f32.mrb[0].mxu0
        %v455 = vadd.f32 %v334, %v454
        %v456 = vpop.f32.mrb[0].mxu0
        %v457 = vadd.f32 %v338, %v456
        %458 = vdwg.mxu0
        %459 = vmatprep.subr.mxu0 0.0
        %460 = vmatpush1.msra.mxu0 %v283
        %461 = vmatprep.subr.mxu0 0.0
        %462 = vmatpush1.msra.mxu0 %v286
        %463 = vmatprep.subr.mxu0 0.0
        %464 = vmatpush1.msra.mxu0 %v289
        %465 = vmatprep.subr.mxu0 0.0
        %466 = vmatpush1.msra.mxu0 %v292
        %467 = vmatprep.subr.mxu0 0.0
        %468 = vmatpush1.msra.mxu0 %v295
        %469 = vmatprep.subr.mxu0 0.0
        %470 = vmatpush1.msra.mxu0 %v298
        %471 = vmatprep.subr.mxu0 0.0
        %472 = vmatpush1.msra.mxu0 %v301
        %473 = vmatprep.subr.mxu0 0.0
        %474 = vmatpush1.msra.mxu0 %v304
        %475 = vmatprep.subr.mxu0 0.0
        %476 = vmatpush1.msra.mxu0 %v307
        %477 = vmatprep.subr.mxu0 0.0
        %478 = vmatpush1.msra.mxu0 %v310
        %479 = vmatprep.subr.mxu0 0.0
        %480 = vmatpush1.msra.mxu0 %v313
        %481 = vmatprep.subr.mxu0 0.0
        %482 = vmatpush1.msra.mxu0 %v316
        %483 = vmatprep.subr.mxu0 0.0
        %484 = vmatpush1.msra.mxu0 %v319
        %485 = vmatprep.subr.mxu0 0.0
        %486 = vmatpush1.msra.mxu0 %v322
        %487 = vmatprep.subr.mxu0 0.0
        %488 = vmatpush1.msra.mxu0 %v325
        %489 = vmatprep.subr.mxu0 0.0
        %490 = vmatpush1.msra.mxu0 %v328
        %491 = vmatprep.subr.mxu0 0.0
        %492 = vmatpush1.msra.mxu0 0.0
        %493 = vmatprep.subr.mxu0 0.0
        %494 = vmatpush1.msra.mxu0 0.0
        %495 = vmatprep.subr.mxu0 0.0
        %496 = vmatpush1.msra.mxu0 0.0
        %497 = vmatprep.subr.mxu0 0.0
        %498 = vmatpush1.msra.mxu0 0.0
        %499 = vmatprep.subr.mxu0 0.0
        %500 = vmatpush1.msra.mxu0 0.0
        %501 = vmatprep.subr.mxu0 0.0
        %502 = vmatpush1.msra.mxu0 0.0
        %503 = vmatprep.subr.mxu0 0.0
        %504 = vmatpush1.msra.mxu0 0.0
        %505 = vmatprep.subr.mxu0 0.0
        %506 = vmatpush1.msra.mxu0 0.0
        %507 = vmatprep.subr.mxu0 0.0
        %508 = vmatpush1.msra.mxu0 0.0
        %509 = vmatprep.subr.mxu0 0.0
        %510 = vmatpush1.msra.mxu0 0.0
        %511 = vmatprep.subr.mxu0 0.0
        %512 = vmatpush1.msra.mxu0 0.0
        %513 = vmatprep.subr.mxu0 0.0
        %514 = vmatpush1.msra.mxu0 0.0
        %515 = vmatprep.subr.mxu0 0.0
        %516 = vmatpush1.msra.mxu0 0.0
        %517 = vmatprep.subr.mxu0 0.0
        %518 = vmatpush1.msra.mxu0 0.0
        %519 = vmatprep.subr.mxu0 0.0
        %520 = vmatpush1.msra.mxu0 0.0
        %521 = vmatprep.subr.mxu0 0.0
        %522 = vmatpush1.msra.mxu0 0.0
        %523 = vmatprep.mubr.f32.mxu0 0.0
        %524 = vmatmul.mubr.f32.gmra.mrb[0].mxu0 %v273
        %v525 = vpop.f32.mrb[0].mxu0
        %v526 = vadd.f32 %v342, %v525
        %v527 = vpop.f32.mrb[0].mxu0
        %528 = vmatprep.mubr.f32.mxu0 0.0
        %529 = vmatmul.mubr.f32.gmra.mrb[0].mxu0 %v274
        %v530 = vpop.f32.mrb[0].mxu0
        %v531 = vadd.f32 %v342, %v530
        %v532 = vpop.f32.mrb[0].mxu0
        %533 = vmatprep.mubr.f32.mxu0 0.0
        %534 = vmatmul.mubr.f32.gmra.mrb[0].mxu0 %v275
        %v535 = vpop.f32.mrb[0].mxu0
        %v536 = vadd.f32 %v342, %v535
        %v537 = vpop.f32.mrb[0].mxu0
        %538 = vmatprep.mubr.f32.mxu0 0.0
        %539 = vmatmul.mubr.f32.gmra.mrb[0].mxu0 %v276
        %v540 = vpop.f32.mrb[0].mxu0
        %v541 = vadd.f32 %v342, %v540
        %v542 = vpop.f32.mrb[0].mxu0
        %543 = vmatprep.mubr.f32.mxu0 0.0
        %544 = vmatmul.mubr.f32.gmra.mrb[0].mxu0 %v277
        %v545 = vpop.f32.mrb[0].mxu0
        %v546 = vadd.f32 %v342, %v545
        %v547 = vpop.f32.mrb[0].mxu0
        %548 = vmatprep.mubr.f32.mxu0 0.0
        %549 = vmatmul.mubr.f32.gmra.mrb[0].mxu0 %v278
        %v550 = vpop.f32.mrb[0].mxu0
        %v551 = vadd.f32 %v342, %v550
        %v552 = vpop.f32.mrb[0].mxu0
        %553 = vmatprep.mubr.f32.mxu0 0.0
        %554 = vmatmul.mubr.f32.gmra.mrb[0].mxu0 %v279
        %v555 = vpop.f32.mrb[0].mxu0
        %v556 = vadd.f32 %v342, %v555
        %v557 = vpop.f32.mrb[0].mxu0
        %558 = vmatprep.mubr.f32.mxu0 0.0
        %559 = vmatmul.mubr.f32.gmra.mrb[0].mxu0 %v280
        %v560 = vpop.f32.mrb[0].mxu0
        %v561 = vadd.f32 %v342, %v560
        %v562 = vpop.f32.mrb[0].mxu0
        %563 = vdwg.mxu0
        %564 = vst [vmem:[#allocation2] sm:$0xff] %v413
        %565 = vst [vmem:[#allocation2 + $0x8] sm:$0xff] %v415
        %566 = vst [vmem:[#allocation2 + $0x10] sm:$0xff] %v526
        %567 = vst [vmem:[#allocation2 + $0x18] sm:$0xff] %v419
        %568 = vst [vmem:[#allocation2 + $0x20] sm:$0xff] %v421
        %569 = vst [vmem:[#allocation2 + $0x28] sm:$0xff] %v531
        %570 = vst [vmem:[#allocation2 + $0x30] sm:$0xff] %v425
        %571 = vst [vmem:[#allocation2 + $0x38] sm:$0xff] %v427
        %572 = vst [vmem:[#allocation2 + $0x40] sm:$0xff] %v536
        %573 = vst [vmem:[#allocation2 + $0x48] sm:$0xff] %v431
        %574 = vst [vmem:[#allocation2 + $0x50] sm:$0xff] %v433
        %575 = vst [vmem:[#allocation2 + $0x58] sm:$0xff] %v541
        %576 = vst [vmem:[#allocation2 + $0x60] sm:$0xff] %v437
        %577 = vst [vmem:[#allocation2 + $0x68] sm:$0xff] %v439
        %578 = vst [vmem:[#allocation2 + $0x70] sm:$0xff] %v546
        %579 = vst [vmem:[#allocation2 + $0x78] sm:$0xff] %v443
        %580 = vst [vmem:[#allocation2 + $0x80] sm:$0xff] %v445
        %581 = vst [vmem:[#allocation2 + $0x88] sm:$0xff] %v551
        %582 = vst [vmem:[#allocation2 + $0x90] sm:$0xff] %v449
        %583 = vst [vmem:[#allocation2 + $0x98] sm:$0xff] %v451
        %584 = vst [vmem:[#allocation2 + $0xa0] sm:$0xff] %v556
        %585 = vst [vmem:[#allocation2 + $0xa8] sm:$0xff] %v455
        %586 = vst [vmem:[#allocation2 + $0xb0] sm:$0xff] %v457
        %587 = vst [vmem:[#allocation2 + $0xb8] sm:$0xff] %v561
        %588 = vst [vmem:[#allocation3] sm:$0xff] 0.0
        %v589 = vld [vmem:[%s264] sm:$0xff]
        %v590 = vld [vmem:[%s264 + $0x8] sm:$0xff]
        %v591 = vld [vmem:[%s264 + $0x10] sm:$0xff]
        %v592 = vld [vmem:[%s264 + $0x18] sm:$0xff]
        %v593 = vld [vmem:[%s264 + $0x20] sm:$0xff]
        %v594 = vld [vmem:[%s264 + $0x28] sm:$0xff]
        %v595 = vld [vmem:[%s264 + $0x30] sm:$0xff]
        %v596 = vld [vmem:[%s264 + $0x38] sm:$0xff]
        %v597 = vld [vmem:[%s264 + $0x40] sm:$0xff]
        %v598 = vld [vmem:[%s264 + $0x48] sm:$0xff]
        %v599 = vld [vmem:[%s264 + $0x50] sm:$0xff]
        %v600 = vld [vmem:[%s264 + $0x58] sm:$0xff]
        %v601 = vld [vmem:[%s264 + $0x60] sm:$0xff]
        %v602 = vld [vmem:[%s264 + $0x68] sm:$0xff]
        %v603 = vld [vmem:[%s264 + $0x70] sm:$0xff]
        %v604 = vld [vmem:[%s264 + $0x78] sm:$0xff]
        %v605 = vld [vmem:[%s264 + $0x80] sm:$0xff]
        %v606 = vld [vmem:[%s264 + $0x88] sm:$0xff]
        %v607 = vld [vmem:[%s264 + $0x90] sm:$0xff]
        %v608 = vld [vmem:[%s264 + $0x98] sm:$0xff]
        %v609 = vld [vmem:[%s264 + $0xa0] sm:$0xff]
        %v610 = vld [vmem:[%s264 + $0xa8] sm:$0xff]
        %v611 = vld [vmem:[%s264 + $0xb0] sm:$0xff]
        %v612 = vld [vmem:[%s264 + $0xb8] sm:$0xff]
        %v613 = vld [vmem:[%s264 + $0xc0] sm:$0xff]
        %v614 = vld [vmem:[%s264 + $0xc8] sm:$0xff]
        %v615 = vld [vmem:[%s264 + $0xd0] sm:$0xff]
        %v616 = vld [vmem:[%s264 + $0xd8] sm:$0xff]
        %v617 = vld [vmem:[%s264 + $0xe0] sm:$0xff]
        %v618 = vld [vmem:[%s264 + $0xe8] sm:$0xff]
        %v619 = vld [vmem:[%s264 + $0xf0] sm:$0xff]
        %v620 = vld [vmem:[%s264 + $0xf8] sm:$0xff]
        %v621 = vld [vmem:[%s264 + $0x100] sm:$0xff]
        %v622 = vld [vmem:[%s264 + $0x108] sm:$0xff]
        %v623 = vld [vmem:[%s264 + $0x110] sm:$0xff]
        %v624 = vld [vmem:[%s264 + $0x118] sm:$0xff]
        %v625 = vld [vmem:[%s264 + $0x120] sm:$0xff]
        %v626 = vld [vmem:[%s264 + $0x128] sm:$0xff]
        %v627 = vld [vmem:[%s264 + $0x130] sm:$0xff]
        %v628 = vld [vmem:[%s264 + $0x138] sm:$0xff]
        %v629 = vld [vmem:[%s264 + $0x140] sm:$0xff]
        %v630 = vld [vmem:[%s264 + $0x148] sm:$0xff]
        %v631 = vld [vmem:[%s264 + $0x150] sm:$0xff]
        %v632 = vld [vmem:[%s264 + $0x158] sm:$0xff]
        %v633 = vld [vmem:[%s264 + $0x160] sm:$0xff]
        %v634 = vld [vmem:[%s264 + $0x168] sm:$0xff]
        %v635 = vld [vmem:[%s264 + $0x170] sm:$0xff]
        %v636 = vld [vmem:[%s264 + $0x178] sm:$0xff]
        %v637 = vld [vmem:[%s272] sm:$0x7]
        %p638 = scmp.eq.s32.totalorder %s16, 0
        %s639 = scalar_select %p638, 0, 7
        %s640 = smul.u32 %s639, 8
        %s641 = sshra.s32 %s640, 3
        %s642 = sand.u32 %s640, 7
        %s643 = smul.u32 %s641, 3
        %s644 = smul.addr %s643, 8
        %s645 = scalar_lea.vmem [#allocation2], %s644
        %v646 = vld [vmem:[%s645] sm:$0xff]
        %v647 = vld [vmem:[%s645 + $0x8] sm:$0xff]
        %v648 = vld [vmem:[%s645 + $0x10] sm:$0xff]
        %v649 = vld [vmem:[#allocation3] sm:$0xff]
        %v651 = vlaneseq
        %v652 = vshrl.u32 %v651, 7
        %v653 = vsub.s32 0, %v652
        %v654 = vrot.slane %v637, %v653
        %v655 = vlaneseq
        %v656 = vshrl.u32 %v655, 7
        %v657 = vsub.s32 1, %v656
        %v658 = vrot.slane %v637, %v657
        %v659 = vlaneseq
        %v660 = vshrl.u32 %v659, 7
        %v661 = vsub.s32 2, %v660
        %v662 = vrot.slane %v637, %v661
        %666 = vmatprep.subr.mxu0 %v590
        %667 = vmatpush1.msra.mxu0 %v589
        %668 = vmatprep.subr.mxu0 %v593
        %669 = vmatpush1.msra.mxu0 %v592
        %670 = vmatprep.subr.mxu0 %v596
        %671 = vmatpush1.msra.mxu0 %v595
        %672 = vmatprep.subr.mxu0 %v599
        %673 = vmatpush1.msra.mxu0 %v598
        %674 = vmatprep.subr.mxu0 %v602
        %675 = vmatpush1.msra.mxu0 %v601
        %676 = vmatprep.subr.mxu0 %v605
        %677 = vmatpush1.msra.mxu0 %v604
        %678 = vmatprep.subr.mxu0 %v608
        %679 = vmatpush1.msra.mxu0 %v607
        %680 = vmatprep.subr.mxu0 %v611
        %681 = vmatpush1.msra.mxu0 %v610
        %682 = vmatprep.subr.mxu0 %v614
        %683 = vmatpush1.msra.mxu0 %v613
        %684 = vmatprep.subr.mxu0 %v617
        %685 = vmatpush1.msra.mxu0 %v616
        %686 = vmatprep.subr.mxu0 %v620
        %687 = vmatpush1.msra.mxu0 %v619
        %688 = vmatprep.subr.mxu0 %v623
        %689 = vmatpush1.msra.mxu0 %v622
        %690 = vmatprep.subr.mxu0 %v626
        %691 = vmatpush1.msra.mxu0 %v625
        %692 = vmatprep.subr.mxu0 %v629
        %693 = vmatpush1.msra.mxu0 %v628
        %694 = vmatprep.subr.mxu0 %v632
        %695 = vmatpush1.msra.mxu0 %v631
        %696 = vmatprep.subr.mxu0 %v635
        %697 = vmatpush1.msra.mxu0 %v634
        %698 = vmatprep.subr.mxu0 0.0
        %699 = vmatpush1.msra.mxu0 0.0
        %700 = vmatprep.subr.mxu0 0.0
        %701 = vmatpush1.msra.mxu0 0.0
        %702 = vmatprep.subr.mxu0 0.0
        %703 = vmatpush1.msra.mxu0 0.0
        %704 = vmatprep.subr.mxu0 0.0
        %705 = vmatpush1.msra.mxu0 0.0
        %706 = vmatprep.subr.mxu0 0.0
        %707 = vmatpush1.msra.mxu0 0.0
        %708 = vmatprep.subr.mxu0 0.0
        %709 = vmatpush1.msra.mxu0 0.0
        %710 = vmatprep.subr.mxu0 0.0
        %711 = vmatpush1.msra.mxu0 0.0
        %712 = vmatprep.subr.mxu0 0.0
        %713 = vmatpush1.msra.mxu0 0.0
        %714 = vmatprep.subr.mxu0 0.0
        %715 = vmatpush1.msra.mxu0 0.0
        %716 = vmatprep.subr.mxu0 0.0
        %717 = vmatpush1.msra.mxu0 0.0
        %718 = vmatprep.subr.mxu0 0.0
        %719 = vmatpush1.msra.mxu0 0.0
        %720 = vmatprep.subr.mxu0 0.0
        %721 = vmatpush1.msra.mxu0 0.0
        %722 = vmatprep.subr.mxu0 0.0
        %723 = vmatpush1.msra.mxu0 0.0
        %724 = vmatprep.subr.mxu0 0.0
        %725 = vmatpush1.msra.mxu0 0.0
        %726 = vmatprep.subr.mxu0 0.0
        %727 = vmatpush1.msra.mxu0 0.0
        %728 = vmatprep.subr.mxu0 0.0
        %729 = vmatpush1.msra.mxu0 0.0
        %730 = vmatprep.mubr.f32.mxu0 0.0
        %731 = vmatmul.mubr.f32.gmra.mrb[0].mxu0 %v649
        %v732 = vpop.f32.mrb[0].mxu0
        %v733 = vadd.f32 %v654, %v732
        %v734 = vpop.f32.mrb[0].mxu0
        %v735 = vadd.f32 %v658, %v734
        %736 = vdwg.mxu0
        %737 = vmatprep.subr.mxu0 0.0
        %738 = vmatpush1.msra.mxu0 %v591
        %739 = vmatprep.subr.mxu0 0.0
        %740 = vmatpush1.msra.mxu0 %v594
        %741 = vmatprep.subr.mxu0 0.0
        %742 = vmatpush1.msra.mxu0 %v597
        %743 = vmatprep.subr.mxu0 0.0
        %744 = vmatpush1.msra.mxu0 %v600
        %745 = vmatprep.subr.mxu0 0.0
        %746 = vmatpush1.msra.mxu0 %v603
        %747 = vmatprep.subr.mxu0 0.0
        %748 = vmatpush1.msra.mxu0 %v606
        %749 = vmatprep.subr.mxu0 0.0
        %750 = vmatpush1.msra.mxu0 %v609
        %751 = vmatprep.subr.mxu0 0.0
        %752 = vmatpush1.msra.mxu0 %v612
        %753 = vmatprep.subr.mxu0 0.0
        %754 = vmatpush1.msra.mxu0 %v615
        %755 = vmatprep.subr.mxu0 0.0
        %756 = vmatpush1.msra.mxu0 %v618
        %757 = vmatprep.subr.mxu0 0.0
        %758 = vmatpush1.msra.mxu0 %v621
        %759 = vmatprep.subr.mxu0 0.0
        %760 = vmatpush1.msra.mxu0 %v624
        %761 = vmatprep.subr.mxu0 0.0
        %762 = vmatpush1.msra.mxu0 %v627
        %763 = vmatprep.subr.mxu0 0.0
        %764 = vmatpush1.msra.mxu0 %v630
        %765 = vmatprep.subr.mxu0 0.0
        %766 = vmatpush1.msra.mxu0 %v633
        %767 = vmatprep.subr.mxu0 0.0
        %768 = vmatpush1.msra.mxu0 %v636
        %769 = vmatprep.subr.mxu0 0.0
        %770 = vmatpush1.msra.mxu0 0.0
        %771 = vmatprep.subr.mxu0 0.0
        %772 = vmatpush1.msra.mxu0 0.0
        %773 = vmatprep.subr.mxu0 0.0
        %774 = vmatpush1.msra.mxu0 0.0
        %775 = vmatprep.subr.mxu0 0.0
        %776 = vmatpush1.msra.mxu0 0.0
        %777 = vmatprep.subr.mxu0 0.0
        %778 = vmatpush1.msra.mxu0 0.0
        %779 = vmatprep.subr.mxu0 0.0
        %780 = vmatpush1.msra.mxu0 0.0
        %781 = vmatprep.subr.mxu0 0.0
        %782 = vmatpush1.msra.mxu0 0.0
        %783 = vmatprep.subr.mxu0 0.0
        %784 = vmatpush1.msra.mxu0 0.0
        %785 = vmatprep.subr.mxu0 0.0
        %786 = vmatpush1.msra.mxu0 0.0
        %787 = vmatprep.subr.mxu0 0.0
        %788 = vmatpush1.msra.mxu0 0.0
        %789 = vmatprep.subr.mxu0 0.0
        %790 = vmatpush1.msra.mxu0 0.0
        %791 = vmatprep.subr.mxu0 0.0
        %792 = vmatpush1.msra.mxu0 0.0
        %793 = vmatprep.subr.mxu0 0.0
        %794 = vmatpush1.msra.mxu0 0.0
        %795 = vmatprep.subr.mxu0 0.0
        %796 = vmatpush1.msra.mxu0 0.0
        %797 = vmatprep.subr.mxu0 0.0
        %798 = vmatpush1.msra.mxu0 0.0
        %799 = vmatprep.subr.mxu0 0.0
        %800 = vmatpush1.msra.mxu0 0.0
        %801 = vmatprep.mubr.f32.mxu0 0.0
        %802 = vmatmul.mubr.f32.gmra.mrb[0].mxu0 %v649
        %v803 = vpop.f32.mrb[0].mxu0
        %v804 = vadd.f32 %v662, %v803
        %v805 = vpop.f32.mrb[0].mxu0
        %806 = vdwg.mxu0
        %v807 = vadd.f32 %v646, %v733
        %v808 = vxor.u32 %v807, 2147483648
        %v809 = vmul.f32 %v808, 1.442695
        %v810 = vpow.pop %v809
        %v811 = vadd.f32 %v810, 1.0
        %v812 = vrcp.pop %v811
        %v813 = vmul.f32 1.0, %v812
        %v814 = vadd.f32 %v647, %v735
        %v815 = vxor.u32 %v814, 2147483648
        %v816 = vmul.f32 %v815, 1.442695
        %v817 = vpow.pop %v816
        %v818 = vadd.f32 %v817, 1.0
        %v819 = vrcp.pop %v818
        %v820 = vmul.f32 1.0, %v819
        %v821 = vmul.f32 %v813, %v804
        %v822 = vadd.f32 %v648, %v821
        %v823 = vtanh.pop %v822
        %v824 = vsub.f32 1.0, %v820
        %v825 = vmul.f32 %v824, %v823
        %v826 = vmul.f32 %v820, %v649
        %v827 = vadd.f32 %v825, %v826
        %828 = vst [vmem:[#allocation3] sm:$0xff] %v827
        %s829 = scalar_lea.vmem %s254, %s640 [#allocation4]
        %830 = vst [vmem:[%s829] sm:$0xff] %v827
        %s831 = scalar_select %p638, 1, 6
        %s832 = smul.u32 %s831, 8
        %s833 = sshra.s32 %s832, 3
        %s834 = sand.u32 %s832, 7
        %s835 = smul.u32 %s833, 3
        %s836 = smul.addr %s835, 8
        %s837 = scalar_lea.vmem [#allocation2], %s836
        %v838 = vld [vmem:[%s837] sm:$0xff]
        %v839 = vld [vmem:[%s837 + $0x8] sm:$0xff]
        %v840 = vld [vmem:[%s837 + $0x10] sm:$0xff]
        %v841 = vld [vmem:[#allocation3] sm:$0xff]
        %842 = vmatprep.subr.mxu0 %v590
        %843 = vmatpush1.msra.mxu0 %v589
        %844 = vmatprep.subr.mxu0 %v593
        %845 = vmatpush1.msra.mxu0 %v592
        %846 = vmatprep.subr.mxu0 %v596
        %847 = vmatpush1.msra.mxu0 %v595
        %848 = vmatprep.subr.mxu0 %v599
        %849 = vmatpush1.msra.mxu0 %v598
        %850 = vmatprep.subr.mxu0 %v602
        %851 = vmatpush1.msra.mxu0 %v601
        %852 = vmatprep.subr.mxu0 %v605
        %853 = vmatpush1.msra.mxu0 %v604
        %854 = vmatprep.subr.mxu0 %v608
        %855 = vmatpush1.msra.mxu0 %v607
        %856 = vmatprep.subr.mxu0 %v611
        %857 = vmatpush1.msra.mxu0 %v610
        %858 = vmatprep.subr.mxu0 %v614
        %859 = vmatpush1.msra.mxu0 %v613
        %860 = vmatprep.subr.mxu0 %v617
        %861 = vmatpush1.msra.mxu0 %v616
        %862 = vmatprep.subr.mxu0 %v620
        %863 = vmatpush1.msra.mxu0 %v619
        %864 = vmatprep.subr.mxu0 %v623
        %865 = vmatpush1.msra.mxu0 %v622
        %866 = vmatprep.subr.mxu0 %v626
        %867 = vmatpush1.msra.mxu0 %v625
        %868 = vmatprep.subr.mxu0 %v629
        %869 = vmatpush1.msra.mxu0 %v628
        %870 = vmatprep.subr.mxu0 %v632
        %871 = vmatpush1.msra.mxu0 %v631
        %872 = vmatprep.subr.mxu0 %v635
        %873 = vmatpush1.msra.mxu0 %v634
        %874 = vmatprep.subr.mxu0 0.0
        %875 = vmatpush1.msra.mxu0 0.0
        %876 = vmatprep.subr.mxu0 0.0
        %877 = vmatpush1.msra.mxu0 0.0
        %878 = vmatprep.subr.mxu0 0.0
        %879 = vmatpush1.msra.mxu0 0.0
        %880 = vmatprep.subr.mxu0 0.0
        %881 = vmatpush1.msra.mxu0 0.0
        %882 = vmatprep.subr.mxu0 0.0
        %883 = vmatpush1.msra.mxu0 0.0
        %884 = vmatprep.subr.mxu0 0.0
        %885 = vmatpush1.msra.mxu0 0.0
        %886 = vmatprep.subr.mxu0 0.0
        %887 = vmatpush1.msra.mxu0 0.0
        %888 = vmatprep.subr.mxu0 0.0
        %889 = vmatpush1.msra.mxu0 0.0
        %890 = vmatprep.subr.mxu0 0.0
        %891 = vmatpush1.msra.mxu0 0.0
        %892 = vmatprep.subr.mxu0 0.0
        %893 = vmatpush1.msra.mxu0 0.0
        %894 = vmatprep.subr.mxu0 0.0
        %895 = vmatpush1.msra.mxu0 0.0
        %896 = vmatprep.subr.mxu0 0.0
        %897 = vmatpush1.msra.mxu0 0.0
        %898 = vmatprep.subr.mxu0 0.0
        %899 = vmatpush1.msra.mxu0 0.0
        %900 = vmatprep.subr.mxu0 0.0
        %901 = vmatpush1.msra.mxu0 0.0
        %902 = vmatprep.subr.mxu0 0.0
        %903 = vmatpush1.msra.mxu0 0.0
        %904 = vmatprep.subr.mxu0 0.0
        %905 = vmatpush1.msra.mxu0 0.0
        %906 = vmatprep.mubr.f32.mxu0 0.0
        %907 = vmatmul.mubr.f32.gmra.mrb[0].mxu0 %v841
        %v908 = vpop.f32.mrb[0].mxu0
        %v909 = vadd.f32 %v654, %v908
        %v910 = vpop.f32.mrb[0].mxu0
        %v911 = vadd.f32 %v658, %v910
        %912 = vdwg.mxu0
        %913 = vmatprep.subr.mxu0 0.0
        %914 = vmatpush1.msra.mxu0 %v591
        %915 = vmatprep.subr.mxu0 0.0
        %916 = vmatpush1.msra.mxu0 %v594
        %917 = vmatprep.subr.mxu0 0.0
        %918 = vmatpush1.msra.mxu0 %v597
        %919 = vmatprep.subr.mxu0 0.0
        %920 = vmatpush1.msra.mxu0 %v600
        %921 = vmatprep.subr.mxu0 0.0
        %922 = vmatpush1.msra.mxu0 %v603
        %923 = vmatprep.subr.mxu0 0.0
        %924 = vmatpush1.msra.mxu0 %v606
        %925 = vmatprep.subr.mxu0 0.0
        %926 = vmatpush1.msra.mxu0 %v609
        %927 = vmatprep.subr.mxu0 0.0
        %928 = vmatpush1.msra.mxu0 %v612
        %929 = vmatprep.subr.mxu0 0.0
        %930 = vmatpush1.msra.mxu0 %v615
        %931 = vmatprep.subr.mxu0 0.0
        %932 = vmatpush1.msra.mxu0 %v618
        %933 = vmatprep.subr.mxu0 0.0
        %934 = vmatpush1.msra.mxu0 %v621
        %935 = vmatprep.subr.mxu0 0.0
        %936 = vmatpush1.msra.mxu0 %v624
        %937 = vmatprep.subr.mxu0 0.0
        %938 = vmatpush1.msra.mxu0 %v627
        %939 = vmatprep.subr.mxu0 0.0
        %940 = vmatpush1.msra.mxu0 %v630
        %941 = vmatprep.subr.mxu0 0.0
        %942 = vmatpush1.msra.mxu0 %v633
        %943 = vmatprep.subr.mxu0 0.0
        %944 = vmatpush1.msra.mxu0 %v636
        %945 = vmatprep.subr.mxu0 0.0
        %946 = vmatpush1.msra.mxu0 0.0
        %947 = vmatprep.subr.mxu0 0.0
        %948 = vmatpush1.msra.mxu0 0.0
        %949 = vmatprep.subr.mxu0 0.0
        %950 = vmatpush1.msra.mxu0 0.0
        %951 = vmatprep.subr.mxu0 0.0
        %952 = vmatpush1.msra.mxu0 0.0
        %953 = vmatprep.subr.mxu0 0.0
        %954 = vmatpush1.msra.mxu0 0.0
        %955 = vmatprep.subr.mxu0 0.0
        %956 = vmatpush1.msra.mxu0 0.0
        %957 = vmatprep.subr.mxu0 0.0
        %958 = vmatpush1.msra.mxu0 0.0
        %959 = vmatprep.subr.mxu0 0.0
        %960 = vmatpush1.msra.mxu0 0.0
        %961 = vmatprep.subr.mxu0 0.0
        %962 = vmatpush1.msra.mxu0 0.0
        %963 = vmatprep.subr.mxu0 0.0
        %964 = vmatpush1.msra.mxu0 0.0
        %965 = vmatprep.subr.mxu0 0.0
        %966 = vmatpush1.msra.mxu0 0.0
        %967 = vmatprep.subr.mxu0 0.0
        %968 = vmatpush1.msra.mxu0 0.0
        %969 = vmatprep.subr.mxu0 0.0
        %970 = vmatpush1.msra.mxu0 0.0
        %971 = vmatprep.subr.mxu0 0.0
        %972 = vmatpush1.msra.mxu0 0.0
        %973 = vmatprep.subr.mxu0 0.0
        %974 = vmatpush1.msra.mxu0 0.0
        %975 = vmatprep.subr.mxu0 0.0
        %976 = vmatpush1.msra.mxu0 0.0
        %977 = vmatprep.mubr.f32.mxu0 0.0
        %978 = vmatmul.mubr.f32.gmra.mrb[0].mxu0 %v841
        %v979 = vpop.f32.mrb[0].mxu0
        %v980 = vadd.f32 %v662, %v979
        %v981 = vpop.f32.mrb[0].mxu0
        %982 = vdwg.mxu0
        %v983 = vadd.f32 %v838, %v909
        %v984 = vxor.u32 %v983, 2147483648
        %v985 = vmul.f32 %v984, 1.442695
        %v986 = vpow.pop %v985
        %v987 = vadd.f32 %v986, 1.0
        %v988 = vrcp.pop %v987
        %v989 = vmul.f32 1.0, %v988
        %v990 = vadd.f32 %v839, %v911
        %v991 = vxor.u32 %v990, 2147483648
        %v992 = vmul.f32 %v991, 1.442695
        %v993 = vpow.pop %v992
        %v994 = vadd.f32 %v993, 1.0
        %v995 = vrcp.pop %v994
        %v996 = vmul.f32 1.0, %v995
        %v997 = vmul.f32 %v989, %v980
        %v998 = vadd.f32 %v840, %v997
        %v999 = vtanh.pop %v998
        %v1000 = vsub.f32 1.0, %v996
        %v1001 = vmul.f32 %v1000, %v999
        %v1002 = vmul.f32 %v996, %v841
        %v1003 = vadd.f32 %v1001, %v1002
        %1004 = vst [vmem:[#allocation3] sm:$0xff] %v1003
        %s1005 = scalar_lea.vmem %s254, %s832 [#allocation4]
        %1006 = vst [vmem:[%s1005] sm:$0xff] %v1003
        %s1007 = scalar_select %p638, 2, 5
        %s1008 = smul.u32 %s1007, 8
        %s1009 = sshra.s32 %s1008, 3
        %s1010 = sand.u32 %s1008, 7
        %s1011 = smul.u32 %s1009, 3
        %s1012 = smul.addr %s1011, 8
        %s1013 = scalar_lea.vmem [#allocation2], %s1012
        %v1014 = vld [vmem:[%s1013] sm:$0xff]
        %v1015 = vld [vmem:[%s1013 + $0x8] sm:$0xff]
        %v1016 = vld [vmem:[%s1013 + $0x10] sm:$0xff]
        %v1017 = vld [vmem:[#allocation3] sm:$0xff]
        %1018 = vmatprep.subr.mxu0 %v590
        %1019 = vmatpush1.msra.mxu0 %v589
        %1020 = vmatprep.subr.mxu0 %v593
        %1021 = vmatpush1.msra.mxu0 %v592
        %1022 = vmatprep.subr.mxu0 %v596
        %1023 = vmatpush1.msra.mxu0 %v595
        %1024 = vmatprep.subr.mxu0 %v599
        %1025 = vmatpush1.msra.mxu0 %v598
        %1026 = vmatprep.subr.mxu0 %v602
        %1027 = vmatpush1.msra.mxu0 %v601
        %1028 = vmatprep.subr.mxu0 %v605
        %1029 = vmatpush1.msra.mxu0 %v604
        %1030 = vmatprep.subr.mxu0 %v608
        %1031 = vmatpush1.msra.mxu0 %v607
        %1032 = vmatprep.subr.mxu0 %v611
        %1033 = vmatpush1.msra.mxu0 %v610
        %1034 = vmatprep.subr.mxu0 %v614
        %1035 = vmatpush1.msra.mxu0 %v613
        %1036 = vmatprep.subr.mxu0 %v617
        %1037 = vmatpush1.msra.mxu0 %v616
        %1038 = vmatprep.subr.mxu0 %v620
        %1039 = vmatpush1.msra.mxu0 %v619
        %1040 = vmatprep.subr.mxu0 %v623
        %1041 = vmatpush1.msra.mxu0 %v622
        %1042 = vmatprep.subr.mxu0 %v626
        %1043 = vmatpush1.msra.mxu0 %v625
        %1044 = vmatprep.subr.mxu0 %v629
        %1045 = vmatpush1.msra.mxu0 %v628
        %1046 = vmatprep.subr.mxu0 %v632
        %1047 = vmatpush1.msra.mxu0 %v631
        %1048 = vmatprep.subr.mxu0 %v635
        %1049 = vmatpush1.msra.mxu0 %v634
        %1050 = vmatprep.subr.mxu0 0.0
        %1051 = vmatpush1.msra.mxu0 0.0
        %1052 = vmatprep.subr.mxu0 0.0
        %1053 = vmatpush1.msra.mxu0 0.0
        %1054 = vmatprep.subr.mxu0 0.0
        %1055 = vmatpush1.msra.mxu0 0.0
        %1056 = vmatprep.subr.mxu0 0.0
        %1057 = vmatpush1.msra.mxu0 0.0
        %1058 = vmatprep.subr.mxu0 0.0
        %1059 = vmatpush1.msra.mxu0 0.0
        %1060 = vmatprep.subr.mxu0 0.0
        %1061 = vmatpush1.msra.mxu0 0.0
        %1062 = vmatprep.subr.mxu0 0.0
        %1063 = vmatpush1.msra.mxu0 0.0
        %1064 = vmatprep.subr.mxu0 0.0
        %1065 = vmatpush1.msra.mxu0 0.0
        %1066 = vmatprep.subr.mxu0 0.0
        %1067 = vmatpush1.msra.mxu0 0.0
        %1068 = vmatprep.subr.mxu0 0.0
        %1069 = vmatpush1.msra.mxu0 0.0
        %1070 = vmatprep.subr.mxu0 0.0
        %1071 = vmatpush1.msra.mxu0 0.0
        %1072 = vmatprep.subr.mxu0 0.0
        %1073 = vmatpush1.msra.mxu0 0.0
        %1074 = vmatprep.subr.mxu0 0.0
        %1075 = vmatpush1.msra.mxu0 0.0
        %1076 = vmatprep.subr.mxu0 0.0
        %1077 = vmatpush1.msra.mxu0 0.0
        %1078 = vmatprep.subr.mxu0 0.0
        %1079 = vmatpush1.msra.mxu0 0.0
        %1080 = vmatprep.subr.mxu0 0.0
        %1081 = vmatpush1.msra.mxu0 0.0
        %1082 = vmatprep.mubr.f32.mxu0 0.0
        %1083 = vmatmul.mubr.f32.gmra.mrb[0].mxu0 %v1017
        %v1084 = vpop.f32.mrb[0].mxu0
        %v1085 = vadd.f32 %v654, %v1084
        %v1086 = vpop.f32.mrb[0].mxu0
        %v1087 = vadd.f32 %v658, %v1086
        %1088 = vdwg.mxu0
        %1089 = vmatprep.subr.mxu0 0.0
        %1090 = vmatpush1.msra.mxu0 %v591
        %1091 = vmatprep.subr.mxu0 0.0
        %1092 = vmatpush1.msra.mxu0 %v594
        %1093 = vmatprep.subr.mxu0 0.0
        %1094 = vmatpush1.msra.mxu0 %v597
        %1095 = vmatprep.subr.mxu0 0.0
        %1096 = vmatpush1.msra.mxu0 %v600
        %1097 = vmatprep.subr.mxu0 0.0
        %1098 = vmatpush1.msra.mxu0 %v603
        %1099 = vmatprep.subr.mxu0 0.0
        %1100 = vmatpush1.msra.mxu0 %v606
        %1101 = vmatprep.subr.mxu0 0.0
        %1102 = vmatpush1.msra.mxu0 %v609
        %1103 = vmatprep.subr.mxu0 0.0
        %1104 = vmatpush1.msra.mxu0 %v612
        %1105 = vmatprep.subr.mxu0 0.0
        %1106 = vmatpush1.msra.mxu0 %v615
        %1107 = vmatprep.subr.mxu0 0.0
        %1108 = vmatpush1.msra.mxu0 %v618
        %1109 = vmatprep.subr.mxu0 0.0
        %1110 = vmatpush1.msra.mxu0 %v621
        %1111 = vmatprep.subr.mxu0 0.0
        %1112 = vmatpush1.msra.mxu0 %v624
        %1113 = vmatprep.subr.mxu0 0.0
        %1114 = vmatpush1.msra.mxu0 %v627
        %1115 = vmatprep.subr.mxu0 0.0
        %1116 = vmatpush1.msra.mxu0 %v630
        %1117 = vmatprep.subr.mxu0 0.0
        %1118 = vmatpush1.msra.mxu0 %v633
        %1119 = vmatprep.subr.mxu0 0.0
        %1120 = vmatpush1.msra.mxu0 %v636
        %1121 = vmatprep.subr.mxu0 0.0
        %1122 = vmatpush1.msra.mxu0 0.0
        %1123 = vmatprep.subr.mxu0 0.0
        %1124 = vmatpush1.msra.mxu0 0.0
        %1125 = vmatprep.subr.mxu0 0.0
        %1126 = vmatpush1.msra.mxu0 0.0
        %1127 = vmatprep.subr.mxu0 0.0
        %1128 = vmatpush1.msra.mxu0 0.0
        %1129 = vmatprep.subr.mxu0 0.0
        %1130 = vmatpush1.msra.mxu0 0.0
        %1131 = vmatprep.subr.mxu0 0.0
        %1132 = vmatpush1.msra.mxu0 0.0
        %1133 = vmatprep.subr.mxu0 0.0
        %1134 = vmatpush1.msra.mxu0 0.0
        %1135 = vmatprep.subr.mxu0 0.0
        %1136 = vmatpush1.msra.mxu0 0.0
        %1137 = vmatprep.subr.mxu0 0.0
        %1138 = vmatpush1.msra.mxu0 0.0
        %1139 = vmatprep.subr.mxu0 0.0
        %1140 = vmatpush1.msra.mxu0 0.0
        %1141 = vmatprep.subr.mxu0 0.0
        %1142 = vmatpush1.msra.mxu0 0.0
        %1143 = vmatprep.subr.mxu0 0.0
        %1144 = vmatpush1.msra.mxu0 0.0
        %1145 = vmatprep.subr.mxu0 0.0
        %1146 = vmatpush1.msra.mxu0 0.0
        %1147 = vmatprep.subr.mxu0 0.0
        %1148 = vmatpush1.msra.mxu0 0.0
        %1149 = vmatprep.subr.mxu0 0.0
        %1150 = vmatpush1.msra.mxu0 0.0
        %1151 = vmatprep.subr.mxu0 0.0
        %1152 = vmatpush1.msra.mxu0 0.0
        %1153 = vmatprep.mubr.f32.mxu0 0.0
        %1154 = vmatmul.mubr.f32.gmra.mrb[0].mxu0 %v1017
        %v1155 = vpop.f32.mrb[0].mxu0
        %v1156 = vadd.f32 %v662, %v1155
        %v1157 = vpop.f32.mrb[0].mxu0
        %1158 = vdwg.mxu0
        %v1159 = vadd.f32 %v1014, %v1085
        %v1160 = vxor.u32 %v1159, 2147483648
        %v1161 = vmul.f32 %v1160, 1.442695
        %v1162 = vpow.pop %v1161
        %v1163 = vadd.f32 %v1162, 1.0
        %v1164 = vrcp.pop %v1163
        %v1165 = vmul.f32 1.0, %v1164
        %v1166 = vadd.f32 %v1015, %v1087
        %v1167 = vxor.u32 %v1166, 2147483648
        %v1168 = vmul.f32 %v1167, 1.442695
        %v1169 = vpow.pop %v1168
        %v1170 = vadd.f32 %v1169, 1.0
        %v1171 = vrcp.pop %v1170
        %v1172 = vmul.f32 1.0, %v1171
        %v1173 = vmul.f32 %v1165, %v1156
        %v1174 = vadd.f32 %v1016, %v1173
        %v1175 = vtanh.pop %v1174
        %v1176 = vsub.f32 1.0, %v1172
        %v1177 = vmul.f32 %v1176, %v1175
        %v1178 = vmul.f32 %v1172, %v1017
        %v1179 = vadd.f32 %v1177, %v1178
        %1180 = vst [vmem:[#allocation3] sm:$0xff] %v1179
        %s1181 = scalar_lea.vmem %s254, %s1008 [#allocation4]
        %1182 = vst [vmem:[%s1181] sm:$0xff] %v1179
        %s1183 = scalar_select %p638, 3, 4
        %s1184 = smul.u32 %s1183, 8
        %s1185 = sshra.s32 %s1184, 3
        %s1186 = sand.u32 %s1184, 7
        %s1187 = smul.u32 %s1185, 3
        %s1188 = smul.addr %s1187, 8
        %s1189 = scalar_lea.vmem [#allocation2], %s1188
        %v1190 = vld [vmem:[%s1189] sm:$0xff]
        %v1191 = vld [vmem:[%s1189 + $0x8] sm:$0xff]
        %v1192 = vld [vmem:[%s1189 + $0x10] sm:$0xff]
        %v1193 = vld [vmem:[#allocation3] sm:$0xff]
        %1194 = vmatprep.subr.mxu0 %v590
        %1195 = vmatpush1.msra.mxu0 %v589
        %1196 = vmatprep.subr.mxu0 %v593
        %1197 = vmatpush1.msra.mxu0 %v592
        %1198 = vmatprep.subr.mxu0 %v596
        %1199 = vmatpush1.msra.mxu0 %v595
        %1200 = vmatprep.subr.mxu0 %v599
        %1201 = vmatpush1.msra.mxu0 %v598
        %1202 = vmatprep.subr.mxu0 %v602
        %1203 = vmatpush1.msra.mxu0 %v601
        %1204 = vmatprep.subr.mxu0 %v605
        %1205 = vmatpush1.msra.mxu0 %v604
        %1206 = vmatprep.subr.mxu0 %v608
        %1207 = vmatpush1.msra.mxu0 %v607
        %1208 = vmatprep.subr.mxu0 %v611
        %1209 = vmatpush1.msra.mxu0 %v610
        %1210 = vmatprep.subr.mxu0 %v614
        %1211 = vmatpush1.msra.mxu0 %v613
        %1212 = vmatprep.subr.mxu0 %v617
        %1213 = vmatpush1.msra.mxu0 %v616
        %1214 = vmatprep.subr.mxu0 %v620
        %1215 = vmatpush1.msra.mxu0 %v619
        %1216 = vmatprep.subr.mxu0 %v623
        %1217 = vmatpush1.msra.mxu0 %v622
        %1218 = vmatprep.subr.mxu0 %v626
        %1219 = vmatpush1.msra.mxu0 %v625
        %1220 = vmatprep.subr.mxu0 %v629
        %1221 = vmatpush1.msra.mxu0 %v628
        %1222 = vmatprep.subr.mxu0 %v632
        %1223 = vmatpush1.msra.mxu0 %v631
        %1224 = vmatprep.subr.mxu0 %v635
        %1225 = vmatpush1.msra.mxu0 %v634
        %1226 = vmatprep.subr.mxu0 0.0
        %1227 = vmatpush1.msra.mxu0 0.0
        %1228 = vmatprep.subr.mxu0 0.0
        %1229 = vmatpush1.msra.mxu0 0.0
        %1230 = vmatprep.subr.mxu0 0.0
        %1231 = vmatpush1.msra.mxu0 0.0
        %1232 = vmatprep.subr.mxu0 0.0
        %1233 = vmatpush1.msra.mxu0 0.0
        %1234 = vmatprep.subr.mxu0 0.0
        %1235 = vmatpush1.msra.mxu0 0.0
        %1236 = vmatprep.subr.mxu0 0.0
        %1237 = vmatpush1.msra.mxu0 0.0
        %1238 = vmatprep.subr.mxu0 0.0
        %1239 = vmatpush1.msra.mxu0 0.0
        %1240 = vmatprep.subr.mxu0 0.0
        %1241 = vmatpush1.msra.mxu0 0.0
        %1242 = vmatprep.subr.mxu0 0.0
        %1243 = vmatpush1.msra.mxu0 0.0
        %1244 = vmatprep.subr.mxu0 0.0
        %1245 = vmatpush1.msra.mxu0 0.0
        %1246 = vmatprep.subr.mxu0 0.0
        %1247 = vmatpush1.msra.mxu0 0.0
        %1248 = vmatprep.subr.mxu0 0.0
        %1249 = vmatpush1.msra.mxu0 0.0
        %1250 = vmatprep.subr.mxu0 0.0
        %1251 = vmatpush1.msra.mxu0 0.0
        %1252 = vmatprep.subr.mxu0 0.0
        %1253 = vmatpush1.msra.mxu0 0.0
        %1254 = vmatprep.subr.mxu0 0.0
        %1255 = vmatpush1.msra.mxu0 0.0
        %1256 = vmatprep.subr.mxu0 0.0
        %1257 = vmatpush1.msra.mxu0 0.0
        %1258 = vmatprep.mubr.f32.mxu0 0.0
        %1259 = vmatmul.mubr.f32.gmra.mrb[0].mxu0 %v1193
        %v1260 = vpop.f32.mrb[0].mxu0
        %v1261 = vadd.f32 %v654, %v1260
        %v1262 = vpop.f32.mrb[0].mxu0
        %v1263 = vadd.f32 %v658, %v1262
        %1264 = vdwg.mxu0
        %1265 = vmatprep.subr.mxu0 0.0
        %1266 = vmatpush1.msra.mxu0 %v591
        %1267 = vmatprep.subr.mxu0 0.0
        %1268 = vmatpush1.msra.mxu0 %v594
        %1269 = vmatprep.subr.mxu0 0.0
        %1270 = vmatpush1.msra.mxu0 %v597
        %1271 = vmatprep.subr.mxu0 0.0
        %1272 = vmatpush1.msra.mxu0 %v600
        %1273 = vmatprep.subr.mxu0 0.0
        %1274 = vmatpush1.msra.mxu0 %v603
        %1275 = vmatprep.subr.mxu0 0.0
        %1276 = vmatpush1.msra.mxu0 %v606
        %1277 = vmatprep.subr.mxu0 0.0
        %1278 = vmatpush1.msra.mxu0 %v609
        %1279 = vmatprep.subr.mxu0 0.0
        %1280 = vmatpush1.msra.mxu0 %v612
        %1281 = vmatprep.subr.mxu0 0.0
        %1282 = vmatpush1.msra.mxu0 %v615
        %1283 = vmatprep.subr.mxu0 0.0
        %1284 = vmatpush1.msra.mxu0 %v618
        %1285 = vmatprep.subr.mxu0 0.0
        %1286 = vmatpush1.msra.mxu0 %v621
        %1287 = vmatprep.subr.mxu0 0.0
        %1288 = vmatpush1.msra.mxu0 %v624
        %1289 = vmatprep.subr.mxu0 0.0
        %1290 = vmatpush1.msra.mxu0 %v627
        %1291 = vmatprep.subr.mxu0 0.0
        %1292 = vmatpush1.msra.mxu0 %v630
        %1293 = vmatprep.subr.mxu0 0.0
        %1294 = vmatpush1.msra.mxu0 %v633
        %1295 = vmatprep.subr.mxu0 0.0
        %1296 = vmatpush1.msra.mxu0 %v636
        %1297 = vmatprep.subr.mxu0 0.0
        %1298 = vmatpush1.msra.mxu0 0.0
        %1299 = vmatprep.subr.mxu0 0.0
        %1300 = vmatpush1.msra.mxu0 0.0
        %1301 = vmatprep.subr.mxu0 0.0
        %1302 = vmatpush1.msra.mxu0 0.0
        %1303 = vmatprep.subr.mxu0 0.0
        %1304 = vmatpush1.msra.mxu0 0.0
        %1305 = vmatprep.subr.mxu0 0.0
        %1306 = vmatpush1.msra.mxu0 0.0
        %1307 = vmatprep.subr.mxu0 0.0
        %1308 = vmatpush1.msra.mxu0 0.0
        %1309 = vmatprep.subr.mxu0 0.0
        %1310 = vmatpush1.msra.mxu0 0.0
        %1311 = vmatprep.subr.mxu0 0.0
        %1312 = vmatpush1.msra.mxu0 0.0
        %1313 = vmatprep.subr.mxu0 0.0
        %1314 = vmatpush1.msra.mxu0 0.0
        %1315 = vmatprep.subr.mxu0 0.0
        %1316 = vmatpush1.msra.mxu0 0.0
        %1317 = vmatprep.subr.mxu0 0.0
        %1318 = vmatpush1.msra.mxu0 0.0
        %1319 = vmatprep.subr.mxu0 0.0
        %1320 = vmatpush1.msra.mxu0 0.0
        %1321 = vmatprep.subr.mxu0 0.0
        %1322 = vmatpush1.msra.mxu0 0.0
        %1323 = vmatprep.subr.mxu0 0.0
        %1324 = vmatpush1.msra.mxu0 0.0
        %1325 = vmatprep.subr.mxu0 0.0
        %1326 = vmatpush1.msra.mxu0 0.0
        %1327 = vmatprep.subr.mxu0 0.0
        %1328 = vmatpush1.msra.mxu0 0.0
        %1329 = vmatprep.mubr.f32.mxu0 0.0
        %1330 = vmatmul.mubr.f32.gmra.mrb[0].mxu0 %v1193
        %v1331 = vpop.f32.mrb[0].mxu0
        %v1332 = vadd.f32 %v662, %v1331
        %v1333 = vpop.f32.mrb[0].mxu0
        %1334 = vdwg.mxu0
        %v1335 = vadd.f32 %v1190, %v1261
        %v1336 = vxor.u32 %v1335, 2147483648
        %v1337 = vmul.f32 %v1336, 1.442695
        %v1338 = vpow.pop %v1337
        %v1339 = vadd.f32 %v1338, 1.0
        %v1340 = vrcp.pop %v1339
        %v1341 = vmul.f32 1.0, %v1340
        %v1342 = vadd.f32 %v1191, %v1263
        %v1343 = vxor.u32 %v1342, 2147483648
        %v1344 = vmul.f32 %v1343, 1.442695
        %v1345 = vpow.pop %v1344
        %v1346 = vadd.f32 %v1345, 1.0
        %v1347 = vrcp.pop %v1346
        %v1348 = vmul.f32 1.0, %v1347
        %v1349 = vmul.f32 %v1341, %v1332
        %v1350 = vadd.f32 %v1192, %v1349
        %v1351 = vtanh.pop %v1350
        %v1352 = vsub.f32 1.0, %v1348
        %v1353 = vmul.f32 %v1352, %v1351
        %v1354 = vmul.f32 %v1348, %v1193
        %v1355 = vadd.f32 %v1353, %v1354
        %1356 = vst [vmem:[#allocation3] sm:$0xff] %v1355
        %s1357 = scalar_lea.vmem %s254, %s1184 [#allocation4]
        %1358 = vst [vmem:[%s1357] sm:$0xff] %v1355
        %s1359 = scalar_select %p638, 4, 3
        %s1360 = smul.u32 %s1359, 8
        %s1361 = sshra.s32 %s1360, 3
        %s1362 = sand.u32 %s1360, 7
        %s1363 = smul.u32 %s1361, 3
        %s1364 = smul.addr %s1363, 8
        %s1365 = scalar_lea.vmem [#allocation2], %s1364
        %v1366 = vld [vmem:[%s1365] sm:$0xff]
        %v1367 = vld [vmem:[%s1365 + $0x8] sm:$0xff]
        %v1368 = vld [vmem:[%s1365 + $0x10] sm:$0xff]
        %v1369 = vld [vmem:[#allocation3] sm:$0xff]
        %1370 = vmatprep.subr.mxu0 %v590
        %1371 = vmatpush1.msra.mxu0 %v589
        %1372 = vmatprep.subr.mxu0 %v593
        %1373 = vmatpush1.msra.mxu0 %v592
        %1374 = vmatprep.subr.mxu0 %v596
        %1375 = vmatpush1.msra.mxu0 %v595
        %1376 = vmatprep.subr.mxu0 %v599
        %1377 = vmatpush1.msra.mxu0 %v598
        %1378 = vmatprep.subr.mxu0 %v602
        %1379 = vmatpush1.msra.mxu0 %v601
        %1380 = vmatprep.subr.mxu0 %v605
        %1381 = vmatpush1.msra.mxu0 %v604
        %1382 = vmatprep.subr.mxu0 %v608
        %1383 = vmatpush1.msra.mxu0 %v607
        %1384 = vmatprep.subr.mxu0 %v611
        %1385 = vmatpush1.msra.mxu0 %v610
        %1386 = vmatprep.subr.mxu0 %v614
        %1387 = vmatpush1.msra.mxu0 %v613
        %1388 = vmatprep.subr.mxu0 %v617
        %1389 = vmatpush1.msra.mxu0 %v616
        %1390 = vmatprep.subr.mxu0 %v620
        %1391 = vmatpush1.msra.mxu0 %v619
        %1392 = vmatprep.subr.mxu0 %v623
        %1393 = vmatpush1.msra.mxu0 %v622
        %1394 = vmatprep.subr.mxu0 %v626
        %1395 = vmatpush1.msra.mxu0 %v625
        %1396 = vmatprep.subr.mxu0 %v629
        %1397 = vmatpush1.msra.mxu0 %v628
        %1398 = vmatprep.subr.mxu0 %v632
        %1399 = vmatpush1.msra.mxu0 %v631
        %1400 = vmatprep.subr.mxu0 %v635
        %1401 = vmatpush1.msra.mxu0 %v634
        %1402 = vmatprep.subr.mxu0 0.0
        %1403 = vmatpush1.msra.mxu0 0.0
        %1404 = vmatprep.subr.mxu0 0.0
        %1405 = vmatpush1.msra.mxu0 0.0
        %1406 = vmatprep.subr.mxu0 0.0
        %1407 = vmatpush1.msra.mxu0 0.0
        %1408 = vmatprep.subr.mxu0 0.0
        %1409 = vmatpush1.msra.mxu0 0.0
        %1410 = vmatprep.subr.mxu0 0.0
        %1411 = vmatpush1.msra.mxu0 0.0
        %1412 = vmatprep.subr.mxu0 0.0
        %1413 = vmatpush1.msra.mxu0 0.0
        %1414 = vmatprep.subr.mxu0 0.0
        %1415 = vmatpush1.msra.mxu0 0.0
        %1416 = vmatprep.subr.mxu0 0.0
        %1417 = vmatpush1.msra.mxu0 0.0
        %1418 = vmatprep.subr.mxu0 0.0
        %1419 = vmatpush1.msra.mxu0 0.0
        %1420 = vmatprep.subr.mxu0 0.0
        %1421 = vmatpush1.msra.mxu0 0.0
        %1422 = vmatprep.subr.mxu0 0.0
        %1423 = vmatpush1.msra.mxu0 0.0
        %1424 = vmatprep.subr.mxu0 0.0
        %1425 = vmatpush1.msra.mxu0 0.0
        %1426 = vmatprep.subr.mxu0 0.0
        %1427 = vmatpush1.msra.mxu0 0.0
        %1428 = vmatprep.subr.mxu0 0.0
        %1429 = vmatpush1.msra.mxu0 0.0
        %1430 = vmatprep.subr.mxu0 0.0
        %1431 = vmatpush1.msra.mxu0 0.0
        %1432 = vmatprep.subr.mxu0 0.0
        %1433 = vmatpush1.msra.mxu0 0.0
        %1434 = vmatprep.mubr.f32.mxu0 0.0
        %1435 = vmatmul.mubr.f32.gmra.mrb[0].mxu0 %v1369
        %v1436 = vpop.f32.mrb[0].mxu0
        %v1437 = vadd.f32 %v654, %v1436
        %v1438 = vpop.f32.mrb[0].mxu0
        %v1439 = vadd.f32 %v658, %v1438
        %1440 = vdwg.mxu0
        %1441 = vmatprep.subr.mxu0 0.0
        %1442 = vmatpush1.msra.mxu0 %v591
        %1443 = vmatprep.subr.mxu0 0.0
        %1444 = vmatpush1.msra.mxu0 %v594
        %1445 = vmatprep.subr.mxu0 0.0
        %1446 = vmatpush1.msra.mxu0 %v597
        %1447 = vmatprep.subr.mxu0 0.0
        %1448 = vmatpush1.msra.mxu0 %v600
        %1449 = vmatprep.subr.mxu0 0.0
        %1450 = vmatpush1.msra.mxu0 %v603
        %1451 = vmatprep.subr.mxu0 0.0
        %1452 = vmatpush1.msra.mxu0 %v606
        %1453 = vmatprep.subr.mxu0 0.0
        %1454 = vmatpush1.msra.mxu0 %v609
        %1455 = vmatprep.subr.mxu0 0.0
        %1456 = vmatpush1.msra.mxu0 %v612
        %1457 = vmatprep.subr.mxu0 0.0
        %1458 = vmatpush1.msra.mxu0 %v615
        %1459 = vmatprep.subr.mxu0 0.0
        %1460 = vmatpush1.msra.mxu0 %v618
        %1461 = vmatprep.subr.mxu0 0.0
        %1462 = vmatpush1.msra.mxu0 %v621
        %1463 = vmatprep.subr.mxu0 0.0
        %1464 = vmatpush1.msra.mxu0 %v624
        %1465 = vmatprep.subr.mxu0 0.0
        %1466 = vmatpush1.msra.mxu0 %v627
        %1467 = vmatprep.subr.mxu0 0.0
        %1468 = vmatpush1.msra.mxu0 %v630
        %1469 = vmatprep.subr.mxu0 0.0
        %1470 = vmatpush1.msra.mxu0 %v633
        %1471 = vmatprep.subr.mxu0 0.0
        %1472 = vmatpush1.msra.mxu0 %v636
        %1473 = vmatprep.subr.mxu0 0.0
        %1474 = vmatpush1.msra.mxu0 0.0
        %1475 = vmatprep.subr.mxu0 0.0
        %1476 = vmatpush1.msra.mxu0 0.0
        %1477 = vmatprep.subr.mxu0 0.0
        %1478 = vmatpush1.msra.mxu0 0.0
        %1479 = vmatprep.subr.mxu0 0.0
        %1480 = vmatpush1.msra.mxu0 0.0
        %1481 = vmatprep.subr.mxu0 0.0
        %1482 = vmatpush1.msra.mxu0 0.0
        %1483 = vmatprep.subr.mxu0 0.0
        %1484 = vmatpush1.msra.mxu0 0.0
        %1485 = vmatprep.subr.mxu0 0.0
        %1486 = vmatpush1.msra.mxu0 0.0
        %1487 = vmatprep.subr.mxu0 0.0
        %1488 = vmatpush1.msra.mxu0 0.0
        %1489 = vmatprep.subr.mxu0 0.0
        %1490 = vmatpush1.msra.mxu0 0.0
        %1491 = vmatprep.subr.mxu0 0.0
        %1492 = vmatpush1.msra.mxu0 0.0
        %1493 = vmatprep.subr.mxu0 0.0
        %1494 = vmatpush1.msra.mxu0 0.0
        %1495 = vmatprep.subr.mxu0 0.0
        %1496 = vmatpush1.msra.mxu0 0.0
        %1497 = vmatprep.subr.mxu0 0.0
        %1498 = vmatpush1.msra.mxu0 0.0
        %1499 = vmatprep.subr.mxu0 0.0
        %1500 = vmatpush1.msra.mxu0 0.0
        %1501 = vmatprep.subr.mxu0 0.0
        %1502 = vmatpush1.msra.mxu0 0.0
        %1503 = vmatprep.subr.mxu0 0.0
        %1504 = vmatpush1.msra.mxu0 0.0
        %1505 = vmatprep.mubr.f32.mxu0 0.0
        %1506 = vmatmul.mubr.f32.gmra.mrb[0].mxu0 %v1369
        %v1507 = vpop.f32.mrb[0].mxu0
        %v1508 = vadd.f32 %v662, %v1507
        %v1509 = vpop.f32.mrb[0].mxu0
        %1510 = vdwg.mxu0
        %v1511 = vadd.f32 %v1366, %v1437
        %v1512 = vxor.u32 %v1511, 2147483648
        %v1513 = vmul.f32 %v1512, 1.442695
        %v1514 = vpow.pop %v1513
        %v1515 = vadd.f32 %v1514, 1.0
        %v1516 = vrcp.pop %v1515
        %v1517 = vmul.f32 1.0, %v1516
        %v1518 = vadd.f32 %v1367, %v1439
        %v1519 = vxor.u32 %v1518, 2147483648
        %v1520 = vmul.f32 %v1519, 1.442695
        %v1521 = vpow.pop %v1520
        %v1522 = vadd.f32 %v1521, 1.0
        %v1523 = vrcp.pop %v1522
        %v1524 = vmul.f32 1.0, %v1523
        %v1525 = vmul.f32 %v1517, %v1508
        %v1526 = vadd.f32 %v1368, %v1525
        %v1527 = vtanh.pop %v1526
        %v1528 = vsub.f32 1.0, %v1524
        %v1529 = vmul.f32 %v1528, %v1527
        %v1530 = vmul.f32 %v1524, %v1369
        %v1531 = vadd.f32 %v1529, %v1530
        %1532 = vst [vmem:[#allocation3] sm:$0xff] %v1531
        %s1533 = scalar_lea.vmem %s254, %s1360 [#allocation4]
        %1534 = vst [vmem:[%s1533] sm:$0xff] %v1531
        %s1535 = scalar_select %p638, 5, 2
        %s1536 = smul.u32 %s1535, 8
        %s1537 = sshra.s32 %s1536, 3
        %s1538 = sand.u32 %s1536, 7
        %s1539 = smul.u32 %s1537, 3
        %s1540 = smul.addr %s1539, 8
        %s1541 = scalar_lea.vmem [#allocation2], %s1540
        %v1542 = vld [vmem:[%s1541] sm:$0xff]
        %v1543 = vld [vmem:[%s1541 + $0x8] sm:$0xff]
        %v1544 = vld [vmem:[%s1541 + $0x10] sm:$0xff]
        %v1545 = vld [vmem:[#allocation3] sm:$0xff]
        %1546 = vmatprep.subr.mxu0 %v590
        %1547 = vmatpush1.msra.mxu0 %v589
        %1548 = vmatprep.subr.mxu0 %v593
        %1549 = vmatpush1.msra.mxu0 %v592
        %1550 = vmatprep.subr.mxu0 %v596
        %1551 = vmatpush1.msra.mxu0 %v595
        %1552 = vmatprep.subr.mxu0 %v599
        %1553 = vmatpush1.msra.mxu0 %v598
        %1554 = vmatprep.subr.mxu0 %v602
        %1555 = vmatpush1.msra.mxu0 %v601
        %1556 = vmatprep.subr.mxu0 %v605
        %1557 = vmatpush1.msra.mxu0 %v604
        %1558 = vmatprep.subr.mxu0 %v608
        %1559 = vmatpush1.msra.mxu0 %v607
        %1560 = vmatprep.subr.mxu0 %v611
        %1561 = vmatpush1.msra.mxu0 %v610
        %1562 = vmatprep.subr.mxu0 %v614
        %1563 = vmatpush1.msra.mxu0 %v613
        %1564 = vmatprep.subr.mxu0 %v617
        %1565 = vmatpush1.msra.mxu0 %v616
        %1566 = vmatprep.subr.mxu0 %v620
        %1567 = vmatpush1.msra.mxu0 %v619
        %1568 = vmatprep.subr.mxu0 %v623
        %1569 = vmatpush1.msra.mxu0 %v622
        %1570 = vmatprep.subr.mxu0 %v626
        %1571 = vmatpush1.msra.mxu0 %v625
        %1572 = vmatprep.subr.mxu0 %v629
        %1573 = vmatpush1.msra.mxu0 %v628
        %1574 = vmatprep.subr.mxu0 %v632
        %1575 = vmatpush1.msra.mxu0 %v631
        %1576 = vmatprep.subr.mxu0 %v635
        %1577 = vmatpush1.msra.mxu0 %v634
        %1578 = vmatprep.subr.mxu0 0.0
        %1579 = vmatpush1.msra.mxu0 0.0
        %1580 = vmatprep.subr.mxu0 0.0
        %1581 = vmatpush1.msra.mxu0 0.0
        %1582 = vmatprep.subr.mxu0 0.0
        %1583 = vmatpush1.msra.mxu0 0.0
        %1584 = vmatprep.subr.mxu0 0.0
        %1585 = vmatpush1.msra.mxu0 0.0
        %1586 = vmatprep.subr.mxu0 0.0
        %1587 = vmatpush1.msra.mxu0 0.0
        %1588 = vmatprep.subr.mxu0 0.0
        %1589 = vmatpush1.msra.mxu0 0.0
        %1590 = vmatprep.subr.mxu0 0.0
        %1591 = vmatpush1.msra.mxu0 0.0
        %1592 = vmatprep.subr.mxu0 0.0
        %1593 = vmatpush1.msra.mxu0 0.0
        %1594 = vmatprep.subr.mxu0 0.0
        %1595 = vmatpush1.msra.mxu0 0.0
        %1596 = vmatprep.subr.mxu0 0.0
        %1597 = vmatpush1.msra.mxu0 0.0
        %1598 = vmatprep.subr.mxu0 0.0
        %1599 = vmatpush1.msra.mxu0 0.0
        %1600 = vmatprep.subr.mxu0 0.0
        %1601 = vmatpush1.msra.mxu0 0.0
        %1602 = vmatprep.subr.mxu0 0.0
        %1603 = vmatpush1.msra.mxu0 0.0
        %1604 = vmatprep.subr.mxu0 0.0
        %1605 = vmatpush1.msra.mxu0 0.0
        %1606 = vmatprep.subr.mxu0 0.0
        %1607 = vmatpush1.msra.mxu0 0.0
        %1608 = vmatprep.subr.mxu0 0.0
        %1609 = vmatpush1.msra.mxu0 0.0
        %1610 = vmatprep.mubr.f32.mxu0 0.0
        %1611 = vmatmul.mubr.f32.gmra.mrb[0].mxu0 %v1545
        %v1612 = vpop.f32.mrb[0].mxu0
        %v1613 = vadd.f32 %v654, %v1612
        %v1614 = vpop.f32.mrb[0].mxu0
        %v1615 = vadd.f32 %v658, %v1614
        %1616 = vdwg.mxu0
        %1617 = vmatprep.subr.mxu0 0.0
        %1618 = vmatpush1.msra.mxu0 %v591
        %1619 = vmatprep.subr.mxu0 0.0
        %1620 = vmatpush1.msra.mxu0 %v594
        %1621 = vmatprep.subr.mxu0 0.0
        %1622 = vmatpush1.msra.mxu0 %v597
        %1623 = vmatprep.subr.mxu0 0.0
        %1624 = vmatpush1.msra.mxu0 %v600
        %1625 = vmatprep.subr.mxu0 0.0
        %1626 = vmatpush1.msra.mxu0 %v603
        %1627 = vmatprep.subr.mxu0 0.0
        %1628 = vmatpush1.msra.mxu0 %v606
        %1629 = vmatprep.subr.mxu0 0.0
        %1630 = vmatpush1.msra.mxu0 %v609
        %1631 = vmatprep.subr.mxu0 0.0
        %1632 = vmatpush1.msra.mxu0 %v612
        %1633 = vmatprep.subr.mxu0 0.0
        %1634 = vmatpush1.msra.mxu0 %v615
        %1635 = vmatprep.subr.mxu0 0.0
        %1636 = vmatpush1.msra.mxu0 %v618
        %1637 = vmatprep.subr.mxu0 0.0
        %1638 = vmatpush1.msra.mxu0 %v621
        %1639 = vmatprep.subr.mxu0 0.0
        %1640 = vmatpush1.msra.mxu0 %v624
        %1641 = vmatprep.subr.mxu0 0.0
        %1642 = vmatpush1.msra.mxu0 %v627
        %1643 = vmatprep.subr.mxu0 0.0
        %1644 = vmatpush1.msra.mxu0 %v630
        %1645 = vmatprep.subr.mxu0 0.0
        %1646 = vmatpush1.msra.mxu0 %v633
        %1647 = vmatprep.subr.mxu0 0.0
        %1648 = vmatpush1.msra.mxu0 %v636
        %1649 = vmatprep.subr.mxu0 0.0
        %1650 = vmatpush1.msra.mxu0 0.0
        %1651 = vmatprep.subr.mxu0 0.0
        %1652 = vmatpush1.msra.mxu0 0.0
        %1653 = vmatprep.subr.mxu0 0.0
        %1654 = vmatpush1.msra.mxu0 0.0
        %1655 = vmatprep.subr.mxu0 0.0
        %1656 = vmatpush1.msra.mxu0 0.0
        %1657 = vmatprep.subr.mxu0 0.0
        %1658 = vmatpush1.msra.mxu0 0.0
        %1659 = vmatprep.subr.mxu0 0.0
        %1660 = vmatpush1.msra.mxu0 0.0
        %1661 = vmatprep.subr.mxu0 0.0
        %1662 = vmatpush1.msra.mxu0 0.0
        %1663 = vmatprep.subr.mxu0 0.0
        %1664 = vmatpush1.msra.mxu0 0.0
        %1665 = vmatprep.subr.mxu0 0.0
        %1666 = vmatpush1.msra.mxu0 0.0
        %1667 = vmatprep.subr.mxu0 0.0
        %1668 = vmatpush1.msra.mxu0 0.0
        %1669 = vmatprep.subr.mxu0 0.0
        %1670 = vmatpush1.msra.mxu0 0.0
        %1671 = vmatprep.subr.mxu0 0.0
        %1672 = vmatpush1.msra.mxu0 0.0
        %1673 = vmatprep.subr.mxu0 0.0
        %1674 = vmatpush1.msra.mxu0 0.0
        %1675 = vmatprep.subr.mxu0 0.0
        %1676 = vmatpush1.msra.mxu0 0.0
        %1677 = vmatprep.subr.mxu0 0.0
        %1678 = vmatpush1.msra.mxu0 0.0
        %1679 = vmatprep.subr.mxu0 0.0
        %1680 = vmatpush1.msra.mxu0 0.0
        %1681 = vmatprep.mubr.f32.mxu0 0.0
        %1682 = vmatmul.mubr.f32.gmra.mrb[0].mxu0 %v1545
        %v1683 = vpop.f32.mrb[0].mxu0
        %v1684 = vadd.f32 %v662, %v1683
        %v1685 = vpop.f32.mrb[0].mxu0
        %1686 = vdwg.mxu0
        %v1687 = vadd.f32 %v1542, %v1613
        %v1688 = vxor.u32 %v1687, 2147483648
        %v1689 = vmul.f32 %v1688, 1.442695
        %v1690 = vpow.pop %v1689
        %v1691 = vadd.f32 %v1690, 1.0
        %v1692 = vrcp.pop %v1691
        %v1693 = vmul.f32 1.0, %v1692
        %v1694 = vadd.f32 %v1543, %v1615
        %v1695 = vxor.u32 %v1694, 2147483648
        %v1696 = vmul.f32 %v1695, 1.442695
        %v1697 = vpow.pop %v1696
        %v1698 = vadd.f32 %v1697, 1.0
        %v1699 = vrcp.pop %v1698
        %v1700 = vmul.f32 1.0, %v1699
        %v1701 = vmul.f32 %v1693, %v1684
        %v1702 = vadd.f32 %v1544, %v1701
        %v1703 = vtanh.pop %v1702
        %v1704 = vsub.f32 1.0, %v1700
        %v1705 = vmul.f32 %v1704, %v1703
        %v1706 = vmul.f32 %v1700, %v1545
        %v1707 = vadd.f32 %v1705, %v1706
        %1708 = vst [vmem:[#allocation3] sm:$0xff] %v1707
        %s1709 = scalar_lea.vmem %s254, %s1536 [#allocation4]
        %1710 = vst [vmem:[%s1709] sm:$0xff] %v1707
        %s1711 = scalar_select %p638, 6, 1
        %s1712 = smul.u32 %s1711, 8
        %s1713 = sshra.s32 %s1712, 3
        %s1714 = sand.u32 %s1712, 7
        %s1715 = smul.u32 %s1713, 3
        %s1716 = smul.addr %s1715, 8
        %s1717 = scalar_lea.vmem [#allocation2], %s1716
        %v1718 = vld [vmem:[%s1717] sm:$0xff]
        %v1719 = vld [vmem:[%s1717 + $0x8] sm:$0xff]
        %v1720 = vld [vmem:[%s1717 + $0x10] sm:$0xff]
        %v1721 = vld [vmem:[#allocation3] sm:$0xff]
        %1722 = vmatprep.subr.mxu0 %v590
        %1723 = vmatpush1.msra.mxu0 %v589
        %1724 = vmatprep.subr.mxu0 %v593
        %1725 = vmatpush1.msra.mxu0 %v592
        %1726 = vmatprep.subr.mxu0 %v596
        %1727 = vmatpush1.msra.mxu0 %v595
        %1728 = vmatprep.subr.mxu0 %v599
        %1729 = vmatpush1.msra.mxu0 %v598
        %1730 = vmatprep.subr.mxu0 %v602
        %1731 = vmatpush1.msra.mxu0 %v601
        %1732 = vmatprep.subr.mxu0 %v605
        %1733 = vmatpush1.msra.mxu0 %v604
        %1734 = vmatprep.subr.mxu0 %v608
        %1735 = vmatpush1.msra.mxu0 %v607
        %1736 = vmatprep.subr.mxu0 %v611
        %1737 = vmatpush1.msra.mxu0 %v610
        %1738 = vmatprep.subr.mxu0 %v614
        %1739 = vmatpush1.msra.mxu0 %v613
        %1740 = vmatprep.subr.mxu0 %v617
        %1741 = vmatpush1.msra.mxu0 %v616
        %1742 = vmatprep.subr.mxu0 %v620
        %1743 = vmatpush1.msra.mxu0 %v619
        %1744 = vmatprep.subr.mxu0 %v623
        %1745 = vmatpush1.msra.mxu0 %v622
        %1746 = vmatprep.subr.mxu0 %v626
        %1747 = vmatpush1.msra.mxu0 %v625
        %1748 = vmatprep.subr.mxu0 %v629
        %1749 = vmatpush1.msra.mxu0 %v628
        %1750 = vmatprep.subr.mxu0 %v632
        %1751 = vmatpush1.msra.mxu0 %v631
        %1752 = vmatprep.subr.mxu0 %v635
        %1753 = vmatpush1.msra.mxu0 %v634
        %1754 = vmatprep.subr.mxu0 0.0
        %1755 = vmatpush1.msra.mxu0 0.0
        %1756 = vmatprep.subr.mxu0 0.0
        %1757 = vmatpush1.msra.mxu0 0.0
        %1758 = vmatprep.subr.mxu0 0.0
        %1759 = vmatpush1.msra.mxu0 0.0
        %1760 = vmatprep.subr.mxu0 0.0
        %1761 = vmatpush1.msra.mxu0 0.0
        %1762 = vmatprep.subr.mxu0 0.0
        %1763 = vmatpush1.msra.mxu0 0.0
        %1764 = vmatprep.subr.mxu0 0.0
        %1765 = vmatpush1.msra.mxu0 0.0
        %1766 = vmatprep.subr.mxu0 0.0
        %1767 = vmatpush1.msra.mxu0 0.0
        %1768 = vmatprep.subr.mxu0 0.0
        %1769 = vmatpush1.msra.mxu0 0.0
        %1770 = vmatprep.subr.mxu0 0.0
        %1771 = vmatpush1.msra.mxu0 0.0
        %1772 = vmatprep.subr.mxu0 0.0
        %1773 = vmatpush1.msra.mxu0 0.0
        %1774 = vmatprep.subr.mxu0 0.0
        %1775 = vmatpush1.msra.mxu0 0.0
        %1776 = vmatprep.subr.mxu0 0.0
        %1777 = vmatpush1.msra.mxu0 0.0
        %1778 = vmatprep.subr.mxu0 0.0
        %1779 = vmatpush1.msra.mxu0 0.0
        %1780 = vmatprep.subr.mxu0 0.0
        %1781 = vmatpush1.msra.mxu0 0.0
        %1782 = vmatprep.subr.mxu0 0.0
        %1783 = vmatpush1.msra.mxu0 0.0
        %1784 = vmatprep.subr.mxu0 0.0
        %1785 = vmatpush1.msra.mxu0 0.0
        %1786 = vmatprep.mubr.f32.mxu0 0.0
        %1787 = vmatmul.mubr.f32.gmra.mrb[0].mxu0 %v1721
        %v1788 = vpop.f32.mrb[0].mxu0
        %v1789 = vadd.f32 %v654, %v1788
        %v1790 = vpop.f32.mrb[0].mxu0
        %v1791 = vadd.f32 %v658, %v1790
        %1792 = vdwg.mxu0
        %1793 = vmatprep.subr.mxu0 0.0
        %1794 = vmatpush1.msra.mxu0 %v591
        %1795 = vmatprep.subr.mxu0 0.0
        %1796 = vmatpush1.msra.mxu0 %v594
        %1797 = vmatprep.subr.mxu0 0.0
        %1798 = vmatpush1.msra.mxu0 %v597
        %1799 = vmatprep.subr.mxu0 0.0
        %1800 = vmatpush1.msra.mxu0 %v600
        %1801 = vmatprep.subr.mxu0 0.0
        %1802 = vmatpush1.msra.mxu0 %v603
        %1803 = vmatprep.subr.mxu0 0.0
        %1804 = vmatpush1.msra.mxu0 %v606
        %1805 = vmatprep.subr.mxu0 0.0
        %1806 = vmatpush1.msra.mxu0 %v609
        %1807 = vmatprep.subr.mxu0 0.0
        %1808 = vmatpush1.msra.mxu0 %v612
        %1809 = vmatprep.subr.mxu0 0.0
        %1810 = vmatpush1.msra.mxu0 %v615
        %1811 = vmatprep.subr.mxu0 0.0
        %1812 = vmatpush1.msra.mxu0 %v618
        %1813 = vmatprep.subr.mxu0 0.0
        %1814 = vmatpush1.msra.mxu0 %v621
        %1815 = vmatprep.subr.mxu0 0.0
        %1816 = vmatpush1.msra.mxu0 %v624
        %1817 = vmatprep.subr.mxu0 0.0
        %1818 = vmatpush1.msra.mxu0 %v627
        %1819 = vmatprep.subr.mxu0 0.0
        %1820 = vmatpush1.msra.mxu0 %v630
        %1821 = vmatprep.subr.mxu0 0.0
        %1822 = vmatpush1.msra.mxu0 %v633
        %1823 = vmatprep.subr.mxu0 0.0
        %1824 = vmatpush1.msra.mxu0 %v636
        %1825 = vmatprep.subr.mxu0 0.0
        %1826 = vmatpush1.msra.mxu0 0.0
        %1827 = vmatprep.subr.mxu0 0.0
        %1828 = vmatpush1.msra.mxu0 0.0
        %1829 = vmatprep.subr.mxu0 0.0
        %1830 = vmatpush1.msra.mxu0 0.0
        %1831 = vmatprep.subr.mxu0 0.0
        %1832 = vmatpush1.msra.mxu0 0.0
        %1833 = vmatprep.subr.mxu0 0.0
        %1834 = vmatpush1.msra.mxu0 0.0
        %1835 = vmatprep.subr.mxu0 0.0
        %1836 = vmatpush1.msra.mxu0 0.0
        %1837 = vmatprep.subr.mxu0 0.0
        %1838 = vmatpush1.msra.mxu0 0.0
        %1839 = vmatprep.subr.mxu0 0.0
        %1840 = vmatpush1.msra.mxu0 0.0
        %1841 = vmatprep.subr.mxu0 0.0
        %1842 = vmatpush1.msra.mxu0 0.0
        %1843 = vmatprep.subr.mxu0 0.0
        %1844 = vmatpush1.msra.mxu0 0.0
        %1845 = vmatprep.subr.mxu0 0.0
        %1846 = vmatpush1.msra.mxu0 0.0
        %1847 = vmatprep.subr.mxu0 0.0
        %1848 = vmatpush1.msra.mxu0 0.0
        %1849 = vmatprep.subr.mxu0 0.0
        %1850 = vmatpush1.msra.mxu0 0.0
        %1851 = vmatprep.subr.mxu0 0.0
        %1852 = vmatpush1.msra.mxu0 0.0
        %1853 = vmatprep.subr.mxu0 0.0
        %1854 = vmatpush1.msra.mxu0 0.0
        %1855 = vmatprep.subr.mxu0 0.0
        %1856 = vmatpush1.msra.mxu0 0.0
        %1857 = vmatprep.mubr.f32.mxu0 0.0
        %1858 = vmatmul.mubr.f32.gmra.mrb[0].mxu0 %v1721
        %v1859 = vpop.f32.mrb[0].mxu0
        %v1860 = vadd.f32 %v662, %v1859
        %v1861 = vpop.f32.mrb[0].mxu0
        %1862 = vdwg.mxu0
        %v1863 = vadd.f32 %v1718, %v1789
        %v1864 = vxor.u32 %v1863, 2147483648
        %v1865 = vmul.f32 %v1864, 1.442695
        %v1866 = vpow.pop %v1865
        %v1867 = vadd.f32 %v1866, 1.0
        %v1868 = vrcp.pop %v1867
        %v1869 = vmul.f32 1.0, %v1868
        %v1870 = vadd.f32 %v1719, %v1791
        %v1871 = vxor.u32 %v1870, 2147483648
        %v1872 = vmul.f32 %v1871, 1.442695
        %v1873 = vpow.pop %v1872
        %v1874 = vadd.f32 %v1873, 1.0
        %v1875 = vrcp.pop %v1874
        %v1876 = vmul.f32 1.0, %v1875
        %v1877 = vmul.f32 %v1869, %v1860
        %v1878 = vadd.f32 %v1720, %v1877
        %v1879 = vtanh.pop %v1878
        %v1880 = vsub.f32 1.0, %v1876
        %v1881 = vmul.f32 %v1880, %v1879
        %v1882 = vmul.f32 %v1876, %v1721
        %v1883 = vadd.f32 %v1881, %v1882
        %1884 = vst [vmem:[#allocation3] sm:$0xff] %v1883
        %s1885 = scalar_lea.vmem %s254, %s1712 [#allocation4]
        %1886 = vst [vmem:[%s1885] sm:$0xff] %v1883
        %s1887 = scalar_select %p638, 7, 0
        %s1888 = smul.u32 %s1887, 8
        %s1889 = sshra.s32 %s1888, 3
        %s1890 = sand.u32 %s1888, 7
        %s1891 = smul.u32 %s1889, 3
        %s1892 = smul.addr %s1891, 8
        %s1893 = scalar_lea.vmem [#allocation2], %s1892
        %v1894 = vld [vmem:[%s1893] sm:$0xff]
        %v1895 = vld [vmem:[%s1893 + $0x8] sm:$0xff]
        %v1896 = vld [vmem:[%s1893 + $0x10] sm:$0xff]
        %v1897 = vld [vmem:[#allocation3] sm:$0xff]
        %1898 = vmatprep.subr.mxu0 %v590
        %1899 = vmatpush1.msra.mxu0 %v589
        %1900 = vmatprep.subr.mxu0 %v593
        %1901 = vmatpush1.msra.mxu0 %v592
        %1902 = vmatprep.subr.mxu0 %v596
        %1903 = vmatpush1.msra.mxu0 %v595
        %1904 = vmatprep.subr.mxu0 %v599
        %1905 = vmatpush1.msra.mxu0 %v598
        %1906 = vmatprep.subr.mxu0 %v602
        %1907 = vmatpush1.msra.mxu0 %v601
        %1908 = vmatprep.subr.mxu0 %v605
        %1909 = vmatpush1.msra.mxu0 %v604
        %1910 = vmatprep.subr.mxu0 %v608
        %1911 = vmatpush1.msra.mxu0 %v607
        %1912 = vmatprep.subr.mxu0 %v611
        %1913 = vmatpush1.msra.mxu0 %v610
        %1914 = vmatprep.subr.mxu0 %v614
        %1915 = vmatpush1.msra.mxu0 %v613
        %1916 = vmatprep.subr.mxu0 %v617
        %1917 = vmatpush1.msra.mxu0 %v616
        %1918 = vmatprep.subr.mxu0 %v620
        %1919 = vmatpush1.msra.mxu0 %v619
        %1920 = vmatprep.subr.mxu0 %v623
        %1921 = vmatpush1.msra.mxu0 %v622
        %1922 = vmatprep.subr.mxu0 %v626
        %1923 = vmatpush1.msra.mxu0 %v625
        %1924 = vmatprep.subr.mxu0 %v629
        %1925 = vmatpush1.msra.mxu0 %v628
        %1926 = vmatprep.subr.mxu0 %v632
        %1927 = vmatpush1.msra.mxu0 %v631
        %1928 = vmatprep.subr.mxu0 %v635
        %1929 = vmatpush1.msra.mxu0 %v634
        %1930 = vmatprep.subr.mxu0 0.0
        %1931 = vmatpush1.msra.mxu0 0.0
        %1932 = vmatprep.subr.mxu0 0.0
        %1933 = vmatpush1.msra.mxu0 0.0
        %1934 = vmatprep.subr.mxu0 0.0
        %1935 = vmatpush1.msra.mxu0 0.0
        %1936 = vmatprep.subr.mxu0 0.0
        %1937 = vmatpush1.msra.mxu0 0.0
        %1938 = vmatprep.subr.mxu0 0.0
        %1939 = vmatpush1.msra.mxu0 0.0
        %1940 = vmatprep.subr.mxu0 0.0
        %1941 = vmatpush1.msra.mxu0 0.0
        %1942 = vmatprep.subr.mxu0 0.0
        %1943 = vmatpush1.msra.mxu0 0.0
        %1944 = vmatprep.subr.mxu0 0.0
        %1945 = vmatpush1.msra.mxu0 0.0
        %1946 = vmatprep.subr.mxu0 0.0
        %1947 = vmatpush1.msra.mxu0 0.0
        %1948 = vmatprep.subr.mxu0 0.0
        %1949 = vmatpush1.msra.mxu0 0.0
        %1950 = vmatprep.subr.mxu0 0.0
        %1951 = vmatpush1.msra.mxu0 0.0
        %1952 = vmatprep.subr.mxu0 0.0
        %1953 = vmatpush1.msra.mxu0 0.0
        %1954 = vmatprep.subr.mxu0 0.0
        %1955 = vmatpush1.msra.mxu0 0.0
        %1956 = vmatprep.subr.mxu0 0.0
        %1957 = vmatpush1.msra.mxu0 0.0
        %1958 = vmatprep.subr.mxu0 0.0
        %1959 = vmatpush1.msra.mxu0 0.0
        %1960 = vmatprep.subr.mxu0 0.0
        %1961 = vmatpush1.msra.mxu0 0.0
        %1962 = vmatprep.mubr.f32.mxu0 0.0
        %1963 = vmatmul.mubr.f32.gmra.mrb[0].mxu0 %v1897
        %v1964 = vpop.f32.mrb[0].mxu0
        %v1965 = vadd.f32 %v654, %v1964
        %v1966 = vpop.f32.mrb[0].mxu0
        %v1967 = vadd.f32 %v658, %v1966
        %1968 = vdwg.mxu0
        %1969 = vmatprep.subr.mxu0 0.0
        %1970 = vmatpush1.msra.mxu0 %v591
        %1971 = vmatprep.subr.mxu0 0.0
        %1972 = vmatpush1.msra.mxu0 %v594
        %1973 = vmatprep.subr.mxu0 0.0
        %1974 = vmatpush1.msra.mxu0 %v597
        %1975 = vmatprep.subr.mxu0 0.0
        %1976 = vmatpush1.msra.mxu0 %v600
        %1977 = vmatprep.subr.mxu0 0.0
        %1978 = vmatpush1.msra.mxu0 %v603
        %1979 = vmatprep.subr.mxu0 0.0
        %1980 = vmatpush1.msra.mxu0 %v606
        %1981 = vmatprep.subr.mxu0 0.0
        %1982 = vmatpush1.msra.mxu0 %v609
        %1983 = vmatprep.subr.mxu0 0.0
        %1984 = vmatpush1.msra.mxu0 %v612
        %1985 = vmatprep.subr.mxu0 0.0
        %1986 = vmatpush1.msra.mxu0 %v615
        %1987 = vmatprep.subr.mxu0 0.0
        %1988 = vmatpush1.msra.mxu0 %v618
        %1989 = vmatprep.subr.mxu0 0.0
        %1990 = vmatpush1.msra.mxu0 %v621
        %1991 = vmatprep.subr.mxu0 0.0
        %1992 = vmatpush1.msra.mxu0 %v624
        %1993 = vmatprep.subr.mxu0 0.0
        %1994 = vmatpush1.msra.mxu0 %v627
        %1995 = vmatprep.subr.mxu0 0.0
        %1996 = vmatpush1.msra.mxu0 %v630
        %1997 = vmatprep.subr.mxu0 0.0
        %1998 = vmatpush1.msra.mxu0 %v633
        %1999 = vmatprep.subr.mxu0 0.0
        %2000 = vmatpush1.msra.mxu0 %v636
        %2001 = vmatprep.subr.mxu0 0.0
        %2002 = vmatpush1.msra.mxu0 0.0
        %2003 = vmatprep.subr.mxu0 0.0
        %2004 = vmatpush1.msra.mxu0 0.0
        %2005 = vmatprep.subr.mxu0 0.0
        %2006 = vmatpush1.msra.mxu0 0.0
        %2007 = vmatprep.subr.mxu0 0.0
        %2008 = vmatpush1.msra.mxu0 0.0
        %2009 = vmatprep.subr.mxu0 0.0
        %2010 = vmatpush1.msra.mxu0 0.0
        %2011 = vmatprep.subr.mxu0 0.0
        %2012 = vmatpush1.msra.mxu0 0.0
        %2013 = vmatprep.subr.mxu0 0.0
        %2014 = vmatpush1.msra.mxu0 0.0
        %2015 = vmatprep.subr.mxu0 0.0
        %2016 = vmatpush1.msra.mxu0 0.0
        %2017 = vmatprep.subr.mxu0 0.0
        %2018 = vmatpush1.msra.mxu0 0.0
        %2019 = vmatprep.subr.mxu0 0.0
        %2020 = vmatpush1.msra.mxu0 0.0
        %2021 = vmatprep.subr.mxu0 0.0
        %2022 = vmatpush1.msra.mxu0 0.0
        %2023 = vmatprep.subr.mxu0 0.0
        %2024 = vmatpush1.msra.mxu0 0.0
        %2025 = vmatprep.subr.mxu0 0.0
        %2026 = vmatpush1.msra.mxu0 0.0
        %2027 = vmatprep.subr.mxu0 0.0
        %2028 = vmatpush1.msra.mxu0 0.0
        %2029 = vmatprep.subr.mxu0 0.0
        %2030 = vmatpush1.msra.mxu0 0.0
        %2031 = vmatprep.subr.mxu0 0.0
        %2032 = vmatpush1.msra.mxu0 0.0
        %2033 = vmatprep.mubr.f32.mxu0 0.0
        %2034 = vmatmul.mubr.f32.gmra.mrb[0].mxu0 %v1897
        %v2035 = vpop.f32.mrb[0].mxu0
        %v2036 = vadd.f32 %v662, %v2035
        %v2037 = vpop.f32.mrb[0].mxu0
        %2038 = vdwg.mxu0
        %v2039 = vadd.f32 %v1894, %v1965
        %v2040 = vxor.u32 %v2039, 2147483648
        %v2041 = vmul.f32 %v2040, 1.442695
        %v2042 = vpow.pop %v2041
        %v2043 = vadd.f32 %v2042, 1.0
        %v2044 = vrcp.pop %v2043
        %v2045 = vmul.f32 1.0, %v2044
        %v2046 = vadd.f32 %v1895, %v1967
        %v2047 = vxor.u32 %v2046, 2147483648
        %v2048 = vmul.f32 %v2047, 1.442695
        %v2049 = vpow.pop %v2048
        %v2050 = vadd.f32 %v2049, 1.0
        %v2051 = vrcp.pop %v2050
        %v2052 = vmul.f32 1.0, %v2051
        %v2053 = vmul.f32 %v2045, %v2036
        %v2054 = vadd.f32 %v1896, %v2053
        %v2055 = vtanh.pop %v2054
        %v2056 = vsub.f32 1.0, %v2052
        %v2057 = vmul.f32 %v2056, %v2055
        %v2058 = vmul.f32 %v2052, %v1897
        %v2059 = vadd.f32 %v2057, %v2058
        %2060 = vst [vmem:[#allocation3] sm:$0xff] %v2059
        %s2061 = scalar_lea.vmem %s254, %s1888 [#allocation4]
        %2062 = vst [vmem:[%s2061] sm:$0xff] %v2059
        %s2063 = sand.u32 %s149, 1
        %s2064 = sand.u32 %s149, 1
        %s2065 = smul.addr %s2064, 64
        %s2066 = scalar_lea.vmem [#allocation4], %s2065
        // Predicated region
        $region41: #{gru_module_forward.3} parent=39 // pred_check
          %p2067 = pneg %p159
        $region42: #{gru_module_forward.3} parent=39 // pred_check_branch
          %2069 = sbr.rel (%p2067) target = $region44
        $region43: #{gru_module_forward.3} parent=39 // pred_region
          %s2070 = smul.addr %s16, 8
          %s2071 = scalar_lea.vmem %s5, %s2070
          // Predicated region
          $region45: #{gru_module_forward.3} parent=43 // pred_check
            _
          $region46: #{gru_module_forward.3} parent=43 // pred_check_branch
            %2073 = sbr.rel (0) target = $region48
          $region47: #{gru_module_forward.3} parent=43 // pred_region
            // Predicated region
            $region49: #{gru_module_forward.3} parent=47 // pred_check
              _
            $region50: #{gru_module_forward.3} parent=47 // pred_check_branch
              %2075 = sbr.rel (0) target = $region52
            $region51: #{gru_module_forward.3} parent=47 // pred_region
              // Predicated region
              $region64: #{gru_module_forward.3} parent=51 // pred_check
                _
              $region65: #{gru_module_forward.3} parent=51 // pred_check_branch
                %2104 = sbr.rel (0) target = $region67
              $region66: #{gru_module_forward.3} parent=51 // pred_region
                loop: start=0, step=1, limit=1
                $region68: #{gru_module_forward.3} parent=66 // loop_pre_header
                  _
                $region69: #{gru_module_forward.3} parent=66 // loop_header
                  %s2106 = sphi 0, %s2110
                  %p2107 = scmp.ge.s32.totalorder %s2106, 1
                  %s2111 = sphi %s2066, %s2066
                  %s2112 = sphi %s2071, %s2071
                $region70: #{gru_module_forward.3} parent=66 // loop_header_branch
                  %2109 = sbr.rel (%p2107) target = $region74
                $region71: #{gru_module_forward.3} parent=66 // loop_body
                  %v2113 = vld [vmem:[%s2111] sm:$0xff]
                  %2114 = vst [vmem:[%s2112] sm:$0xff] %v2113
                  %v2115 = vld [vmem:[%s2111 + $0x8] sm:$0xff]
                  %2116 = vst [vmem:[%s2112 + $0x10] sm:$0xff] %v2115
                  %v2117 = vld [vmem:[%s2111 + $0x10] sm:$0xff]
                  %2118 = vst [vmem:[%s2112 + $0x20] sm:$0xff] %v2117
                  %v2119 = vld [vmem:[%s2111 + $0x18] sm:$0xff]
                  %2120 = vst [vmem:[%s2112 + $0x30] sm:$0xff] %v2119
                  %v2121 = vld [vmem:[%s2111 + $0x20] sm:$0xff]
                  %2122 = vst [vmem:[%s2112 + $0x40] sm:$0xff] %v2121
                  %v2123 = vld [vmem:[%s2111 + $0x28] sm:$0xff]
                  %2124 = vst [vmem:[%s2112 + $0x50] sm:$0xff] %v2123
                  %v2125 = vld [vmem:[%s2111 + $0x30] sm:$0xff]
                  %2126 = vst [vmem:[%s2112 + $0x60] sm:$0xff] %v2125
                  %v2127 = vld [vmem:[%s2111 + $0x38] sm:$0xff]
                  %2128 = vst [vmem:[%s2112 + $0x70] sm:$0xff] %v2127
                $region72: #{gru_module_forward.3} parent=66 // loop_footer
                  %s2110 = sadd.s32 1, %s2106
                $region73: #{gru_module_forward.3} parent=66 // loop_footer_branch
                  %2105 = sbr.rel target = $region69
                $region74: #{gru_module_forward.3} parent=66 // loop_exit
                  _
              $region67: #{gru_module_forward.3} parent=51 // pred_fallthru
                _
              // Predicated region
              $region75: #{gru_module_forward.3} parent=51 // pred_check
                _
              $region76: #{gru_module_forward.3} parent=51 // pred_check_branch
                %2130 = sbr.rel target = $region78
              $region77: #{gru_module_forward.3} parent=51 // pred_region
                _
              $region78: #{gru_module_forward.3} parent=51 // pred_fallthru
                _
            $region52: #{gru_module_forward.3} parent=47 // pred_fallthru
              _
            // Predicated region
            $region53: #{gru_module_forward.3} parent=47 // pred_check
              _
            $region54: #{gru_module_forward.3} parent=47 // pred_check_branch
              %2077 = sbr.rel target = $region56
            $region55: #{gru_module_forward.3} parent=47 // pred_region
              loop: start=0, step=1, limit=1
              $region57: #{gru_module_forward.3} parent=55 // loop_pre_header
                _
              $region58: #{gru_module_forward.3} parent=55 // loop_header
                %s2080 = sphi 0, %s2084
                %p2081 = scmp.ge.s32.totalorder %s2080, 1
                %s2085 = sphi %s2066, %s2066
                %s2086 = sphi %s2071, %s2071
              $region59: #{gru_module_forward.3} parent=55 // loop_header_branch
                %2083 = sbr.rel (%p2081) target = $region63
              $region60: #{gru_module_forward.3} parent=55 // loop_body
                %v2087 = vld [vmem:[%s2085] sm:$0xff]
                %2088 = vst [vmem:[%s2086] sm:$0xff] %v2087
                %v2089 = vld [vmem:[%s2085 + $0x8] sm:$0xff]
                %2090 = vst [vmem:[%s2086 + $0x10] sm:$0xff] %v2089
                %v2091 = vld [vmem:[%s2085 + $0x10] sm:$0xff]
                %2092 = vst [vmem:[%s2086 + $0x20] sm:$0xff] %v2091
                %v2093 = vld [vmem:[%s2085 + $0x18] sm:$0xff]
                %2094 = vst [vmem:[%s2086 + $0x30] sm:$0xff] %v2093
                %v2095 = vld [vmem:[%s2085 + $0x20] sm:$0xff]
                %2096 = vst [vmem:[%s2086 + $0x40] sm:$0xff] %v2095
                %v2097 = vld [vmem:[%s2085 + $0x28] sm:$0xff]
                %2098 = vst [vmem:[%s2086 + $0x50] sm:$0xff] %v2097
                %v2099 = vld [vmem:[%s2085 + $0x30] sm:$0xff]
                %2100 = vst [vmem:[%s2086 + $0x60] sm:$0xff] %v2099
                %v2101 = vld [vmem:[%s2085 + $0x38] sm:$0xff]
                %2102 = vst [vmem:[%s2086 + $0x70] sm:$0xff] %v2101
              $region61: #{gru_module_forward.3} parent=55 // loop_footer
                %s2084 = sadd.s32 1, %s2080
              $region62: #{gru_module_forward.3} parent=55 // loop_footer_branch
                %2079 = sbr.rel target = $region58
              $region63: #{gru_module_forward.3} parent=55 // loop_exit
                _
            $region56: #{gru_module_forward.3} parent=47 // pred_fallthru
              _
          $region48: #{gru_module_forward.3} parent=43 // pred_fallthru
            _
          %2131 = vnop
        $region44: #{gru_module_forward.3} parent=39 // pred_fallthru
          _
      $region40: #{gru_module_forward.3} parent=5 // pred_fallthru
        _
      %p2132 = scmp.le.s32.totalorder 2, %s11
      // Predicated region
      $region79: #{gru_module_forward.3} parent=5 // pred_check
        %p2133 = pneg %p2132
      $region80: #{gru_module_forward.3} parent=5 // pred_check_branch
        %2135 = sbr.rel (%p2133) target = $region82
      $region81: #{gru_module_forward.3} parent=5 // pred_region
        %s2136 = ssub.s32 %s11, 2
        // Predicated region
        $region83: #{gru_module_forward.3} parent=81 // pred_check
          %p2137 = pneg %p165
        $region84: #{gru_module_forward.3} parent=81 // pred_check_branch
          %2139 = sbr.rel (%p2137) target = $region86
        $region85: #{gru_module_forward.3} parent=81 // pred_region
          %s2140 = sand.u32 %s150, 1
          %s2141 = sand.u32 %s150, 1
          %s2142 = smul.addr %s2141, 64
          %s2143 = scalar_lea.vmem [#allocation4], %s2142
        $region86: #{gru_module_forward.3} parent=81 // pred_fallthru
          _
      $region82: #{gru_module_forward.3} parent=5 // pred_fallthru
        _
    $region6: #{gru_module_forward.3} parent=1 // loop_footer
      %s15 = sadd.s32 1, %s11
    $region7: #{gru_module_forward.3} parent=1 // loop_footer_branch
      %10 = sbr.rel target = $region3
    $region8: #{gru_module_forward.3} parent=1 // loop_exit
      _

// kernel: squeeze.2
$region0: #{squeeze.2}
  %s0 = inlined_call_operand.vmem [shape: f32[64], index: 0, kind: input, shape index: {}]
  %s1 = inlined_call_operand.vmem [shape: f32[1,8,8], index: 1, kind: output, shape index: {}]
  $region1: #{squeeze.2} parent=0
    #allocation0 [shape = 'u8[4096]{0}', space=vmem, size = 0x1000, scoped, tag = 'scoped mem for input reshape']
    %s3 = sshllo.u32 0, 1
    %v4 = vld [vmem:[%s0] sm:%s3]
    %5 = vst [vmem:[#allocation0] sm:%s3] %v4
    %v6 = vld [vmem:[#allocation0] sm:$0x1]
    %vm7 = vcmask 64512
    %8 = vst.msk [vmem:[%s1] sm:$0x1] %vm7, %v6
    %v9 = vld [vmem:[#allocation0] sm:$0x1]
    %10 = vrot.lane.b32.xlu0 %v9, 120
    %v11 = vpop.permute.xlu0 %10
    %vm12 = vcmask 64512
    %s13 = scalar_lea.vmem %s1, 1
    %14 = vst.msk [vmem:[%s13] sm:$0x1] %vm12, %v11
    %v15 = vld [vmem:[#allocation0] sm:$0x1]
    %16 = vrot.lane.b32.xlu0 %v15, 112
    %v17 = vpop.permute.xlu0 %16
    %vm18 = vcmask 64512
    %s19 = scalar_lea.vmem %s1, 2
    %20 = vst.msk [vmem:[%s19] sm:$0x1] %vm18, %v17
    %v21 = vld [vmem:[#allocation0] sm:$0x1]
    %22 = vrot.lane.b32.xlu0 %v21, 104
    %v23 = vpop.permute.xlu0 %22
    %vm24 = vcmask 64512
    %s25 = scalar_lea.vmem %s1, 3
    %26 = vst.msk [vmem:[%s25] sm:$0x1] %vm24, %v23
    %v27 = vld [vmem:[#allocation0] sm:$0x1]
    %28 = vrot.lane.b32.xlu0 %v27, 96
    %v29 = vpop.permute.xlu0 %28
    %vm30 = vcmask 64512
    %s31 = scalar_lea.vmem %s1, 4
    %32 = vst.msk [vmem:[%s31] sm:$0x1] %vm30, %v29
    %v33 = vld [vmem:[#allocation0] sm:$0x1]
    %34 = vrot.lane.b32.xlu0 %v33, 88
    %v35 = vpop.permute.xlu0 %34
    %vm36 = vcmask 64512
    %s37 = scalar_lea.vmem %s1, 5
    %38 = vst.msk [vmem:[%s37] sm:$0x1] %vm36, %v35
    %v39 = vld [vmem:[#allocation0] sm:$0x1]
    %40 = vrot.lane.b32.xlu0 %v39, 80
    %v41 = vpop.permute.xlu0 %40
    %vm42 = vcmask 64512
    %s43 = scalar_lea.vmem %s1, 6
    %44 = vst.msk [vmem:[%s43] sm:$0x1] %vm42, %v41
    %v45 = vld [vmem:[#allocation0] sm:$0x1]
    %46 = vrot.lane.b32.xlu0 %v45, 72
    %v47 = vpop.permute.xlu0 %46
    %vm48 = vcmask 64512
    %s49 = scalar_lea.vmem %s1, 7
    %50 = vst.msk [vmem:[%s49] sm:$0x1] %vm48, %v47

// kernel: gru_module_forward.4
$region0: #{gru_module_forward.4}
  #allocation0 [shape = 'u32[]', space=smem, size = 0x4, offset = 0x4, fixed_abs, tag = 'smem constant byte address 0x4 - core index']
  #allocation1 [shape = 'u32[144,128]{1,0:T(1,128)}', space=vmem, size = 0x12000, scoped, tag = 'internal scratch']
  #allocation2 [shape = 'f32[64,384]{1,0:T(8,128)}', space=vmem, size = 0x18000, scoped, tag = 'scratch operand']
  #allocation3 [shape = 'f32[8,128]{1,0:T(8,128)}', space=vmem, size = 0x1000, scoped, tag = 'scratch operand']
  %s0 = inlined_call_operand.vmem [shape: f32[64,256], index: 0, kind: input, shape index: {}]
  %s1 = inlined_call_operand.vmem [shape: f32[2,256,384], index: 1, kind: input, shape index: {}]
  %s2 = inlined_call_operand.vmem [shape: f32[2,128,384], index: 2, kind: input, shape index: {}]
  %s3 = inlined_call_operand.vmem [shape: f32[2,1,384], index: 3, kind: input, shape index: {}]
  %s4 = inlined_call_operand.vmem [shape: f32[2,1,384], index: 4, kind: input, shape index: {}]
  %s5 = inlined_call_operand.vmem [shape: f32[64,256], index: 5, kind: output, shape index: {}]
  %s6 = sld [smem:[#allocation0]]
  $region87: #{gru_module_forward.4} parent=0
    _
  %s8 = ssub.s32 1, %s6
  %s9 = scalar_select 0, %s8, %s6
  $region1: #{gru_module_forward.4} parent=0
    #allocation4 [shape = 'u8[65536]{0}', space=vmem, size = 0x10000, scoped, tag = 'output window, operand 0']
    loop: start=0, step=1, limit=4
    $region2: #{gru_module_forward.4} parent=1 // loop_pre_header
      _
    $region3: #{gru_module_forward.4} parent=1 // loop_header
      %s11 = sphi 0, %s15
      %p12 = scmp.ge.s32.totalorder %s11, 4
      %s19 = sphi 0, %s19
      %s21 = sphi 0, %s19
      %s22 = sphi 0, %s21
      %s36 = sphi 0, %s22
      %s42 = sphi 0, %s44
      %s45 = sphi 0, %s42
      %s46 = sphi 0, %s45
      %s62 = sphi 0, %s46
      %s68 = sphi 0, %s70
      %s71 = sphi 0, %s68
      %s72 = sphi 0, %s71
      %s88 = sphi 0, %s72
      %s94 = sphi 0, %s96
      %s97 = sphi 0, %s94
      %s98 = sphi 0, %s97
      %s114 = sphi 0, %s98
      %s120 = sphi 0, %s122
      %s123 = sphi 0, %s120
      %s124 = sphi 0, %s123
      %s140 = sphi 0, %s124
      %s146 = sphi 0, %s148
      %s149 = sphi 0, %s146
      %s150 = sphi 0, %s149
      %s166 = sphi 0, %s150
    $region4: #{gru_module_forward.4} parent=1 // loop_header_branch
      %14 = sbr.rel (%p12) target = $region8
    $region5: #{gru_module_forward.4} parent=1 // loop_body
      %s16 = ssub.s32 %s11, 1
      %s17 = ssub.s32 %s11, 2
      %s18 = sadd.s32 %s11, 1
      %s20 = sadd.s32 %s19, 1
      %p23 = scmp.eq.s32.totalorder %s11, 1
      %p24 = scmp.ne.s32.totalorder %s19, %s21
      %p25 = scmp.eq.s32.totalorder %s11, 0
      %p26 = por %p24, %p25
      %p27 = scmp.ne.s32.totalorder %s19, %s21
      %p28 = scmp.eq.s32.totalorder %s16, 1
      %p29 = por %p27, %p28
      %p30 = scmp.ne.s32.totalorder %s21, %s22
      %p31 = scmp.eq.s32.totalorder %s16, 0
      %p32 = por %p30, %p31
      %p33 = scmp.ne.s32.totalorder %s21, %s22
      %p34 = scmp.eq.s32.totalorder %s17, 1
      %p35 = por %p33, %p34
      %p37 = scmp.ne.s32.totalorder %s22, %s36
      %p38 = scmp.eq.s32.totalorder %s17, 0
      %p39 = por %p37, %p38
      %s40 = ssub.s32 %s11, %s18
      %p41 = scmp.eq.s32.totalorder %s40, 0
      %s43 = sadd.s32 %s42, 1
      %s44 = scalar_select %p41, %s42, %s43
      %p47 = pneg %p41
      %p48 = scmp.eq.s32.totalorder %s11, 1
      %p49 = por %p47, %p48
      %p50 = scmp.ne.s32.totalorder %s42, %s45
      %p51 = scmp.eq.s32.totalorder %s11, 0
      %p52 = por %p50, %p51
      %p53 = scmp.ne.s32.totalorder %s42, %s45
      %p54 = scmp.eq.s32.totalorder %s16, 1
      %p55 = por %p53, %p54
      %p56 = scmp.ne.s32.totalorder %s45, %s46
      %p57 = scmp.eq.s32.totalorder %s16, 0
      %p58 = por %p56, %p57
      %p59 = scmp.ne.s32.totalorder %s45, %s46
      %p60 = scmp.eq.s32.totalorder %s17, 1
      %p61 = por %p59, %p60
      %p63 = scmp.ne.s32.totalorder %s46, %s62
      %p64 = scmp.eq.s32.totalorder %s17, 0
      %p65 = por %p63, %p64
      %s66 = ssub.s32 %s11, %s18
      %p67 = scmp.eq.s32.totalorder %s66, 0
      %s69 = sadd.s32 %s68, 1
      %s70 = scalar_select %p67, %s68, %s69
      %p73 = pneg %p67
      %p74 = scmp.eq.s32.totalorder %s11, 1
      %p75 = por %p73, %p74
      %p76 = scmp.ne.s32.totalorder %s68, %s71
      %p77 = scmp.eq.s32.totalorder %s11, 0
      %p78 = por %p76, %p77
      %p79 = scmp.ne.s32.totalorder %s68, %s71
      %p80 = scmp.eq.s32.totalorder %s16, 1
      %p81 = por %p79, %p80
      %p82 = scmp.ne.s32.totalorder %s71, %s72
      %p83 = scmp.eq.s32.totalorder %s16, 0
      %p84 = por %p82, %p83
      %p85 = scmp.ne.s32.totalorder %s71, %s72
      %p86 = scmp.eq.s32.totalorder %s17, 1
      %p87 = por %p85, %p86
      %p89 = scmp.ne.s32.totalorder %s72, %s88
      %p90 = scmp.eq.s32.totalorder %s17, 0
      %p91 = por %p89, %p90
      %s92 = ssub.s32 %s11, %s18
      %p93 = scmp.eq.s32.totalorder %s92, 0
      %s95 = sadd.s32 %s94, 1
      %s96 = scalar_select %p93, %s94, %s95
      %p99 = pneg %p93
      %p100 = scmp.eq.s32.totalorder %s11, 1
      %p101 = por %p99, %p100
      %p102 = scmp.ne.s32.totalorder %s94, %s97
      %p103 = scmp.eq.s32.totalorder %s11, 0
      %p104 = por %p102, %p103
      %p105 = scmp.ne.s32.totalorder %s94, %s97
      %p106 = scmp.eq.s32.totalorder %s16, 1
      %p107 = por %p105, %p106
      %p108 = scmp.ne.s32.totalorder %s97, %s98
      %p109 = scmp.eq.s32.totalorder %s16, 0
      %p110 = por %p108, %p109
      %p111 = scmp.ne.s32.totalorder %s97, %s98
      %p112 = scmp.eq.s32.totalorder %s17, 1
      %p113 = por %p111, %p112
      %p115 = scmp.ne.s32.totalorder %s98, %s114
      %p116 = scmp.eq.s32.totalorder %s17, 0
      %p117 = por %p115, %p116
      %s118 = ssub.s32 %s11, %s18
      %p119 = scmp.eq.s32.totalorder %s118, 0
      %s121 = sadd.s32 %s120, 1
      %s122 = scalar_select %p119, %s120, %s121
      %p125 = pneg %p119
      %p126 = scmp.eq.s32.totalorder %s11, 1
      %p127 = por %p125, %p126
      %p128 = scmp.ne.s32.totalorder %s120, %s123
      %p129 = scmp.eq.s32.totalorder %s11, 0
      %p130 = por %p128, %p129
      %p131 = scmp.ne.s32.totalorder %s120, %s123
      %p132 = scmp.eq.s32.totalorder %s16, 1
      %p133 = por %p131, %p132
      %p134 = scmp.ne.s32.totalorder %s123, %s124
      %p135 = scmp.eq.s32.totalorder %s16, 0
      %p136 = por %p134, %p135
      %p137 = scmp.ne.s32.totalorder %s123, %s124
      %p138 = scmp.eq.s32.totalorder %s17, 1
      %p139 = por %p137, %p138
      %p141 = scmp.ne.s32.totalorder %s124, %s140
      %p142 = scmp.eq.s32.totalorder %s17, 0
      %p143 = por %p141, %p142
      %s144 = ssub.s32 %s11, %s18
      %p145 = scmp.eq.s32.totalorder %s144, 0
      %s147 = sadd.s32 %s146, 1
      %s148 = scalar_select %p145, %s146, %s147
      %p151 = pneg %p145
      %p152 = scmp.eq.s32.totalorder %s11, 1
      %p153 = por %p151, %p152
      %p154 = scmp.ne.s32.totalorder %s146, %s149
      %p155 = scmp.eq.s32.totalorder %s11, 0
      %p156 = por %p154, %p155
      %p157 = scmp.ne.s32.totalorder %s146, %s149
      %p158 = scmp.eq.s32.totalorder %s16, 1
      %p159 = por %p157, %p158
      %p160 = scmp.ne.s32.totalorder %s149, %s150
      %p161 = scmp.eq.s32.totalorder %s16, 0
      %p162 = por %p160, %p161
      %p163 = scmp.ne.s32.totalorder %s149, %s150
      %p164 = scmp.eq.s32.totalorder %s17, 1
      %p165 = por %p163, %p164
      %p167 = scmp.ne.s32.totalorder %s150, %s166
      %p168 = scmp.eq.s32.totalorder %s17, 0
      %p169 = por %p167, %p168
      %p170 = scmp.le.s32.totalorder 1, %s11
      %p171 = scmp.lt.s32.totalorder %s11, 3
      %p172 = pnand %p170, %p171
      %p173 = pneg %p172
      // Predicated region
      $region9: #{gru_module_forward.4} parent=5 // pred_check
        _
      $region10: #{gru_module_forward.4} parent=5 // pred_check_branch
        %175 = sbr.rel (%p172) target = $region12
      $region11: #{gru_module_forward.4} parent=5 // pred_region
        %s176 = ssub.s32 %s11, 1
        // Predicated region
        $region13: #{gru_module_forward.4} parent=11 // pred_check
          %p177 = pneg %p32
        $region14: #{gru_module_forward.4} parent=11 // pred_check_branch
          %179 = sbr.rel (%p177) target = $region16
        $region15: #{gru_module_forward.4} parent=11 // pred_region
          _
        $region16: #{gru_module_forward.4} parent=11 // pred_fallthru
          _
      $region12: #{gru_module_forward.4} parent=5 // pred_fallthru
        _
      %p180 = scmp.lt.s32.totalorder %s11, 2
      // Predicated region
      $region17: #{gru_module_forward.4} parent=5 // pred_check
        %p181 = pneg %p180
      $region18: #{gru_module_forward.4} parent=5 // pred_check_branch
        %183 = sbr.rel (%p181) target = $region20
      $region19: #{gru_module_forward.4} parent=5 // pred_region
        // Predicated region
        $region21: #{gru_module_forward.4} parent=19 // pred_check
          %p184 = pneg %p52
        $region22: #{gru_module_forward.4} parent=19 // pred_check_branch
          %186 = sbr.rel (%p184) target = $region24
        $region23: #{gru_module_forward.4} parent=19 // pred_region
          %p187 = scmp.lt.s32.totalorder %s11, 1
          %s188 = scalar_select %p187, %s11, 1
          %s189 = smul.addr %s188, 96
          %s190 = smul.addr %s189, 8
          %s191 = scalar_lea.vmem %s1, %s190
        $region24: #{gru_module_forward.4} parent=19 // pred_fallthru
          _
        // Predicated region
        $region25: #{gru_module_forward.4} parent=19 // pred_check
          %p192 = pneg %p78
        $region26: #{gru_module_forward.4} parent=19 // pred_check_branch
          %194 = sbr.rel (%p192) target = $region28
        $region27: #{gru_module_forward.4} parent=19 // pred_region
          %p195 = scmp.lt.s32.totalorder %s11, 1
          %s196 = scalar_select %p195, %s11, 1
          %s197 = smul.addr %s196, 48
          %s198 = smul.addr %s197, 8
          %s199 = scalar_lea.vmem %s2, %s198
        $region28: #{gru_module_forward.4} parent=19 // pred_fallthru
          _
        // Predicated region
        $region29: #{gru_module_forward.4} parent=19 // pred_check
          %p200 = pneg %p104
        $region30: #{gru_module_forward.4} parent=19 // pred_check_branch
          %202 = sbr.rel (%p200) target = $region32
        $region31: #{gru_module_forward.4} parent=19 // pred_region
          %p203 = scmp.lt.s32.totalorder %s11, 1
          %s204 = scalar_select %p203, %s11, 1
          %s205 = smul.addr %s204, 3
          %s206 = scalar_lea.vmem %s3, %s205
        $region32: #{gru_module_forward.4} parent=19 // pred_fallthru
          _
        // Predicated region
        $region33: #{gru_module_forward.4} parent=19 // pred_check
          %p207 = pneg %p130
        $region34: #{gru_module_forward.4} parent=19 // pred_check_branch
          %209 = sbr.rel (%p207) target = $region36
        $region35: #{gru_module_forward.4} parent=19 // pred_region
          %p210 = scmp.lt.s32.totalorder %s11, 1
          %s211 = scalar_select %p210, %s11, 1
          %s212 = smul.addr %s211, 3
          %s213 = scalar_lea.vmem %s4, %s212
        $region36: #{gru_module_forward.4} parent=19 // pred_fallthru
          _
      $region20: #{gru_module_forward.4} parent=5 // pred_fallthru
        _
      %p214 = scmp.le.s32.totalorder 1, %s11
      %p215 = scmp.lt.s32.totalorder %s11, 3
      %p216 = pnand %p214, %p215
      %p217 = pneg %p216
      // Predicated region
      $region37: #{gru_module_forward.4} parent=5 // pred_check
        _
      $region38: #{gru_module_forward.4} parent=5 // pred_check_branch
        %219 = sbr.rel (%p216) target = $region40
      $region39: #{gru_module_forward.4} parent=5 // pred_region
        %s220 = ssub.s32 %s11, 1
        %p221 = pneg %p32
        %p222 = pneg %p29
        %p223 = scmp.lt.s32.totalorder %s16, 1
        %s224 = scalar_select %p223, %s16, 1
        %s225 = smul.addr %s224, 96
        %s226 = smul.addr %s225, 8
        %s227 = scalar_lea.vmem %s1, %s226
        %p228 = pneg %p58
        %p229 = pneg %p55
        %p230 = scmp.lt.s32.totalorder %s16, 1
        %s231 = scalar_select %p230, %s16, 1
        %s232 = smul.addr %s231, 48
        %s233 = smul.addr %s232, 8
        %s234 = scalar_lea.vmem %s2, %s233
        %p235 = pneg %p84
        %p236 = pneg %p81
        %p237 = scmp.lt.s32.totalorder %s16, 1
        %s238 = scalar_select %p237, %s16, 1
        %s239 = smul.addr %s238, 3
        %s240 = scalar_lea.vmem %s3, %s239
        %p241 = pneg %p110
        %p242 = pneg %p107
        %p243 = scmp.lt.s32.totalorder %s16, 1
        %s244 = scalar_select %p243, %s16, 1
        %s245 = smul.addr %s244, 3
        %s246 = scalar_lea.vmem %s4, %s245
        %p247 = pneg %p136
        %p248 = pneg %p133
        %p249 = pneg %p162
        %p250 = pneg %p159
        %s251 = sand.u32 %s149, 1
        %s252 = sand.u32 %s149, 1
        %s253 = smul.addr %s252, 64
        %s254 = scalar_lea.vmem [#allocation4], %s253
        %p255 = scmp.lt.s32.totalorder %s16, 1
        %s256 = scalar_select %p255, %s16, 1
        %s257 = smul.addr %s256, 96
        %s258 = smul.addr %s257, 8
        %s259 = scalar_lea.vmem %s1, %s258
        %p260 = scmp.lt.s32.totalorder %s16, 1
        %s261 = scalar_select %p260, %s16, 1
        %s262 = smul.addr %s261, 48
        %s263 = smul.addr %s262, 8
        %s264 = scalar_lea.vmem %s2, %s263
        %p265 = scmp.lt.s32.totalorder %s16, 1
        %s266 = scalar_select %p265, %s16, 1
        %s267 = smul.addr %s266, 3
        %s268 = scalar_lea.vmem %s3, %s267
        %p269 = scmp.lt.s32.totalorder %s16, 1
        %s270 = scalar_select %p269, %s16, 1
        %s271 = smul.addr %s270, 3
        %s272 = scalar_lea.vmem %s4, %s271
        %v273 = vld [vmem:[%s0] sm:$0xff]
        %v274 = vld [vmem:[%s0 + $0x8] sm:$0xff]
        %v275 = vld [vmem:[%s0 + $0x10] sm:$0xff]
        %v276 = vld [vmem:[%s0 + $0x18] sm:$0xff]
        %v277 = vld [vmem:[%s0 + $0x20] sm:$0xff]
        %v278 = vld [vmem:[%s0 + $0x28] sm:$0xff]
        %v279 = vld [vmem:[%s0 + $0x30] sm:$0xff]
        %v280 = vld [vmem:[%s0 + $0x38] sm:$0xff]
        %v281 = vld [vmem:[%s0 + $0x40] sm:$0xff]
        %v282 = vld [vmem:[%s0 + $0x48] sm:$0xff]
        %v283 = vld [vmem:[%s0 + $0x50] sm:$0xff]
        %v284 = vld [vmem:[%s0 + $0x58] sm:$0xff]
        %v285 = vld [vmem:[%s0 + $0x60] sm:$0xff]
        %v286 = vld [vmem:[%s0 + $0x68] sm:$0xff]
        %v287 = vld [vmem:[%s0 + $0x70] sm:$0xff]
        %v288 = vld [vmem:[%s0 + $0x78] sm:$0xff]
        %v289 = vld [vmem:[%s259] sm:$0xff]
        %v290 = vld [vmem:[%s259 + $0x8] sm:$0xff]
        %v291 = vld [vmem:[%s259 + $0x10] sm:$0xff]
        %v292 = vld [vmem:[%s259 + $0x18] sm:$0xff]
        %v293 = vld [vmem:[%s259 + $0x20] sm:$0xff]
        %v294 = vld [vmem:[%s259 + $0x28] sm:$0xff]
        %v295 = vld [vmem:[%s259 + $0x30] sm:$0xff]
        %v296 = vld [vmem:[%s259 + $0x38] sm:$0xff]
        %v297 = vld [vmem:[%s259 + $0x40] sm:$0xff]
        %v298 = vld [vmem:[%s259 + $0x48] sm:$0xff]
        %v299 = vld [vmem:[%s259 + $0x50] sm:$0xff]
        %v300 = vld [vmem:[%s259 + $0x58] sm:$0xff]
        %v301 = vld [vmem:[%s259 + $0x60] sm:$0xff]
        %v302 = vld [vmem:[%s259 + $0x68] sm:$0xff]
        %v303 = vld [vmem:[%s259 + $0x70] sm:$0xff]
        %v304 = vld [vmem:[%s259 + $0x78] sm:$0xff]
        %v305 = vld [vmem:[%s259 + $0x80] sm:$0xff]
        %v306 = vld [vmem:[%s259 + $0x88] sm:$0xff]
        %v307 = vld [vmem:[%s259 + $0x90] sm:$0xff]
        %v308 = vld [vmem:[%s259 + $0x98] sm:$0xff]
        %v309 = vld [vmem:[%s259 + $0xa0] sm:$0xff]
        %v310 = vld [vmem:[%s259 + $0xa8] sm:$0xff]
        %v311 = vld [vmem:[%s259 + $0xb0] sm:$0xff]
        %v312 = vld [vmem:[%s259 + $0xb8] sm:$0xff]
        %v313 = vld [vmem:[%s259 + $0xc0] sm:$0xff]
        %v314 = vld [vmem:[%s259 + $0xc8] sm:$0xff]
        %v315 = vld [vmem:[%s259 + $0xd0] sm:$0xff]
        %v316 = vld [vmem:[%s259 + $0xd8] sm:$0xff]
        %v317 = vld [vmem:[%s259 + $0xe0] sm:$0xff]
        %v318 = vld [vmem:[%s259 + $0xe8] sm:$0xff]
        %v319 = vld [vmem:[%s259 + $0xf0] sm:$0xff]
        %v320 = vld [vmem:[%s259 + $0xf8] sm:$0xff]
        %v321 = vld [vmem:[%s259 + $0x100] sm:$0xff]
        %v322 = vld [vmem:[%s259 + $0x108] sm:$0xff]
        %v323 = vld [vmem:[%s259 + $0x110] sm:$0xff]
        %v324 = vld [vmem:[%s259 + $0x118] sm:$0xff]
        %v325 = vld [vmem:[%s259 + $0x120] sm:$0xff]
        %v326 = vld [vmem:[%s259 + $0x128] sm:$0xff]
        %v327 = vld [vmem:[%s259 + $0x130] sm:$0xff]
        %v328 = vld [vmem:[%s259 + $0x138] sm:$0xff]
        %v329 = vld [vmem:[%s259 + $0x140] sm:$0xff]
        %v330 = vld [vmem:[%s259 + $0x148] sm:$0xff]
        %v331 = vld [vmem:[%s259 + $0x150] sm:$0xff]
        %v332 = vld [vmem:[%s259 + $0x158] sm:$0xff]
        %v333 = vld [vmem:[%s259 + $0x160] sm:$0xff]
        %v334 = vld [vmem:[%s259 + $0x168] sm:$0xff]
        %v335 = vld [vmem:[%s259 + $0x170] sm:$0xff]
        %v336 = vld [vmem:[%s259 + $0x178] sm:$0xff]
        %v337 = vld [vmem:[%s259 + $0x180] sm:$0xff]
        %v338 = vld [vmem:[%s259 + $0x188] sm:$0xff]
        %v339 = vld [vmem:[%s259 + $0x190] sm:$0xff]
        %v340 = vld [vmem:[%s259 + $0x198] sm:$0xff]
        %v341 = vld [vmem:[%s259 + $0x1a0] sm:$0xff]
        %v342 = vld [vmem:[%s259 + $0x1a8] sm:$0xff]
        %v343 = vld [vmem:[%s259 + $0x1b0] sm:$0xff]
        %v344 = vld [vmem:[%s259 + $0x1b8] sm:$0xff]
        %v345 = vld [vmem:[%s259 + $0x1c0] sm:$0xff]
        %v346 = vld [vmem:[%s259 + $0x1c8] sm:$0xff]
        %v347 = vld [vmem:[%s259 + $0x1d0] sm:$0xff]
        %v348 = vld [vmem:[%s259 + $0x1d8] sm:$0xff]
        %v349 = vld [vmem:[%s259 + $0x1e0] sm:$0xff]
        %v350 = vld [vmem:[%s259 + $0x1e8] sm:$0xff]
        %v351 = vld [vmem:[%s259 + $0x1f0] sm:$0xff]
        %v352 = vld [vmem:[%s259 + $0x1f8] sm:$0xff]
        %v353 = vld [vmem:[%s259 + $0x200] sm:$0xff]
        %v354 = vld [vmem:[%s259 + $0x208] sm:$0xff]
        %v355 = vld [vmem:[%s259 + $0x210] sm:$0xff]
        %v356 = vld [vmem:[%s259 + $0x218] sm:$0xff]
        %v357 = vld [vmem:[%s259 + $0x220] sm:$0xff]
        %v358 = vld [vmem:[%s259 + $0x228] sm:$0xff]
        %v359 = vld [vmem:[%s259 + $0x230] sm:$0xff]
        %v360 = vld [vmem:[%s259 + $0x238] sm:$0xff]
        %v361 = vld [vmem:[%s259 + $0x240] sm:$0xff]
        %v362 = vld [vmem:[%s259 + $0x248] sm:$0xff]
        %v363 = vld [vmem:[%s259 + $0x250] sm:$0xff]
        %v364 = vld [vmem:[%s259 + $0x258] sm:$0xff]
        %v365 = vld [vmem:[%s259 + $0x260] sm:$0xff]
        %v366 = vld [vmem:[%s259 + $0x268] sm:$0xff]
        %v367 = vld [vmem:[%s259 + $0x270] sm:$0xff]
        %v368 = vld [vmem:[%s259 + $0x278] sm:$0xff]
        %v369 = vld [vmem:[%s259 + $0x280] sm:$0xff]
        %v370 = vld [vmem:[%s259 + $0x288] sm:$0xff]
        %v371 = vld [vmem:[%s259 + $0x290] sm:$0xff]
        %v372 = vld [vmem:[%s259 + $0x298] sm:$0xff]
        %v373 = vld [vmem:[%s259 + $0x2a0] sm:$0xff]
        %v374 = vld [vmem:[%s259 + $0x2a8] sm:$0xff]
        %v375 = vld [vmem:[%s259 + $0x2b0] sm:$0xff]
        %v376 = vld [vmem:[%s259 + $0x2b8] sm:$0xff]
        %v377 = vld [vmem:[%s259 + $0x2c0] sm:$0xff]
        %v378 = vld [vmem:[%s259 + $0x2c8] sm:$0xff]
        %v379 = vld [vmem:[%s259 + $0x2d0] sm:$0xff]
        %v380 = vld [vmem:[%s259 + $0x2d8] sm:$0xff]
        %v381 = vld [vmem:[%s259 + $0x2e0] sm:$0xff]
        %v382 = vld [vmem:[%s259 + $0x2e8] sm:$0xff]
        %v383 = vld [vmem:[%s259 + $0x2f0] sm:$0xff]
        %v384 = vld [vmem:[%s259 + $0x2f8] sm:$0xff]
        %v385 = vld [vmem:[%s268] sm:$0x7]
        %v387 = vlaneseq
        %v388 = vshrl.u32 %v387, 7
        %v389 = vsub.s32 0, %v388
        %v390 = vrot.slane %v385, %v389
        %v391 = vlaneseq
        %v392 = vshrl.u32 %v391, 7
        %v393 = vsub.s32 1, %v392
        %v394 = vrot.slane %v385, %v393
        %v395 = vlaneseq
        %v396 = vshrl.u32 %v395, 7
        %v397 = vsub.s32 2, %v396
        %v398 = vrot.slane %v385, %v397
        %402 = vmatprep.subr.mxu0 %v290
        %403 = vmatpush1.msra.mxu0 %v289
        %404 = vmatprep.subr.mxu0 %v293
        %405 = vmatpush1.msra.mxu0 %v292
        %406 = vmatprep.subr.mxu0 %v296
        %407 = vmatpush1.msra.mxu0 %v295
        %408 = vmatprep.subr.mxu0 %v299
        %409 = vmatpush1.msra.mxu0 %v298
        %410 = vmatprep.subr.mxu0 %v302
        %411 = vmatpush1.msra.mxu0 %v301
        %412 = vmatprep.subr.mxu0 %v305
        %413 = vmatpush1.msra.mxu0 %v304
        %414 = vmatprep.subr.mxu0 %v308
        %415 = vmatpush1.msra.mxu0 %v307
        %416 = vmatprep.subr.mxu0 %v311
        %417 = vmatpush1.msra.mxu0 %v310
        %418 = vmatprep.subr.mxu0 %v314
        %419 = vmatpush1.msra.mxu0 %v313
        %420 = vmatprep.subr.mxu0 %v317
        %421 = vmatpush1.msra.mxu0 %v316
        %422 = vmatprep.subr.mxu0 %v320
        %423 = vmatpush1.msra.mxu0 %v319
        %424 = vmatprep.subr.mxu0 %v323
        %425 = vmatpush1.msra.mxu0 %v322
        %426 = vmatprep.subr.mxu0 %v326
        %427 = vmatpush1.msra.mxu0 %v325
        %428 = vmatprep.subr.mxu0 %v329
        %429 = vmatpush1.msra.mxu0 %v328
        %430 = vmatprep.subr.mxu0 %v332
        %431 = vmatpush1.msra.mxu0 %v331
        %432 = vmatprep.subr.mxu0 %v335
        %433 = vmatpush1.msra.mxu0 %v334
        %434 = vmatprep.subr.mxu0 %v338
        %435 = vmatpush1.msra.mxu0 %v337
        %436 = vmatprep.subr.mxu0 %v341
        %437 = vmatpush1.msra.mxu0 %v340
        %438 = vmatprep.subr.mxu0 %v344
        %439 = vmatpush1.msra.mxu0 %v343
        %440 = vmatprep.subr.mxu0 %v347
        %441 = vmatpush1.msra.mxu0 %v346
        %442 = vmatprep.subr.mxu0 %v350
        %443 = vmatpush1.msra.mxu0 %v349
        %444 = vmatprep.subr.mxu0 %v353
        %445 = vmatpush1.msra.mxu0 %v352
        %446 = vmatprep.subr.mxu0 %v356
        %447 = vmatpush1.msra.mxu0 %v355
        %448 = vmatprep.subr.mxu0 %v359
        %449 = vmatpush1.msra.mxu0 %v358
        %450 = vmatprep.subr.mxu0 %v362
        %451 = vmatpush1.msra.mxu0 %v361
        %452 = vmatprep.subr.mxu0 %v365
        %453 = vmatpush1.msra.mxu0 %v364
        %454 = vmatprep.subr.mxu0 %v368
        %455 = vmatpush1.msra.mxu0 %v367
        %456 = vmatprep.subr.mxu0 %v371
        %457 = vmatpush1.msra.mxu0 %v370
        %458 = vmatprep.subr.mxu0 %v374
        %459 = vmatpush1.msra.mxu0 %v373
        %460 = vmatprep.subr.mxu0 %v377
        %461 = vmatpush1.msra.mxu0 %v376
        %462 = vmatprep.subr.mxu0 %v380
        %463 = vmatpush1.msra.mxu0 %v379
        %464 = vmatprep.subr.mxu0 %v383
        %465 = vmatpush1.msra.mxu0 %v382
        %466 = vmatprep.mubr.f32.mxu0 %v274
        %467 = vmatmul.mubr.f32.gmra.mrb[0].mxu0 %v273
        %v468 = vpop.f32.mrb[0].mxu0
        %v469 = vadd.f32 %v390, %v468
        %v470 = vpop.f32.mrb[0].mxu0
        %v471 = vadd.f32 %v394, %v470
        %472 = vmatprep.mubr.f32.mxu0 %v276
        %473 = vmatmul.mubr.f32.gmra.mrb[0].mxu0 %v275
        %v474 = vpop.f32.mrb[0].mxu0
        %v475 = vadd.f32 %v390, %v474
        %v476 = vpop.f32.mrb[0].mxu0
        %v477 = vadd.f32 %v394, %v476
        %478 = vmatprep.mubr.f32.mxu0 %v278
        %479 = vmatmul.mubr.f32.gmra.mrb[0].mxu0 %v277
        %v480 = vpop.f32.mrb[0].mxu0
        %v481 = vadd.f32 %v390, %v480
        %v482 = vpop.f32.mrb[0].mxu0
        %v483 = vadd.f32 %v394, %v482
        %484 = vmatprep.mubr.f32.mxu0 %v280
        %485 = vmatmul.mubr.f32.gmra.mrb[0].mxu0 %v279
        %v486 = vpop.f32.mrb[0].mxu0
        %v487 = vadd.f32 %v390, %v486
        %v488 = vpop.f32.mrb[0].mxu0
        %v489 = vadd.f32 %v394, %v488
        %490 = vmatprep.mubr.f32.mxu0 %v282
        %491 = vmatmul.mubr.f32.gmra.mrb[0].mxu0 %v281
        %v492 = vpop.f32.mrb[0].mxu0
        %v493 = vadd.f32 %v390, %v492
        %v494 = vpop.f32.mrb[0].mxu0
        %v495 = vadd.f32 %v394, %v494
        %496 = vmatprep.mubr.f32.mxu0 %v284
        %497 = vmatmul.mubr.f32.gmra.mrb[0].mxu0 %v283
        %v498 = vpop.f32.mrb[0].mxu0
        %v499 = vadd.f32 %v390, %v498
        %v500 = vpop.f32.mrb[0].mxu0
        %v501 = vadd.f32 %v394, %v500
        %502 = vmatprep.mubr.f32.mxu0 %v286
        %503 = vmatmul.mubr.f32.gmra.mrb[0].mxu0 %v285
        %v504 = vpop.f32.mrb[0].mxu0
        %v505 = vadd.f32 %v390, %v504
        %v506 = vpop.f32.mrb[0].mxu0
        %v507 = vadd.f32 %v394, %v506
        %508 = vmatprep.mubr.f32.mxu0 %v288
        %509 = vmatmul.mubr.f32.gmra.mrb[0].mxu0 %v287
        %v510 = vpop.f32.mrb[0].mxu0
        %v511 = vadd.f32 %v390, %v510
        %v512 = vpop.f32.mrb[0].mxu0
        %v513 = vadd.f32 %v394, %v512
        %514 = vdwg.mxu0
        %515 = vmatprep.subr.mxu0 0.0
        %516 = vmatpush1.msra.mxu0 %v291
        %517 = vmatprep.subr.mxu0 0.0
        %518 = vmatpush1.msra.mxu0 %v294
        %519 = vmatprep.subr.mxu0 0.0
        %520 = vmatpush1.msra.mxu0 %v297
        %521 = vmatprep.subr.mxu0 0.0
        %522 = vmatpush1.msra.mxu0 %v300
        %523 = vmatprep.subr.mxu0 0.0
        %524 = vmatpush1.msra.mxu0 %v303
        %525 = vmatprep.subr.mxu0 0.0
        %526 = vmatpush1.msra.mxu0 %v306
        %527 = vmatprep.subr.mxu0 0.0
        %528 = vmatpush1.msra.mxu0 %v309
        %529 = vmatprep.subr.mxu0 0.0
        %530 = vmatpush1.msra.mxu0 %v312
        %531 = vmatprep.subr.mxu0 0.0
        %532 = vmatpush1.msra.mxu0 %v315
        %533 = vmatprep.subr.mxu0 0.0
        %534 = vmatpush1.msra.mxu0 %v318
        %535 = vmatprep.subr.mxu0 0.0
        %536 = vmatpush1.msra.mxu0 %v321
        %537 = vmatprep.subr.mxu0 0.0
        %538 = vmatpush1.msra.mxu0 %v324
        %539 = vmatprep.subr.mxu0 0.0
        %540 = vmatpush1.msra.mxu0 %v327
        %541 = vmatprep.subr.mxu0 0.0
        %542 = vmatpush1.msra.mxu0 %v330
        %543 = vmatprep.subr.mxu0 0.0
        %544 = vmatpush1.msra.mxu0 %v333
        %545 = vmatprep.subr.mxu0 0.0
        %546 = vmatpush1.msra.mxu0 %v336
        %547 = vmatprep.subr.mxu0 0.0
        %548 = vmatpush1.msra.mxu0 %v339
        %549 = vmatprep.subr.mxu0 0.0
        %550 = vmatpush1.msra.mxu0 %v342
        %551 = vmatprep.subr.mxu0 0.0
        %552 = vmatpush1.msra.mxu0 %v345
        %553 = vmatprep.subr.mxu0 0.0
        %554 = vmatpush1.msra.mxu0 %v348
        %555 = vmatprep.subr.mxu0 0.0
        %556 = vmatpush1.msra.mxu0 %v351
        %557 = vmatprep.subr.mxu0 0.0
        %558 = vmatpush1.msra.mxu0 %v354
        %559 = vmatprep.subr.mxu0 0.0
        %560 = vmatpush1.msra.mxu0 %v357
        %561 = vmatprep.subr.mxu0 0.0
        %562 = vmatpush1.msra.mxu0 %v360
        %563 = vmatprep.subr.mxu0 0.0
        %564 = vmatpush1.msra.mxu0 %v363
        %565 = vmatprep.subr.mxu0 0.0
        %566 = vmatpush1.msra.mxu0 %v366
        %567 = vmatprep.subr.mxu0 0.0
        %568 = vmatpush1.msra.mxu0 %v369
        %569 = vmatprep.subr.mxu0 0.0
        %570 = vmatpush1.msra.mxu0 %v372
        %571 = vmatprep.subr.mxu0 0.0
        %572 = vmatpush1.msra.mxu0 %v375
        %573 = vmatprep.subr.mxu0 0.0
        %574 = vmatpush1.msra.mxu0 %v378
        %575 = vmatprep.subr.mxu0 0.0
        %576 = vmatpush1.msra.mxu0 %v381
        %577 = vmatprep.subr.mxu0 0.0
        %578 = vmatpush1.msra.mxu0 %v384
        %579 = vmatprep.mubr.f32.mxu0 %v274
        %580 = vmatmul.mubr.f32.gmra.mrb[0].mxu0 %v273
        %v581 = vpop.f32.mrb[0].mxu0
        %v582 = vadd.f32 %v398, %v581
        %v583 = vpop.f32.mrb[0].mxu0
        %584 = vmatprep.mubr.f32.mxu0 %v276
        %585 = vmatmul.mubr.f32.gmra.mrb[0].mxu0 %v275
        %v586 = vpop.f32.mrb[0].mxu0
        %v587 = vadd.f32 %v398, %v586
        %v588 = vpop.f32.mrb[0].mxu0
        %589 = vmatprep.mubr.f32.mxu0 %v278
        %590 = vmatmul.mubr.f32.gmra.mrb[0].mxu0 %v277
        %v591 = vpop.f32.mrb[0].mxu0
        %v592 = vadd.f32 %v398, %v591
        %v593 = vpop.f32.mrb[0].mxu0
        %594 = vmatprep.mubr.f32.mxu0 %v280
        %595 = vmatmul.mubr.f32.gmra.mrb[0].mxu0 %v279
        %v596 = vpop.f32.mrb[0].mxu0
        %v597 = vadd.f32 %v398, %v596
        %v598 = vpop.f32.mrb[0].mxu0
        %599 = vmatprep.mubr.f32.mxu0 %v282
        %600 = vmatmul.mubr.f32.gmra.mrb[0].mxu0 %v281
        %v601 = vpop.f32.mrb[0].mxu0
        %v602 = vadd.f32 %v398, %v601
        %v603 = vpop.f32.mrb[0].mxu0
        %604 = vmatprep.mubr.f32.mxu0 %v284
        %605 = vmatmul.mubr.f32.gmra.mrb[0].mxu0 %v283
        %v606 = vpop.f32.mrb[0].mxu0
        %v607 = vadd.f32 %v398, %v606
        %v608 = vpop.f32.mrb[0].mxu0
        %609 = vmatprep.mubr.f32.mxu0 %v286
        %610 = vmatmul.mubr.f32.gmra.mrb[0].mxu0 %v285
        %v611 = vpop.f32.mrb[0].mxu0
        %v612 = vadd.f32 %v398, %v611
        %v613 = vpop.f32.mrb[0].mxu0
        %614 = vmatprep.mubr.f32.mxu0 %v288
        %615 = vmatmul.mubr.f32.gmra.mrb[0].mxu0 %v287
        %v616 = vpop.f32.mrb[0].mxu0
        %v617 = vadd.f32 %v398, %v616
        %v618 = vpop.f32.mrb[0].mxu0
        %619 = vdwg.mxu0
        %620 = vst [vmem:[#allocation2] sm:$0xff] %v469
        %621 = vst [vmem:[#allocation2 + $0x8] sm:$0xff] %v471
        %622 = vst [vmem:[#allocation2 + $0x10] sm:$0xff] %v582
        %623 = vst [vmem:[#allocation2 + $0x18] sm:$0xff] %v475
        %624 = vst [vmem:[#allocation2 + $0x20] sm:$0xff] %v477
        %625 = vst [vmem:[#allocation2 + $0x28] sm:$0xff] %v587
        %626 = vst [vmem:[#allocation2 + $0x30] sm:$0xff] %v481
        %627 = vst [vmem:[#allocation2 + $0x38] sm:$0xff] %v483
        %628 = vst [vmem:[#allocation2 + $0x40] sm:$0xff] %v592
        %629 = vst [vmem:[#allocation2 + $0x48] sm:$0xff] %v487
        %630 = vst [vmem:[#allocation2 + $0x50] sm:$0xff] %v489
        %631 = vst [vmem:[#allocation2 + $0x58] sm:$0xff] %v597
        %632 = vst [vmem:[#allocation2 + $0x60] sm:$0xff] %v493
        %633 = vst [vmem:[#allocation2 + $0x68] sm:$0xff] %v495
        %634 = vst [vmem:[#allocation2 + $0x70] sm:$0xff] %v602
        %635 = vst [vmem:[#allocation2 + $0x78] sm:$0xff] %v499
        %636 = vst [vmem:[#allocation2 + $0x80] sm:$0xff] %v501
        %637 = vst [vmem:[#allocation2 + $0x88] sm:$0xff] %v607
        %638 = vst [vmem:[#allocation2 + $0x90] sm:$0xff] %v505
        %639 = vst [vmem:[#allocation2 + $0x98] sm:$0xff] %v507
        %640 = vst [vmem:[#allocation2 + $0xa0] sm:$0xff] %v612
        %641 = vst [vmem:[#allocation2 + $0xa8] sm:$0xff] %v511
        %642 = vst [vmem:[#allocation2 + $0xb0] sm:$0xff] %v513
        %643 = vst [vmem:[#allocation2 + $0xb8] sm:$0xff] %v617
        %644 = vst [vmem:[#allocation3] sm:$0xff] 0.0
        %v645 = vld [vmem:[%s264] sm:$0xff]
        %v646 = vld [vmem:[%s264 + $0x8] sm:$0xff]
        %v647 = vld [vmem:[%s264 + $0x10] sm:$0xff]
        %v648 = vld [vmem:[%s264 + $0x18] sm:$0xff]
        %v649 = vld [vmem:[%s264 + $0x20] sm:$0xff]
        %v650 = vld [vmem:[%s264 + $0x28] sm:$0xff]
        %v651 = vld [vmem:[%s264 + $0x30] sm:$0xff]
        %v652 = vld [vmem:[%s264 + $0x38] sm:$0xff]
        %v653 = vld [vmem:[%s264 + $0x40] sm:$0xff]
        %v654 = vld [vmem:[%s264 + $0x48] sm:$0xff]
        %v655 = vld [vmem:[%s264 + $0x50] sm:$0xff]
        %v656 = vld [vmem:[%s264 + $0x58] sm:$0xff]
        %v657 = vld [vmem:[%s264 + $0x60] sm:$0xff]
        %v658 = vld [vmem:[%s264 + $0x68] sm:$0xff]
        %v659 = vld [vmem:[%s264 + $0x70] sm:$0xff]
        %v660 = vld [vmem:[%s264 + $0x78] sm:$0xff]
        %v661 = vld [vmem:[%s264 + $0x80] sm:$0xff]
        %v662 = vld [vmem:[%s264 + $0x88] sm:$0xff]
        %v663 = vld [vmem:[%s264 + $0x90] sm:$0xff]
        %v664 = vld [vmem:[%s264 + $0x98] sm:$0xff]
        %v665 = vld [vmem:[%s264 + $0xa0] sm:$0xff]
        %v666 = vld [vmem:[%s264 + $0xa8] sm:$0xff]
        %v667 = vld [vmem:[%s264 + $0xb0] sm:$0xff]
        %v668 = vld [vmem:[%s264 + $0xb8] sm:$0xff]
        %v669 = vld [vmem:[%s264 + $0xc0] sm:$0xff]
        %v670 = vld [vmem:[%s264 + $0xc8] sm:$0xff]
        %v671 = vld [vmem:[%s264 + $0xd0] sm:$0xff]
        %v672 = vld [vmem:[%s264 + $0xd8] sm:$0xff]
        %v673 = vld [vmem:[%s264 + $0xe0] sm:$0xff]
        %v674 = vld [vmem:[%s264 + $0xe8] sm:$0xff]
        %v675 = vld [vmem:[%s264 + $0xf0] sm:$0xff]
        %v676 = vld [vmem:[%s264 + $0xf8] sm:$0xff]
        %v677 = vld [vmem:[%s264 + $0x100] sm:$0xff]
        %v678 = vld [vmem:[%s264 + $0x108] sm:$0xff]
        %v679 = vld [vmem:[%s264 + $0x110] sm:$0xff]
        %v680 = vld [vmem:[%s264 + $0x118] sm:$0xff]
        %v681 = vld [vmem:[%s264 + $0x120] sm:$0xff]
        %v682 = vld [vmem:[%s264 + $0x128] sm:$0xff]
        %v683 = vld [vmem:[%s264 + $0x130] sm:$0xff]
        %v684 = vld [vmem:[%s264 + $0x138] sm:$0xff]
        %v685 = vld [vmem:[%s264 + $0x140] sm:$0xff]
        %v686 = vld [vmem:[%s264 + $0x148] sm:$0xff]
        %v687 = vld [vmem:[%s264 + $0x150] sm:$0xff]
        %v688 = vld [vmem:[%s264 + $0x158] sm:$0xff]
        %v689 = vld [vmem:[%s264 + $0x160] sm:$0xff]
        %v690 = vld [vmem:[%s264 + $0x168] sm:$0xff]
        %v691 = vld [vmem:[%s264 + $0x170] sm:$0xff]
        %v692 = vld [vmem:[%s264 + $0x178] sm:$0xff]
        %v693 = vld [vmem:[%s272] sm:$0x7]
        %p694 = scmp.eq.s32.totalorder %s16, 0
        %s695 = scalar_select %p694, 0, 7
        %s696 = smul.u32 %s695, 8
        %s697 = sshra.s32 %s696, 3
        %s698 = sand.u32 %s696, 7
        %s699 = smul.u32 %s697, 3
        %s700 = smul.addr %s699, 8
        %s701 = scalar_lea.vmem [#allocation2], %s700
        %v702 = vld [vmem:[%s701] sm:$0xff]
        %v703 = vld [vmem:[%s701 + $0x8] sm:$0xff]
        %v704 = vld [vmem:[%s701 + $0x10] sm:$0xff]
        %v705 = vld [vmem:[#allocation3] sm:$0xff]
        %v707 = vlaneseq
        %v708 = vshrl.u32 %v707, 7
        %v709 = vsub.s32 0, %v708
        %v710 = vrot.slane %v693, %v709
        %v711 = vlaneseq
        %v712 = vshrl.u32 %v711, 7
        %v713 = vsub.s32 1, %v712
        %v714 = vrot.slane %v693, %v713
        %v715 = vlaneseq
        %v716 = vshrl.u32 %v715, 7
        %v717 = vsub.s32 2, %v716
        %v718 = vrot.slane %v693, %v717
        %722 = vmatprep.subr.mxu0 %v646
        %723 = vmatpush1.msra.mxu0 %v645
        %724 = vmatprep.subr.mxu0 %v649
        %725 = vmatpush1.msra.mxu0 %v648
        %726 = vmatprep.subr.mxu0 %v652
        %727 = vmatpush1.msra.mxu0 %v651
        %728 = vmatprep.subr.mxu0 %v655
        %729 = vmatpush1.msra.mxu0 %v654
        %730 = vmatprep.subr.mxu0 %v658
        %731 = vmatpush1.msra.mxu0 %v657
        %732 = vmatprep.subr.mxu0 %v661
        %733 = vmatpush1.msra.mxu0 %v660
        %734 = vmatprep.subr.mxu0 %v664
        %735 = vmatpush1.msra.mxu0 %v663
        %736 = vmatprep.subr.mxu0 %v667
        %737 = vmatpush1.msra.mxu0 %v666
        %738 = vmatprep.subr.mxu0 %v670
        %739 = vmatpush1.msra.mxu0 %v669
        %740 = vmatprep.subr.mxu0 %v673
        %741 = vmatpush1.msra.mxu0 %v672
        %742 = vmatprep.subr.mxu0 %v676
        %743 = vmatpush1.msra.mxu0 %v675
        %744 = vmatprep.subr.mxu0 %v679
        %745 = vmatpush1.msra.mxu0 %v678
        %746 = vmatprep.subr.mxu0 %v682
        %747 = vmatpush1.msra.mxu0 %v681
        %748 = vmatprep.subr.mxu0 %v685
        %749 = vmatpush1.msra.mxu0 %v684
        %750 = vmatprep.subr.mxu0 %v688
        %751 = vmatpush1.msra.mxu0 %v687
        %752 = vmatprep.subr.mxu0 %v691
        %753 = vmatpush1.msra.mxu0 %v690
        %754 = vmatprep.subr.mxu0 0.0
        %755 = vmatpush1.msra.mxu0 0.0
        %756 = vmatprep.subr.mxu0 0.0
        %757 = vmatpush1.msra.mxu0 0.0
        %758 = vmatprep.subr.mxu0 0.0
        %759 = vmatpush1.msra.mxu0 0.0
        %760 = vmatprep.subr.mxu0 0.0
        %761 = vmatpush1.msra.mxu0 0.0
        %762 = vmatprep.subr.mxu0 0.0
        %763 = vmatpush1.msra.mxu0 0.0
        %764 = vmatprep.subr.mxu0 0.0
        %765 = vmatpush1.msra.mxu0 0.0
        %766 = vmatprep.subr.mxu0 0.0
        %767 = vmatpush1.msra.mxu0 0.0
        %768 = vmatprep.subr.mxu0 0.0
        %769 = vmatpush1.msra.mxu0 0.0
        %770 = vmatprep.subr.mxu0 0.0
        %771 = vmatpush1.msra.mxu0 0.0
        %772 = vmatprep.subr.mxu0 0.0
        %773 = vmatpush1.msra.mxu0 0.0
        %774 = vmatprep.subr.mxu0 0.0
        %775 = vmatpush1.msra.mxu0 0.0
        %776 = vmatprep.subr.mxu0 0.0
        %777 = vmatpush1.msra.mxu0 0.0
        %778 = vmatprep.subr.mxu0 0.0
        %779 = vmatpush1.msra.mxu0 0.0
        %780 = vmatprep.subr.mxu0 0.0
        %781 = vmatpush1.msra.mxu0 0.0
        %782 = vmatprep.subr.mxu0 0.0
        %783 = vmatpush1.msra.mxu0 0.0
        %784 = vmatprep.subr.mxu0 0.0
        %785 = vmatpush1.msra.mxu0 0.0
        %786 = vmatprep.mubr.f32.mxu0 0.0
        %787 = vmatmul.mubr.f32.gmra.mrb[0].mxu0 %v705
        %v788 = vpop.f32.mrb[0].mxu0
        %v789 = vadd.f32 %v710, %v788
        %v790 = vpop.f32.mrb[0].mxu0
        %v791 = vadd.f32 %v714, %v790
        %792 = vdwg.mxu0
        %793 = vmatprep.subr.mxu0 0.0
        %794 = vmatpush1.msra.mxu0 %v647
        %795 = vmatprep.subr.mxu0 0.0
        %796 = vmatpush1.msra.mxu0 %v650
        %797 = vmatprep.subr.mxu0 0.0
        %798 = vmatpush1.msra.mxu0 %v653
        %799 = vmatprep.subr.mxu0 0.0
        %800 = vmatpush1.msra.mxu0 %v656
        %801 = vmatprep.subr.mxu0 0.0
        %802 = vmatpush1.msra.mxu0 %v659
        %803 = vmatprep.subr.mxu0 0.0
        %804 = vmatpush1.msra.mxu0 %v662
        %805 = vmatprep.subr.mxu0 0.0
        %806 = vmatpush1.msra.mxu0 %v665
        %807 = vmatprep.subr.mxu0 0.0
        %808 = vmatpush1.msra.mxu0 %v668
        %809 = vmatprep.subr.mxu0 0.0
        %810 = vmatpush1.msra.mxu0 %v671
        %811 = vmatprep.subr.mxu0 0.0
        %812 = vmatpush1.msra.mxu0 %v674
        %813 = vmatprep.subr.mxu0 0.0
        %814 = vmatpush1.msra.mxu0 %v677
        %815 = vmatprep.subr.mxu0 0.0
        %816 = vmatpush1.msra.mxu0 %v680
        %817 = vmatprep.subr.mxu0 0.0
        %818 = vmatpush1.msra.mxu0 %v683
        %819 = vmatprep.subr.mxu0 0.0
        %820 = vmatpush1.msra.mxu0 %v686
        %821 = vmatprep.subr.mxu0 0.0
        %822 = vmatpush1.msra.mxu0 %v689
        %823 = vmatprep.subr.mxu0 0.0
        %824 = vmatpush1.msra.mxu0 %v692
        %825 = vmatprep.subr.mxu0 0.0
        %826 = vmatpush1.msra.mxu0 0.0
        %827 = vmatprep.subr.mxu0 0.0
        %828 = vmatpush1.msra.mxu0 0.0
        %829 = vmatprep.subr.mxu0 0.0
        %830 = vmatpush1.msra.mxu0 0.0
        %831 = vmatprep.subr.mxu0 0.0
        %832 = vmatpush1.msra.mxu0 0.0
        %833 = vmatprep.subr.mxu0 0.0
        %834 = vmatpush1.msra.mxu0 0.0
        %835 = vmatprep.subr.mxu0 0.0
        %836 = vmatpush1.msra.mxu0 0.0
        %837 = vmatprep.subr.mxu0 0.0
        %838 = vmatpush1.msra.mxu0 0.0
        %839 = vmatprep.subr.mxu0 0.0
        %840 = vmatpush1.msra.mxu0 0.0
        %841 = vmatprep.subr.mxu0 0.0
        %842 = vmatpush1.msra.mxu0 0.0
        %843 = vmatprep.subr.mxu0 0.0
        %844 = vmatpush1.msra.mxu0 0.0
        %845 = vmatprep.subr.mxu0 0.0
        %846 = vmatpush1.msra.mxu0 0.0
        %847 = vmatprep.subr.mxu0 0.0
        %848 = vmatpush1.msra.mxu0 0.0
        %849 = vmatprep.subr.mxu0 0.0
        %850 = vmatpush1.msra.mxu0 0.0
        %851 = vmatprep.subr.mxu0 0.0
        %852 = vmatpush1.msra.mxu0 0.0
        %853 = vmatprep.subr.mxu0 0.0
        %854 = vmatpush1.msra.mxu0 0.0
        %855 = vmatprep.subr.mxu0 0.0
        %856 = vmatpush1.msra.mxu0 0.0
        %857 = vmatprep.mubr.f32.mxu0 0.0
        %858 = vmatmul.mubr.f32.gmra.mrb[0].mxu0 %v705
        %v859 = vpop.f32.mrb[0].mxu0
        %v860 = vadd.f32 %v718, %v859
        %v861 = vpop.f32.mrb[0].mxu0
        %862 = vdwg.mxu0
        %v863 = vadd.f32 %v702, %v789
        %v864 = vxor.u32 %v863, 2147483648
        %v865 = vmul.f32 %v864, 1.442695
        %v866 = vpow.pop %v865
        %v867 = vadd.f32 %v866, 1.0
        %v868 = vrcp.pop %v867
        %v869 = vmul.f32 1.0, %v868
        %v870 = vadd.f32 %v703, %v791
        %v871 = vxor.u32 %v870, 2147483648
        %v872 = vmul.f32 %v871, 1.442695
        %v873 = vpow.pop %v872
        %v874 = vadd.f32 %v873, 1.0
        %v875 = vrcp.pop %v874
        %v876 = vmul.f32 1.0, %v875
        %v877 = vmul.f32 %v869, %v860
        %v878 = vadd.f32 %v704, %v877
        %v879 = vtanh.pop %v878
        %v880 = vsub.f32 1.0, %v876
        %v881 = vmul.f32 %v880, %v879
        %v882 = vmul.f32 %v876, %v705
        %v883 = vadd.f32 %v881, %v882
        %884 = vst [vmem:[#allocation3] sm:$0xff] %v883
        %s885 = scalar_lea.vmem %s254, %s696 [#allocation4]
        %886 = vst [vmem:[%s885] sm:$0xff] %v883
        %s887 = scalar_select %p694, 1, 6
        %s888 = smul.u32 %s887, 8
        %s889 = sshra.s32 %s888, 3
        %s890 = sand.u32 %s888, 7
        %s891 = smul.u32 %s889, 3
        %s892 = smul.addr %s891, 8
        %s893 = scalar_lea.vmem [#allocation2], %s892
        %v894 = vld [vmem:[%s893] sm:$0xff]
        %v895 = vld [vmem:[%s893 + $0x8] sm:$0xff]
        %v896 = vld [vmem:[%s893 + $0x10] sm:$0xff]
        %v897 = vld [vmem:[#allocation3] sm:$0xff]
        %898 = vmatprep.subr.mxu0 %v646
        %899 = vmatpush1.msra.mxu0 %v645
        %900 = vmatprep.subr.mxu0 %v649
        %901 = vmatpush1.msra.mxu0 %v648
        %902 = vmatprep.subr.mxu0 %v652
        %903 = vmatpush1.msra.mxu0 %v651
        %904 = vmatprep.subr.mxu0 %v655
        %905 = vmatpush1.msra.mxu0 %v654
        %906 = vmatprep.subr.mxu0 %v658
        %907 = vmatpush1.msra.mxu0 %v657
        %908 = vmatprep.subr.mxu0 %v661
        %909 = vmatpush1.msra.mxu0 %v660
        %910 = vmatprep.subr.mxu0 %v664
        %911 = vmatpush1.msra.mxu0 %v663
        %912 = vmatprep.subr.mxu0 %v667
        %913 = vmatpush1.msra.mxu0 %v666
        %914 = vmatprep.subr.mxu0 %v670
        %915 = vmatpush1.msra.mxu0 %v669
        %916 = vmatprep.subr.mxu0 %v673
        %917 = vmatpush1.msra.mxu0 %v672
        %918 = vmatprep.subr.mxu0 %v676
        %919 = vmatpush1.msra.mxu0 %v675
        %920 = vmatprep.subr.mxu0 %v679
        %921 = vmatpush1.msra.mxu0 %v678
        %922 = vmatprep.subr.mxu0 %v682
        %923 = vmatpush1.msra.mxu0 %v681
        %924 = vmatprep.subr.mxu0 %v685
        %925 = vmatpush1.msra.mxu0 %v684
        %926 = vmatprep.subr.mxu0 %v688
        %927 = vmatpush1.msra.mxu0 %v687
        %928 = vmatprep.subr.mxu0 %v691
        %929 = vmatpush1.msra.mxu0 %v690
        %930 = vmatprep.subr.mxu0 0.0
        %931 = vmatpush1.msra.mxu0 0.0
        %932 = vmatprep.subr.mxu0 0.0
        %933 = vmatpush1.msra.mxu0 0.0
        %934 = vmatprep.subr.mxu0 0.0
        %935 = vmatpush1.msra.mxu0 0.0
        %936 = vmatprep.subr.mxu0 0.0
        %937 = vmatpush1.msra.mxu0 0.0
        %938 = vmatprep.subr.mxu0 0.0
        %939 = vmatpush1.msra.mxu0 0.0
        %940 = vmatprep.subr.mxu0 0.0
        %941 = vmatpush1.msra.mxu0 0.0
        %942 = vmatprep.subr.mxu0 0.0
        %943 = vmatpush1.msra.mxu0 0.0
        %944 = vmatprep.subr.mxu0 0.0
        %945 = vmatpush1.msra.mxu0 0.0
        %946 = vmatprep.subr.mxu0 0.0
        %947 = vmatpush1.msra.mxu0 0.0
        %948 = vmatprep.subr.mxu0 0.0
        %949 = vmatpush1.msra.mxu0 0.0
        %950 = vmatprep.subr.mxu0 0.0
        %951 = vmatpush1.msra.mxu0 0.0
        %952 = vmatprep.subr.mxu0 0.0
        %953 = vmatpush1.msra.mxu0 0.0
        %954 = vmatprep.subr.mxu0 0.0
        %955 = vmatpush1.msra.mxu0 0.0
        %956 = vmatprep.subr.mxu0 0.0
        %957 = vmatpush1.msra.mxu0 0.0
        %958 = vmatprep.subr.mxu0 0.0
        %959 = vmatpush1.msra.mxu0 0.0
        %960 = vmatprep.subr.mxu0 0.0
        %961 = vmatpush1.msra.mxu0 0.0
        %962 = vmatprep.mubr.f32.mxu0 0.0
        %963 = vmatmul.mubr.f32.gmra.mrb[0].mxu0 %v897
        %v964 = vpop.f32.mrb[0].mxu0
        %v965 = vadd.f32 %v710, %v964
        %v966 = vpop.f32.mrb[0].mxu0
        %v967 = vadd.f32 %v714, %v966
        %968 = vdwg.mxu0
        %969 = vmatprep.subr.mxu0 0.0
        %970 = vmatpush1.msra.mxu0 %v647
        %971 = vmatprep.subr.mxu0 0.0
        %972 = vmatpush1.msra.mxu0 %v650
        %973 = vmatprep.subr.mxu0 0.0
        %974 = vmatpush1.msra.mxu0 %v653
        %975 = vmatprep.subr.mxu0 0.0
        %976 = vmatpush1.msra.mxu0 %v656
        %977 = vmatprep.subr.mxu0 0.0
        %978 = vmatpush1.msra.mxu0 %v659
        %979 = vmatprep.subr.mxu0 0.0
        %980 = vmatpush1.msra.mxu0 %v662
        %981 = vmatprep.subr.mxu0 0.0
        %982 = vmatpush1.msra.mxu0 %v665
        %983 = vmatprep.subr.mxu0 0.0
        %984 = vmatpush1.msra.mxu0 %v668
        %985 = vmatprep.subr.mxu0 0.0
        %986 = vmatpush1.msra.mxu0 %v671
        %987 = vmatprep.subr.mxu0 0.0
        %988 = vmatpush1.msra.mxu0 %v674
        %989 = vmatprep.subr.mxu0 0.0
        %990 = vmatpush1.msra.mxu0 %v677
        %991 = vmatprep.subr.mxu0 0.0
        %992 = vmatpush1.msra.mxu0 %v680
        %993 = vmatprep.subr.mxu0 0.0
        %994 = vmatpush1.msra.mxu0 %v683
        %995 = vmatprep.subr.mxu0 0.0
        %996 = vmatpush1.msra.mxu0 %v686
        %997 = vmatprep.subr.mxu0 0.0
        %998 = vmatpush1.msra.mxu0 %v689
        %999 = vmatprep.subr.mxu0 0.0
        %1000 = vmatpush1.msra.mxu0 %v692
        %1001 = vmatprep.subr.mxu0 0.0
        %1002 = vmatpush1.msra.mxu0 0.0
        %1003 = vmatprep.subr.mxu0 0.0
        %1004 = vmatpush1.msra.mxu0 0.0
        %1005 = vmatprep.subr.mxu0 0.0
        %1006 = vmatpush1.msra.mxu0 0.0
        %1007 = vmatprep.subr.mxu0 0.0
        %1008 = vmatpush1.msra.mxu0 0.0
        %1009 = vmatprep.subr.mxu0 0.0
        %1010 = vmatpush1.msra.mxu0 0.0
        %1011 = vmatprep.subr.mxu0 0.0
        %1012 = vmatpush1.msra.mxu0 0.0
        %1013 = vmatprep.subr.mxu0 0.0
        %1014 = vmatpush1.msra.mxu0 0.0
        %1015 = vmatprep.subr.mxu0 0.0
        %1016 = vmatpush1.msra.mxu0 0.0
        %1017 = vmatprep.subr.mxu0 0.0
        %1018 = vmatpush1.msra.mxu0 0.0
        %1019 = vmatprep.subr.mxu0 0.0
        %1020 = vmatpush1.msra.mxu0 0.0
        %1021 = vmatprep.subr.mxu0 0.0
        %1022 = vmatpush1.msra.mxu0 0.0
        %1023 = vmatprep.subr.mxu0 0.0
        %1024 = vmatpush1.msra.mxu0 0.0
        %1025 = vmatprep.subr.mxu0 0.0
        %1026 = vmatpush1.msra.mxu0 0.0
        %1027 = vmatprep.subr.mxu0 0.0
        %1028 = vmatpush1.msra.mxu0 0.0
        %1029 = vmatprep.subr.mxu0 0.0
        %1030 = vmatpush1.msra.mxu0 0.0
        %1031 = vmatprep.subr.mxu0 0.0
        %1032 = vmatpush1.msra.mxu0 0.0
        %1033 = vmatprep.mubr.f32.mxu0 0.0
        %1034 = vmatmul.mubr.f32.gmra.mrb[0].mxu0 %v897
        %v1035 = vpop.f32.mrb[0].mxu0
        %v1036 = vadd.f32 %v718, %v1035
        %v1037 = vpop.f32.mrb[0].mxu0
        %1038 = vdwg.mxu0
        %v1039 = vadd.f32 %v894, %v965
        %v1040 = vxor.u32 %v1039, 2147483648
        %v1041 = vmul.f32 %v1040, 1.442695
        %v1042 = vpow.pop %v1041
        %v1043 = vadd.f32 %v1042, 1.0
        %v1044 = vrcp.pop %v1043
        %v1045 = vmul.f32 1.0, %v1044
        %v1046 = vadd.f32 %v895, %v967
        %v1047 = vxor.u32 %v1046, 2147483648
        %v1048 = vmul.f32 %v1047, 1.442695
        %v1049 = vpow.pop %v1048
        %v1050 = vadd.f32 %v1049, 1.0
        %v1051 = vrcp.pop %v1050
        %v1052 = vmul.f32 1.0, %v1051
        %v1053 = vmul.f32 %v1045, %v1036
        %v1054 = vadd.f32 %v896, %v1053
        %v1055 = vtanh.pop %v1054
        %v1056 = vsub.f32 1.0, %v1052
        %v1057 = vmul.f32 %v1056, %v1055
        %v1058 = vmul.f32 %v1052, %v897
        %v1059 = vadd.f32 %v1057, %v1058
        %1060 = vst [vmem:[#allocation3] sm:$0xff] %v1059
        %s1061 = scalar_lea.vmem %s254, %s888 [#allocation4]
        %1062 = vst [vmem:[%s1061] sm:$0xff] %v1059
        %s1063 = scalar_select %p694, 2, 5
        %s1064 = smul.u32 %s1063, 8
        %s1065 = sshra.s32 %s1064, 3
        %s1066 = sand.u32 %s1064, 7
        %s1067 = smul.u32 %s1065, 3
        %s1068 = smul.addr %s1067, 8
        %s1069 = scalar_lea.vmem [#allocation2], %s1068
        %v1070 = vld [vmem:[%s1069] sm:$0xff]
        %v1071 = vld [vmem:[%s1069 + $0x8] sm:$0xff]
        %v1072 = vld [vmem:[%s1069 + $0x10] sm:$0xff]
        %v1073 = vld [vmem:[#allocation3] sm:$0xff]
        %1074 = vmatprep.subr.mxu0 %v646
        %1075 = vmatpush1.msra.mxu0 %v645
        %1076 = vmatprep.subr.mxu0 %v649
        %1077 = vmatpush1.msra.mxu0 %v648
        %1078 = vmatprep.subr.mxu0 %v652
        %1079 = vmatpush1.msra.mxu0 %v651
        %1080 = vmatprep.subr.mxu0 %v655
        %1081 = vmatpush1.msra.mxu0 %v654
        %1082 = vmatprep.subr.mxu0 %v658
        %1083 = vmatpush1.msra.mxu0 %v657
        %1084 = vmatprep.subr.mxu0 %v661
        %1085 = vmatpush1.msra.mxu0 %v660
        %1086 = vmatprep.subr.mxu0 %v664
        %1087 = vmatpush1.msra.mxu0 %v663
        %1088 = vmatprep.subr.mxu0 %v667
        %1089 = vmatpush1.msra.mxu0 %v666
        %1090 = vmatprep.subr.mxu0 %v670
        %1091 = vmatpush1.msra.mxu0 %v669
        %1092 = vmatprep.subr.mxu0 %v673
        %1093 = vmatpush1.msra.mxu0 %v672
        %1094 = vmatprep.subr.mxu0 %v676
        %1095 = vmatpush1.msra.mxu0 %v675
        %1096 = vmatprep.subr.mxu0 %v679
        %1097 = vmatpush1.msra.mxu0 %v678
        %1098 = vmatprep.subr.mxu0 %v682
        %1099 = vmatpush1.msra.mxu0 %v681
        %1100 = vmatprep.subr.mxu0 %v685
        %1101 = vmatpush1.msra.mxu0 %v684
        %1102 = vmatprep.subr.mxu0 %v688
        %1103 = vmatpush1.msra.mxu0 %v687
        %1104 = vmatprep.subr.mxu0 %v691
        %1105 = vmatpush1.msra.mxu0 %v690
        %1106 = vmatprep.subr.mxu0 0.0
        %1107 = vmatpush1.msra.mxu0 0.0
        %1108 = vmatprep.subr.mxu0 0.0
        %1109 = vmatpush1.msra.mxu0 0.0
        %1110 = vmatprep.subr.mxu0 0.0
        %1111 = vmatpush1.msra.mxu0 0.0
        %1112 = vmatprep.subr.mxu0 0.0
        %1113 = vmatpush1.msra.mxu0 0.0
        %1114 = vmatprep.subr.mxu0 0.0
        %1115 = vmatpush1.msra.mxu0 0.0
        %1116 = vmatprep.subr.mxu0 0.0
        %1117 = vmatpush1.msra.mxu0 0.0
        %1118 = vmatprep.subr.mxu0 0.0
        %1119 = vmatpush1.msra.mxu0 0.0
        %1120 = vmatprep.subr.mxu0 0.0
        %1121 = vmatpush1.msra.mxu0 0.0
        %1122 = vmatprep.subr.mxu0 0.0
        %1123 = vmatpush1.msra.mxu0 0.0
        %1124 = vmatprep.subr.mxu0 0.0
        %1125 = vmatpush1.msra.mxu0 0.0
        %1126 = vmatprep.subr.mxu0 0.0
        %1127 = vmatpush1.msra.mxu0 0.0
        %1128 = vmatprep.subr.mxu0 0.0
        %1129 = vmatpush1.msra.mxu0 0.0
        %1130 = vmatprep.subr.mxu0 0.0
        %1131 = vmatpush1.msra.mxu0 0.0
        %1132 = vmatprep.subr.mxu0 0.0
        %1133 = vmatpush1.msra.mxu0 0.0
        %1134 = vmatprep.subr.mxu0 0.0
        %1135 = vmatpush1.msra.mxu0 0.0
        %1136 = vmatprep.subr.mxu0 0.0
        %1137 = vmatpush1.msra.mxu0 0.0
        %1138 = vmatprep.mubr.f32.mxu0 0.0
        %1139 = vmatmul.mubr.f32.gmra.mrb[0].mxu0 %v1073
        %v1140 = vpop.f32.mrb[0].mxu0
        %v1141 = vadd.f32 %v710, %v1140
        %v1142 = vpop.f32.mrb[0].mxu0
        %v1143 = vadd.f32 %v714, %v1142
        %1144 = vdwg.mxu0
        %1145 = vmatprep.subr.mxu0 0.0
        %1146 = vmatpush1.msra.mxu0 %v647
        %1147 = vmatprep.subr.mxu0 0.0
        %1148 = vmatpush1.msra.mxu0 %v650
        %1149 = vmatprep.subr.mxu0 0.0
        %1150 = vmatpush1.msra.mxu0 %v653
        %1151 = vmatprep.subr.mxu0 0.0
        %1152 = vmatpush1.msra.mxu0 %v656
        %1153 = vmatprep.subr.mxu0 0.0
        %1154 = vmatpush1.msra.mxu0 %v659
        %1155 = vmatprep.subr.mxu0 0.0
        %1156 = vmatpush1.msra.mxu0 %v662
        %1157 = vmatprep.subr.mxu0 0.0
        %1158 = vmatpush1.msra.mxu0 %v665
        %1159 = vmatprep.subr.mxu0 0.0
        %1160 = vmatpush1.msra.mxu0 %v668
        %1161 = vmatprep.subr.mxu0 0.0
        %1162 = vmatpush1.msra.mxu0 %v671
        %1163 = vmatprep.subr.mxu0 0.0
        %1164 = vmatpush1.msra.mxu0 %v674
        %1165 = vmatprep.subr.mxu0 0.0
        %1166 = vmatpush1.msra.mxu0 %v677
        %1167 = vmatprep.subr.mxu0 0.0
        %1168 = vmatpush1.msra.mxu0 %v680
        %1169 = vmatprep.subr.mxu0 0.0
        %1170 = vmatpush1.msra.mxu0 %v683
        %1171 = vmatprep.subr.mxu0 0.0
        %1172 = vmatpush1.msra.mxu0 %v686
        %1173 = vmatprep.subr.mxu0 0.0
        %1174 = vmatpush1.msra.mxu0 %v689
        %1175 = vmatprep.subr.mxu0 0.0
        %1176 = vmatpush1.msra.mxu0 %v692
        %1177 = vmatprep.subr.mxu0 0.0
        %1178 = vmatpush1.msra.mxu0 0.0
        %1179 = vmatprep.subr.mxu0 0.0
        %1180 = vmatpush1.msra.mxu0 0.0
        %1181 = vmatprep.subr.mxu0 0.0
        %1182 = vmatpush1.msra.mxu0 0.0
        %1183 = vmatprep.subr.mxu0 0.0
        %1184 = vmatpush1.msra.mxu0 0.0
        %1185 = vmatprep.subr.mxu0 0.0
        %1186 = vmatpush1.msra.mxu0 0.0
        %1187 = vmatprep.subr.mxu0 0.0
        %1188 = vmatpush1.msra.mxu0 0.0
        %1189 = vmatprep.subr.mxu0 0.0
        %1190 = vmatpush1.msra.mxu0 0.0
        %1191 = vmatprep.subr.mxu0 0.0
        %1192 = vmatpush1.msra.mxu0 0.0
        %1193 = vmatprep.subr.mxu0 0.0
        %1194 = vmatpush1.msra.mxu0 0.0
        %1195 = vmatprep.subr.mxu0 0.0
        %1196 = vmatpush1.msra.mxu0 0.0
        %1197 = vmatprep.subr.mxu0 0.0
        %1198 = vmatpush1.msra.mxu0 0.0
        %1199 = vmatprep.subr.mxu0 0.0
        %1200 = vmatpush1.msra.mxu0 0.0
        %1201 = vmatprep.subr.mxu0 0.0
        %1202 = vmatpush1.msra.mxu0 0.0
        %1203 = vmatprep.subr.mxu0 0.0
        %1204 = vmatpush1.msra.mxu0 0.0
        %1205 = vmatprep.subr.mxu0 0.0
        %1206 = vmatpush1.msra.mxu0 0.0
        %1207 = vmatprep.subr.mxu0 0.0
        %1208 = vmatpush1.msra.mxu0 0.0
        %1209 = vmatprep.mubr.f32.mxu0 0.0
        %1210 = vmatmul.mubr.f32.gmra.mrb[0].mxu0 %v1073
        %v1211 = vpop.f32.mrb[0].mxu0
        %v1212 = vadd.f32 %v718, %v1211
        %v1213 = vpop.f32.mrb[0].mxu0
        %1214 = vdwg.mxu0
        %v1215 = vadd.f32 %v1070, %v1141
        %v1216 = vxor.u32 %v1215, 2147483648
        %v1217 = vmul.f32 %v1216, 1.442695
        %v1218 = vpow.pop %v1217
        %v1219 = vadd.f32 %v1218, 1.0
        %v1220 = vrcp.pop %v1219
        %v1221 = vmul.f32 1.0, %v1220
        %v1222 = vadd.f32 %v1071, %v1143
        %v1223 = vxor.u32 %v1222, 2147483648
        %v1224 = vmul.f32 %v1223, 1.442695
        %v1225 = vpow.pop %v1224
        %v1226 = vadd.f32 %v1225, 1.0
        %v1227 = vrcp.pop %v1226
        %v1228 = vmul.f32 1.0, %v1227
        %v1229 = vmul.f32 %v1221, %v1212
        %v1230 = vadd.f32 %v1072, %v1229
        %v1231 = vtanh.pop %v1230
        %v1232 = vsub.f32 1.0, %v1228
        %v1233 = vmul.f32 %v1232, %v1231
        %v1234 = vmul.f32 %v1228, %v1073
        %v1235 = vadd.f32 %v1233, %v1234
        %1236 = vst [vmem:[#allocation3] sm:$0xff] %v1235
        %s1237 = scalar_lea.vmem %s254, %s1064 [#allocation4]
        %1238 = vst [vmem:[%s1237] sm:$0xff] %v1235
        %s1239 = scalar_select %p694, 3, 4
        %s1240 = smul.u32 %s1239, 8
        %s1241 = sshra.s32 %s1240, 3
        %s1242 = sand.u32 %s1240, 7
        %s1243 = smul.u32 %s1241, 3
        %s1244 = smul.addr %s1243, 8
        %s1245 = scalar_lea.vmem [#allocation2], %s1244
        %v1246 = vld [vmem:[%s1245] sm:$0xff]
        %v1247 = vld [vmem:[%s1245 + $0x8] sm:$0xff]
        %v1248 = vld [vmem:[%s1245 + $0x10] sm:$0xff]
        %v1249 = vld [vmem:[#allocation3] sm:$0xff]
        %1250 = vmatprep.subr.mxu0 %v646
        %1251 = vmatpush1.msra.mxu0 %v645
        %1252 = vmatprep.subr.mxu0 %v649
        %1253 = vmatpush1.msra.mxu0 %v648
        %1254 = vmatprep.subr.mxu0 %v652
        %1255 = vmatpush1.msra.mxu0 %v651
        %1256 = vmatprep.subr.mxu0 %v655
        %1257 = vmatpush1.msra.mxu0 %v654
        %1258 = vmatprep.subr.mxu0 %v658
        %1259 = vmatpush1.msra.mxu0 %v657
        %1260 = vmatprep.subr.mxu0 %v661
        %1261 = vmatpush1.msra.mxu0 %v660
        %1262 = vmatprep.subr.mxu0 %v664
        %1263 = vmatpush1.msra.mxu0 %v663
        %1264 = vmatprep.subr.mxu0 %v667
        %1265 = vmatpush1.msra.mxu0 %v666
        %1266 = vmatprep.subr.mxu0 %v670
        %1267 = vmatpush1.msra.mxu0 %v669
        %1268 = vmatprep.subr.mxu0 %v673
        %1269 = vmatpush1.msra.mxu0 %v672
        %1270 = vmatprep.subr.mxu0 %v676
        %1271 = vmatpush1.msra.mxu0 %v675
        %1272 = vmatprep.subr.mxu0 %v679
        %1273 = vmatpush1.msra.mxu0 %v678
        %1274 = vmatprep.subr.mxu0 %v682
        %1275 = vmatpush1.msra.mxu0 %v681
        %1276 = vmatprep.subr.mxu0 %v685
        %1277 = vmatpush1.msra.mxu0 %v684
        %1278 = vmatprep.subr.mxu0 %v688
        %1279 = vmatpush1.msra.mxu0 %v687
        %1280 = vmatprep.subr.mxu0 %v691
        %1281 = vmatpush1.msra.mxu0 %v690
        %1282 = vmatprep.subr.mxu0 0.0
        %1283 = vmatpush1.msra.mxu0 0.0
        %1284 = vmatprep.subr.mxu0 0.0
        %1285 = vmatpush1.msra.mxu0 0.0
        %1286 = vmatprep.subr.mxu0 0.0
        %1287 = vmatpush1.msra.mxu0 0.0
        %1288 = vmatprep.subr.mxu0 0.0
        %1289 = vmatpush1.msra.mxu0 0.0
        %1290 = vmatprep.subr.mxu0 0.0
        %1291 = vmatpush1.msra.mxu0 0.0
        %1292 = vmatprep.subr.mxu0 0.0
        %1293 = vmatpush1.msra.mxu0 0.0
        %1294 = vmatprep.subr.mxu0 0.0
        %1295 = vmatpush1.msra.mxu0 0.0
        %1296 = vmatprep.subr.mxu0 0.0
        %1297 = vmatpush1.msra.mxu0 0.0
        %1298 = vmatprep.subr.mxu0 0.0
        %1299 = vmatpush1.msra.mxu0 0.0
        %1300 = vmatprep.subr.mxu0 0.0
        %1301 = vmatpush1.msra.mxu0 0.0
        %1302 = vmatprep.subr.mxu0 0.0
        %1303 = vmatpush1.msra.mxu0 0.0
        %1304 = vmatprep.subr.mxu0 0.0
        %1305 = vmatpush1.msra.mxu0 0.0
        %1306 = vmatprep.subr.mxu0 0.0
        %1307 = vmatpush1.msra.mxu0 0.0
        %1308 = vmatprep.subr.mxu0 0.0
        %1309 = vmatpush1.msra.mxu0 0.0
        %1310 = vmatprep.subr.mxu0 0.0
        %1311 = vmatpush1.msra.mxu0 0.0
        %1312 = vmatprep.subr.mxu0 0.0
        %1313 = vmatpush1.msra.mxu0 0.0
        %1314 = vmatprep.mubr.f32.mxu0 0.0
        %1315 = vmatmul.mubr.f32.gmra.mrb[0].mxu0 %v1249
        %v1316 = vpop.f32.mrb[0].mxu0
        %v1317 = vadd.f32 %v710, %v1316
        %v1318 = vpop.f32.mrb[0].mxu0
        %v1319 = vadd.f32 %v714, %v1318
        %1320 = vdwg.mxu0
        %1321 = vmatprep.subr.mxu0 0.0
        %1322 = vmatpush1.msra.mxu0 %v647
        %1323 = vmatprep.subr.mxu0 0.0
        %1324 = vmatpush1.msra.mxu0 %v650
        %1325 = vmatprep.subr.mxu0 0.0
        %1326 = vmatpush1.msra.mxu0 %v653
        %1327 = vmatprep.subr.mxu0 0.0
        %1328 = vmatpush1.msra.mxu0 %v656
        %1329 = vmatprep.subr.mxu0 0.0
        %1330 = vmatpush1.msra.mxu0 %v659
        %1331 = vmatprep.subr.mxu0 0.0
        %1332 = vmatpush1.msra.mxu0 %v662
        %1333 = vmatprep.subr.mxu0 0.0
        %1334 = vmatpush1.msra.mxu0 %v665
        %1335 = vmatprep.subr.mxu0 0.0
        %1336 = vmatpush1.msra.mxu0 %v668
        %1337 = vmatprep.subr.mxu0 0.0
        %1338 = vmatpush1.msra.mxu0 %v671
        %1339 = vmatprep.subr.mxu0 0.0
        %1340 = vmatpush1.msra.mxu0 %v674
        %1341 = vmatprep.subr.mxu0 0.0
        %1342 = vmatpush1.msra.mxu0 %v677
        %1343 = vmatprep.subr.mxu0 0.0
        %1344 = vmatpush1.msra.mxu0 %v680
        %1345 = vmatprep.subr.mxu0 0.0
        %1346 = vmatpush1.msra.mxu0 %v683
        %1347 = vmatprep.subr.mxu0 0.0
        %1348 = vmatpush1.msra.mxu0 %v686
        %1349 = vmatprep.subr.mxu0 0.0
        %1350 = vmatpush1.msra.mxu0 %v689
        %1351 = vmatprep.subr.mxu0 0.0
        %1352 = vmatpush1.msra.mxu0 %v692
        %1353 = vmatprep.subr.mxu0 0.0
        %1354 = vmatpush1.msra.mxu0 0.0
        %1355 = vmatprep.subr.mxu0 0.0
        %1356 = vmatpush1.msra.mxu0 0.0
        %1357 = vmatprep.subr.mxu0 0.0
        %1358 = vmatpush1.msra.mxu0 0.0
        %1359 = vmatprep.subr.mxu0 0.0
        %1360 = vmatpush1.msra.mxu0 0.0
        %1361 = vmatprep.subr.mxu0 0.0
        %1362 = vmatpush1.msra.mxu0 0.0
        %1363 = vmatprep.subr.mxu0 0.0
        %1364 = vmatpush1.msra.mxu0 0.0
        %1365 = vmatprep.subr.mxu0 0.0
        %1366 = vmatpush1.msra.mxu0 0.0
        %1367 = vmatprep.subr.mxu0 0.0
        %1368 = vmatpush1.msra.mxu0 0.0
        %1369 = vmatprep.subr.mxu0 0.0
        %1370 = vmatpush1.msra.mxu0 0.0
        %1371 = vmatprep.subr.mxu0 0.0
        %1372 = vmatpush1.msra.mxu0 0.0
        %1373 = vmatprep.subr.mxu0 0.0
        %1374 = vmatpush1.msra.mxu0 0.0
        %1375 = vmatprep.subr.mxu0 0.0
        %1376 = vmatpush1.msra.mxu0 0.0
        %1377 = vmatprep.subr.mxu0 0.0
        %1378 = vmatpush1.msra.mxu0 0.0
        %1379 = vmatprep.subr.mxu0 0.0
        %1380 = vmatpush1.msra.mxu0 0.0
        %1381 = vmatprep.subr.mxu0 0.0
        %1382 = vmatpush1.msra.mxu0 0.0
        %1383 = vmatprep.subr.mxu0 0.0
        %1384 = vmatpush1.msra.mxu0 0.0
        %1385 = vmatprep.mubr.f32.mxu0 0.0
        %1386 = vmatmul.mubr.f32.gmra.mrb[0].mxu0 %v1249
        %v1387 = vpop.f32.mrb[0].mxu0
        %v1388 = vadd.f32 %v718, %v1387
        %v1389 = vpop.f32.mrb[0].mxu0
        %1390 = vdwg.mxu0
        %v1391 = vadd.f32 %v1246, %v1317
        %v1392 = vxor.u32 %v1391, 2147483648
        %v1393 = vmul.f32 %v1392, 1.442695
        %v1394 = vpow.pop %v1393
        %v1395 = vadd.f32 %v1394, 1.0
        %v1396 = vrcp.pop %v1395
        %v1397 = vmul.f32 1.0, %v1396
        %v1398 = vadd.f32 %v1247, %v1319
        %v1399 = vxor.u32 %v1398, 2147483648
        %v1400 = vmul.f32 %v1399, 1.442695
        %v1401 = vpow.pop %v1400
        %v1402 = vadd.f32 %v1401, 1.0
        %v1403 = vrcp.pop %v1402
        %v1404 = vmul.f32 1.0, %v1403
        %v1405 = vmul.f32 %v1397, %v1388
        %v1406 = vadd.f32 %v1248, %v1405
        %v1407 = vtanh.pop %v1406
        %v1408 = vsub.f32 1.0, %v1404
        %v1409 = vmul.f32 %v1408, %v1407
        %v1410 = vmul.f32 %v1404, %v1249
        %v1411 = vadd.f32 %v1409, %v1410
        %1412 = vst [vmem:[#allocation3] sm:$0xff] %v1411
        %s1413 = scalar_lea.vmem %s254, %s1240 [#allocation4]
        %1414 = vst [vmem:[%s1413] sm:$0xff] %v1411
        %s1415 = scalar_select %p694, 4, 3
        %s1416 = smul.u32 %s1415, 8
        %s1417 = sshra.s32 %s1416, 3
        %s1418 = sand.u32 %s1416, 7
        %s1419 = smul.u32 %s1417, 3
        %s1420 = smul.addr %s1419, 8
        %s1421 = scalar_lea.vmem [#allocation2], %s1420
        %v1422 = vld [vmem:[%s1421] sm:$0xff]
        %v1423 = vld [vmem:[%s1421 + $0x8] sm:$0xff]
        %v1424 = vld [vmem:[%s1421 + $0x10] sm:$0xff]
        %v1425 = vld [vmem:[#allocation3] sm:$0xff]
        %1426 = vmatprep.subr.mxu0 %v646
        %1427 = vmatpush1.msra.mxu0 %v645
        %1428 = vmatprep.subr.mxu0 %v649
        %1429 = vmatpush1.msra.mxu0 %v648
        %1430 = vmatprep.subr.mxu0 %v652
        %1431 = vmatpush1.msra.mxu0 %v651
        %1432 = vmatprep.subr.mxu0 %v655
        %1433 = vmatpush1.msra.mxu0 %v654
        %1434 = vmatprep.subr.mxu0 %v658
        %1435 = vmatpush1.msra.mxu0 %v657
        %1436 = vmatprep.subr.mxu0 %v661
        %1437 = vmatpush1.msra.mxu0 %v660
        %1438 = vmatprep.subr.mxu0 %v664
        %1439 = vmatpush1.msra.mxu0 %v663
        %1440 = vmatprep.subr.mxu0 %v667
        %1441 = vmatpush1.msra.mxu0 %v666
        %1442 = vmatprep.subr.mxu0 %v670
        %1443 = vmatpush1.msra.mxu0 %v669
        %1444 = vmatprep.subr.mxu0 %v673
        %1445 = vmatpush1.msra.mxu0 %v672
        %1446 = vmatprep.subr.mxu0 %v676
        %1447 = vmatpush1.msra.mxu0 %v675
        %1448 = vmatprep.subr.mxu0 %v679
        %1449 = vmatpush1.msra.mxu0 %v678
        %1450 = vmatprep.subr.mxu0 %v682
        %1451 = vmatpush1.msra.mxu0 %v681
        %1452 = vmatprep.subr.mxu0 %v685
        %1453 = vmatpush1.msra.mxu0 %v684
        %1454 = vmatprep.subr.mxu0 %v688
        %1455 = vmatpush1.msra.mxu0 %v687
        %1456 = vmatprep.subr.mxu0 %v691
        %1457 = vmatpush1.msra.mxu0 %v690
        %1458 = vmatprep.subr.mxu0 0.0
        %1459 = vmatpush1.msra.mxu0 0.0
        %1460 = vmatprep.subr.mxu0 0.0
        %1461 = vmatpush1.msra.mxu0 0.0
        %1462 = vmatprep.subr.mxu0 0.0
        %1463 = vmatpush1.msra.mxu0 0.0
        %1464 = vmatprep.subr.mxu0 0.0
        %1465 = vmatpush1.msra.mxu0 0.0
        %1466 = vmatprep.subr.mxu0 0.0
        %1467 = vmatpush1.msra.mxu0 0.0
        %1468 = vmatprep.subr.mxu0 0.0
        %1469 = vmatpush1.msra.mxu0 0.0
        %1470 = vmatprep.subr.mxu0 0.0
        %1471 = vmatpush1.msra.mxu0 0.0
        %1472 = vmatprep.subr.mxu0 0.0
        %1473 = vmatpush1.msra.mxu0 0.0
        %1474 = vmatprep.subr.mxu0 0.0
        %1475 = vmatpush1.msra.mxu0 0.0
        %1476 = vmatprep.subr.mxu0 0.0
        %1477 = vmatpush1.msra.mxu0 0.0
        %1478 = vmatprep.subr.mxu0 0.0
        %1479 = vmatpush1.msra.mxu0 0.0
        %1480 = vmatprep.subr.mxu0 0.0
        %1481 = vmatpush1.msra.mxu0 0.0
        %1482 = vmatprep.subr.mxu0 0.0
        %1483 = vmatpush1.msra.mxu0 0.0
        %1484 = vmatprep.subr.mxu0 0.0
        %1485 = vmatpush1.msra.mxu0 0.0
        %1486 = vmatprep.subr.mxu0 0.0
        %1487 = vmatpush1.msra.mxu0 0.0
        %1488 = vmatprep.subr.mxu0 0.0
        %1489 = vmatpush1.msra.mxu0 0.0
        %1490 = vmatprep.mubr.f32.mxu0 0.0
        %1491 = vmatmul.mubr.f32.gmra.mrb[0].mxu0 %v1425
        %v1492 = vpop.f32.mrb[0].mxu0
        %v1493 = vadd.f32 %v710, %v1492
        %v1494 = vpop.f32.mrb[0].mxu0
        %v1495 = vadd.f32 %v714, %v1494
        %1496 = vdwg.mxu0
        %1497 = vmatprep.subr.mxu0 0.0
        %1498 = vmatpush1.msra.mxu0 %v647
        %1499 = vmatprep.subr.mxu0 0.0
        %1500 = vmatpush1.msra.mxu0 %v650
        %1501 = vmatprep.subr.mxu0 0.0
        %1502 = vmatpush1.msra.mxu0 %v653
        %1503 = vmatprep.subr.mxu0 0.0
        %1504 = vmatpush1.msra.mxu0 %v656
        %1505 = vmatprep.subr.mxu0 0.0
        %1506 = vmatpush1.msra.mxu0 %v659
        %1507 = vmatprep.subr.mxu0 0.0
        %1508 = vmatpush1.msra.mxu0 %v662
        %1509 = vmatprep.subr.mxu0 0.0
        %1510 = vmatpush1.msra.mxu0 %v665
        %1511 = vmatprep.subr.mxu0 0.0
        %1512 = vmatpush1.msra.mxu0 %v668
        %1513 = vmatprep.subr.mxu0 0.0
        %1514 = vmatpush1.msra.mxu0 %v671
        %1515 = vmatprep.subr.mxu0 0.0
        %1516 = vmatpush1.msra.mxu0 %v674
        %1517 = vmatprep.subr.mxu0 0.0
        %1518 = vmatpush1.msra.mxu0 %v677
        %1519 = vmatprep.subr.mxu0 0.0
        %1520 = vmatpush1.msra.mxu0 %v680
        %1521 = vmatprep.subr.mxu0 0.0
        %1522 = vmatpush1.msra.mxu0 %v683
        %1523 = vmatprep.subr.mxu0 0.0
        %1524 = vmatpush1.msra.mxu0 %v686
        %1525 = vmatprep.subr.mxu0 0.0
        %1526 = vmatpush1.msra.mxu0 %v689
        %1527 = vmatprep.subr.mxu0 0.0
        %1528 = vmatpush1.msra.mxu0 %v692
        %1529 = vmatprep.subr.mxu0 0.0
        %1530 = vmatpush1.msra.mxu0 0.0
        %1531 = vmatprep.subr.mxu0 0.0
        %1532 = vmatpush1.msra.mxu0 0.0
        %1533 = vmatprep.subr.mxu0 0.0
        %1534 = vmatpush1.msra.mxu0 0.0
        %1535 = vmatprep.subr.mxu0 0.0
        %1536 = vmatpush1.msra.mxu0 0.0
        %1537 = vmatprep.subr.mxu0 0.0
        %1538 = vmatpush1.msra.mxu0 0.0
        %1539 = vmatprep.subr.mxu0 0.0
        %1540 = vmatpush1.msra.mxu0 0.0
        %1541 = vmatprep.subr.mxu0 0.0
        %1542 = vmatpush1.msra.mxu0 0.0
        %1543 = vmatprep.subr.mxu0 0.0
        %1544 = vmatpush1.msra.mxu0 0.0
        %1545 = vmatprep.subr.mxu0 0.0
        %1546 = vmatpush1.msra.mxu0 0.0
        %1547 = vmatprep.subr.mxu0 0.0
        %1548 = vmatpush1.msra.mxu0 0.0
        %1549 = vmatprep.subr.mxu0 0.0
        %1550 = vmatpush1.msra.mxu0 0.0
        %1551 = vmatprep.subr.mxu0 0.0
        %1552 = vmatpush1.msra.mxu0 0.0
        %1553 = vmatprep.subr.mxu0 0.0
        %1554 = vmatpush1.msra.mxu0 0.0
        %1555 = vmatprep.subr.mxu0 0.0
        %1556 = vmatpush1.msra.mxu0 0.0
        %1557 = vmatprep.subr.mxu0 0.0
        %1558 = vmatpush1.msra.mxu0 0.0
        %1559 = vmatprep.subr.mxu0 0.0
        %1560 = vmatpush1.msra.mxu0 0.0
        %1561 = vmatprep.mubr.f32.mxu0 0.0
        %1562 = vmatmul.mubr.f32.gmra.mrb[0].mxu0 %v1425
        %v1563 = vpop.f32.mrb[0].mxu0
        %v1564 = vadd.f32 %v718, %v1563
        %v1565 = vpop.f32.mrb[0].mxu0
        %1566 = vdwg.mxu0
        %v1567 = vadd.f32 %v1422, %v1493
        %v1568 = vxor.u32 %v1567, 2147483648
        %v1569 = vmul.f32 %v1568, 1.442695
        %v1570 = vpow.pop %v1569
        %v1571 = vadd.f32 %v1570, 1.0
        %v1572 = vrcp.pop %v1571
        %v1573 = vmul.f32 1.0, %v1572
        %v1574 = vadd.f32 %v1423, %v1495
        %v1575 = vxor.u32 %v1574, 2147483648
        %v1576 = vmul.f32 %v1575, 1.442695
        %v1577 = vpow.pop %v1576
        %v1578 = vadd.f32 %v1577, 1.0
        %v1579 = vrcp.pop %v1578
        %v1580 = vmul.f32 1.0, %v1579
        %v1581 = vmul.f32 %v1573, %v1564
        %v1582 = vadd.f32 %v1424, %v1581
        %v1583 = vtanh.pop %v1582
        %v1584 = vsub.f32 1.0, %v1580
        %v1585 = vmul.f32 %v1584, %v1583
        %v1586 = vmul.f32 %v1580, %v1425
        %v1587 = vadd.f32 %v1585, %v1586
        %1588 = vst [vmem:[#allocation3] sm:$0xff] %v1587
        %s1589 = scalar_lea.vmem %s254, %s1416 [#allocation4]
        %1590 = vst [vmem:[%s1589] sm:$0xff] %v1587
        %s1591 = scalar_select %p694, 5, 2
        %s1592 = smul.u32 %s1591, 8
        %s1593 = sshra.s32 %s1592, 3
        %s1594 = sand.u32 %s1592, 7
        %s1595 = smul.u32 %s1593, 3
        %s1596 = smul.addr %s1595, 8
        %s1597 = scalar_lea.vmem [#allocation2], %s1596
        %v1598 = vld [vmem:[%s1597] sm:$0xff]
        %v1599 = vld [vmem:[%s1597 + $0x8] sm:$0xff]
        %v1600 = vld [vmem:[%s1597 + $0x10] sm:$0xff]
        %v1601 = vld [vmem:[#allocation3] sm:$0xff]
        %1602 = vmatprep.subr.mxu0 %v646
        %1603 = vmatpush1.msra.mxu0 %v645
        %1604 = vmatprep.subr.mxu0 %v649
        %1605 = vmatpush1.msra.mxu0 %v648
        %1606 = vmatprep.subr.mxu0 %v652
        %1607 = vmatpush1.msra.mxu0 %v651
        %1608 = vmatprep.subr.mxu0 %v655
        %1609 = vmatpush1.msra.mxu0 %v654
        %1610 = vmatprep.subr.mxu0 %v658
        %1611 = vmatpush1.msra.mxu0 %v657
        %1612 = vmatprep.subr.mxu0 %v661
        %1613 = vmatpush1.msra.mxu0 %v660
        %1614 = vmatprep.subr.mxu0 %v664
        %1615 = vmatpush1.msra.mxu0 %v663
        %1616 = vmatprep.subr.mxu0 %v667
        %1617 = vmatpush1.msra.mxu0 %v666
        %1618 = vmatprep.subr.mxu0 %v670
        %1619 = vmatpush1.msra.mxu0 %v669
        %1620 = vmatprep.subr.mxu0 %v673
        %1621 = vmatpush1.msra.mxu0 %v672
        %1622 = vmatprep.subr.mxu0 %v676
        %1623 = vmatpush1.msra.mxu0 %v675
        %1624 = vmatprep.subr.mxu0 %v679
        %1625 = vmatpush1.msra.mxu0 %v678
        %1626 = vmatprep.subr.mxu0 %v682
        %1627 = vmatpush1.msra.mxu0 %v681
        %1628 = vmatprep.subr.mxu0 %v685
        %1629 = vmatpush1.msra.mxu0 %v684
        %1630 = vmatprep.subr.mxu0 %v688
        %1631 = vmatpush1.msra.mxu0 %v687
        %1632 = vmatprep.subr.mxu0 %v691
        %1633 = vmatpush1.msra.mxu0 %v690
        %1634 = vmatprep.subr.mxu0 0.0
        %1635 = vmatpush1.msra.mxu0 0.0
        %1636 = vmatprep.subr.mxu0 0.0
        %1637 = vmatpush1.msra.mxu0 0.0
        %1638 = vmatprep.subr.mxu0 0.0
        %1639 = vmatpush1.msra.mxu0 0.0
        %1640 = vmatprep.subr.mxu0 0.0
        %1641 = vmatpush1.msra.mxu0 0.0
        %1642 = vmatprep.subr.mxu0 0.0
        %1643 = vmatpush1.msra.mxu0 0.0
        %1644 = vmatprep.subr.mxu0 0.0
        %1645 = vmatpush1.msra.mxu0 0.0
        %1646 = vmatprep.subr.mxu0 0.0
        %1647 = vmatpush1.msra.mxu0 0.0
        %1648 = vmatprep.subr.mxu0 0.0
        %1649 = vmatpush1.msra.mxu0 0.0
        %1650 = vmatprep.subr.mxu0 0.0
        %1651 = vmatpush1.msra.mxu0 0.0
        %1652 = vmatprep.subr.mxu0 0.0
        %1653 = vmatpush1.msra.mxu0 0.0
        %1654 = vmatprep.subr.mxu0 0.0
        %1655 = vmatpush1.msra.mxu0 0.0
        %1656 = vmatprep.subr.mxu0 0.0
        %1657 = vmatpush1.msra.mxu0 0.0
        %1658 = vmatprep.subr.mxu0 0.0
        %1659 = vmatpush1.msra.mxu0 0.0
        %1660 = vmatprep.subr.mxu0 0.0
        %1661 = vmatpush1.msra.mxu0 0.0
        %1662 = vmatprep.subr.mxu0 0.0
        %1663 = vmatpush1.msra.mxu0 0.0
        %1664 = vmatprep.subr.mxu0 0.0
        %1665 = vmatpush1.msra.mxu0 0.0
        %1666 = vmatprep.mubr.f32.mxu0 0.0
        %1667 = vmatmul.mubr.f32.gmra.mrb[0].mxu0 %v1601
        %v1668 = vpop.f32.mrb[0].mxu0
        %v1669 = vadd.f32 %v710, %v1668
        %v1670 = vpop.f32.mrb[0].mxu0
        %v1671 = vadd.f32 %v714, %v1670
        %1672 = vdwg.mxu0
        %1673 = vmatprep.subr.mxu0 0.0
        %1674 = vmatpush1.msra.mxu0 %v647
        %1675 = vmatprep.subr.mxu0 0.0
        %1676 = vmatpush1.msra.mxu0 %v650
        %1677 = vmatprep.subr.mxu0 0.0
        %1678 = vmatpush1.msra.mxu0 %v653
        %1679 = vmatprep.subr.mxu0 0.0
        %1680 = vmatpush1.msra.mxu0 %v656
        %1681 = vmatprep.subr.mxu0 0.0
        %1682 = vmatpush1.msra.mxu0 %v659
        %1683 = vmatprep.subr.mxu0 0.0
        %1684 = vmatpush1.msra.mxu0 %v662
        %1685 = vmatprep.subr.mxu0 0.0
        %1686 = vmatpush1.msra.mxu0 %v665
        %1687 = vmatprep.subr.mxu0 0.0
        %1688 = vmatpush1.msra.mxu0 %v668
        %1689 = vmatprep.subr.mxu0 0.0
        %1690 = vmatpush1.msra.mxu0 %v671
        %1691 = vmatprep.subr.mxu0 0.0
        %1692 = vmatpush1.msra.mxu0 %v674
        %1693 = vmatprep.subr.mxu0 0.0
        %1694 = vmatpush1.msra.mxu0 %v677
        %1695 = vmatprep.subr.mxu0 0.0
        %1696 = vmatpush1.msra.mxu0 %v680
        %1697 = vmatprep.subr.mxu0 0.0
        %1698 = vmatpush1.msra.mxu0 %v683
        %1699 = vmatprep.subr.mxu0 0.0
        %1700 = vmatpush1.msra.mxu0 %v686
        %1701 = vmatprep.subr.mxu0 0.0
        %1702 = vmatpush1.msra.mxu0 %v689
        %1703 = vmatprep.subr.mxu0 0.0
        %1704 = vmatpush1.msra.mxu0 %v692
        %1705 = vmatprep.subr.mxu0 0.0
        %1706 = vmatpush1.msra.mxu0 0.0
        %1707 = vmatprep.subr.mxu0 0.0
        %1708 = vmatpush1.msra.mxu0 0.0
        %1709 = vmatprep.subr.mxu0 0.0
        %1710 = vmatpush1.msra.mxu0 0.0
        %1711 = vmatprep.subr.mxu0 0.0
        %1712 = vmatpush1.msra.mxu0 0.0
        %1713 = vmatprep.subr.mxu0 0.0
        %1714 = vmatpush1.msra.mxu0 0.0
        %1715 = vmatprep.subr.mxu0 0.0
        %1716 = vmatpush1.msra.mxu0 0.0
        %1717 = vmatprep.subr.mxu0 0.0
        %1718 = vmatpush1.msra.mxu0 0.0
        %1719 = vmatprep.subr.mxu0 0.0
        %1720 = vmatpush1.msra.mxu0 0.0
        %1721 = vmatprep.subr.mxu0 0.0
        %1722 = vmatpush1.msra.mxu0 0.0
        %1723 = vmatprep.subr.mxu0 0.0
        %1724 = vmatpush1.msra.mxu0 0.0
        %1725 = vmatprep.subr.mxu0 0.0
        %1726 = vmatpush1.msra.mxu0 0.0
        %1727 = vmatprep.subr.mxu0 0.0
        %1728 = vmatpush1.msra.mxu0 0.0
        %1729 = vmatprep.subr.mxu0 0.0
        %1730 = vmatpush1.msra.mxu0 0.0
        %1731 = vmatprep.subr.mxu0 0.0
        %1732 = vmatpush1.msra.mxu0 0.0
        %1733 = vmatprep.subr.mxu0 0.0
        %1734 = vmatpush1.msra.mxu0 0.0
        %1735 = vmatprep.subr.mxu0 0.0
        %1736 = vmatpush1.msra.mxu0 0.0
        %1737 = vmatprep.mubr.f32.mxu0 0.0
        %1738 = vmatmul.mubr.f32.gmra.mrb[0].mxu0 %v1601
        %v1739 = vpop.f32.mrb[0].mxu0
        %v1740 = vadd.f32 %v718, %v1739
        %v1741 = vpop.f32.mrb[0].mxu0
        %1742 = vdwg.mxu0
        %v1743 = vadd.f32 %v1598, %v1669
        %v1744 = vxor.u32 %v1743, 2147483648
        %v1745 = vmul.f32 %v1744, 1.442695
        %v1746 = vpow.pop %v1745
        %v1747 = vadd.f32 %v1746, 1.0
        %v1748 = vrcp.pop %v1747
        %v1749 = vmul.f32 1.0, %v1748
        %v1750 = vadd.f32 %v1599, %v1671
        %v1751 = vxor.u32 %v1750, 2147483648
        %v1752 = vmul.f32 %v1751, 1.442695
        %v1753 = vpow.pop %v1752
        %v1754 = vadd.f32 %v1753, 1.0
        %v1755 = vrcp.pop %v1754
        %v1756 = vmul.f32 1.0, %v1755
        %v1757 = vmul.f32 %v1749, %v1740
        %v1758 = vadd.f32 %v1600, %v1757
        %v1759 = vtanh.pop %v1758
        %v1760 = vsub.f32 1.0, %v1756
        %v1761 = vmul.f32 %v1760, %v1759
        %v1762 = vmul.f32 %v1756, %v1601
        %v1763 = vadd.f32 %v1761, %v1762
        %1764 = vst [vmem:[#allocation3] sm:$0xff] %v1763
        %s1765 = scalar_lea.vmem %s254, %s1592 [#allocation4]
        %1766 = vst [vmem:[%s1765] sm:$0xff] %v1763
        %s1767 = scalar_select %p694, 6, 1
        %s1768 = smul.u32 %s1767, 8
        %s1769 = sshra.s32 %s1768, 3
        %s1770 = sand.u32 %s1768, 7
        %s1771 = smul.u32 %s1769, 3
        %s1772 = smul.addr %s1771, 8
        %s1773 = scalar_lea.vmem [#allocation2], %s1772
        %v1774 = vld [vmem:[%s1773] sm:$0xff]
        %v1775 = vld [vmem:[%s1773 + $0x8] sm:$0xff]
        %v1776 = vld [vmem:[%s1773 + $0x10] sm:$0xff]
        %v1777 = vld [vmem:[#allocation3] sm:$0xff]
        %1778 = vmatprep.subr.mxu0 %v646
        %1779 = vmatpush1.msra.mxu0 %v645
        %1780 = vmatprep.subr.mxu0 %v649
        %1781 = vmatpush1.msra.mxu0 %v648
        %1782 = vmatprep.subr.mxu0 %v652
        %1783 = vmatpush1.msra.mxu0 %v651
        %1784 = vmatprep.subr.mxu0 %v655
        %1785 = vmatpush1.msra.mxu0 %v654
        %1786 = vmatprep.subr.mxu0 %v658
        %1787 = vmatpush1.msra.mxu0 %v657
        %1788 = vmatprep.subr.mxu0 %v661
        %1789 = vmatpush1.msra.mxu0 %v660
        %1790 = vmatprep.subr.mxu0 %v664
        %1791 = vmatpush1.msra.mxu0 %v663
        %1792 = vmatprep.subr.mxu0 %v667
        %1793 = vmatpush1.msra.mxu0 %v666
        %1794 = vmatprep.subr.mxu0 %v670
        %1795 = vmatpush1.msra.mxu0 %v669
        %1796 = vmatprep.subr.mxu0 %v673
        %1797 = vmatpush1.msra.mxu0 %v672
        %1798 = vmatprep.subr.mxu0 %v676
        %1799 = vmatpush1.msra.mxu0 %v675
        %1800 = vmatprep.subr.mxu0 %v679
        %1801 = vmatpush1.msra.mxu0 %v678
        %1802 = vmatprep.subr.mxu0 %v682
        %1803 = vmatpush1.msra.mxu0 %v681
        %1804 = vmatprep.subr.mxu0 %v685
        %1805 = vmatpush1.msra.mxu0 %v684
        %1806 = vmatprep.subr.mxu0 %v688
        %1807 = vmatpush1.msra.mxu0 %v687
        %1808 = vmatprep.subr.mxu0 %v691
        %1809 = vmatpush1.msra.mxu0 %v690
        %1810 = vmatprep.subr.mxu0 0.0
        %1811 = vmatpush1.msra.mxu0 0.0
        %1812 = vmatprep.subr.mxu0 0.0
        %1813 = vmatpush1.msra.mxu0 0.0
        %1814 = vmatprep.subr.mxu0 0.0
        %1815 = vmatpush1.msra.mxu0 0.0
        %1816 = vmatprep.subr.mxu0 0.0
        %1817 = vmatpush1.msra.mxu0 0.0
        %1818 = vmatprep.subr.mxu0 0.0
        %1819 = vmatpush1.msra.mxu0 0.0
        %1820 = vmatprep.subr.mxu0 0.0
        %1821 = vmatpush1.msra.mxu0 0.0
        %1822 = vmatprep.subr.mxu0 0.0
        %1823 = vmatpush1.msra.mxu0 0.0
        %1824 = vmatprep.subr.mxu0 0.0
        %1825 = vmatpush1.msra.mxu0 0.0
        %1826 = vmatprep.subr.mxu0 0.0
        %1827 = vmatpush1.msra.mxu0 0.0
        %1828 = vmatprep.subr.mxu0 0.0
        %1829 = vmatpush1.msra.mxu0 0.0
        %1830 = vmatprep.subr.mxu0 0.0
        %1831 = vmatpush1.msra.mxu0 0.0
        %1832 = vmatprep.subr.mxu0 0.0
        %1833 = vmatpush1.msra.mxu0 0.0
        %1834 = vmatprep.subr.mxu0 0.0
        %1835 = vmatpush1.msra.mxu0 0.0
        %1836 = vmatprep.subr.mxu0 0.0
        %1837 = vmatpush1.msra.mxu0 0.0
        %1838 = vmatprep.subr.mxu0 0.0
        %1839 = vmatpush1.msra.mxu0 0.0
        %1840 = vmatprep.subr.mxu0 0.0
        %1841 = vmatpush1.msra.mxu0 0.0
        %1842 = vmatprep.mubr.f32.mxu0 0.0
        %1843 = vmatmul.mubr.f32.gmra.mrb[0].mxu0 %v1777
        %v1844 = vpop.f32.mrb[0].mxu0
        %v1845 = vadd.f32 %v710, %v1844
        %v1846 = vpop.f32.mrb[0].mxu0
        %v1847 = vadd.f32 %v714, %v1846
        %1848 = vdwg.mxu0
        %1849 = vmatprep.subr.mxu0 0.0
        %1850 = vmatpush1.msra.mxu0 %v647
        %1851 = vmatprep.subr.mxu0 0.0
        %1852 = vmatpush1.msra.mxu0 %v650
        %1853 = vmatprep.subr.mxu0 0.0
        %1854 = vmatpush1.msra.mxu0 %v653
        %1855 = vmatprep.subr.mxu0 0.0
        %1856 = vmatpush1.msra.mxu0 %v656
        %1857 = vmatprep.subr.mxu0 0.0
        %1858 = vmatpush1.msra.mxu0 %v659
        %1859 = vmatprep.subr.mxu0 0.0
        %1860 = vmatpush1.msra.mxu0 %v662
        %1861 = vmatprep.subr.mxu0 0.0
        %1862 = vmatpush1.msra.mxu0 %v665
        %1863 = vmatprep.subr.mxu0 0.0
        %1864 = vmatpush1.msra.mxu0 %v668
        %1865 = vmatprep.subr.mxu0 0.0
        %1866 = vmatpush1.msra.mxu0 %v671
        %1867 = vmatprep.subr.mxu0 0.0
        %1868 = vmatpush1.msra.mxu0 %v674
        %1869 = vmatprep.subr.mxu0 0.0
        %1870 = vmatpush1.msra.mxu0 %v677
        %1871 = vmatprep.subr.mxu0 0.0
        %1872 = vmatpush1.msra.mxu0 %v680
        %1873 = vmatprep.subr.mxu0 0.0
        %1874 = vmatpush1.msra.mxu0 %v683
        %1875 = vmatprep.subr.mxu0 0.0
        %1876 = vmatpush1.msra.mxu0 %v686
        %1877 = vmatprep.subr.mxu0 0.0
        %1878 = vmatpush1.msra.mxu0 %v689
        %1879 = vmatprep.subr.mxu0 0.0
        %1880 = vmatpush1.msra.mxu0 %v692
        %1881 = vmatprep.subr.mxu0 0.0
        %1882 = vmatpush1.msra.mxu0 0.0
        %1883 = vmatprep.subr.mxu0 0.0
        %1884 = vmatpush1.msra.mxu0 0.0
        %1885 = vmatprep.subr.mxu0 0.0
        %1886 = vmatpush1.msra.mxu0 0.0
        %1887 = vmatprep.subr.mxu0 0.0
        %1888 = vmatpush1.msra.mxu0 0.0
        %1889 = vmatprep.subr.mxu0 0.0
        %1890 = vmatpush1.msra.mxu0 0.0
        %1891 = vmatprep.subr.mxu0 0.0
        %1892 = vmatpush1.msra.mxu0 0.0
        %1893 = vmatprep.subr.mxu0 0.0
        %1894 = vmatpush1.msra.mxu0 0.0
        %1895 = vmatprep.subr.mxu0 0.0
        %1896 = vmatpush1.msra.mxu0 0.0
        %1897 = vmatprep.subr.mxu0 0.0
        %1898 = vmatpush1.msra.mxu0 0.0
        %1899 = vmatprep.subr.mxu0 0.0
        %1900 = vmatpush1.msra.mxu0 0.0
        %1901 = vmatprep.subr.mxu0 0.0
        %1902 = vmatpush1.msra.mxu0 0.0
        %1903 = vmatprep.subr.mxu0 0.0
        %1904 = vmatpush1.msra.mxu0 0.0
        %1905 = vmatprep.subr.mxu0 0.0
        %1906 = vmatpush1.msra.mxu0 0.0
        %1907 = vmatprep.subr.mxu0 0.0
        %1908 = vmatpush1.msra.mxu0 0.0
        %1909 = vmatprep.subr.mxu0 0.0
        %1910 = vmatpush1.msra.mxu0 0.0
        %1911 = vmatprep.subr.mxu0 0.0
        %1912 = vmatpush1.msra.mxu0 0.0
        %1913 = vmatprep.mubr.f32.mxu0 0.0
        %1914 = vmatmul.mubr.f32.gmra.mrb[0].mxu0 %v1777
        %v1915 = vpop.f32.mrb[0].mxu0
        %v1916 = vadd.f32 %v718, %v1915
        %v1917 = vpop.f32.mrb[0].mxu0
        %1918 = vdwg.mxu0
        %v1919 = vadd.f32 %v1774, %v1845
        %v1920 = vxor.u32 %v1919, 2147483648
        %v1921 = vmul.f32 %v1920, 1.442695
        %v1922 = vpow.pop %v1921
        %v1923 = vadd.f32 %v1922, 1.0
        %v1924 = vrcp.pop %v1923
        %v1925 = vmul.f32 1.0, %v1924
        %v1926 = vadd.f32 %v1775, %v1847
        %v1927 = vxor.u32 %v1926, 2147483648
        %v1928 = vmul.f32 %v1927, 1.442695
        %v1929 = vpow.pop %v1928
        %v1930 = vadd.f32 %v1929, 1.0
        %v1931 = vrcp.pop %v1930
        %v1932 = vmul.f32 1.0, %v1931
        %v1933 = vmul.f32 %v1925, %v1916
        %v1934 = vadd.f32 %v1776, %v1933
        %v1935 = vtanh.pop %v1934
        %v1936 = vsub.f32 1.0, %v1932
        %v1937 = vmul.f32 %v1936, %v1935
        %v1938 = vmul.f32 %v1932, %v1777
        %v1939 = vadd.f32 %v1937, %v1938
        %1940 = vst [vmem:[#allocation3] sm:$0xff] %v1939
        %s1941 = scalar_lea.vmem %s254, %s1768 [#allocation4]
        %1942 = vst [vmem:[%s1941] sm:$0xff] %v1939
        %s1943 = scalar_select %p694, 7, 0
        %s1944 = smul.u32 %s1943, 8
        %s1945 = sshra.s32 %s1944, 3
        %s1946 = sand.u32 %s1944, 7
        %s1947 = smul.u32 %s1945, 3
        %s1948 = smul.addr %s1947, 8
        %s1949 = scalar_lea.vmem [#allocation2], %s1948
        %v1950 = vld [vmem:[%s1949] sm:$0xff]
        %v1951 = vld [vmem:[%s1949 + $0x8] sm:$0xff]
        %v1952 = vld [vmem:[%s1949 + $0x10] sm:$0xff]
        %v1953 = vld [vmem:[#allocation3] sm:$0xff]
        %1954 = vmatprep.subr.mxu0 %v646
        %1955 = vmatpush1.msra.mxu0 %v645
        %1956 = vmatprep.subr.mxu0 %v649
        %1957 = vmatpush1.msra.mxu0 %v648
        %1958 = vmatprep.subr.mxu0 %v652
        %1959 = vmatpush1.msra.mxu0 %v651
        %1960 = vmatprep.subr.mxu0 %v655
        %1961 = vmatpush1.msra.mxu0 %v654
        %1962 = vmatprep.subr.mxu0 %v658
        %1963 = vmatpush1.msra.mxu0 %v657
        %1964 = vmatprep.subr.mxu0 %v661
        %1965 = vmatpush1.msra.mxu0 %v660
        %1966 = vmatprep.subr.mxu0 %v664
        %1967 = vmatpush1.msra.mxu0 %v663
        %1968 = vmatprep.subr.mxu0 %v667
        %1969 = vmatpush1.msra.mxu0 %v666
        %1970 = vmatprep.subr.mxu0 %v670
        %1971 = vmatpush1.msra.mxu0 %v669
        %1972 = vmatprep.subr.mxu0 %v673
        %1973 = vmatpush1.msra.mxu0 %v672
        %1974 = vmatprep.subr.mxu0 %v676
        %1975 = vmatpush1.msra.mxu0 %v675
        %1976 = vmatprep.subr.mxu0 %v679
        %1977 = vmatpush1.msra.mxu0 %v678
        %1978 = vmatprep.subr.mxu0 %v682
        %1979 = vmatpush1.msra.mxu0 %v681
        %1980 = vmatprep.subr.mxu0 %v685
        %1981 = vmatpush1.msra.mxu0 %v684
        %1982 = vmatprep.subr.mxu0 %v688
        %1983 = vmatpush1.msra.mxu0 %v687
        %1984 = vmatprep.subr.mxu0 %v691
        %1985 = vmatpush1.msra.mxu0 %v690
        %1986 = vmatprep.subr.mxu0 0.0
        %1987 = vmatpush1.msra.mxu0 0.0
        %1988 = vmatprep.subr.mxu0 0.0
        %1989 = vmatpush1.msra.mxu0 0.0
        %1990 = vmatprep.subr.mxu0 0.0
        %1991 = vmatpush1.msra.mxu0 0.0
        %1992 = vmatprep.subr.mxu0 0.0
        %1993 = vmatpush1.msra.mxu0 0.0
        %1994 = vmatprep.subr.mxu0 0.0
        %1995 = vmatpush1.msra.mxu0 0.0
        %1996 = vmatprep.subr.mxu0 0.0
        %1997 = vmatpush1.msra.mxu0 0.0
        %1998 = vmatprep.subr.mxu0 0.0
        %1999 = vmatpush1.msra.mxu0 0.0
        %2000 = vmatprep.subr.mxu0 0.0
        %2001 = vmatpush1.msra.mxu0 0.0
        %2002 = vmatprep.subr.mxu0 0.0
        %2003 = vmatpush1.msra.mxu0 0.0
        %2004 = vmatprep.subr.mxu0 0.0
        %2005 = vmatpush1.msra.mxu0 0.0
        %2006 = vmatprep.subr.mxu0 0.0
        %2007 = vmatpush1.msra.mxu0 0.0
        %2008 = vmatprep.subr.mxu0 0.0
        %2009 = vmatpush1.msra.mxu0 0.0
        %2010 = vmatprep.subr.mxu0 0.0
        %2011 = vmatpush1.msra.mxu0 0.0
        %2012 = vmatprep.subr.mxu0 0.0
        %2013 = vmatpush1.msra.mxu0 0.0
        %2014 = vmatprep.subr.mxu0 0.0
        %2015 = vmatpush1.msra.mxu0 0.0
        %2016 = vmatprep.subr.mxu0 0.0
        %2017 = vmatpush1.msra.mxu0 0.0
        %2018 = vmatprep.mubr.f32.mxu0 0.0
        %2019 = vmatmul.mubr.f32.gmra.mrb[0].mxu0 %v1953
        %v2020 = vpop.f32.mrb[0].mxu0
        %v2021 = vadd.f32 %v710, %v2020
        %v2022 = vpop.f32.mrb[0].mxu0
        %v2023 = vadd.f32 %v714, %v2022
        %2024 = vdwg.mxu0
        %2025 = vmatprep.subr.mxu0 0.0
        %2026 = vmatpush1.msra.mxu0 %v647
        %2027 = vmatprep.subr.mxu0 0.0
        %2028 = vmatpush1.msra.mxu0 %v650
        %2029 = vmatprep.subr.mxu0 0.0
        %2030 = vmatpush1.msra.mxu0 %v653
        %2031 = vmatprep.subr.mxu0 0.0
        %2032 = vmatpush1.msra.mxu0 %v656
        %2033 = vmatprep.subr.mxu0 0.0
        %2034 = vmatpush1.msra.mxu0 %v659
        %2035 = vmatprep.subr.mxu0 0.0
        %2036 = vmatpush1.msra.mxu0 %v662
        %2037 = vmatprep.subr.mxu0 0.0
        %2038 = vmatpush1.msra.mxu0 %v665
        %2039 = vmatprep.subr.mxu0 0.0
        %2040 = vmatpush1.msra.mxu0 %v668
        %2041 = vmatprep.subr.mxu0 0.0
        %2042 = vmatpush1.msra.mxu0 %v671
        %2043 = vmatprep.subr.mxu0 0.0
        %2044 = vmatpush1.msra.mxu0 %v674
        %2045 = vmatprep.subr.mxu0 0.0
        %2046 = vmatpush1.msra.mxu0 %v677
        %2047 = vmatprep.subr.mxu0 0.0
        %2048 = vmatpush1.msra.mxu0 %v680
        %2049 = vmatprep.subr.mxu0 0.0
        %2050 = vmatpush1.msra.mxu0 %v683
        %2051 = vmatprep.subr.mxu0 0.0
        %2052 = vmatpush1.msra.mxu0 %v686
        %2053 = vmatprep.subr.mxu0 0.0
        %2054 = vmatpush1.msra.mxu0 %v689
        %2055 = vmatprep.subr.mxu0 0.0
        %2056 = vmatpush1.msra.mxu0 %v692
        %2057 = vmatprep.subr.mxu0 0.0
        %2058 = vmatpush1.msra.mxu0 0.0
        %2059 = vmatprep.subr.mxu0 0.0
        %2060 = vmatpush1.msra.mxu0 0.0
        %2061 = vmatprep.subr.mxu0 0.0
        %2062 = vmatpush1.msra.mxu0 0.0
        %2063 = vmatprep.subr.mxu0 0.0
        %2064 = vmatpush1.msra.mxu0 0.0
        %2065 = vmatprep.subr.mxu0 0.0
        %2066 = vmatpush1.msra.mxu0 0.0
        %2067 = vmatprep.subr.mxu0 0.0
        %2068 = vmatpush1.msra.mxu0 0.0
        %2069 = vmatprep.subr.mxu0 0.0
        %2070 = vmatpush1.msra.mxu0 0.0
        %2071 = vmatprep.subr.mxu0 0.0
        %2072 = vmatpush1.msra.mxu0 0.0
        %2073 = vmatprep.subr.mxu0 0.0
        %2074 = vmatpush1.msra.mxu0 0.0
        %2075 = vmatprep.subr.mxu0 0.0
        %2076 = vmatpush1.msra.mxu0 0.0
        %2077 = vmatprep.subr.mxu0 0.0
        %2078 = vmatpush1.msra.mxu0 0.0
        %2079 = vmatprep.subr.mxu0 0.0
        %2080 = vmatpush1.msra.mxu0 0.0
        %2081 = vmatprep.subr.mxu0 0.0
        %2082 = vmatpush1.msra.mxu0 0.0
        %2083 = vmatprep.subr.mxu0 0.0
        %2084 = vmatpush1.msra.mxu0 0.0
        %2085 = vmatprep.subr.mxu0 0.0
        %2086 = vmatpush1.msra.mxu0 0.0
        %2087 = vmatprep.subr.mxu0 0.0
        %2088 = vmatpush1.msra.mxu0 0.0
        %2089 = vmatprep.mubr.f32.mxu0 0.0
        %2090 = vmatmul.mubr.f32.gmra.mrb[0].mxu0 %v1953
        %v2091 = vpop.f32.mrb[0].mxu0
        %v2092 = vadd.f32 %v718, %v2091
        %v2093 = vpop.f32.mrb[0].mxu0
        %2094 = vdwg.mxu0
        %v2095 = vadd.f32 %v1950, %v2021
        %v2096 = vxor.u32 %v2095, 2147483648
        %v2097 = vmul.f32 %v2096, 1.442695
        %v2098 = vpow.pop %v2097
        %v2099 = vadd.f32 %v2098, 1.0
        %v2100 = vrcp.pop %v2099
        %v2101 = vmul.f32 1.0, %v2100
        %v2102 = vadd.f32 %v1951, %v2023
        %v2103 = vxor.u32 %v2102, 2147483648
        %v2104 = vmul.f32 %v2103, 1.442695
        %v2105 = vpow.pop %v2104
        %v2106 = vadd.f32 %v2105, 1.0
        %v2107 = vrcp.pop %v2106
        %v2108 = vmul.f32 1.0, %v2107
        %v2109 = vmul.f32 %v2101, %v2092
        %v2110 = vadd.f32 %v1952, %v2109
        %v2111 = vtanh.pop %v2110
        %v2112 = vsub.f32 1.0, %v2108
        %v2113 = vmul.f32 %v2112, %v2111
        %v2114 = vmul.f32 %v2108, %v1953
        %v2115 = vadd.f32 %v2113, %v2114
        %2116 = vst [vmem:[#allocation3] sm:$0xff] %v2115
        %s2117 = scalar_lea.vmem %s254, %s1944 [#allocation4]
        %2118 = vst [vmem:[%s2117] sm:$0xff] %v2115
        %s2119 = sand.u32 %s149, 1
        %s2120 = sand.u32 %s149, 1
        %s2121 = smul.addr %s2120, 64
        %s2122 = scalar_lea.vmem [#allocation4], %s2121
        // Predicated region
        $region41: #{gru_module_forward.4} parent=39 // pred_check
          %p2123 = pneg %p159
        $region42: #{gru_module_forward.4} parent=39 // pred_check_branch
          %2125 = sbr.rel (%p2123) target = $region44
        $region43: #{gru_module_forward.4} parent=39 // pred_region
          %s2126 = smul.addr %s16, 8
          %s2127 = scalar_lea.vmem %s5, %s2126
          // Predicated region
          $region45: #{gru_module_forward.4} parent=43 // pred_check
            _
          $region46: #{gru_module_forward.4} parent=43 // pred_check_branch
            %2129 = sbr.rel (0) target = $region48
          $region47: #{gru_module_forward.4} parent=43 // pred_region
            // Predicated region
            $region49: #{gru_module_forward.4} parent=47 // pred_check
              _
            $region50: #{gru_module_forward.4} parent=47 // pred_check_branch
              %2131 = sbr.rel (0) target = $region52
            $region51: #{gru_module_forward.4} parent=47 // pred_region
              // Predicated region
              $region64: #{gru_module_forward.4} parent=51 // pred_check
                _
              $region65: #{gru_module_forward.4} parent=51 // pred_check_branch
                %2160 = sbr.rel (0) target = $region67
              $region66: #{gru_module_forward.4} parent=51 // pred_region
                loop: start=0, step=1, limit=1
                $region68: #{gru_module_forward.4} parent=66 // loop_pre_header
                  _
                $region69: #{gru_module_forward.4} parent=66 // loop_header
                  %s2162 = sphi 0, %s2166
                  %p2163 = scmp.ge.s32.totalorder %s2162, 1
                  %s2167 = sphi %s2122, %s2122
                  %s2168 = sphi %s2127, %s2127
                $region70: #{gru_module_forward.4} parent=66 // loop_header_branch
                  %2165 = sbr.rel (%p2163) target = $region74
                $region71: #{gru_module_forward.4} parent=66 // loop_body
                  %v2169 = vld [vmem:[%s2167] sm:$0xff]
                  %2170 = vst [vmem:[%s2168] sm:$0xff] %v2169
                  %v2171 = vld [vmem:[%s2167 + $0x8] sm:$0xff]
                  %2172 = vst [vmem:[%s2168 + $0x10] sm:$0xff] %v2171
                  %v2173 = vld [vmem:[%s2167 + $0x10] sm:$0xff]
                  %2174 = vst [vmem:[%s2168 + $0x20] sm:$0xff] %v2173
                  %v2175 = vld [vmem:[%s2167 + $0x18] sm:$0xff]
                  %2176 = vst [vmem:[%s2168 + $0x30] sm:$0xff] %v2175
                  %v2177 = vld [vmem:[%s2167 + $0x20] sm:$0xff]
                  %2178 = vst [vmem:[%s2168 + $0x40] sm:$0xff] %v2177
                  %v2179 = vld [vmem:[%s2167 + $0x28] sm:$0xff]
                  %2180 = vst [vmem:[%s2168 + $0x50] sm:$0xff] %v2179
                  %v2181 = vld [vmem:[%s2167 + $0x30] sm:$0xff]
                  %2182 = vst [vmem:[%s2168 + $0x60] sm:$0xff] %v2181
                  %v2183 = vld [vmem:[%s2167 + $0x38] sm:$0xff]
                  %2184 = vst [vmem:[%s2168 + $0x70] sm:$0xff] %v2183
                $region72: #{gru_module_forward.4} parent=66 // loop_footer
                  %s2166 = sadd.s32 1, %s2162
                $region73: #{gru_module_forward.4} parent=66 // loop_footer_branch
                  %2161 = sbr.rel target = $region69
                $region74: #{gru_module_forward.4} parent=66 // loop_exit
                  _
              $region67: #{gru_module_forward.4} parent=51 // pred_fallthru
                _
              // Predicated region
              $region75: #{gru_module_forward.4} parent=51 // pred_check
                _
              $region76: #{gru_module_forward.4} parent=51 // pred_check_branch
                %2186 = sbr.rel target = $region78
              $region77: #{gru_module_forward.4} parent=51 // pred_region
                _
              $region78: #{gru_module_forward.4} parent=51 // pred_fallthru
                _
            $region52: #{gru_module_forward.4} parent=47 // pred_fallthru
              _
            // Predicated region
            $region53: #{gru_module_forward.4} parent=47 // pred_check
              _
            $region54: #{gru_module_forward.4} parent=47 // pred_check_branch
              %2133 = sbr.rel target = $region56
            $region55: #{gru_module_forward.4} parent=47 // pred_region
              loop: start=0, step=1, limit=1
              $region57: #{gru_module_forward.4} parent=55 // loop_pre_header
                _
              $region58: #{gru_module_forward.4} parent=55 // loop_header
                %s2136 = sphi 0, %s2140
                %p2137 = scmp.ge.s32.totalorder %s2136, 1
                %s2141 = sphi %s2122, %s2122
                %s2142 = sphi %s2127, %s2127
              $region59: #{gru_module_forward.4} parent=55 // loop_header_branch
                %2139 = sbr.rel (%p2137) target = $region63
              $region60: #{gru_module_forward.4} parent=55 // loop_body
                %v2143 = vld [vmem:[%s2141] sm:$0xff]
                %2144 = vst [vmem:[%s2142] sm:$0xff] %v2143
                %v2145 = vld [vmem:[%s2141 + $0x8] sm:$0xff]
                %2146 = vst [vmem:[%s2142 + $0x10] sm:$0xff] %v2145
                %v2147 = vld [vmem:[%s2141 + $0x10] sm:$0xff]
                %2148 = vst [vmem:[%s2142 + $0x20] sm:$0xff] %v2147
                %v2149 = vld [vmem:[%s2141 + $0x18] sm:$0xff]
                %2150 = vst [vmem:[%s2142 + $0x30] sm:$0xff] %v2149
                %v2151 = vld [vmem:[%s2141 + $0x20] sm:$0xff]
                %2152 = vst [vmem:[%s2142 + $0x40] sm:$0xff] %v2151
                %v2153 = vld [vmem:[%s2141 + $0x28] sm:$0xff]
                %2154 = vst [vmem:[%s2142 + $0x50] sm:$0xff] %v2153
                %v2155 = vld [vmem:[%s2141 + $0x30] sm:$0xff]
                %2156 = vst [vmem:[%s2142 + $0x60] sm:$0xff] %v2155
                %v2157 = vld [vmem:[%s2141 + $0x38] sm:$0xff]
                %2158 = vst [vmem:[%s2142 + $0x70] sm:$0xff] %v2157
              $region61: #{gru_module_forward.4} parent=55 // loop_footer
                %s2140 = sadd.s32 1, %s2136
              $region62: #{gru_module_forward.4} parent=55 // loop_footer_branch
                %2135 = sbr.rel target = $region58
              $region63: #{gru_module_forward.4} parent=55 // loop_exit
                _
            $region56: #{gru_module_forward.4} parent=47 // pred_fallthru
              _
          $region48: #{gru_module_forward.4} parent=43 // pred_fallthru
            _
          %2187 = vnop
        $region44: #{gru_module_forward.4} parent=39 // pred_fallthru
          _
      $region40: #{gru_module_forward.4} parent=5 // pred_fallthru
        _
      %p2188 = scmp.le.s32.totalorder 2, %s11
      // Predicated region
      $region79: #{gru_module_forward.4} parent=5 // pred_check
        %p2189 = pneg %p2188
      $region80: #{gru_module_forward.4} parent=5 // pred_check_branch
        %2191 = sbr.rel (%p2189) target = $region82
      $region81: #{gru_module_forward.4} parent=5 // pred_region
        %s2192 = ssub.s32 %s11, 2
        // Predicated region
        $region83: #{gru_module_forward.4} parent=81 // pred_check
          %p2193 = pneg %p165
        $region84: #{gru_module_forward.4} parent=81 // pred_check_branch
          %2195 = sbr.rel (%p2193) target = $region86
        $region85: #{gru_module_forward.4} parent=81 // pred_region
          %s2196 = sand.u32 %s150, 1
          %s2197 = sand.u32 %s150, 1
          %s2198 = smul.addr %s2197, 64
          %s2199 = scalar_lea.vmem [#allocation4], %s2198
        $region86: #{gru_module_forward.4} parent=81 // pred_fallthru
          _
      $region82: #{gru_module_forward.4} parent=5 // pred_fallthru
        _
    $region6: #{gru_module_forward.4} parent=1 // loop_footer
      %s15 = sadd.s32 1, %s11
    $region7: #{gru_module_forward.4} parent=1 // loop_footer_branch
      %10 = sbr.rel target = $region3
    $region8: #{gru_module_forward.4} parent=1 // loop_exit
      _

// kernel: gru_module_forward.5
$region0: #{gru_module_forward.5}
  #allocation0 [shape = 'u32[]', space=smem, size = 0x4, offset = 0x4, fixed_abs, tag = 'smem constant byte address 0x4 - core index']
  #allocation1 [shape = 'u32[144,128]{1,0:T(1,128)}', space=vmem, size = 0x12000, scoped, tag = 'internal scratch']
  %s0 = inlined_call_operand.vmem [shape: f32[64,256], index: 0, kind: input, shape index: {}]
  %s1 = inlined_call_operand.vmem [shape: f32[1,256,64], index: 1, kind: input, shape index: {}]
  %s2 = inlined_call_operand.vmem [shape: f32[1,1,64], index: 2, kind: input, shape index: {}]
  %s3 = inlined_call_operand.vmem [shape: f32[1,64,16], index: 3, kind: input, shape index: {}]
  %s4 = inlined_call_operand.vmem [shape: f32[1,1,16], index: 4, kind: input, shape index: {}]
  %s5 = inlined_call_operand.vmem [shape: f32[1,16,128], index: 5, kind: input, shape index: {}]
  %s6 = inlined_call_operand.vmem [shape: f32[1,1,128], index: 6, kind: input, shape index: {}]
  %s7 = inlined_call_operand.vmem [shape: f32[1,64,128], index: 7, kind: output, shape index: {}]
  %s8 = sld [smem:[#allocation0]]
  $region38: #{gru_module_forward.5} parent=0
    _
  %s10 = ssub.s32 1, %s8
  %s11 = scalar_select 0, %s10, %s8
  // Predicated region
  $region2: #{gru_module_forward.5} parent=0 // pred_check
    _
  $region3: #{gru_module_forward.5} parent=0 // pred_check_branch
    %13 = sbr.rel (0) target = $region5
  $region4: #{gru_module_forward.5} parent=0 // pred_region
    _
  $region5: #{gru_module_forward.5} parent=0 // pred_fallthru
    _
  // Predicated region
  $region6: #{gru_module_forward.5} parent=0 // pred_check
    _
  $region7: #{gru_module_forward.5} parent=0 // pred_check_branch
    %15 = sbr.rel (0) target = $region9
  $region8: #{gru_module_forward.5} parent=0 // pred_region
    _
  $region9: #{gru_module_forward.5} parent=0 // pred_fallthru
    _
  // Predicated region
  $region10: #{gru_module_forward.5} parent=0 // pred_check
    _
  $region11: #{gru_module_forward.5} parent=0 // pred_check_branch
    %17 = sbr.rel (0) target = $region13
  $region12: #{gru_module_forward.5} parent=0 // pred_region
    _
  $region13: #{gru_module_forward.5} parent=0 // pred_fallthru
    _
  // Predicated region
  $region14: #{gru_module_forward.5} parent=0 // pred_check
    _
  $region15: #{gru_module_forward.5} parent=0 // pred_check_branch
    %19 = sbr.rel (0) target = $region17
  $region16: #{gru_module_forward.5} parent=0 // pred_region
    _
  $region17: #{gru_module_forward.5} parent=0 // pred_fallthru
    _
  // Predicated region
  $region18: #{gru_module_forward.5} parent=0 // pred_check
    _
  $region19: #{gru_module_forward.5} parent=0 // pred_check_branch
    %21 = sbr.rel (0) target = $region21
  $region20: #{gru_module_forward.5} parent=0 // pred_region
    _
  $region21: #{gru_module_forward.5} parent=0 // pred_fallthru
    _
  // Predicated region
  $region22: #{gru_module_forward.5} parent=0 // pred_check
    _
  $region23: #{gru_module_forward.5} parent=0 // pred_check_branch
    %23 = sbr.rel (0) target = $region25
  $region24: #{gru_module_forward.5} parent=0 // pred_region
    _
  $region25: #{gru_module_forward.5} parent=0 // pred_fallthru
    _
  // Predicated region
  $region26: #{gru_module_forward.5} parent=0 // pred_check
    _
  $region27: #{gru_module_forward.5} parent=0 // pred_check_branch
    %25 = sbr.rel (0) target = $region29
  $region28: #{gru_module_forward.5} parent=0 // pred_region
    _
  $region29: #{gru_module_forward.5} parent=0 // pred_fallthru
    _
  %v26 = vld [vmem:[%s0] sm:$0xff]
  %v27 = vld [vmem:[%s0 + $0x8] sm:$0xff]
  %v28 = vld [vmem:[%s0 + $0x10] sm:$0xff]
  %v29 = vld [vmem:[%s0 + $0x18] sm:$0xff]
  %v30 = vld [vmem:[%s0 + $0x20] sm:$0xff]
  %v31 = vld [vmem:[%s0 + $0x28] sm:$0xff]
  %v32 = vld [vmem:[%s0 + $0x30] sm:$0xff]
  %v33 = vld [vmem:[%s0 + $0x38] sm:$0xff]
  %v34 = vld [vmem:[%s0 + $0x40] sm:$0xff]
  %v35 = vld [vmem:[%s0 + $0x48] sm:$0xff]
  %v36 = vld [vmem:[%s0 + $0x50] sm:$0xff]
  %v37 = vld [vmem:[%s0 + $0x58] sm:$0xff]
  %v38 = vld [vmem:[%s0 + $0x60] sm:$0xff]
  %v39 = vld [vmem:[%s0 + $0x68] sm:$0xff]
  %v40 = vld [vmem:[%s0 + $0x70] sm:$0xff]
  %v41 = vld [vmem:[%s0 + $0x78] sm:$0xff]
  %v42 = vld [vmem:[%s1] sm:$0xff]
  %v43 = vld [vmem:[%s1 + $0x8] sm:$0xff]
  %v44 = vld [vmem:[%s1 + $0x10] sm:$0xff]
  %v45 = vld [vmem:[%s1 + $0x18] sm:$0xff]
  %v46 = vld [vmem:[%s1 + $0x20] sm:$0xff]
  %v47 = vld [vmem:[%s1 + $0x28] sm:$0xff]
  %v48 = vld [vmem:[%s1 + $0x30] sm:$0xff]
  %v49 = vld [vmem:[%s1 + $0x38] sm:$0xff]
  %v50 = vld [vmem:[%s1 + $0x40] sm:$0xff]
  %v51 = vld [vmem:[%s1 + $0x48] sm:$0xff]
  %v52 = vld [vmem:[%s1 + $0x50] sm:$0xff]
  %v53 = vld [vmem:[%s1 + $0x58] sm:$0xff]
  %v54 = vld [vmem:[%s1 + $0x60] sm:$0xff]
  %v55 = vld [vmem:[%s1 + $0x68] sm:$0xff]
  %v56 = vld [vmem:[%s1 + $0x70] sm:$0xff]
  %v57 = vld [vmem:[%s1 + $0x78] sm:$0xff]
  %v58 = vld [vmem:[%s1 + $0x80] sm:$0xff]
  %v59 = vld [vmem:[%s1 + $0x88] sm:$0xff]
  %v60 = vld [vmem:[%s1 + $0x90] sm:$0xff]
  %v61 = vld [vmem:[%s1 + $0x98] sm:$0xff]
  %v62 = vld [vmem:[%s1 + $0xa0] sm:$0xff]
  %v63 = vld [vmem:[%s1 + $0xa8] sm:$0xff]
  %v64 = vld [vmem:[%s1 + $0xb0] sm:$0xff]
  %v65 = vld [vmem:[%s1 + $0xb8] sm:$0xff]
  %v66 = vld [vmem:[%s1 + $0xc0] sm:$0xff]
  %v67 = vld [vmem:[%s1 + $0xc8] sm:$0xff]
  %v68 = vld [vmem:[%s1 + $0xd0] sm:$0xff]
  %v69 = vld [vmem:[%s1 + $0xd8] sm:$0xff]
  %v70 = vld [vmem:[%s1 + $0xe0] sm:$0xff]
  %v71 = vld [vmem:[%s1 + $0xe8] sm:$0xff]
  %v72 = vld [vmem:[%s1 + $0xf0] sm:$0xff]
  %v73 = vld [vmem:[%s1 + $0xf8] sm:$0xff]
  %v74 = vld [vmem:[%s2] sm:$0x1]
  %v76 = vlaneseq
  %v77 = vshrl.u32 %v76, 7
  %v78 = vsub.s32 0, %v77
  %v79 = vrot.slane %v74, %v78
  %81 = vmatprep.subr.mxu0 0.0
  %82 = vmatpush1.msra.mxu0 %v42
  %83 = vmatprep.subr.mxu0 0.0
  %84 = vmatpush1.msra.mxu0 %v43
  %85 = vmatprep.subr.mxu0 0.0
  %86 = vmatpush1.msra.mxu0 %v44
  %87 = vmatprep.subr.mxu0 0.0
  %88 = vmatpush1.msra.mxu0 %v45
  %89 = vmatprep.subr.mxu0 0.0
  %90 = vmatpush1.msra.mxu0 %v46
  %91 = vmatprep.subr.mxu0 0.0
  %92 = vmatpush1.msra.mxu0 %v47
  %93 = vmatprep.subr.mxu0 0.0
  %94 = vmatpush1.msra.mxu0 %v48
  %95 = vmatprep.subr.mxu0 0.0
  %96 = vmatpush1.msra.mxu0 %v49
  %97 = vmatprep.subr.mxu0 0.0
  %98 = vmatpush1.msra.mxu0 %v50
  %99 = vmatprep.subr.mxu0 0.0
  %100 = vmatpush1.msra.mxu0 %v51
  %101 = vmatprep.subr.mxu0 0.0
  %102 = vmatpush1.msra.mxu0 %v52
  %103 = vmatprep.subr.mxu0 0.0
  %104 = vmatpush1.msra.mxu0 %v53
  %105 = vmatprep.subr.mxu0 0.0
  %106 = vmatpush1.msra.mxu0 %v54
  %107 = vmatprep.subr.mxu0 0.0
  %108 = vmatpush1.msra.mxu0 %v55
  %109 = vmatprep.subr.mxu0 0.0
  %110 = vmatpush1.msra.mxu0 %v56
  %111 = vmatprep.subr.mxu0 0.0
  %112 = vmatpush1.msra.mxu0 %v57
  %113 = vmatprep.subr.mxu0 0.0
  %114 = vmatpush1.msra.mxu0 %v58
  %115 = vmatprep.subr.mxu0 0.0
  %116 = vmatpush1.msra.mxu0 %v59
  %117 = vmatprep.subr.mxu0 0.0
  %118 = vmatpush1.msra.mxu0 %v60
  %119 = vmatprep.subr.mxu0 0.0
  %120 = vmatpush1.msra.mxu0 %v61
  %121 = vmatprep.subr.mxu0 0.0
  %122 = vmatpush1.msra.mxu0 %v62
  %123 = vmatprep.subr.mxu0 0.0
  %124 = vmatpush1.msra.mxu0 %v63
  %125 = vmatprep.subr.mxu0 0.0
  %126 = vmatpush1.msra.mxu0 %v64
  %127 = vmatprep.subr.mxu0 0.0
  %128 = vmatpush1.msra.mxu0 %v65
  %129 = vmatprep.subr.mxu0 0.0
  %130 = vmatpush1.msra.mxu0 %v66
  %131 = vmatprep.subr.mxu0 0.0
  %132 = vmatpush1.msra.mxu0 %v67
  %133 = vmatprep.subr.mxu0 0.0
  %134 = vmatpush1.msra.mxu0 %v68
  %135 = vmatprep.subr.mxu0 0.0
  %136 = vmatpush1.msra.mxu0 %v69
  %137 = vmatprep.subr.mxu0 0.0
  %138 = vmatpush1.msra.mxu0 %v70
  %139 = vmatprep.subr.mxu0 0.0
  %140 = vmatpush1.msra.mxu0 %v71
  %141 = vmatprep.subr.mxu0 0.0
  %142 = vmatpush1.msra.mxu0 %v72
  %143 = vmatprep.subr.mxu0 0.0
  %144 = vmatpush1.msra.mxu0 %v73
  %145 = vmatprep.mubr.f32.mxu0 %v27
  %146 = vmatmul.mubr.f32.gmra.mrb[0].mxu0 %v26
  %v147 = vpop.f32.mrb[0].mxu0
  %v148 = vadd.f32 %v79, %v147
  %v149 = vpop.f32.mrb[0].mxu0
  %150 = vmatprep.mubr.f32.mxu0 %v29
  %151 = vmatmul.mubr.f32.gmra.mrb[0].mxu0 %v28
  %v152 = vpop.f32.mrb[0].mxu0
  %v153 = vadd.f32 %v79, %v152
  %v154 = vpop.f32.mrb[0].mxu0
  %155 = vmatprep.mubr.f32.mxu0 %v31
  %156 = vmatmul.mubr.f32.gmra.mrb[0].mxu0 %v30
  %v157 = vpop.f32.mrb[0].mxu0
  %v158 = vadd.f32 %v79, %v157
  %v159 = vpop.f32.mrb[0].mxu0
  %160 = vmatprep.mubr.f32.mxu0 %v33
  %161 = vmatmul.mubr.f32.gmra.mrb[0].mxu0 %v32
  %v162 = vpop.f32.mrb[0].mxu0
  %v163 = vadd.f32 %v79, %v162
  %v164 = vpop.f32.mrb[0].mxu0
  %165 = vmatprep.mubr.f32.mxu0 %v35
  %166 = vmatmul.mubr.f32.gmra.mrb[0].mxu0 %v34
  %v167 = vpop.f32.mrb[0].mxu0
  %v168 = vadd.f32 %v79, %v167
  %v169 = vpop.f32.mrb[0].mxu0
  %170 = vmatprep.mubr.f32.mxu0 %v37
  %171 = vmatmul.mubr.f32.gmra.mrb[0].mxu0 %v36
  %v172 = vpop.f32.mrb[0].mxu0
  %v173 = vadd.f32 %v79, %v172
  %v174 = vpop.f32.mrb[0].mxu0
  %175 = vmatprep.mubr.f32.mxu0 %v39
  %176 = vmatmul.mubr.f32.gmra.mrb[0].mxu0 %v38
  %v177 = vpop.f32.mrb[0].mxu0
  %v178 = vadd.f32 %v79, %v177
  %v179 = vpop.f32.mrb[0].mxu0
  %180 = vmatprep.mubr.f32.mxu0 %v41
  %181 = vmatmul.mubr.f32.gmra.mrb[0].mxu0 %v40
  %v182 = vpop.f32.mrb[0].mxu0
  %v183 = vadd.f32 %v79, %v182
  %v184 = vpop.f32.mrb[0].mxu0
  %185 = vdwg.mxu0
  %v186 = vmax.f32 %v148, 0.0
  %v187 = vmax.f32 %v153, 0.0
  %v188 = vmax.f32 %v158, 0.0
  %v189 = vmax.f32 %v163, 0.0
  %v190 = vmax.f32 %v168, 0.0
  %v191 = vmax.f32 %v173, 0.0
  %v192 = vmax.f32 %v178, 0.0
  %v193 = vmax.f32 %v183, 0.0
  %v194 = vld [vmem:[%s3] sm:$0xff]
  %v195 = vld [vmem:[%s3 + $0x8] sm:$0xff]
  %v196 = vld [vmem:[%s3 + $0x10] sm:$0xff]
  %v197 = vld [vmem:[%s3 + $0x18] sm:$0xff]
  %v198 = vld [vmem:[%s3 + $0x20] sm:$0xff]
  %v199 = vld [vmem:[%s3 + $0x28] sm:$0xff]
  %v200 = vld [vmem:[%s3 + $0x30] sm:$0xff]
  %v201 = vld [vmem:[%s3 + $0x38] sm:$0xff]
  %v202 = vld [vmem:[%s4] sm:$0x1]
  %v204 = vlaneseq
  %v205 = vshrl.u32 %v204, 7
  %v206 = vsub.s32 0, %v205
  %v207 = vrot.slane %v202, %v206
  %vm209 = vcmask 523264
  %v211 = vsel %vm209, %v186, 0
  %v214 = vsel %vm209, %v187, 0
  %v217 = vsel %vm209, %v188, 0
  %v220 = vsel %vm209, %v189, 0
  %v223 = vsel %vm209, %v190, 0
  %v226 = vsel %vm209, %v191, 0
  %v229 = vsel %vm209, %v192, 0
  %v232 = vsel %vm209, %v193, 0
  %234 = vmatprep.subr.mxu0 0.0
  %235 = vmatpush1.msra.mxu0 %v194
  %236 = vmatprep.subr.mxu0 0.0
  %237 = vmatpush1.msra.mxu0 %v195
  %238 = vmatprep.subr.mxu0 0.0
  %239 = vmatpush1.msra.mxu0 %v196
  %240 = vmatprep.subr.mxu0 0.0
  %241 = vmatpush1.msra.mxu0 %v197
  %242 = vmatprep.subr.mxu0 0.0
  %243 = vmatpush1.msra.mxu0 %v198
  %244 = vmatprep.subr.mxu0 0.0
  %245 = vmatpush1.msra.mxu0 %v199
  %246 = vmatprep.subr.mxu0 0.0
  %247 = vmatpush1.msra.mxu0 %v200
  %248 = vmatprep.subr.mxu0 0.0
  %249 = vmatpush1.msra.mxu0 %v201
  %250 = vmatprep.subr.mxu0 0.0
  %251 = vmatpush1.msra.mxu0 0.0
  %252 = vmatprep.subr.mxu0 0.0
  %253 = vmatpush1.msra.mxu0 0.0
  %254 = vmatprep.subr.mxu0 0.0
  %255 = vmatpush1.msra.mxu0 0.0
  %256 = vmatprep.subr.mxu0 0.0
  %257 = vmatpush1.msra.mxu0 0.0
  %258 = vmatprep.subr.mxu0 0.0
  %259 = vmatpush1.msra.mxu0 0.0
  %260 = vmatprep.subr.mxu0 0.0
  %261 = vmatpush1.msra.mxu0 0.0
  %262 = vmatprep.subr.mxu0 0.0
  %263 = vmatpush1.msra.mxu0 0.0
  %264 = vmatprep.subr.mxu0 0.0
  %265 = vmatpush1.msra.mxu0 0.0
  %266 = vmatprep.subr.mxu0 0.0
  %267 = vmatpush1.msra.mxu0 0.0
  %268 = vmatprep.subr.mxu0 0.0
  %269 = vmatpush1.msra.mxu0 0.0
  %270 = vmatprep.subr.mxu0 0.0
  %271 = vmatpush1.msra.mxu0 0.0
  %272 = vmatprep.subr.mxu0 0.0
  %273 = vmatpush1.msra.mxu0 0.0
  %274 = vmatprep.subr.mxu0 0.0
  %275 = vmatpush1.msra.mxu0 0.0
  %276 = vmatprep.subr.mxu0 0.0
  %277 = vmatpush1.msra.mxu0 0.0
  %278 = vmatprep.subr.mxu0 0.0
  %279 = vmatpush1.msra.mxu0 0.0
  %280 = vmatprep.subr.mxu0 0.0
  %281 = vmatpush1.msra.mxu0 0.0
  %282 = vmatprep.subr.mxu0 0.0
  %283 = vmatpush1.msra.mxu0 0.0
  %284 = vmatprep.subr.mxu0 0.0
  %285 = vmatpush1.msra.mxu0 0.0
  %286 = vmatprep.subr.mxu0 0.0
  %287 = vmatpush1.msra.mxu0 0.0
  %288 = vmatprep.subr.mxu0 0.0
  %289 = vmatpush1.msra.mxu0 0.0
  %290 = vmatprep.subr.mxu0 0.0
  %291 = vmatpush1.msra.mxu0 0.0
  %292 = vmatprep.subr.mxu0 0.0
  %293 = vmatpush1.msra.mxu0 0.0
  %294 = vmatprep.subr.mxu0 0.0
  %295 = vmatpush1.msra.mxu0 0.0
  %296 = vmatprep.subr.mxu0 0.0
  %297 = vmatpush1.msra.mxu0 0.0
  %298 = vmatprep.mubr.f32.mxu0 0.0
  %299 = vmatmul.mubr.f32.gmra.mrb[0].mxu0 %v211
  %v300 = vpop.f32.mrb[0].mxu0
  %v301 = vadd.f32 %v207, %v300
  %v302 = vpop.f32.mrb[0].mxu0
  %303 = vmatprep.mubr.f32.mxu0 0.0
  %304 = vmatmul.mubr.f32.gmra.mrb[0].mxu0 %v214
  %v305 = vpop.f32.mrb[0].mxu0
  %v306 = vadd.f32 %v207, %v305
  %v307 = vpop.f32.mrb[0].mxu0
  %308 = vmatprep.mubr.f32.mxu0 0.0
  %309 = vmatmul.mubr.f32.gmra.mrb[0].mxu0 %v217
  %v310 = vpop.f32.mrb[0].mxu0
  %v311 = vadd.f32 %v207, %v310
  %v312 = vpop.f32.mrb[0].mxu0
  %313 = vmatprep.mubr.f32.mxu0 0.0
  %314 = vmatmul.mubr.f32.gmra.mrb[0].mxu0 %v220
  %v315 = vpop.f32.mrb[0].mxu0
  %v316 = vadd.f32 %v207, %v315
  %v317 = vpop.f32.mrb[0].mxu0
  %318 = vmatprep.mubr.f32.mxu0 0.0
  %319 = vmatmul.mubr.f32.gmra.mrb[0].mxu0 %v223
  %v320 = vpop.f32.mrb[0].mxu0
  %v321 = vadd.f32 %v207, %v320
  %v322 = vpop.f32.mrb[0].mxu0
  %323 = vmatprep.mubr.f32.mxu0 0.0
  %324 = vmatmul.mubr.f32.gmra.mrb[0].mxu0 %v226
  %v325 = vpop.f32.mrb[0].mxu0
  %v326 = vadd.f32 %v207, %v325
  %v327 = vpop.f32.mrb[0].mxu0
  %328 = vmatprep.mubr.f32.mxu0 0.0
  %329 = vmatmul.mubr.f32.gmra.mrb[0].mxu0 %v229
  %v330 = vpop.f32.mrb[0].mxu0
  %v331 = vadd.f32 %v207, %v330
  %v332 = vpop.f32.mrb[0].mxu0
  %333 = vmatprep.mubr.f32.mxu0 0.0
  %334 = vmatmul.mubr.f32.gmra.mrb[0].mxu0 %v232
  %v335 = vpop.f32.mrb[0].mxu0
  %v336 = vadd.f32 %v207, %v335
  %v337 = vpop.f32.mrb[0].mxu0
  %338 = vdwg.mxu0
  %v339 = vmax.f32 %v301, 0.0
  %v340 = vmax.f32 %v306, 0.0
  %v341 = vmax.f32 %v311, 0.0
  %v342 = vmax.f32 %v316, 0.0
  %v343 = vmax.f32 %v321, 0.0
  %v344 = vmax.f32 %v326, 0.0
  %v345 = vmax.f32 %v331, 0.0
  %v346 = vmax.f32 %v336, 0.0
  %v347 = vld [vmem:[%s5] sm:$0xff]
  %v348 = vld [vmem:[%s5 + $0x8] sm:$0xff]
  %v349 = vld [vmem:[%s6] sm:$0x1]
  %v351 = vlaneseq
  %v352 = vshrl.u32 %v351, 7
  %v353 = vsub.s32 0, %v352
  %v354 = vrot.slane %v349, %v353
  %vm356 = vcmask 130048
  %v358 = vsel %vm356, %v339, 0
  %v361 = vsel %vm356, %v340, 0
  %v364 = vsel %vm356, %v341, 0
  %v367 = vsel %vm356, %v342, 0
  %v370 = vsel %vm356, %v343, 0
  %v373 = vsel %vm356, %v344, 0
  %v376 = vsel %vm356, %v345, 0
  %v379 = vsel %vm356, %v346, 0
  %381 = vmatprep.subr.mxu0 0.0
  %382 = vmatpush1.msra.mxu0 %v347
  %383 = vmatprep.subr.mxu0 0.0
  %384 = vmatpush1.msra.mxu0 %v348
  %385 = vmatprep.subr.mxu0 0.0
  %386 = vmatpush1.msra.mxu0 0.0
  %387 = vmatprep.subr.mxu0 0.0
  %388 = vmatpush1.msra.mxu0 0.0
  %389 = vmatprep.subr.mxu0 0.0
  %390 = vmatpush1.msra.mxu0 0.0
  %391 = vmatprep.subr.mxu0 0.0
  %392 = vmatpush1.msra.mxu0 0.0
  %393 = vmatprep.subr.mxu0 0.0
  %394 = vmatpush1.msra.mxu0 0.0
  %395 = vmatprep.subr.mxu0 0.0
  %396 = vmatpush1.msra.mxu0 0.0
  %397 = vmatprep.subr.mxu0 0.0
  %398 = vmatpush1.msra.mxu0 0.0
  %399 = vmatprep.subr.mxu0 0.0
  %400 = vmatpush1.msra.mxu0 0.0
  %401 = vmatprep.subr.mxu0 0.0
  %402 = vmatpush1.msra.mxu0 0.0
  %403 = vmatprep.subr.mxu0 0.0
  %404 = vmatpush1.msra.mxu0 0.0
  %405 = vmatprep.subr.mxu0 0.0
  %406 = vmatpush1.msra.mxu0 0.0
  %407 = vmatprep.subr.mxu0 0.0
  %408 = vmatpush1.msra.mxu0 0.0
  %409 = vmatprep.subr.mxu0 0.0
  %410 = vmatpush1.msra.mxu0 0.0
  %411 = vmatprep.subr.mxu0 0.0
  %412 = vmatpush1.msra.mxu0 0.0
  %413 = vmatprep.subr.mxu0 0.0
  %414 = vmatpush1.msra.mxu0 0.0
  %415 = vmatprep.subr.mxu0 0.0
  %416 = vmatpush1.msra.mxu0 0.0
  %417 = vmatprep.subr.mxu0 0.0
  %418 = vmatpush1.msra.mxu0 0.0
  %419 = vmatprep.subr.mxu0 0.0
  %420 = vmatpush1.msra.mxu0 0.0
  %421 = vmatprep.subr.mxu0 0.0
  %422 = vmatpush1.msra.mxu0 0.0
  %423 = vmatprep.subr.mxu0 0.0
  %424 = vmatpush1.msra.mxu0 0.0
  %425 = vmatprep.subr.mxu0 0.0
  %426 = vmatpush1.msra.mxu0 0.0
  %427 = vmatprep.subr.mxu0 0.0
  %428 = vmatpush1.msra.mxu0 0.0
  %429 = vmatprep.subr.mxu0 0.0
  %430 = vmatpush1.msra.mxu0 0.0
  %431 = vmatprep.subr.mxu0 0.0
  %432 = vmatpush1.msra.mxu0 0.0
  %433 = vmatprep.subr.mxu0 0.0
  %434 = vmatpush1.msra.mxu0 0.0
  %435 = vmatprep.subr.mxu0 0.0
  %436 = vmatpush1.msra.mxu0 0.0
  %437 = vmatprep.subr.mxu0 0.0
  %438 = vmatpush1.msra.mxu0 0.0
  %439 = vmatprep.subr.mxu0 0.0
  %440 = vmatpush1.msra.mxu0 0.0
  %441 = vmatprep.subr.mxu0 0.0
  %442 = vmatpush1.msra.mxu0 0.0
  %443 = vmatprep.subr.mxu0 0.0
  %444 = vmatpush1.msra.mxu0 0.0
  %445 = vmatprep.mubr.f32.mxu0 0.0
  %446 = vmatmul.mubr.f32.gmra.mrb[0].mxu0 %v358
  %v447 = vpop.f32.mrb[0].mxu0
  %v448 = vadd.f32 %v354, %v447
  %v449 = vpop.f32.mrb[0].mxu0
  %450 = vmatprep.mubr.f32.mxu0 0.0
  %451 = vmatmul.mubr.f32.gmra.mrb[0].mxu0 %v361
  %v452 = vpop.f32.mrb[0].mxu0
  %v453 = vadd.f32 %v354, %v452
  %v454 = vpop.f32.mrb[0].mxu0
  %455 = vmatprep.mubr.f32.mxu0 0.0
  %456 = vmatmul.mubr.f32.gmra.mrb[0].mxu0 %v364
  %v457 = vpop.f32.mrb[0].mxu0
  %v458 = vadd.f32 %v354, %v457
  %v459 = vpop.f32.mrb[0].mxu0
  %460 = vmatprep.mubr.f32.mxu0 0.0
  %461 = vmatmul.mubr.f32.gmra.mrb[0].mxu0 %v367
  %v462 = vpop.f32.mrb[0].mxu0
  %v463 = vadd.f32 %v354, %v462
  %v464 = vpop.f32.mrb[0].mxu0
  %465 = vmatprep.mubr.f32.mxu0 0.0
  %466 = vmatmul.mubr.f32.gmra.mrb[0].mxu0 %v370
  %v467 = vpop.f32.mrb[0].mxu0
  %v468 = vadd.f32 %v354, %v467
  %v469 = vpop.f32.mrb[0].mxu0
  %470 = vmatprep.mubr.f32.mxu0 0.0
  %471 = vmatmul.mubr.f32.gmra.mrb[0].mxu0 %v373
  %v472 = vpop.f32.mrb[0].mxu0
  %v473 = vadd.f32 %v354, %v472
  %v474 = vpop.f32.mrb[0].mxu0
  %475 = vmatprep.mubr.f32.mxu0 0.0
  %476 = vmatmul.mubr.f32.gmra.mrb[0].mxu0 %v376
  %v477 = vpop.f32.mrb[0].mxu0
  %v478 = vadd.f32 %v354, %v477
  %v479 = vpop.f32.mrb[0].mxu0
  %480 = vmatprep.mubr.f32.mxu0 0.0
  %481 = vmatmul.mubr.f32.gmra.mrb[0].mxu0 %v379
  %v482 = vpop.f32.mrb[0].mxu0
  %v483 = vadd.f32 %v354, %v482
  %v484 = vpop.f32.mrb[0].mxu0
  %485 = vdwg.mxu0
  %486 = vst [vmem:[%s7] sm:$0xff] %v448
  %487 = vst [vmem:[%s7 + $0x8] sm:$0xff] %v453
  %488 = vst [vmem:[%s7 + $0x10] sm:$0xff] %v458
  %489 = vst [vmem:[%s7 + $0x18] sm:$0xff] %v463
  %490 = vst [vmem:[%s7 + $0x20] sm:$0xff] %v468
  %491 = vst [vmem:[%s7 + $0x28] sm:$0xff] %v473
  %492 = vst [vmem:[%s7 + $0x30] sm:$0xff] %v478
  %493 = vst [vmem:[%s7 + $0x38] sm:$0xff] %v483
  // Predicated region
  $region30: #{gru_module_forward.5} parent=0 // pred_check
    _
  $region31: #{gru_module_forward.5} parent=0 // pred_check_branch
    %495 = sbr.rel (0) target = $region33
  $region32: #{gru_module_forward.5} parent=0 // pred_region
    _
  $region33: #{gru_module_forward.5} parent=0 // pred_fallthru
    _
  // Predicated region
  $region34: #{gru_module_forward.5} parent=0 // pred_check
    _
  $region35: #{gru_module_forward.5} parent=0 // pred_check_branch
    %497 = sbr.rel (0) target = $region37
  $region36: #{gru_module_forward.5} parent=0 // pred_region
    _
  $region37: #{gru_module_forward.5} parent=0 // pred_fallthru
    _

</llo_original>
